<compile_context>
chip_gen: v7x
topology: tpu7x:2x2x1
jax: 0.10.0
libtpu: 0.0.40
codegen_flags: <defaults>
</compile_context>

<pallas_src>
import jax
import jax.numpy as jnp
from jax.experimental import pallas as pl
from jax.experimental.pallas import tpu as pltpu

BN_EPS = 1e-5


def _head_kernel(x_ref, p_ref, w_ref, gamma_ref, beta_ref,
                 score_ref, gfeat_ref,
                 gfeat_acc, sum_acc, sumsq_acc):
    # x_ref:     (TB*HW, C)   trunk feature tile, channel-last (bf16 or f32)
    # p_ref:     (TB, TB*HW)  block-diagonal pooling matrix (entries 1/HW)
    # w_ref:     (NCP, C)     classifier weight, PyTorch layout, zero-padded rows
    # gamma/beta:(1, C)       BatchNorm1d affine params
    # score_ref: (B, NCP)     resident output block (written at last step)
    # gfeat_ref: (TB, C)      per-tile output block
    i = pl.program_id(0)
    last = pl.num_programs(0) - 1
    tb = gfeat_ref.shape[0]

    @pl.when(i == 0)
    def _init():
        sum_acc[...] = jnp.zeros_like(sum_acc)
        sumsq_acc[...] = jnp.zeros_like(sumsq_acc)

    # Global average pool on the MXU: P @ x_tile == per-sample spatial mean,
    # landing channel-last (C on lanes) in f32 — exactly the layout the BN and
    # classifier need, no relayout.
    gfeat_tile = jnp.dot(p_ref[...], x_ref[...],
                         preferred_element_type=jnp.float32)          # (TB, C)

    gfeat_ref[...] = gfeat_tile.astype(gfeat_ref.dtype)
    row0 = pl.multiple_of(i * tb, tb)
    gfeat_acc[pl.ds(row0, tb), :] = gfeat_tile
    sum_acc[...] += jnp.sum(gfeat_tile, axis=0, keepdims=True)
    sumsq_acc[...] += jnp.sum(gfeat_tile * gfeat_tile, axis=0, keepdims=True)

    @pl.when(i == last)
    def _finalize():
        # BatchNorm1d in training mode: per-channel biased batch statistics.
        # TODO(synk): eval-mode path would use running_mean/running_var instead.
        inv_b = 1.0 / gfeat_acc.shape[0]
        mean = sum_acc[...] * inv_b                                    # (1, C)
        var = sumsq_acc[...] * inv_b - mean * mean                     # (1, C)
        scale = gamma_ref[...] * jax.lax.rsqrt(var + BN_EPS)
        shift = beta_ref[...] - mean * scale
        feat = gfeat_acc[...] * scale + shift                          # (B, C)
        # classifier: Linear(C, NC, bias=False).  Weight kept (NCP, C), so the
        # contraction is a trans_b dot_general on the MXU; output is lane-dense
        # because NC was padded to a multiple of 128.
        score_ref[...] = jax.lax.dot_general(
            feat, w_ref[...],
            dimension_numbers=(((1,), (1,)), ((), ())),
            preferred_element_type=jnp.float32,
        ).astype(score_ref.dtype)


def backbone_head(x_nchw, w_cls, bn_gamma, bn_beta, *, block_b=None):
    """x_nchw: (B, C, H, W) trunk feature map (bf16 or f32).
    w_cls: (num_classes, C) classifier weight (PyTorch layout, NOT transposed).
    Returns (cls_score (B, num_classes) f32, global_feat (B, C) f32)."""
    B, C, H, W = x_nchw.shape
    HW = H * W
    NC = w_cls.shape[0]
    NCP = ((NC + 127) // 128) * 128           # lane-dense score width

    if block_b is None:
        block_b = 8 if B % 8 == 0 else B
    assert B % block_b == 0  # TODO(synk): pad ragged batch tiles if needed
    grid_b = B // block_b

    # Layout plumbing: channel-last (B*HW, C) so C=2048 maps to lanes in-kernel.
    # TODO(synk): in a fused pipeline the trunk would emit NHWC directly.
    x2 = jnp.transpose(x_nchw.reshape(B, C, HW), (0, 2, 1)).reshape(B * HW, C)

    # Block-diagonal pooling matrix: one MXU matmul == per-sample spatial mean.
    pool = (jnp.repeat(jnp.eye(block_b, dtype=jnp.float32), HW, axis=1)
            * (1.0 / HW)).astype(x2.dtype)                     # (TB, TB*HW)

    w_pad = jnp.pad(w_cls.astype(jnp.float32), ((0, NCP - NC), (0, 0)))
    gamma = bn_gamma.reshape(1, C).astype(jnp.float32)
    beta = bn_beta.reshape(1, C).astype(jnp.float32)

    x_bytes = x2.size * x2.dtype.itemsize
    cost = pl.CostEstimate(
        flops=2 * B * HW * C + 2 * B * C * NCP,
        transcendentals=C,
        bytes_accessed=(x_bytes + w_pad.size * 4 + 2 * C * 4
                        + B * NCP * 4 + B * C * 4),
    )

    score_pad, gfeat = pl.pallas_call(
        _head_kernel,
        out_shape=(
            jax.ShapeDtypeStruct((B, NCP), jnp.float32),
            jax.ShapeDtypeStruct((B, C), jnp.float32),
        ),
        grid_spec=pltpu.PrefetchScalarGridSpec(
            num_scalar_prefetch=0,
            grid=(grid_b,),
            in_specs=[
                pl.BlockSpec((block_b * HW, C), lambda i: (i, 0)),       # x tile
                pl.BlockSpec((block_b, block_b * HW), lambda i: (0, 0)), # pool P
                pl.BlockSpec((NCP, C), lambda i: (0, 0)),                # W
                pl.BlockSpec((1, C), lambda i: (0, 0)),                  # gamma
                pl.BlockSpec((1, C), lambda i: (0, 0)),                  # beta
            ],
            out_specs=[
                pl.BlockSpec((B, NCP), lambda i: (0, 0)),   # resident, last step
                pl.BlockSpec((block_b, C), lambda i: (i, 0)),
            ],
            scratch_shapes=[
                pltpu.VMEM((B, C), jnp.float32),   # all pooled feats (finalize)
                pltpu.VMEM((1, C), jnp.float32),   # per-channel sum
                pltpu.VMEM((1, C), jnp.float32),   # per-channel sum of squares
            ],
        ),
        compiler_params=pltpu.CompilerParams(
            # Single grid axis carries the cross-batch BN reduction -> arbitrary.
            dimension_semantics=("arbitrary",),
            vmem_limit_bytes=32 * 1024 * 1024,
        ),
        cost_estimate=cost,
    )(x2, pool, w_pad, gamma, beta)

    return score_pad[:, :NC], gfeat


def _reference(x_nchw, w_cls, bn_gamma, bn_beta):
    B, C, H, W = x_nchw.shape
    x = x_nchw.astype(jnp.float32)
    gfeat = jnp.mean(x.reshape(B, C, H * W), axis=-1)
    mean = jnp.mean(gfeat, axis=0, keepdims=True)
    var = jnp.mean((gfeat - mean) ** 2, axis=0, keepdims=True)
    feat = (gfeat - mean) / jnp.sqrt(var + BN_EPS) * bn_gamma[None, :] + bn_beta[None, :]
    return feat @ w_cls.astype(jnp.float32).T, gfeat


if __name__ == "__main__":
    # Shapes consistent with the module: in_planes=2048 feature map from the
    # ResNet50 trunk, 16x8 spatial (256x128 input image), batch=16 so the
    # batch-tiled grid actually has 2 steps (block_b=8).
    B, C, H, W = 16, 2048, 16, 8
    NUM_CLASSES = 16

    key = jax.random.PRNGKey(0)
    kx, kw = jax.random.split(key)
    # Trunk feature map kept bf16 on the wire (halves the dominant HBM DMA);
    # the kernel accumulates the pool in f32 so all chips are fine.
    x = jax.random.normal(kx, (B, C, H, W), dtype=jnp.float32).astype(jnp.bfloat16)

    # Deterministic parameter init matching the module's __init__:
    #   classifier: Linear(2048, num_classes, bias=False), normal(std=0.001)
    #   bottleneck: BatchNorm1d(2048), weight=1, bias=0 (kaiming init branch)
    w_cls = 0.001 * jax.random.normal(kw, (NUM_CLASSES, C), dtype=jnp.float32)
    bn_gamma = jnp.ones((C,), dtype=jnp.float32)
    bn_beta = jnp.zeros((C,), dtype=jnp.float32)

    cls_score, global_feat = backbone_head(x, w_cls, bn_gamma, bn_beta)
    jax.block_until_ready((cls_score, global_feat))

    ref_score, ref_gfeat = _reference(x, w_cls, bn_gamma, bn_beta)
    assert cls_score.shape == (B, NUM_CLASSES)
    assert global_feat.shape == (B, C)
    assert jnp.allclose(global_feat, ref_gfeat, atol=1e-5, rtol=1e-5), \
        float(jnp.max(jnp.abs(global_feat - ref_gfeat)))
    assert jnp.allclose(cls_score, ref_score, atol=5e-4, rtol=1e-3), \
        float(jnp.max(jnp.abs(cls_score - ref_score)))

    print("KERNEL_OK")
</pallas_src>

<mosaic_0001>
module attributes {stable_mosaic.version = 11 : i64} {
  func.func @_head_kernel(%arg0: i32, %arg1: memref<1024x2048xbf16, #tpu.memory_space<vmem>>, %arg2: memref<8x1024xbf16, #tpu.memory_space<vmem>>, %arg3: memref<128x2048xf32, #tpu.memory_space<vmem>>, %arg4: memref<1x2048xf32, #tpu.memory_space<vmem>>, %arg5: memref<1x2048xf32, #tpu.memory_space<vmem>>, %arg6: memref<16x128xf32, #tpu.memory_space<vmem>>, %arg7: memref<8x2048xf32, #tpu.memory_space<vmem>>, %arg8: memref<16x2048xf32, #tpu.memory_space<vmem>>, %arg9: memref<1x2048xf32, #tpu.memory_space<vmem>>, %arg10: memref<1x2048xf32, #tpu.memory_space<vmem>>) attributes {dimension_semantics = [#tpu.dimension_semantics<arbitrary>], iteration_bounds = array<i64: 2>, scalar_prefetch = 0 : i64, scratch_operands = 3 : i64, tpu.core_type = #tpu.core_type<tc>, window_params = [{transform_indices = @transform_0, window_bounds = array<i64: 1024, 2048>}, {pipeline_mode = #tpu.pipeline_mode<synchronous>, transform_indices = @transform_1, window_bounds = array<i64: 8, 1024>}, {pipeline_mode = #tpu.pipeline_mode<synchronous>, transform_indices = @transform_2, window_bounds = array<i64: 128, 2048>}, {pipeline_mode = #tpu.pipeline_mode<synchronous>, transform_indices = @transform_3, window_bounds = array<i64: 1, 2048>}, {pipeline_mode = #tpu.pipeline_mode<synchronous>, transform_indices = @transform_4, window_bounds = array<i64: 1, 2048>}, {pipeline_mode = #tpu.pipeline_mode<synchronous>, transform_indices = @transform_5, window_bounds = array<i64: 16, 128>}, {transform_indices = @transform_6, window_bounds = array<i64: 8, 2048>}]} {
    %c0_i32 = arith.constant 0 : i32
    %0 = arith.cmpi eq, %arg0, %c0_i32 : i32
    %1 = arith.extui %0 : i1 to i32
    %c0_i32_0 = arith.constant 0 : i32
    %2 = arith.cmpi ne, %1, %c0_i32_0 : i32
    scf.if %2 {
      %cst_18 = arith.constant 0.000000e+00 : f32
      %25 = vector.broadcast %cst_18 : f32 to vector<1x2048xf32>
      %c0_19 = arith.constant 0 : index
      %c0_20 = arith.constant 0 : index
      %26 = vector.load %arg9[%c0_19, %c0_20] : memref<1x2048xf32, #tpu.memory_space<vmem>>, vector<1x2048xf32>
      tpu.vector_store %arg9[%c0_19, %c0_20], %25 {strides = array<i32>} : memref<1x2048xf32, #tpu.memory_space<vmem>>, vector<1x2048xf32>,
      %cst_21 = arith.constant 0.000000e+00 : f32
      %27 = vector.broadcast %cst_21 : f32 to vector<1x2048xf32>
      %c0_22 = arith.constant 0 : index
      %c0_23 = arith.constant 0 : index
      %28 = vector.load %arg10[%c0_22, %c0_23] : memref<1x2048xf32, #tpu.memory_space<vmem>>, vector<1x2048xf32>
      tpu.vector_store %arg10[%c0_22, %c0_23], %27 {strides = array<i32>} : memref<1x2048xf32, #tpu.memory_space<vmem>>, vector<1x2048xf32>,
    } else {
    }
    %c0 = arith.constant 0 : index
    %c0_1 = arith.constant 0 : index
    %3 = vector.load %arg2[%c0, %c0_1] : memref<8x1024xbf16, #tpu.memory_space<vmem>>, vector<8x1024xbf16>
    %c0_2 = arith.constant 0 : index
    %c0_3 = arith.constant 0 : index
    %4 = vector.load %arg1[%c0_2, %c0_3] : memref<1024x2048xbf16, #tpu.memory_space<vmem>>, vector<1024x2048xbf16>
    %cst = arith.constant dense<0.000000e+00> : vector<8x2048xf32>
    %5 = tpu.matmul %3, %4, %cst {dimension_numbers = #tpu.dot_dimension_numbers<[1], [0], [0], [1], [0, 0, 1, 1], [], []>} : vector<8x1024xbf16>, vector<1024x2048xbf16>, vector<8x2048xf32> -> vector<8x2048xf32>
    %c0_4 = arith.constant 0 : index
    %c0_5 = arith.constant 0 : index
    %6 = vector.load %arg7[%c0_4, %c0_5] : memref<8x2048xf32, #tpu.memory_space<vmem>>, vector<8x2048xf32>
    tpu.vector_store %arg7[%c0_4, %c0_5], %5 {strides = array<i32>} : memref<8x2048xf32, #tpu.memory_space<vmem>>, vector<8x2048xf32>,
    %c8_i32 = arith.constant 8 : i32
    %7 = arith.muli %arg0, %c8_i32 : i32
    %8 = tpu.assume_multiple %7, 8 : i32
    %9 = arith.index_cast %8 : i32 to index
    %c0_6 = arith.constant 0 : index
    %10 = vector.load %arg8[%9, %c0_6] : memref<16x2048xf32, #tpu.memory_space<vmem>>, vector<8x2048xf32>
    tpu.vector_store %arg8[%9, %c0_6], %5 {strides = array<i32>} : memref<16x2048xf32, #tpu.memory_space<vmem>>, vector<8x2048xf32>,
    %c0_7 = arith.constant 0 : index
    %c0_8 = arith.constant 0 : index
    %11 = vector.load %arg9[%c0_7, %c0_8] : memref<1x2048xf32, #tpu.memory_space<vmem>>, vector<1x2048xf32>
    %cst_9 = arith.constant dense<0.000000e+00> : vector<2048xf32>
    %12 = vector.multi_reduction <add>, %5, %cst_9 [0] : vector<8x2048xf32> to vector<2048xf32>
    %13 = vector.shape_cast %12 : vector<2048xf32> to vector<1x2048xf32>
    %14 = arith.addf %11, %13 : vector<1x2048xf32>
    %c0_10 = arith.constant 0 : index
    %c0_11 = arith.constant 0 : index
    %15 = vector.load %arg9[%c0_10, %c0_11] : memref<1x2048xf32, #tpu.memory_space<vmem>>, vector<1x2048xf32>
    tpu.vector_store %arg9[%c0_10, %c0_11], %14 {strides = array<i32>} : memref<1x2048xf32, #tpu.memory_space<vmem>>, vector<1x2048xf32>,
    %c0_12 = arith.constant 0 : index
    %c0_13 = arith.constant 0 : index
    %16 = vector.load %arg10[%c0_12, %c0_13] : memref<1x2048xf32, #tpu.memory_space<vmem>>, vector<1x2048xf32>
    %17 = arith.mulf %5, %5 : vector<8x2048xf32>
    %cst_14 = arith.constant dense<0.000000e+00> : vector<2048xf32>
    %18 = vector.multi_reduction <add>, %17, %cst_14 [0] : vector<8x2048xf32> to vector<2048xf32>
    %19 = vector.shape_cast %18 : vector<2048xf32> to vector<1x2048xf32>
    %20 = arith.addf %16, %19 : vector<1x2048xf32>
    %c0_15 = arith.constant 0 : index
    %c0_16 = arith.constant 0 : index
    %21 = vector.load %arg10[%c0_15, %c0_16] : memref<1x2048xf32, #tpu.memory_space<vmem>>, vector<1x2048xf32>
    tpu.vector_store %arg10[%c0_15, %c0_16], %20 {strides = array<i32>} : memref<1x2048xf32, #tpu.memory_space<vmem>>, vector<1x2048xf32>,
    %c1_i32 = arith.constant 1 : i32
    %22 = arith.cmpi eq, %arg0, %c1_i32 : i32
    %23 = arith.extui %22 : i1 to i32
    %c0_i32_17 = arith.constant 0 : i32
    %24 = arith.cmpi ne, %23, %c0_i32_17 : i32
    scf.if %24 {
      %c0_18 = arith.constant 0 : index
      %c0_19 = arith.constant 0 : index
      %25 = vector.load %arg9[%c0_18, %c0_19] : memref<1x2048xf32, #tpu.memory_space<vmem>>, vector<1x2048xf32>
      %cst_20 = arith.constant 6.250000e-02 : f32
      %26 = vector.broadcast %cst_20 : f32 to vector<1x2048xf32>
      %27 = arith.mulf %25, %26 : vector<1x2048xf32>
      %c0_21 = arith.constant 0 : index
      %c0_22 = arith.constant 0 : index
      %28 = vector.load %arg10[%c0_21, %c0_22] : memref<1x2048xf32, #tpu.memory_space<vmem>>, vector<1x2048xf32>
      %cst_23 = arith.constant 6.250000e-02 : f32
      %29 = vector.broadcast %cst_23 : f32 to vector<1x2048xf32>
      %30 = arith.mulf %28, %29 : vector<1x2048xf32>
      %31 = arith.mulf %27, %27 : vector<1x2048xf32>
      %32 = arith.subf %30, %31 : vector<1x2048xf32>
      %c0_24 = arith.constant 0 : index
      %c0_25 = arith.constant 0 : index
      %33 = vector.load %arg4[%c0_24, %c0_25] : memref<1x2048xf32, #tpu.memory_space<vmem>>, vector<1x2048xf32>
      %cst_26 = arith.constant 9.99999974E-6 : f32
      %34 = vector.broadcast %cst_26 : f32 to vector<1x2048xf32>
      %35 = arith.addf %32, %34 : vector<1x2048xf32>
      %36 = math.rsqrt %35 : vector<1x2048xf32>
      %37 = arith.mulf %33, %36 : vector<1x2048xf32>
      %c0_27 = arith.constant 0 : index
      %c0_28 = arith.constant 0 : index
      %38 = vector.load %arg5[%c0_27, %c0_28] : memref<1x2048xf32, #tpu.memory_space<vmem>>, vector<1x2048xf32>
      %39 = arith.mulf %27, %37 : vector<1x2048xf32>
      %40 = arith.subf %38, %39 : vector<1x2048xf32>
      %c0_29 = arith.constant 0 : index
      %c0_30 = arith.constant 0 : index
      %41 = vector.load %arg8[%c0_29, %c0_30] : memref<16x2048xf32, #tpu.memory_space<vmem>>, vector<16x2048xf32>
      %42 = vector.broadcast %37 : vector<1x2048xf32> to vector<16x2048xf32>
      %43 = arith.mulf %41, %42 : vector<16x2048xf32>
      %44 = vector.broadcast %40 : vector<1x2048xf32> to vector<16x2048xf32>
      %45 = arith.addf %43, %44 : vector<16x2048xf32>
      %c0_31 = arith.constant 0 : index
      %c0_32 = arith.constant 0 : index
      %46 = vector.load %arg3[%c0_31, %c0_32] : memref<128x2048xf32, #tpu.memory_space<vmem>>, vector<128x2048xf32>
      %cst_33 = arith.constant dense<0.000000e+00> : vector<16x128xf32>
      %47 = tpu.matmul %45, %46, %cst_33 {dimension_numbers = #tpu.dot_dimension_numbers<[1], [1], [0], [0], [0, 0, 1, 0], [], []>} : vector<16x2048xf32>, vector<128x2048xf32>, vector<16x128xf32> -> vector<16x128xf32>
      %c0_34 = arith.constant 0 : index
      %c0_35 = arith.constant 0 : index
      %48 = vector.load %arg6[%c0_34, %c0_35] : memref<16x128xf32, #tpu.memory_space<vmem>>, vector<16x128xf32>
      tpu.vector_store %arg6[%c0_34, %c0_35], %47 {strides = array<i32>} : memref<16x128xf32, #tpu.memory_space<vmem>>, vector<16x128xf32>,
    } else {
    }
    return
  }
  func.func @transform_0(%arg0: i32) -> (i32, i32) {
    %c0_i32 = arith.constant 0 : i32
    %c0_i32_0 = arith.constant 0 : i32
    return %arg0, %c0_i32 : i32, i32
  }
  func.func @transform_1(%arg0: i32) -> (i32, i32) {
    %c0_i32 = arith.constant 0 : i32
    %c0_i32_0 = arith.constant 0 : i32
    %c0_i32_1 = arith.constant 0 : i32
    return %c0_i32, %c0_i32_0 : i32, i32
  }
  func.func @transform_2(%arg0: i32) -> (i32, i32) {
    %c0_i32 = arith.constant 0 : i32
    %c0_i32_0 = arith.constant 0 : i32
    %c0_i32_1 = arith.constant 0 : i32
    return %c0_i32, %c0_i32_0 : i32, i32
  }
  func.func @transform_3(%arg0: i32) -> (i32, i32) {
    %c0_i32 = arith.constant 0 : i32
    %c0_i32_0 = arith.constant 0 : i32
    %c0_i32_1 = arith.constant 0 : i32
    return %c0_i32, %c0_i32_0 : i32, i32
  }
  func.func @transform_4(%arg0: i32) -> (i32, i32) {
    %c0_i32 = arith.constant 0 : i32
    %c0_i32_0 = arith.constant 0 : i32
    %c0_i32_1 = arith.constant 0 : i32
    return %c0_i32, %c0_i32_0 : i32, i32
  }
  func.func @transform_5(%arg0: i32) -> (i32, i32) {
    %c0_i32 = arith.constant 0 : i32
    %c0_i32_0 = arith.constant 0 : i32
    %c0_i32_1 = arith.constant 0 : i32
    return %c0_i32, %c0_i32_0 : i32, i32
  }
  func.func @transform_6(%arg0: i32) -> (i32, i32) {
    %c0_i32 = arith.constant 0 : i32
    %c0_i32_0 = arith.constant 0 : i32
    return %arg0, %c0_i32 : i32, i32
  }
}

</mosaic_0001>

<llo_original>
// kernel: tpu_custom_call.1
$region0: #{tpu_custom_call.1}
  #allocation0 [shape = 'u32[]', space=smem, size = 0x4, offset = 0x4, fixed_abs, tag = 'smem constant byte address 0x4 - core index']
  #allocation1 [shape = 'u32[144,128]{1,0:T(1,128)}', space=vmem, size = 0x12000, scoped, tag = 'internal scratch']
  #allocation2 [shape = 'f32[16,2048]{1,0:T(8,128)}', space=vmem, size = 0x20000, scoped, tag = 'scratch operand']
  #allocation3 [shape = 'f32[1,2048]{1,0:T(1,128)}', space=vmem, size = 0x2000, scoped, tag = 'scratch operand']
  #allocation4 [shape = 'f32[1,2048]{1,0:T(1,128)}', space=vmem, size = 0x2000, scoped, tag = 'scratch operand']
  %s0 = inlined_call_operand.hbm [shape: bf16[2048,2048], index: 0, kind: input, shape index: {}]
  %s1 = inlined_call_operand.hbm [shape: bf16[8,1024], index: 1, kind: input, shape index: {}]
  %s2 = inlined_call_operand.hbm [shape: f32[128,2048], index: 2, kind: input, shape index: {}]
  %s3 = inlined_call_operand.hbm [shape: f32[1,2048], index: 3, kind: input, shape index: {}]
  %s4 = inlined_call_operand.hbm [shape: f32[1,2048], index: 4, kind: input, shape index: {}]
  %s5 = inlined_call_operand.hbm [shape: f32[16,128], index: 5, kind: output, shape index: {0}]
  %s6 = inlined_call_operand.hbm [shape: f32[16,2048], index: 6, kind: output, shape index: {1}]
  %7 = xla_tuple %s5, %s6
  %s8 = sld [smem:[#allocation0]]
  $region89: #{tpu_custom_call.1} parent=0
    _
  %s10 = ssub.s32 1, %s8
  %s11 = scalar_select 0, %s10, %s8
  $region1: #{tpu_custom_call.1} parent=0
    #allocation5 [shape = 'u8[8388608]{0}', space=vmem, size = 0x800000, scoped, tag = 'input window, operand 0']
    #allocation6 [shape = 's32[2]{0}', space=sflag, size = 0x8, scoped, tag = 'scoped memory for tpu_custom_call.1']
    #allocation7 [shape = 's32[2]{0}', space=sflag, size = 0x8, scoped, tag = 'scoped memory for tpu_custom_call.1']
    #allocation8 [shape = 'u8[16384]{0}', space=vmem, size = 0x4000, scoped, tag = 'input window, operand 1, single buffered']
    #allocation9 [shape = 's32[1]{0}', space=sflag, size = 0x4, scoped, tag = 'scoped memory for tpu_custom_call.1']
    #allocation10 [shape = 'u8[1048576]{0}', space=vmem, size = 0x100000, scoped, tag = 'input window, operand 2, single buffered']
    #allocation11 [shape = 'u8[8192]{0}', space=vmem, size = 0x2000, scoped, tag = 'input window, operand 3, single buffered']
    #allocation12 [shape = 's32[1]{0}', space=sflag, size = 0x4, scoped, tag = 'scoped memory for tpu_custom_call.1']
    #allocation13 [shape = 'u8[8192]{0}', space=vmem, size = 0x2000, scoped, tag = 'input window, operand 4, single buffered']
    #allocation14 [shape = 'u8[8192]{0}', space=vmem, size = 0x2000, scoped, tag = 'output window, operand 0, single buffered']
    #allocation15 [shape = 'u8[131072]{0}', space=vmem, size = 0x20000, scoped, tag = 'output window, operand 1']
    #allocation16 [shape = 's32[2]{0}', space=sflag, size = 0x8, scoped, tag = 'scoped memory for tpu_custom_call.1']
    %12 = vsyncpa [#allocation6], 0
    %s13 = scalar_lea.sflag [#allocation6], 1
    %14 = vsyncpa %s13, 0
    %15 = vsyncpa [#allocation9], 0
    %16 = vsyncpa [#allocation12], 0
    %17 = vsyncpa [#allocation7], 0
    %18 = vsyncpa [#allocation16], 0
    %s19 = scalar_lea.sflag [#allocation16], 1
    %20 = vsyncpa %s19, 0
    loop: start=0, step=1, limit=4
    $region2: #{tpu_custom_call.1} parent=1 // loop_pre_header
      _
    $region3: #{tpu_custom_call.1} parent=1 // loop_header
      %s22 = sphi 0, %s26
      %p23 = scmp.ge.s32.totalorder %s22, 4
      %s32 = sphi 0, %s34
      %s35 = sphi 0, %s32
      %s36 = sphi 0, %s35
      %s52 = sphi 0, %s36
      %s56 = sphi 0, %s56
      %s58 = sphi 0, %s56
      %s59 = sphi 0, %s58
      %s73 = sphi 0, %s59
      %s77 = sphi 0, %s77
      %s79 = sphi 0, %s77
      %s80 = sphi 0, %s79
      %s94 = sphi 0, %s80
      %s98 = sphi 0, %s98
      %s100 = sphi 0, %s98
      %s101 = sphi 0, %s100
      %s115 = sphi 0, %s101
      %s119 = sphi 0, %s119
      %s121 = sphi 0, %s119
      %s122 = sphi 0, %s121
      %s136 = sphi 0, %s122
      %s140 = sphi 0, %s140
      %s142 = sphi 0, %s140
      %s143 = sphi 0, %s142
      %s157 = sphi 0, %s143
      %s163 = sphi 0, %s165
      %s166 = sphi 0, %s163
      %s167 = sphi 0, %s166
      %s183 = sphi 0, %s167
    $region4: #{tpu_custom_call.1} parent=1 // loop_header_branch
      %25 = sbr.rel (%p23) target = $region8
    $region5: #{tpu_custom_call.1} parent=1 // loop_body
      %s27 = ssub.s32 %s22, 1
      %s28 = ssub.s32 %s22, 2
      %s29 = sadd.s32 %s22, 1
      %s30 = ssub.s32 %s22, %s29
      %p31 = scmp.eq.s32.totalorder %s30, 0
      %s33 = sadd.s32 %s32, 1
      %s34 = scalar_select %p31, %s32, %s33
      %p37 = pneg %p31
      %p38 = scmp.eq.s32.totalorder %s22, 1
      %p39 = por %p37, %p38
      %p40 = scmp.ne.s32.totalorder %s32, %s35
      %p41 = scmp.eq.s32.totalorder %s22, 0
      %p42 = por %p40, %p41
      %p43 = scmp.ne.s32.totalorder %s32, %s35
      %p44 = scmp.eq.s32.totalorder %s27, 1
      %p45 = por %p43, %p44
      %p46 = scmp.ne.s32.totalorder %s35, %s36
      %p47 = scmp.eq.s32.totalorder %s27, 0
      %p48 = por %p46, %p47
      %p49 = scmp.ne.s32.totalorder %s35, %s36
      %p50 = scmp.eq.s32.totalorder %s28, 1
      %p51 = por %p49, %p50
      %p53 = scmp.ne.s32.totalorder %s36, %s52
      %p54 = scmp.eq.s32.totalorder %s28, 0
      %p55 = por %p53, %p54
      %s57 = sadd.s32 %s56, 1
      %p60 = scmp.eq.s32.totalorder %s22, 1
      %p61 = scmp.ne.s32.totalorder %s56, %s58
      %p62 = scmp.eq.s32.totalorder %s22, 0
      %p63 = por %p61, %p62
      %p64 = scmp.ne.s32.totalorder %s56, %s58
      %p65 = scmp.eq.s32.totalorder %s27, 1
      %p66 = por %p64, %p65
      %p67 = scmp.ne.s32.totalorder %s58, %s59
      %p68 = scmp.eq.s32.totalorder %s27, 0
      %p69 = por %p67, %p68
      %p70 = scmp.ne.s32.totalorder %s58, %s59
      %p71 = scmp.eq.s32.totalorder %s28, 1
      %p72 = por %p70, %p71
      %p74 = scmp.ne.s32.totalorder %s59, %s73
      %p75 = scmp.eq.s32.totalorder %s28, 0
      %p76 = por %p74, %p75
      %s78 = sadd.s32 %s77, 1
      %p81 = scmp.eq.s32.totalorder %s22, 1
      %p82 = scmp.ne.s32.totalorder %s77, %s79
      %p83 = scmp.eq.s32.totalorder %s22, 0
      %p84 = por %p82, %p83
      %p85 = scmp.ne.s32.totalorder %s77, %s79
      %p86 = scmp.eq.s32.totalorder %s27, 1
      %p87 = por %p85, %p86
      %p88 = scmp.ne.s32.totalorder %s79, %s80
      %p89 = scmp.eq.s32.totalorder %s27, 0
      %p90 = por %p88, %p89
      %p91 = scmp.ne.s32.totalorder %s79, %s80
      %p92 = scmp.eq.s32.totalorder %s28, 1
      %p93 = por %p91, %p92
      %p95 = scmp.ne.s32.totalorder %s80, %s94
      %p96 = scmp.eq.s32.totalorder %s28, 0
      %p97 = por %p95, %p96
      %s99 = sadd.s32 %s98, 1
      %p102 = scmp.eq.s32.totalorder %s22, 1
      %p103 = scmp.ne.s32.totalorder %s98, %s100
      %p104 = scmp.eq.s32.totalorder %s22, 0
      %p105 = por %p103, %p104
      %p106 = scmp.ne.s32.totalorder %s98, %s100
      %p107 = scmp.eq.s32.totalorder %s27, 1
      %p108 = por %p106, %p107
      %p109 = scmp.ne.s32.totalorder %s100, %s101
      %p110 = scmp.eq.s32.totalorder %s27, 0
      %p111 = por %p109, %p110
      %p112 = scmp.ne.s32.totalorder %s100, %s101
      %p113 = scmp.eq.s32.totalorder %s28, 1
      %p114 = por %p112, %p113
      %p116 = scmp.ne.s32.totalorder %s101, %s115
      %p117 = scmp.eq.s32.totalorder %s28, 0
      %p118 = por %p116, %p117
      %s120 = sadd.s32 %s119, 1
      %p123 = scmp.eq.s32.totalorder %s22, 1
      %p124 = scmp.ne.s32.totalorder %s119, %s121
      %p125 = scmp.eq.s32.totalorder %s22, 0
      %p126 = por %p124, %p125
      %p127 = scmp.ne.s32.totalorder %s119, %s121
      %p128 = scmp.eq.s32.totalorder %s27, 1
      %p129 = por %p127, %p128
      %p130 = scmp.ne.s32.totalorder %s121, %s122
      %p131 = scmp.eq.s32.totalorder %s27, 0
      %p132 = por %p130, %p131
      %p133 = scmp.ne.s32.totalorder %s121, %s122
      %p134 = scmp.eq.s32.totalorder %s28, 1
      %p135 = por %p133, %p134
      %p137 = scmp.ne.s32.totalorder %s122, %s136
      %p138 = scmp.eq.s32.totalorder %s28, 0
      %p139 = por %p137, %p138
      %s141 = sadd.s32 %s140, 1
      %p144 = scmp.eq.s32.totalorder %s22, 1
      %p145 = scmp.ne.s32.totalorder %s140, %s142
      %p146 = scmp.eq.s32.totalorder %s22, 0
      %p147 = por %p145, %p146
      %p148 = scmp.ne.s32.totalorder %s140, %s142
      %p149 = scmp.eq.s32.totalorder %s27, 1
      %p150 = por %p148, %p149
      %p151 = scmp.ne.s32.totalorder %s142, %s143
      %p152 = scmp.eq.s32.totalorder %s27, 0
      %p153 = por %p151, %p152
      %p154 = scmp.ne.s32.totalorder %s142, %s143
      %p155 = scmp.eq.s32.totalorder %s28, 1
      %p156 = por %p154, %p155
      %p158 = scmp.ne.s32.totalorder %s143, %s157
      %p159 = scmp.eq.s32.totalorder %s28, 0
      %p160 = por %p158, %p159
      %s161 = ssub.s32 %s22, %s29
      %p162 = scmp.eq.s32.totalorder %s161, 0
      %s164 = sadd.s32 %s163, 1
      %s165 = scalar_select %p162, %s163, %s164
      %p168 = pneg %p162
      %p169 = scmp.eq.s32.totalorder %s22, 1
      %p170 = por %p168, %p169
      %p171 = scmp.ne.s32.totalorder %s163, %s166
      %p172 = scmp.eq.s32.totalorder %s22, 0
      %p173 = por %p171, %p172
      %p174 = scmp.ne.s32.totalorder %s163, %s166
      %p175 = scmp.eq.s32.totalorder %s27, 1
      %p176 = por %p174, %p175
      %p177 = scmp.ne.s32.totalorder %s166, %s167
      %p178 = scmp.eq.s32.totalorder %s27, 0
      %p179 = por %p177, %p178
      %p180 = scmp.ne.s32.totalorder %s166, %s167
      %p181 = scmp.eq.s32.totalorder %s28, 1
      %p182 = por %p180, %p181
      %p184 = scmp.ne.s32.totalorder %s167, %s183
      %p185 = scmp.eq.s32.totalorder %s28, 0
      %p186 = por %p184, %p185
      %p187 = scmp.le.s32.totalorder 1, %s22
      %p188 = scmp.lt.s32.totalorder %s22, 3
      %p189 = pnand %p187, %p188
      %p190 = pneg %p189
      // Predicated region
      $region9: #{tpu_custom_call.1} parent=5 // pred_check
        _
      $region10: #{tpu_custom_call.1} parent=5 // pred_check_branch
        %192 = sbr.rel (%p189) target = $region12
      $region11: #{tpu_custom_call.1} parent=5 // pred_region
        %s193 = ssub.s32 %s22, 1
        // Predicated region
        $region13: #{tpu_custom_call.1} parent=11 // pred_check
          %p194 = pneg %p69
        $region14: #{tpu_custom_call.1} parent=11 // pred_check_branch
          %196 = sbr.rel (%p194) target = $region16
        $region15: #{tpu_custom_call.1} parent=11 // pred_region
          %s198 = ssub.s32 512, 512
          %199 = vsyncadd [#allocation9], %s198
          %s201 = sshll.u32 [#allocation8], 4
          %s202 = int_to_ptr.vmem [resolvable:$true] %s201
          %204 = dma.hbm_to_vmem [thread:$0]  %s1, 512, %s202, [#allocation9]
        $region16: #{tpu_custom_call.1} parent=11 // pred_fallthru
          _
        // Predicated region
        $region17: #{tpu_custom_call.1} parent=11 // pred_check
          %p205 = pneg %p90
        $region18: #{tpu_custom_call.1} parent=11 // pred_check_branch
          %207 = sbr.rel (%p205) target = $region20
        $region19: #{tpu_custom_call.1} parent=11 // pred_region
          %s209 = ssub.s32 32768, 32768
          %210 = vsyncadd [#allocation9], %s209
          %s211 = sshll.u32 [#allocation10], 4
          %s212 = int_to_ptr.vmem [resolvable:$true] %s211
          %217 = dma.hbm_to_vmem [thread:$0]  %s2, 32768, %s212, [#allocation9], 2048, 2048, 128
        $region20: #{tpu_custom_call.1} parent=11 // pred_fallthru
          _
        // Predicated region
        $region21: #{tpu_custom_call.1} parent=11 // pred_check
          %p218 = pneg %p111
        $region22: #{tpu_custom_call.1} parent=11 // pred_check_branch
          %220 = sbr.rel (%p218) target = $region24
        $region23: #{tpu_custom_call.1} parent=11 // pred_region
          %s222 = ssub.s32 256, 256
          %223 = vsyncadd [#allocation12], %s222
          %s225 = sshll.u32 [#allocation11], 4
          %s226 = int_to_ptr.vmem [resolvable:$true] %s225
          %228 = dma.hbm_to_vmem [thread:$0]  %s3, 256, %s226, [#allocation12]
        $region24: #{tpu_custom_call.1} parent=11 // pred_fallthru
          _
        // Predicated region
        $region25: #{tpu_custom_call.1} parent=11 // pred_check
          %p229 = pneg %p132
        $region26: #{tpu_custom_call.1} parent=11 // pred_check_branch
          %231 = sbr.rel (%p229) target = $region28
        $region27: #{tpu_custom_call.1} parent=11 // pred_region
          %s233 = ssub.s32 256, 256
          %234 = vsyncadd [#allocation12], %s233
          %s236 = sshll.u32 [#allocation13], 4
          %s237 = int_to_ptr.vmem [resolvable:$true] %s236
          %239 = dma.hbm_to_vmem [thread:$0]  %s4, 256, %s237, [#allocation12]
        $region28: #{tpu_custom_call.1} parent=11 // pred_fallthru
          _
      $region12: #{tpu_custom_call.1} parent=5 // pred_fallthru
        _
      %p240 = scmp.lt.s32.totalorder %s22, 2
      // Predicated region
      $region29: #{tpu_custom_call.1} parent=5 // pred_check
        %p241 = pneg %p240
      $region30: #{tpu_custom_call.1} parent=5 // pred_check_branch
        %243 = sbr.rel (%p241) target = $region32
      $region31: #{tpu_custom_call.1} parent=5 // pred_region
        // Predicated region
        $region33: #{tpu_custom_call.1} parent=31 // pred_check
          %p244 = pneg %p42
        $region34: #{tpu_custom_call.1} parent=31 // pred_check_branch
          %246 = sbr.rel (%p244) target = $region36
        $region35: #{tpu_custom_call.1} parent=31 // pred_region
          %s247 = sand.u32 %s32, 1
          %s248 = scalar_lea.sflag [#allocation6], %s247
          %s249 = sand.u32 %s32, 1
          %s250 = smul.addr %s249, 8192
          %s251 = scalar_lea.vmem [#allocation5], %s250
          %s252 = smul.u32 128, %s22
          %s254 = ssub.s32 131072, 131072
          %255 = vsyncadd %s248, %s254
          %s256 = smul.addr %s252, 16
          %s257 = smul.addr %s256, 64
          %s258 = scalar_lea.hbm %s0, %s257
          %s259 = sshll.u32 %s251, 4
          %s260 = int_to_ptr.vmem [resolvable:$true] %s259
          %265 = dma.hbm_to_vmem [thread:$0]  %s258, 131072, %s260, %s248, 1024, 1024, 64
        $region36: #{tpu_custom_call.1} parent=31 // pred_fallthru
          _
      $region32: #{tpu_custom_call.1} parent=5 // pred_fallthru
        _
      %p266 = scmp.le.s32.totalorder 1, %s22
      %p267 = scmp.lt.s32.totalorder %s22, 3
      %p268 = pnand %p266, %p267
      %p269 = pneg %p268
      // Predicated region
      $region37: #{tpu_custom_call.1} parent=5 // pred_check
        _
      $region38: #{tpu_custom_call.1} parent=5 // pred_check_branch
        %271 = sbr.rel (%p268) target = $region40
      $region39: #{tpu_custom_call.1} parent=5 // pred_region
        %s272 = ssub.s32 %s22, 1
        %s273 = sand.u32 %s35, 1
        %s274 = scalar_lea.sflag [#allocation6], %s273
        %s275 = sand.u32 %s35, 1
        %s276 = smul.addr %s275, 8192
        %s277 = scalar_lea.vmem [#allocation5], %s276
        // Predicated region
        $region41: #{tpu_custom_call.1} parent=39 // pred_check
          %p278 = pneg %p48
        $region42: #{tpu_custom_call.1} parent=39 // pred_check_branch
          %280 = sbr.rel (%p278) target = $region44
        $region43: #{tpu_custom_call.1} parent=39 // pred_region
          %281 = dma.done %s274, 131072
        $region44: #{tpu_custom_call.1} parent=39 // pred_fallthru
          _
        // Predicated region
        $region45: #{tpu_custom_call.1} parent=39 // pred_check
          %p282 = pneg %p69
        $region46: #{tpu_custom_call.1} parent=39 // pred_check_branch
          %284 = sbr.rel (%p282) target = $region48
        $region47: #{tpu_custom_call.1} parent=39 // pred_region
          %285 = dma.done [#allocation9], 512
        $region48: #{tpu_custom_call.1} parent=39 // pred_fallthru
          _
        // Predicated region
        $region49: #{tpu_custom_call.1} parent=39 // pred_check
          %p286 = pneg %p90
        $region50: #{tpu_custom_call.1} parent=39 // pred_check_branch
          %288 = sbr.rel (%p286) target = $region52
        $region51: #{tpu_custom_call.1} parent=39 // pred_region
          %289 = dma.done [#allocation9], 32768
        $region52: #{tpu_custom_call.1} parent=39 // pred_fallthru
          _
        // Predicated region
        $region53: #{tpu_custom_call.1} parent=39 // pred_check
          %p290 = pneg %p111
        $region54: #{tpu_custom_call.1} parent=39 // pred_check_branch
          %292 = sbr.rel (%p290) target = $region56
        $region55: #{tpu_custom_call.1} parent=39 // pred_region
          %293 = dma.done [#allocation12], 256
        $region56: #{tpu_custom_call.1} parent=39 // pred_fallthru
          _
        // Predicated region
        $region57: #{tpu_custom_call.1} parent=39 // pred_check
          %p294 = pneg %p132
        $region58: #{tpu_custom_call.1} parent=39 // pred_check_branch
          %296 = sbr.rel (%p294) target = $region60
        $region59: #{tpu_custom_call.1} parent=39 // pred_region
          %297 = dma.done [#allocation12], 256
        $region60: #{tpu_custom_call.1} parent=39 // pred_fallthru
          _
        %s298 = sand.u32 %s35, 1
        %s299 = scalar_lea.sflag [#allocation6], %s298
        %s300 = sand.u32 %s35, 1
        %s301 = smul.addr %s300, 8192
        %s302 = scalar_lea.vmem [#allocation5], %s301
        %p303 = pneg %p48
        %p304 = pneg %p45
        %p305 = pneg %p69
        %p306 = pneg %p66
        %p307 = pneg %p90
        %p308 = pneg %p87
        %p309 = pneg %p111
        %p310 = pneg %p108
        %p311 = pneg %p132
        %p312 = pneg %p129
        %p313 = pneg %p153
        %p314 = pneg %p150
        %p315 = pneg %p179
        %p316 = pneg %p176
        %s317 = sand.u32 %s166, 1
        %s318 = scalar_lea.sflag [#allocation16], %s317
        %s319 = sand.u32 %s166, 1
        %s320 = smul.addr %s319, 128
        %s321 = scalar_lea.vmem [#allocation15], %s320
        %s322 = smul.u32 128, %s27
        %p323 = scmp.eq.s32.totalorder %s27, 0
        // Predicated region
        $region61: #{tpu_custom_call.1} parent=39 // pred_check
          %p324 = pneg %p323
        $region62: #{tpu_custom_call.1} parent=39 // pred_check_branch
          %326 = sbr.rel (%p324) target = $region64
        $region63: #{tpu_custom_call.1} parent=39 // pred_region
          %327 = vst [vmem:[#allocation3] sm:$0xff] 0.0
          %328 = vst [vmem:[#allocation3 + $0x8] sm:$0xff] 0.0
          %329 = vst [vmem:[#allocation4] sm:$0xff] 0.0
          %330 = vst [vmem:[#allocation4 + $0x8] sm:$0xff] 0.0
        $region64: #{tpu_custom_call.1} parent=39 // pred_fallthru
          _
        %v331 = vld [vmem:[#allocation8] sm:$0xff]
        %v332 = vld [vmem:[#allocation8 + $0x8] sm:$0xff]
        %v333 = vld [vmem:[#allocation8 + $0x10] sm:$0xff]
        %v334 = vld [vmem:[#allocation8 + $0x18] sm:$0xff]
        %v335 = vld [vmem:[%s277] sm:$0xff]
        %v336 = vld [vmem:[%s277 + $0x8] sm:$0xff]
        %v337 = vld [vmem:[%s277 + $0x10] sm:$0xff]
        %v338 = vld [vmem:[%s277 + $0x18] sm:$0xff]
        %v339 = vld [vmem:[%s277 + $0x20] sm:$0xff]
        %v340 = vld [vmem:[%s277 + $0x28] sm:$0xff]
        %v341 = vld [vmem:[%s277 + $0x30] sm:$0xff]
        %v342 = vld [vmem:[%s277 + $0x38] sm:$0xff]
        %v343 = vld [vmem:[%s277 + $0x40] sm:$0xff]
        %v344 = vld [vmem:[%s277 + $0x48] sm:$0xff]
        %v345 = vld [vmem:[%s277 + $0x50] sm:$0xff]
        %v346 = vld [vmem:[%s277 + $0x58] sm:$0xff]
        %v347 = vld [vmem:[%s277 + $0x60] sm:$0xff]
        %v348 = vld [vmem:[%s277 + $0x68] sm:$0xff]
        %v349 = vld [vmem:[%s277 + $0x70] sm:$0xff]
        %v350 = vld [vmem:[%s277 + $0x78] sm:$0xff]
        %v351 = vld [vmem:[%s277 + $0x80] sm:$0xff]
        %v352 = vld [vmem:[%s277 + $0x88] sm:$0xff]
        %v353 = vld [vmem:[%s277 + $0x90] sm:$0xff]
        %v354 = vld [vmem:[%s277 + $0x98] sm:$0xff]
        %v355 = vld [vmem:[%s277 + $0xa0] sm:$0xff]
        %v356 = vld [vmem:[%s277 + $0xa8] sm:$0xff]
        %v357 = vld [vmem:[%s277 + $0xb0] sm:$0xff]
        %v358 = vld [vmem:[%s277 + $0xb8] sm:$0xff]
        %v359 = vld [vmem:[%s277 + $0xc0] sm:$0xff]
        %v360 = vld [vmem:[%s277 + $0xc8] sm:$0xff]
        %v361 = vld [vmem:[%s277 + $0xd0] sm:$0xff]
        %v362 = vld [vmem:[%s277 + $0xd8] sm:$0xff]
        %v363 = vld [vmem:[%s277 + $0xe0] sm:$0xff]
        %v364 = vld [vmem:[%s277 + $0xe8] sm:$0xff]
        %v365 = vld [vmem:[%s277 + $0xf0] sm:$0xff]
        %v366 = vld [vmem:[%s277 + $0xf8] sm:$0xff]
        %v367 = vld [vmem:[%s277 + $0x100] sm:$0xff]
        %v368 = vld [vmem:[%s277 + $0x108] sm:$0xff]
        %v369 = vld [vmem:[%s277 + $0x110] sm:$0xff]
        %v370 = vld [vmem:[%s277 + $0x118] sm:$0xff]
        %v371 = vld [vmem:[%s277 + $0x120] sm:$0xff]
        %v372 = vld [vmem:[%s277 + $0x128] sm:$0xff]
        %v373 = vld [vmem:[%s277 + $0x130] sm:$0xff]
        %v374 = vld [vmem:[%s277 + $0x138] sm:$0xff]
        %v375 = vld [vmem:[%s277 + $0x140] sm:$0xff]
        %v376 = vld [vmem:[%s277 + $0x148] sm:$0xff]
        %v377 = vld [vmem:[%s277 + $0x150] sm:$0xff]
        %v378 = vld [vmem:[%s277 + $0x158] sm:$0xff]
        %v379 = vld [vmem:[%s277 + $0x160] sm:$0xff]
        %v380 = vld [vmem:[%s277 + $0x168] sm:$0xff]
        %v381 = vld [vmem:[%s277 + $0x170] sm:$0xff]
        %v382 = vld [vmem:[%s277 + $0x178] sm:$0xff]
        %v383 = vld [vmem:[%s277 + $0x180] sm:$0xff]
        %v384 = vld [vmem:[%s277 + $0x188] sm:$0xff]
        %v385 = vld [vmem:[%s277 + $0x190] sm:$0xff]
        %v386 = vld [vmem:[%s277 + $0x198] sm:$0xff]
        %v387 = vld [vmem:[%s277 + $0x1a0] sm:$0xff]
        %v388 = vld [vmem:[%s277 + $0x1a8] sm:$0xff]
        %v389 = vld [vmem:[%s277 + $0x1b0] sm:$0xff]
        %v390 = vld [vmem:[%s277 + $0x1b8] sm:$0xff]
        %v391 = vld [vmem:[%s277 + $0x1c0] sm:$0xff]
        %v392 = vld [vmem:[%s277 + $0x1c8] sm:$0xff]
        %v393 = vld [vmem:[%s277 + $0x1d0] sm:$0xff]
        %v394 = vld [vmem:[%s277 + $0x1d8] sm:$0xff]
        %v395 = vld [vmem:[%s277 + $0x1e0] sm:$0xff]
        %v396 = vld [vmem:[%s277 + $0x1e8] sm:$0xff]
        %v397 = vld [vmem:[%s277 + $0x1f0] sm:$0xff]
        %v398 = vld [vmem:[%s277 + $0x1f8] sm:$0xff]
        %v399 = vld [vmem:[%s277 + $0x200] sm:$0xff]
        %v400 = vld [vmem:[%s277 + $0x208] sm:$0xff]
        %v401 = vld [vmem:[%s277 + $0x210] sm:$0xff]
        %v402 = vld [vmem:[%s277 + $0x218] sm:$0xff]
        %v403 = vld [vmem:[%s277 + $0x220] sm:$0xff]
        %v404 = vld [vmem:[%s277 + $0x228] sm:$0xff]
        %v405 = vld [vmem:[%s277 + $0x230] sm:$0xff]
        %v406 = vld [vmem:[%s277 + $0x238] sm:$0xff]
        %v407 = vld [vmem:[%s277 + $0x240] sm:$0xff]
        %v408 = vld [vmem:[%s277 + $0x248] sm:$0xff]
        %v409 = vld [vmem:[%s277 + $0x250] sm:$0xff]
        %v410 = vld [vmem:[%s277 + $0x258] sm:$0xff]
        %v411 = vld [vmem:[%s277 + $0x260] sm:$0xff]
        %v412 = vld [vmem:[%s277 + $0x268] sm:$0xff]
        %v413 = vld [vmem:[%s277 + $0x270] sm:$0xff]
        %v414 = vld [vmem:[%s277 + $0x278] sm:$0xff]
        %v415 = vld [vmem:[%s277 + $0x280] sm:$0xff]
        %v416 = vld [vmem:[%s277 + $0x288] sm:$0xff]
        %v417 = vld [vmem:[%s277 + $0x290] sm:$0xff]
        %v418 = vld [vmem:[%s277 + $0x298] sm:$0xff]
        %v419 = vld [vmem:[%s277 + $0x2a0] sm:$0xff]
        %v420 = vld [vmem:[%s277 + $0x2a8] sm:$0xff]
        %v421 = vld [vmem:[%s277 + $0x2b0] sm:$0xff]
        %v422 = vld [vmem:[%s277 + $0x2b8] sm:$0xff]
        %v423 = vld [vmem:[%s277 + $0x2c0] sm:$0xff]
        %v424 = vld [vmem:[%s277 + $0x2c8] sm:$0xff]
        %v425 = vld [vmem:[%s277 + $0x2d0] sm:$0xff]
        %v426 = vld [vmem:[%s277 + $0x2d8] sm:$0xff]
        %v427 = vld [vmem:[%s277 + $0x2e0] sm:$0xff]
        %v428 = vld [vmem:[%s277 + $0x2e8] sm:$0xff]
        %v429 = vld [vmem:[%s277 + $0x2f0] sm:$0xff]
        %v430 = vld [vmem:[%s277 + $0x2f8] sm:$0xff]
        %v431 = vld [vmem:[%s277 + $0x300] sm:$0xff]
        %v432 = vld [vmem:[%s277 + $0x308] sm:$0xff]
        %v433 = vld [vmem:[%s277 + $0x310] sm:$0xff]
        %v434 = vld [vmem:[%s277 + $0x318] sm:$0xff]
        %v435 = vld [vmem:[%s277 + $0x320] sm:$0xff]
        %v436 = vld [vmem:[%s277 + $0x328] sm:$0xff]
        %v437 = vld [vmem:[%s277 + $0x330] sm:$0xff]
        %v438 = vld [vmem:[%s277 + $0x338] sm:$0xff]
        %v439 = vld [vmem:[%s277 + $0x340] sm:$0xff]
        %v440 = vld [vmem:[%s277 + $0x348] sm:$0xff]
        %v441 = vld [vmem:[%s277 + $0x350] sm:$0xff]
        %v442 = vld [vmem:[%s277 + $0x358] sm:$0xff]
        %v443 = vld [vmem:[%s277 + $0x360] sm:$0xff]
        %v444 = vld [vmem:[%s277 + $0x368] sm:$0xff]
        %v445 = vld [vmem:[%s277 + $0x370] sm:$0xff]
        %v446 = vld [vmem:[%s277 + $0x378] sm:$0xff]
        %v447 = vld [vmem:[%s277 + $0x380] sm:$0xff]
        %v448 = vld [vmem:[%s277 + $0x388] sm:$0xff]
        %v449 = vld [vmem:[%s277 + $0x390] sm:$0xff]
        %v450 = vld [vmem:[%s277 + $0x398] sm:$0xff]
        %v451 = vld [vmem:[%s277 + $0x3a0] sm:$0xff]
        %v452 = vld [vmem:[%s277 + $0x3a8] sm:$0xff]
        %v453 = vld [vmem:[%s277 + $0x3b0] sm:$0xff]
        %v454 = vld [vmem:[%s277 + $0x3b8] sm:$0xff]
        %v455 = vld [vmem:[%s277 + $0x3c0] sm:$0xff]
        %v456 = vld [vmem:[%s277 + $0x3c8] sm:$0xff]
        %v457 = vld [vmem:[%s277 + $0x3d0] sm:$0xff]
        %v458 = vld [vmem:[%s277 + $0x3d8] sm:$0xff]
        %v459 = vld [vmem:[%s277 + $0x3e0] sm:$0xff]
        %v460 = vld [vmem:[%s277 + $0x3e8] sm:$0xff]
        %v461 = vld [vmem:[%s277 + $0x3f0] sm:$0xff]
        %v462 = vld [vmem:[%s277 + $0x3f8] sm:$0xff]
        %v463 = vld [vmem:[%s277 + $0x400] sm:$0xff]
        %v464 = vld [vmem:[%s277 + $0x408] sm:$0xff]
        %v465 = vld [vmem:[%s277 + $0x410] sm:$0xff]
        %v466 = vld [vmem:[%s277 + $0x418] sm:$0xff]
        %v467 = vld [vmem:[%s277 + $0x420] sm:$0xff]
        %v468 = vld [vmem:[%s277 + $0x428] sm:$0xff]
        %v469 = vld [vmem:[%s277 + $0x430] sm:$0xff]
        %v470 = vld [vmem:[%s277 + $0x438] sm:$0xff]
        %v471 = vld [vmem:[%s277 + $0x440] sm:$0xff]
        %v472 = vld [vmem:[%s277 + $0x448] sm:$0xff]
        %v473 = vld [vmem:[%s277 + $0x450] sm:$0xff]
        %v474 = vld [vmem:[%s277 + $0x458] sm:$0xff]
        %v475 = vld [vmem:[%s277 + $0x460] sm:$0xff]
        %v476 = vld [vmem:[%s277 + $0x468] sm:$0xff]
        %v477 = vld [vmem:[%s277 + $0x470] sm:$0xff]
        %v478 = vld [vmem:[%s277 + $0x478] sm:$0xff]
        %v479 = vld [vmem:[%s277 + $0x480] sm:$0xff]
        %v480 = vld [vmem:[%s277 + $0x488] sm:$0xff]
        %v481 = vld [vmem:[%s277 + $0x490] sm:$0xff]
        %v482 = vld [vmem:[%s277 + $0x498] sm:$0xff]
        %v483 = vld [vmem:[%s277 + $0x4a0] sm:$0xff]
        %v484 = vld [vmem:[%s277 + $0x4a8] sm:$0xff]
        %v485 = vld [vmem:[%s277 + $0x4b0] sm:$0xff]
        %v486 = vld [vmem:[%s277 + $0x4b8] sm:$0xff]
        %v487 = vld [vmem:[%s277 + $0x4c0] sm:$0xff]
        %v488 = vld [vmem:[%s277 + $0x4c8] sm:$0xff]
        %v489 = vld [vmem:[%s277 + $0x4d0] sm:$0xff]
        %v490 = vld [vmem:[%s277 + $0x4d8] sm:$0xff]
        %v491 = vld [vmem:[%s277 + $0x4e0] sm:$0xff]
        %v492 = vld [vmem:[%s277 + $0x4e8] sm:$0xff]
        %v493 = vld [vmem:[%s277 + $0x4f0] sm:$0xff]
        %v494 = vld [vmem:[%s277 + $0x4f8] sm:$0xff]
        %v495 = vld [vmem:[%s277 + $0x500] sm:$0xff]
        %v496 = vld [vmem:[%s277 + $0x508] sm:$0xff]
        %v497 = vld [vmem:[%s277 + $0x510] sm:$0xff]
        %v498 = vld [vmem:[%s277 + $0x518] sm:$0xff]
        %v499 = vld [vmem:[%s277 + $0x520] sm:$0xff]
        %v500 = vld [vmem:[%s277 + $0x528] sm:$0xff]
        %v501 = vld [vmem:[%s277 + $0x530] sm:$0xff]
        %v502 = vld [vmem:[%s277 + $0x538] sm:$0xff]
        %v503 = vld [vmem:[%s277 + $0x540] sm:$0xff]
        %v504 = vld [vmem:[%s277 + $0x548] sm:$0xff]
        %v505 = vld [vmem:[%s277 + $0x550] sm:$0xff]
        %v506 = vld [vmem:[%s277 + $0x558] sm:$0xff]
        %v507 = vld [vmem:[%s277 + $0x560] sm:$0xff]
        %v508 = vld [vmem:[%s277 + $0x568] sm:$0xff]
        %v509 = vld [vmem:[%s277 + $0x570] sm:$0xff]
        %v510 = vld [vmem:[%s277 + $0x578] sm:$0xff]
        %v511 = vld [vmem:[%s277 + $0x580] sm:$0xff]
        %v512 = vld [vmem:[%s277 + $0x588] sm:$0xff]
        %v513 = vld [vmem:[%s277 + $0x590] sm:$0xff]
        %v514 = vld [vmem:[%s277 + $0x598] sm:$0xff]
        %v515 = vld [vmem:[%s277 + $0x5a0] sm:$0xff]
        %v516 = vld [vmem:[%s277 + $0x5a8] sm:$0xff]
        %v517 = vld [vmem:[%s277 + $0x5b0] sm:$0xff]
        %v518 = vld [vmem:[%s277 + $0x5b8] sm:$0xff]
        %v519 = vld [vmem:[%s277 + $0x5c0] sm:$0xff]
        %v520 = vld [vmem:[%s277 + $0x5c8] sm:$0xff]
        %v521 = vld [vmem:[%s277 + $0x5d0] sm:$0xff]
        %v522 = vld [vmem:[%s277 + $0x5d8] sm:$0xff]
        %v523 = vld [vmem:[%s277 + $0x5e0] sm:$0xff]
        %v524 = vld [vmem:[%s277 + $0x5e8] sm:$0xff]
        %v525 = vld [vmem:[%s277 + $0x5f0] sm:$0xff]
        %v526 = vld [vmem:[%s277 + $0x5f8] sm:$0xff]
        %v527 = vld [vmem:[%s277 + $0x600] sm:$0xff]
        %v528 = vld [vmem:[%s277 + $0x608] sm:$0xff]
        %v529 = vld [vmem:[%s277 + $0x610] sm:$0xff]
        %v530 = vld [vmem:[%s277 + $0x618] sm:$0xff]
        %v531 = vld [vmem:[%s277 + $0x620] sm:$0xff]
        %v532 = vld [vmem:[%s277 + $0x628] sm:$0xff]
        %v533 = vld [vmem:[%s277 + $0x630] sm:$0xff]
        %v534 = vld [vmem:[%s277 + $0x638] sm:$0xff]
        %v535 = vld [vmem:[%s277 + $0x640] sm:$0xff]
        %v536 = vld [vmem:[%s277 + $0x648] sm:$0xff]
        %v537 = vld [vmem:[%s277 + $0x650] sm:$0xff]
        %v538 = vld [vmem:[%s277 + $0x658] sm:$0xff]
        %v539 = vld [vmem:[%s277 + $0x660] sm:$0xff]
        %v540 = vld [vmem:[%s277 + $0x668] sm:$0xff]
        %v541 = vld [vmem:[%s277 + $0x670] sm:$0xff]
        %v542 = vld [vmem:[%s277 + $0x678] sm:$0xff]
        %v543 = vld [vmem:[%s277 + $0x680] sm:$0xff]
        %v544 = vld [vmem:[%s277 + $0x688] sm:$0xff]
        %v545 = vld [vmem:[%s277 + $0x690] sm:$0xff]
        %v546 = vld [vmem:[%s277 + $0x698] sm:$0xff]
        %v547 = vld [vmem:[%s277 + $0x6a0] sm:$0xff]
        %v548 = vld [vmem:[%s277 + $0x6a8] sm:$0xff]
        %v549 = vld [vmem:[%s277 + $0x6b0] sm:$0xff]
        %v550 = vld [vmem:[%s277 + $0x6b8] sm:$0xff]
        %v551 = vld [vmem:[%s277 + $0x6c0] sm:$0xff]
        %v552 = vld [vmem:[%s277 + $0x6c8] sm:$0xff]
        %v553 = vld [vmem:[%s277 + $0x6d0] sm:$0xff]
        %v554 = vld [vmem:[%s277 + $0x6d8] sm:$0xff]
        %v555 = vld [vmem:[%s277 + $0x6e0] sm:$0xff]
        %v556 = vld [vmem:[%s277 + $0x6e8] sm:$0xff]
        %v557 = vld [vmem:[%s277 + $0x6f0] sm:$0xff]
        %v558 = vld [vmem:[%s277 + $0x6f8] sm:$0xff]
        %v559 = vld [vmem:[%s277 + $0x700] sm:$0xff]
        %v560 = vld [vmem:[%s277 + $0x708] sm:$0xff]
        %v561 = vld [vmem:[%s277 + $0x710] sm:$0xff]
        %v562 = vld [vmem:[%s277 + $0x718] sm:$0xff]
        %v563 = vld [vmem:[%s277 + $0x720] sm:$0xff]
        %v564 = vld [vmem:[%s277 + $0x728] sm:$0xff]
        %v565 = vld [vmem:[%s277 + $0x730] sm:$0xff]
        %v566 = vld [vmem:[%s277 + $0x738] sm:$0xff]
        %v567 = vld [vmem:[%s277 + $0x740] sm:$0xff]
        %v568 = vld [vmem:[%s277 + $0x748] sm:$0xff]
        %v569 = vld [vmem:[%s277 + $0x750] sm:$0xff]
        %v570 = vld [vmem:[%s277 + $0x758] sm:$0xff]
        %v571 = vld [vmem:[%s277 + $0x760] sm:$0xff]
        %v572 = vld [vmem:[%s277 + $0x768] sm:$0xff]
        %v573 = vld [vmem:[%s277 + $0x770] sm:$0xff]
        %v574 = vld [vmem:[%s277 + $0x778] sm:$0xff]
        %v575 = vld [vmem:[%s277 + $0x780] sm:$0xff]
        %v576 = vld [vmem:[%s277 + $0x788] sm:$0xff]
        %v577 = vld [vmem:[%s277 + $0x790] sm:$0xff]
        %v578 = vld [vmem:[%s277 + $0x798] sm:$0xff]
        %v579 = vld [vmem:[%s277 + $0x7a0] sm:$0xff]
        %v580 = vld [vmem:[%s277 + $0x7a8] sm:$0xff]
        %v581 = vld [vmem:[%s277 + $0x7b0] sm:$0xff]
        %v582 = vld [vmem:[%s277 + $0x7b8] sm:$0xff]
        %v583 = vld [vmem:[%s277 + $0x7c0] sm:$0xff]
        %v584 = vld [vmem:[%s277 + $0x7c8] sm:$0xff]
        %v585 = vld [vmem:[%s277 + $0x7d0] sm:$0xff]
        %v586 = vld [vmem:[%s277 + $0x7d8] sm:$0xff]
        %v587 = vld [vmem:[%s277 + $0x7e0] sm:$0xff]
        %v588 = vld [vmem:[%s277 + $0x7e8] sm:$0xff]
        %v589 = vld [vmem:[%s277 + $0x7f0] sm:$0xff]
        %v590 = vld [vmem:[%s277 + $0x7f8] sm:$0xff]
        %v591 = vld [vmem:[%s277 + $0x800] sm:$0xff]
        %v592 = vld [vmem:[%s277 + $0x808] sm:$0xff]
        %v593 = vld [vmem:[%s277 + $0x810] sm:$0xff]
        %v594 = vld [vmem:[%s277 + $0x818] sm:$0xff]
        %v595 = vld [vmem:[%s277 + $0x820] sm:$0xff]
        %v596 = vld [vmem:[%s277 + $0x828] sm:$0xff]
        %v597 = vld [vmem:[%s277 + $0x830] sm:$0xff]
        %v598 = vld [vmem:[%s277 + $0x838] sm:$0xff]
        %v599 = vld [vmem:[%s277 + $0x840] sm:$0xff]
        %v600 = vld [vmem:[%s277 + $0x848] sm:$0xff]
        %v601 = vld [vmem:[%s277 + $0x850] sm:$0xff]
        %v602 = vld [vmem:[%s277 + $0x858] sm:$0xff]
        %v603 = vld [vmem:[%s277 + $0x860] sm:$0xff]
        %v604 = vld [vmem:[%s277 + $0x868] sm:$0xff]
        %v605 = vld [vmem:[%s277 + $0x870] sm:$0xff]
        %v606 = vld [vmem:[%s277 + $0x878] sm:$0xff]
        %v607 = vld [vmem:[%s277 + $0x880] sm:$0xff]
        %v608 = vld [vmem:[%s277 + $0x888] sm:$0xff]
        %v609 = vld [vmem:[%s277 + $0x890] sm:$0xff]
        %v610 = vld [vmem:[%s277 + $0x898] sm:$0xff]
        %v611 = vld [vmem:[%s277 + $0x8a0] sm:$0xff]
        %v612 = vld [vmem:[%s277 + $0x8a8] sm:$0xff]
        %v613 = vld [vmem:[%s277 + $0x8b0] sm:$0xff]
        %v614 = vld [vmem:[%s277 + $0x8b8] sm:$0xff]
        %v615 = vld [vmem:[%s277 + $0x8c0] sm:$0xff]
        %v616 = vld [vmem:[%s277 + $0x8c8] sm:$0xff]
        %v617 = vld [vmem:[%s277 + $0x8d0] sm:$0xff]
        %v618 = vld [vmem:[%s277 + $0x8d8] sm:$0xff]
        %v619 = vld [vmem:[%s277 + $0x8e0] sm:$0xff]
        %v620 = vld [vmem:[%s277 + $0x8e8] sm:$0xff]
        %v621 = vld [vmem:[%s277 + $0x8f0] sm:$0xff]
        %v622 = vld [vmem:[%s277 + $0x8f8] sm:$0xff]
        %v623 = vld [vmem:[%s277 + $0x900] sm:$0xff]
        %v624 = vld [vmem:[%s277 + $0x908] sm:$0xff]
        %v625 = vld [vmem:[%s277 + $0x910] sm:$0xff]
        %v626 = vld [vmem:[%s277 + $0x918] sm:$0xff]
        %v627 = vld [vmem:[%s277 + $0x920] sm:$0xff]
        %v628 = vld [vmem:[%s277 + $0x928] sm:$0xff]
        %v629 = vld [vmem:[%s277 + $0x930] sm:$0xff]
        %v630 = vld [vmem:[%s277 + $0x938] sm:$0xff]
        %v631 = vld [vmem:[%s277 + $0x940] sm:$0xff]
        %v632 = vld [vmem:[%s277 + $0x948] sm:$0xff]
        %v633 = vld [vmem:[%s277 + $0x950] sm:$0xff]
        %v634 = vld [vmem:[%s277 + $0x958] sm:$0xff]
        %v635 = vld [vmem:[%s277 + $0x960] sm:$0xff]
        %v636 = vld [vmem:[%s277 + $0x968] sm:$0xff]
        %v637 = vld [vmem:[%s277 + $0x970] sm:$0xff]
        %v638 = vld [vmem:[%s277 + $0x978] sm:$0xff]
        %v639 = vld [vmem:[%s277 + $0x980] sm:$0xff]
        %v640 = vld [vmem:[%s277 + $0x988] sm:$0xff]
        %v641 = vld [vmem:[%s277 + $0x990] sm:$0xff]
        %v642 = vld [vmem:[%s277 + $0x998] sm:$0xff]
        %v643 = vld [vmem:[%s277 + $0x9a0] sm:$0xff]
        %v644 = vld [vmem:[%s277 + $0x9a8] sm:$0xff]
        %v645 = vld [vmem:[%s277 + $0x9b0] sm:$0xff]
        %v646 = vld [vmem:[%s277 + $0x9b8] sm:$0xff]
        %v647 = vld [vmem:[%s277 + $0x9c0] sm:$0xff]
        %v648 = vld [vmem:[%s277 + $0x9c8] sm:$0xff]
        %v649 = vld [vmem:[%s277 + $0x9d0] sm:$0xff]
        %v650 = vld [vmem:[%s277 + $0x9d8] sm:$0xff]
        %v651 = vld [vmem:[%s277 + $0x9e0] sm:$0xff]
        %v652 = vld [vmem:[%s277 + $0x9e8] sm:$0xff]
        %v653 = vld [vmem:[%s277 + $0x9f0] sm:$0xff]
        %v654 = vld [vmem:[%s277 + $0x9f8] sm:$0xff]
        %v655 = vld [vmem:[%s277 + $0xa00] sm:$0xff]
        %v656 = vld [vmem:[%s277 + $0xa08] sm:$0xff]
        %v657 = vld [vmem:[%s277 + $0xa10] sm:$0xff]
        %v658 = vld [vmem:[%s277 + $0xa18] sm:$0xff]
        %v659 = vld [vmem:[%s277 + $0xa20] sm:$0xff]
        %v660 = vld [vmem:[%s277 + $0xa28] sm:$0xff]
        %v661 = vld [vmem:[%s277 + $0xa30] sm:$0xff]
        %v662 = vld [vmem:[%s277 + $0xa38] sm:$0xff]
        %v663 = vld [vmem:[%s277 + $0xa40] sm:$0xff]
        %v664 = vld [vmem:[%s277 + $0xa48] sm:$0xff]
        %v665 = vld [vmem:[%s277 + $0xa50] sm:$0xff]
        %v666 = vld [vmem:[%s277 + $0xa58] sm:$0xff]
        %v667 = vld [vmem:[%s277 + $0xa60] sm:$0xff]
        %v668 = vld [vmem:[%s277 + $0xa68] sm:$0xff]
        %v669 = vld [vmem:[%s277 + $0xa70] sm:$0xff]
        %v670 = vld [vmem:[%s277 + $0xa78] sm:$0xff]
        %v671 = vld [vmem:[%s277 + $0xa80] sm:$0xff]
        %v672 = vld [vmem:[%s277 + $0xa88] sm:$0xff]
        %v673 = vld [vmem:[%s277 + $0xa90] sm:$0xff]
        %v674 = vld [vmem:[%s277 + $0xa98] sm:$0xff]
        %v675 = vld [vmem:[%s277 + $0xaa0] sm:$0xff]
        %v676 = vld [vmem:[%s277 + $0xaa8] sm:$0xff]
        %v677 = vld [vmem:[%s277 + $0xab0] sm:$0xff]
        %v678 = vld [vmem:[%s277 + $0xab8] sm:$0xff]
        %v679 = vld [vmem:[%s277 + $0xac0] sm:$0xff]
        %v680 = vld [vmem:[%s277 + $0xac8] sm:$0xff]
        %v681 = vld [vmem:[%s277 + $0xad0] sm:$0xff]
        %v682 = vld [vmem:[%s277 + $0xad8] sm:$0xff]
        %v683 = vld [vmem:[%s277 + $0xae0] sm:$0xff]
        %v684 = vld [vmem:[%s277 + $0xae8] sm:$0xff]
        %v685 = vld [vmem:[%s277 + $0xaf0] sm:$0xff]
        %v686 = vld [vmem:[%s277 + $0xaf8] sm:$0xff]
        %v687 = vld [vmem:[%s277 + $0xb00] sm:$0xff]
        %v688 = vld [vmem:[%s277 + $0xb08] sm:$0xff]
        %v689 = vld [vmem:[%s277 + $0xb10] sm:$0xff]
        %v690 = vld [vmem:[%s277 + $0xb18] sm:$0xff]
        %v691 = vld [vmem:[%s277 + $0xb20] sm:$0xff]
        %v692 = vld [vmem:[%s277 + $0xb28] sm:$0xff]
        %v693 = vld [vmem:[%s277 + $0xb30] sm:$0xff]
        %v694 = vld [vmem:[%s277 + $0xb38] sm:$0xff]
        %v695 = vld [vmem:[%s277 + $0xb40] sm:$0xff]
        %v696 = vld [vmem:[%s277 + $0xb48] sm:$0xff]
        %v697 = vld [vmem:[%s277 + $0xb50] sm:$0xff]
        %v698 = vld [vmem:[%s277 + $0xb58] sm:$0xff]
        %v699 = vld [vmem:[%s277 + $0xb60] sm:$0xff]
        %v700 = vld [vmem:[%s277 + $0xb68] sm:$0xff]
        %v701 = vld [vmem:[%s277 + $0xb70] sm:$0xff]
        %v702 = vld [vmem:[%s277 + $0xb78] sm:$0xff]
        %v703 = vld [vmem:[%s277 + $0xb80] sm:$0xff]
        %v704 = vld [vmem:[%s277 + $0xb88] sm:$0xff]
        %v705 = vld [vmem:[%s277 + $0xb90] sm:$0xff]
        %v706 = vld [vmem:[%s277 + $0xb98] sm:$0xff]
        %v707 = vld [vmem:[%s277 + $0xba0] sm:$0xff]
        %v708 = vld [vmem:[%s277 + $0xba8] sm:$0xff]
        %v709 = vld [vmem:[%s277 + $0xbb0] sm:$0xff]
        %v710 = vld [vmem:[%s277 + $0xbb8] sm:$0xff]
        %v711 = vld [vmem:[%s277 + $0xbc0] sm:$0xff]
        %v712 = vld [vmem:[%s277 + $0xbc8] sm:$0xff]
        %v713 = vld [vmem:[%s277 + $0xbd0] sm:$0xff]
        %v714 = vld [vmem:[%s277 + $0xbd8] sm:$0xff]
        %v715 = vld [vmem:[%s277 + $0xbe0] sm:$0xff]
        %v716 = vld [vmem:[%s277 + $0xbe8] sm:$0xff]
        %v717 = vld [vmem:[%s277 + $0xbf0] sm:$0xff]
        %v718 = vld [vmem:[%s277 + $0xbf8] sm:$0xff]
        %v719 = vld [vmem:[%s277 + $0xc00] sm:$0xff]
        %v720 = vld [vmem:[%s277 + $0xc08] sm:$0xff]
        %v721 = vld [vmem:[%s277 + $0xc10] sm:$0xff]
        %v722 = vld [vmem:[%s277 + $0xc18] sm:$0xff]
        %v723 = vld [vmem:[%s277 + $0xc20] sm:$0xff]
        %v724 = vld [vmem:[%s277 + $0xc28] sm:$0xff]
        %v725 = vld [vmem:[%s277 + $0xc30] sm:$0xff]
        %v726 = vld [vmem:[%s277 + $0xc38] sm:$0xff]
        %v727 = vld [vmem:[%s277 + $0xc40] sm:$0xff]
        %v728 = vld [vmem:[%s277 + $0xc48] sm:$0xff]
        %v729 = vld [vmem:[%s277 + $0xc50] sm:$0xff]
        %v730 = vld [vmem:[%s277 + $0xc58] sm:$0xff]
        %v731 = vld [vmem:[%s277 + $0xc60] sm:$0xff]
        %v732 = vld [vmem:[%s277 + $0xc68] sm:$0xff]
        %v733 = vld [vmem:[%s277 + $0xc70] sm:$0xff]
        %v734 = vld [vmem:[%s277 + $0xc78] sm:$0xff]
        %v735 = vld [vmem:[%s277 + $0xc80] sm:$0xff]
        %v736 = vld [vmem:[%s277 + $0xc88] sm:$0xff]
        %v737 = vld [vmem:[%s277 + $0xc90] sm:$0xff]
        %v738 = vld [vmem:[%s277 + $0xc98] sm:$0xff]
        %v739 = vld [vmem:[%s277 + $0xca0] sm:$0xff]
        %v740 = vld [vmem:[%s277 + $0xca8] sm:$0xff]
        %v741 = vld [vmem:[%s277 + $0xcb0] sm:$0xff]
        %v742 = vld [vmem:[%s277 + $0xcb8] sm:$0xff]
        %v743 = vld [vmem:[%s277 + $0xcc0] sm:$0xff]
        %v744 = vld [vmem:[%s277 + $0xcc8] sm:$0xff]
        %v745 = vld [vmem:[%s277 + $0xcd0] sm:$0xff]
        %v746 = vld [vmem:[%s277 + $0xcd8] sm:$0xff]
        %v747 = vld [vmem:[%s277 + $0xce0] sm:$0xff]
        %v748 = vld [vmem:[%s277 + $0xce8] sm:$0xff]
        %v749 = vld [vmem:[%s277 + $0xcf0] sm:$0xff]
        %v750 = vld [vmem:[%s277 + $0xcf8] sm:$0xff]
        %v751 = vld [vmem:[%s277 + $0xd00] sm:$0xff]
        %v752 = vld [vmem:[%s277 + $0xd08] sm:$0xff]
        %v753 = vld [vmem:[%s277 + $0xd10] sm:$0xff]
        %v754 = vld [vmem:[%s277 + $0xd18] sm:$0xff]
        %v755 = vld [vmem:[%s277 + $0xd20] sm:$0xff]
        %v756 = vld [vmem:[%s277 + $0xd28] sm:$0xff]
        %v757 = vld [vmem:[%s277 + $0xd30] sm:$0xff]
        %v758 = vld [vmem:[%s277 + $0xd38] sm:$0xff]
        %v759 = vld [vmem:[%s277 + $0xd40] sm:$0xff]
        %v760 = vld [vmem:[%s277 + $0xd48] sm:$0xff]
        %v761 = vld [vmem:[%s277 + $0xd50] sm:$0xff]
        %v762 = vld [vmem:[%s277 + $0xd58] sm:$0xff]
        %v763 = vld [vmem:[%s277 + $0xd60] sm:$0xff]
        %v764 = vld [vmem:[%s277 + $0xd68] sm:$0xff]
        %v765 = vld [vmem:[%s277 + $0xd70] sm:$0xff]
        %v766 = vld [vmem:[%s277 + $0xd78] sm:$0xff]
        %v767 = vld [vmem:[%s277 + $0xd80] sm:$0xff]
        %v768 = vld [vmem:[%s277 + $0xd88] sm:$0xff]
        %v769 = vld [vmem:[%s277 + $0xd90] sm:$0xff]
        %v770 = vld [vmem:[%s277 + $0xd98] sm:$0xff]
        %v771 = vld [vmem:[%s277 + $0xda0] sm:$0xff]
        %v772 = vld [vmem:[%s277 + $0xda8] sm:$0xff]
        %v773 = vld [vmem:[%s277 + $0xdb0] sm:$0xff]
        %v774 = vld [vmem:[%s277 + $0xdb8] sm:$0xff]
        %v775 = vld [vmem:[%s277 + $0xdc0] sm:$0xff]
        %v776 = vld [vmem:[%s277 + $0xdc8] sm:$0xff]
        %v777 = vld [vmem:[%s277 + $0xdd0] sm:$0xff]
        %v778 = vld [vmem:[%s277 + $0xdd8] sm:$0xff]
        %v779 = vld [vmem:[%s277 + $0xde0] sm:$0xff]
        %v780 = vld [vmem:[%s277 + $0xde8] sm:$0xff]
        %v781 = vld [vmem:[%s277 + $0xdf0] sm:$0xff]
        %v782 = vld [vmem:[%s277 + $0xdf8] sm:$0xff]
        %v783 = vld [vmem:[%s277 + $0xe00] sm:$0xff]
        %v784 = vld [vmem:[%s277 + $0xe08] sm:$0xff]
        %v785 = vld [vmem:[%s277 + $0xe10] sm:$0xff]
        %v786 = vld [vmem:[%s277 + $0xe18] sm:$0xff]
        %v787 = vld [vmem:[%s277 + $0xe20] sm:$0xff]
        %v788 = vld [vmem:[%s277 + $0xe28] sm:$0xff]
        %v789 = vld [vmem:[%s277 + $0xe30] sm:$0xff]
        %v790 = vld [vmem:[%s277 + $0xe38] sm:$0xff]
        %v791 = vld [vmem:[%s277 + $0xe40] sm:$0xff]
        %v792 = vld [vmem:[%s277 + $0xe48] sm:$0xff]
        %v793 = vld [vmem:[%s277 + $0xe50] sm:$0xff]
        %v794 = vld [vmem:[%s277 + $0xe58] sm:$0xff]
        %v795 = vld [vmem:[%s277 + $0xe60] sm:$0xff]
        %v796 = vld [vmem:[%s277 + $0xe68] sm:$0xff]
        %v797 = vld [vmem:[%s277 + $0xe70] sm:$0xff]
        %v798 = vld [vmem:[%s277 + $0xe78] sm:$0xff]
        %v799 = vld [vmem:[%s277 + $0xe80] sm:$0xff]
        %v800 = vld [vmem:[%s277 + $0xe88] sm:$0xff]
        %v801 = vld [vmem:[%s277 + $0xe90] sm:$0xff]
        %v802 = vld [vmem:[%s277 + $0xe98] sm:$0xff]
        %v803 = vld [vmem:[%s277 + $0xea0] sm:$0xff]
        %v804 = vld [vmem:[%s277 + $0xea8] sm:$0xff]
        %v805 = vld [vmem:[%s277 + $0xeb0] sm:$0xff]
        %v806 = vld [vmem:[%s277 + $0xeb8] sm:$0xff]
        %v807 = vld [vmem:[%s277 + $0xec0] sm:$0xff]
        %v808 = vld [vmem:[%s277 + $0xec8] sm:$0xff]
        %v809 = vld [vmem:[%s277 + $0xed0] sm:$0xff]
        %v810 = vld [vmem:[%s277 + $0xed8] sm:$0xff]
        %v811 = vld [vmem:[%s277 + $0xee0] sm:$0xff]
        %v812 = vld [vmem:[%s277 + $0xee8] sm:$0xff]
        %v813 = vld [vmem:[%s277 + $0xef0] sm:$0xff]
        %v814 = vld [vmem:[%s277 + $0xef8] sm:$0xff]
        %v815 = vld [vmem:[%s277 + $0xf00] sm:$0xff]
        %v816 = vld [vmem:[%s277 + $0xf08] sm:$0xff]
        %v817 = vld [vmem:[%s277 + $0xf10] sm:$0xff]
        %v818 = vld [vmem:[%s277 + $0xf18] sm:$0xff]
        %v819 = vld [vmem:[%s277 + $0xf20] sm:$0xff]
        %v820 = vld [vmem:[%s277 + $0xf28] sm:$0xff]
        %v821 = vld [vmem:[%s277 + $0xf30] sm:$0xff]
        %v822 = vld [vmem:[%s277 + $0xf38] sm:$0xff]
        %v823 = vld [vmem:[%s277 + $0xf40] sm:$0xff]
        %v824 = vld [vmem:[%s277 + $0xf48] sm:$0xff]
        %v825 = vld [vmem:[%s277 + $0xf50] sm:$0xff]
        %v826 = vld [vmem:[%s277 + $0xf58] sm:$0xff]
        %v827 = vld [vmem:[%s277 + $0xf60] sm:$0xff]
        %v828 = vld [vmem:[%s277 + $0xf68] sm:$0xff]
        %v829 = vld [vmem:[%s277 + $0xf70] sm:$0xff]
        %v830 = vld [vmem:[%s277 + $0xf78] sm:$0xff]
        %v831 = vld [vmem:[%s277 + $0xf80] sm:$0xff]
        %v832 = vld [vmem:[%s277 + $0xf88] sm:$0xff]
        %v833 = vld [vmem:[%s277 + $0xf90] sm:$0xff]
        %v834 = vld [vmem:[%s277 + $0xf98] sm:$0xff]
        %v835 = vld [vmem:[%s277 + $0xfa0] sm:$0xff]
        %v836 = vld [vmem:[%s277 + $0xfa8] sm:$0xff]
        %v837 = vld [vmem:[%s277 + $0xfb0] sm:$0xff]
        %v838 = vld [vmem:[%s277 + $0xfb8] sm:$0xff]
        %v839 = vld [vmem:[%s277 + $0xfc0] sm:$0xff]
        %v840 = vld [vmem:[%s277 + $0xfc8] sm:$0xff]
        %v841 = vld [vmem:[%s277 + $0xfd0] sm:$0xff]
        %v842 = vld [vmem:[%s277 + $0xfd8] sm:$0xff]
        %v843 = vld [vmem:[%s277 + $0xfe0] sm:$0xff]
        %v844 = vld [vmem:[%s277 + $0xfe8] sm:$0xff]
        %v845 = vld [vmem:[%s277 + $0xff0] sm:$0xff]
        %v846 = vld [vmem:[%s277 + $0xff8] sm:$0xff]
        %v847 = vld [vmem:[%s277 + $0x1000] sm:$0xff]
        %v848 = vld [vmem:[%s277 + $0x1008] sm:$0xff]
        %v849 = vld [vmem:[%s277 + $0x1010] sm:$0xff]
        %v850 = vld [vmem:[%s277 + $0x1018] sm:$0xff]
        %v851 = vld [vmem:[%s277 + $0x1020] sm:$0xff]
        %v852 = vld [vmem:[%s277 + $0x1028] sm:$0xff]
        %v853 = vld [vmem:[%s277 + $0x1030] sm:$0xff]
        %v854 = vld [vmem:[%s277 + $0x1038] sm:$0xff]
        %v855 = vld [vmem:[%s277 + $0x1040] sm:$0xff]
        %v856 = vld [vmem:[%s277 + $0x1048] sm:$0xff]
        %v857 = vld [vmem:[%s277 + $0x1050] sm:$0xff]
        %v858 = vld [vmem:[%s277 + $0x1058] sm:$0xff]
        %v859 = vld [vmem:[%s277 + $0x1060] sm:$0xff]
        %v860 = vld [vmem:[%s277 + $0x1068] sm:$0xff]
        %v861 = vld [vmem:[%s277 + $0x1070] sm:$0xff]
        %v862 = vld [vmem:[%s277 + $0x1078] sm:$0xff]
        %v863 = vld [vmem:[%s277 + $0x1080] sm:$0xff]
        %v864 = vld [vmem:[%s277 + $0x1088] sm:$0xff]
        %v865 = vld [vmem:[%s277 + $0x1090] sm:$0xff]
        %v866 = vld [vmem:[%s277 + $0x1098] sm:$0xff]
        %v867 = vld [vmem:[%s277 + $0x10a0] sm:$0xff]
        %v868 = vld [vmem:[%s277 + $0x10a8] sm:$0xff]
        %v869 = vld [vmem:[%s277 + $0x10b0] sm:$0xff]
        %v870 = vld [vmem:[%s277 + $0x10b8] sm:$0xff]
        %v871 = vld [vmem:[%s277 + $0x10c0] sm:$0xff]
        %v872 = vld [vmem:[%s277 + $0x10c8] sm:$0xff]
        %v873 = vld [vmem:[%s277 + $0x10d0] sm:$0xff]
        %v874 = vld [vmem:[%s277 + $0x10d8] sm:$0xff]
        %v875 = vld [vmem:[%s277 + $0x10e0] sm:$0xff]
        %v876 = vld [vmem:[%s277 + $0x10e8] sm:$0xff]
        %v877 = vld [vmem:[%s277 + $0x10f0] sm:$0xff]
        %v878 = vld [vmem:[%s277 + $0x10f8] sm:$0xff]
        %v879 = vld [vmem:[%s277 + $0x1100] sm:$0xff]
        %v880 = vld [vmem:[%s277 + $0x1108] sm:$0xff]
        %v881 = vld [vmem:[%s277 + $0x1110] sm:$0xff]
        %v882 = vld [vmem:[%s277 + $0x1118] sm:$0xff]
        %v883 = vld [vmem:[%s277 + $0x1120] sm:$0xff]
        %v884 = vld [vmem:[%s277 + $0x1128] sm:$0xff]
        %v885 = vld [vmem:[%s277 + $0x1130] sm:$0xff]
        %v886 = vld [vmem:[%s277 + $0x1138] sm:$0xff]
        %v887 = vld [vmem:[%s277 + $0x1140] sm:$0xff]
        %v888 = vld [vmem:[%s277 + $0x1148] sm:$0xff]
        %v889 = vld [vmem:[%s277 + $0x1150] sm:$0xff]
        %v890 = vld [vmem:[%s277 + $0x1158] sm:$0xff]
        %v891 = vld [vmem:[%s277 + $0x1160] sm:$0xff]
        %v892 = vld [vmem:[%s277 + $0x1168] sm:$0xff]
        %v893 = vld [vmem:[%s277 + $0x1170] sm:$0xff]
        %v894 = vld [vmem:[%s277 + $0x1178] sm:$0xff]
        %v895 = vld [vmem:[%s277 + $0x1180] sm:$0xff]
        %v896 = vld [vmem:[%s277 + $0x1188] sm:$0xff]
        %v897 = vld [vmem:[%s277 + $0x1190] sm:$0xff]
        %v898 = vld [vmem:[%s277 + $0x1198] sm:$0xff]
        %v899 = vld [vmem:[%s277 + $0x11a0] sm:$0xff]
        %v900 = vld [vmem:[%s277 + $0x11a8] sm:$0xff]
        %v901 = vld [vmem:[%s277 + $0x11b0] sm:$0xff]
        %v902 = vld [vmem:[%s277 + $0x11b8] sm:$0xff]
        %v903 = vld [vmem:[%s277 + $0x11c0] sm:$0xff]
        %v904 = vld [vmem:[%s277 + $0x11c8] sm:$0xff]
        %v905 = vld [vmem:[%s277 + $0x11d0] sm:$0xff]
        %v906 = vld [vmem:[%s277 + $0x11d8] sm:$0xff]
        %v907 = vld [vmem:[%s277 + $0x11e0] sm:$0xff]
        %v908 = vld [vmem:[%s277 + $0x11e8] sm:$0xff]
        %v909 = vld [vmem:[%s277 + $0x11f0] sm:$0xff]
        %v910 = vld [vmem:[%s277 + $0x11f8] sm:$0xff]
        %v911 = vld [vmem:[%s277 + $0x1200] sm:$0xff]
        %v912 = vld [vmem:[%s277 + $0x1208] sm:$0xff]
        %v913 = vld [vmem:[%s277 + $0x1210] sm:$0xff]
        %v914 = vld [vmem:[%s277 + $0x1218] sm:$0xff]
        %v915 = vld [vmem:[%s277 + $0x1220] sm:$0xff]
        %v916 = vld [vmem:[%s277 + $0x1228] sm:$0xff]
        %v917 = vld [vmem:[%s277 + $0x1230] sm:$0xff]
        %v918 = vld [vmem:[%s277 + $0x1238] sm:$0xff]
        %v919 = vld [vmem:[%s277 + $0x1240] sm:$0xff]
        %v920 = vld [vmem:[%s277 + $0x1248] sm:$0xff]
        %v921 = vld [vmem:[%s277 + $0x1250] sm:$0xff]
        %v922 = vld [vmem:[%s277 + $0x1258] sm:$0xff]
        %v923 = vld [vmem:[%s277 + $0x1260] sm:$0xff]
        %v924 = vld [vmem:[%s277 + $0x1268] sm:$0xff]
        %v925 = vld [vmem:[%s277 + $0x1270] sm:$0xff]
        %v926 = vld [vmem:[%s277 + $0x1278] sm:$0xff]
        %v927 = vld [vmem:[%s277 + $0x1280] sm:$0xff]
        %v928 = vld [vmem:[%s277 + $0x1288] sm:$0xff]
        %v929 = vld [vmem:[%s277 + $0x1290] sm:$0xff]
        %v930 = vld [vmem:[%s277 + $0x1298] sm:$0xff]
        %v931 = vld [vmem:[%s277 + $0x12a0] sm:$0xff]
        %v932 = vld [vmem:[%s277 + $0x12a8] sm:$0xff]
        %v933 = vld [vmem:[%s277 + $0x12b0] sm:$0xff]
        %v934 = vld [vmem:[%s277 + $0x12b8] sm:$0xff]
        %v935 = vld [vmem:[%s277 + $0x12c0] sm:$0xff]
        %v936 = vld [vmem:[%s277 + $0x12c8] sm:$0xff]
        %v937 = vld [vmem:[%s277 + $0x12d0] sm:$0xff]
        %v938 = vld [vmem:[%s277 + $0x12d8] sm:$0xff]
        %v939 = vld [vmem:[%s277 + $0x12e0] sm:$0xff]
        %v940 = vld [vmem:[%s277 + $0x12e8] sm:$0xff]
        %v941 = vld [vmem:[%s277 + $0x12f0] sm:$0xff]
        %v942 = vld [vmem:[%s277 + $0x12f8] sm:$0xff]
        %v943 = vld [vmem:[%s277 + $0x1300] sm:$0xff]
        %v944 = vld [vmem:[%s277 + $0x1308] sm:$0xff]
        %v945 = vld [vmem:[%s277 + $0x1310] sm:$0xff]
        %v946 = vld [vmem:[%s277 + $0x1318] sm:$0xff]
        %v947 = vld [vmem:[%s277 + $0x1320] sm:$0xff]
        %v948 = vld [vmem:[%s277 + $0x1328] sm:$0xff]
        %v949 = vld [vmem:[%s277 + $0x1330] sm:$0xff]
        %v950 = vld [vmem:[%s277 + $0x1338] sm:$0xff]
        %v951 = vld [vmem:[%s277 + $0x1340] sm:$0xff]
        %v952 = vld [vmem:[%s277 + $0x1348] sm:$0xff]
        %v953 = vld [vmem:[%s277 + $0x1350] sm:$0xff]
        %v954 = vld [vmem:[%s277 + $0x1358] sm:$0xff]
        %v955 = vld [vmem:[%s277 + $0x1360] sm:$0xff]
        %v956 = vld [vmem:[%s277 + $0x1368] sm:$0xff]
        %v957 = vld [vmem:[%s277 + $0x1370] sm:$0xff]
        %v958 = vld [vmem:[%s277 + $0x1378] sm:$0xff]
        %v959 = vld [vmem:[%s277 + $0x1380] sm:$0xff]
        %v960 = vld [vmem:[%s277 + $0x1388] sm:$0xff]
        %v961 = vld [vmem:[%s277 + $0x1390] sm:$0xff]
        %v962 = vld [vmem:[%s277 + $0x1398] sm:$0xff]
        %v963 = vld [vmem:[%s277 + $0x13a0] sm:$0xff]
        %v964 = vld [vmem:[%s277 + $0x13a8] sm:$0xff]
        %v965 = vld [vmem:[%s277 + $0x13b0] sm:$0xff]
        %v966 = vld [vmem:[%s277 + $0x13b8] sm:$0xff]
        %v967 = vld [vmem:[%s277 + $0x13c0] sm:$0xff]
        %v968 = vld [vmem:[%s277 + $0x13c8] sm:$0xff]
        %v969 = vld [vmem:[%s277 + $0x13d0] sm:$0xff]
        %v970 = vld [vmem:[%s277 + $0x13d8] sm:$0xff]
        %v971 = vld [vmem:[%s277 + $0x13e0] sm:$0xff]
        %v972 = vld [vmem:[%s277 + $0x13e8] sm:$0xff]
        %v973 = vld [vmem:[%s277 + $0x13f0] sm:$0xff]
        %v974 = vld [vmem:[%s277 + $0x13f8] sm:$0xff]
        %v975 = vld [vmem:[%s277 + $0x1400] sm:$0xff]
        %v976 = vld [vmem:[%s277 + $0x1408] sm:$0xff]
        %v977 = vld [vmem:[%s277 + $0x1410] sm:$0xff]
        %v978 = vld [vmem:[%s277 + $0x1418] sm:$0xff]
        %v979 = vld [vmem:[%s277 + $0x1420] sm:$0xff]
        %v980 = vld [vmem:[%s277 + $0x1428] sm:$0xff]
        %v981 = vld [vmem:[%s277 + $0x1430] sm:$0xff]
        %v982 = vld [vmem:[%s277 + $0x1438] sm:$0xff]
        %v983 = vld [vmem:[%s277 + $0x1440] sm:$0xff]
        %v984 = vld [vmem:[%s277 + $0x1448] sm:$0xff]
        %v985 = vld [vmem:[%s277 + $0x1450] sm:$0xff]
        %v986 = vld [vmem:[%s277 + $0x1458] sm:$0xff]
        %v987 = vld [vmem:[%s277 + $0x1460] sm:$0xff]
        %v988 = vld [vmem:[%s277 + $0x1468] sm:$0xff]
        %v989 = vld [vmem:[%s277 + $0x1470] sm:$0xff]
        %v990 = vld [vmem:[%s277 + $0x1478] sm:$0xff]
        %v991 = vld [vmem:[%s277 + $0x1480] sm:$0xff]
        %v992 = vld [vmem:[%s277 + $0x1488] sm:$0xff]
        %v993 = vld [vmem:[%s277 + $0x1490] sm:$0xff]
        %v994 = vld [vmem:[%s277 + $0x1498] sm:$0xff]
        %v995 = vld [vmem:[%s277 + $0x14a0] sm:$0xff]
        %v996 = vld [vmem:[%s277 + $0x14a8] sm:$0xff]
        %v997 = vld [vmem:[%s277 + $0x14b0] sm:$0xff]
        %v998 = vld [vmem:[%s277 + $0x14b8] sm:$0xff]
        %v999 = vld [vmem:[%s277 + $0x14c0] sm:$0xff]
        %v1000 = vld [vmem:[%s277 + $0x14c8] sm:$0xff]
        %v1001 = vld [vmem:[%s277 + $0x14d0] sm:$0xff]
        %v1002 = vld [vmem:[%s277 + $0x14d8] sm:$0xff]
        %v1003 = vld [vmem:[%s277 + $0x14e0] sm:$0xff]
        %v1004 = vld [vmem:[%s277 + $0x14e8] sm:$0xff]
        %v1005 = vld [vmem:[%s277 + $0x14f0] sm:$0xff]
        %v1006 = vld [vmem:[%s277 + $0x14f8] sm:$0xff]
        %v1007 = vld [vmem:[%s277 + $0x1500] sm:$0xff]
        %v1008 = vld [vmem:[%s277 + $0x1508] sm:$0xff]
        %v1009 = vld [vmem:[%s277 + $0x1510] sm:$0xff]
        %v1010 = vld [vmem:[%s277 + $0x1518] sm:$0xff]
        %v1011 = vld [vmem:[%s277 + $0x1520] sm:$0xff]
        %v1012 = vld [vmem:[%s277 + $0x1528] sm:$0xff]
        %v1013 = vld [vmem:[%s277 + $0x1530] sm:$0xff]
        %v1014 = vld [vmem:[%s277 + $0x1538] sm:$0xff]
        %v1015 = vld [vmem:[%s277 + $0x1540] sm:$0xff]
        %v1016 = vld [vmem:[%s277 + $0x1548] sm:$0xff]
        %v1017 = vld [vmem:[%s277 + $0x1550] sm:$0xff]
        %v1018 = vld [vmem:[%s277 + $0x1558] sm:$0xff]
        %v1019 = vld [vmem:[%s277 + $0x1560] sm:$0xff]
        %v1020 = vld [vmem:[%s277 + $0x1568] sm:$0xff]
        %v1021 = vld [vmem:[%s277 + $0x1570] sm:$0xff]
        %v1022 = vld [vmem:[%s277 + $0x1578] sm:$0xff]
        %v1023 = vld [vmem:[%s277 + $0x1580] sm:$0xff]
        %v1024 = vld [vmem:[%s277 + $0x1588] sm:$0xff]
        %v1025 = vld [vmem:[%s277 + $0x1590] sm:$0xff]
        %v1026 = vld [vmem:[%s277 + $0x1598] sm:$0xff]
        %v1027 = vld [vmem:[%s277 + $0x15a0] sm:$0xff]
        %v1028 = vld [vmem:[%s277 + $0x15a8] sm:$0xff]
        %v1029 = vld [vmem:[%s277 + $0x15b0] sm:$0xff]
        %v1030 = vld [vmem:[%s277 + $0x15b8] sm:$0xff]
        %v1031 = vld [vmem:[%s277 + $0x15c0] sm:$0xff]
        %v1032 = vld [vmem:[%s277 + $0x15c8] sm:$0xff]
        %v1033 = vld [vmem:[%s277 + $0x15d0] sm:$0xff]
        %v1034 = vld [vmem:[%s277 + $0x15d8] sm:$0xff]
        %v1035 = vld [vmem:[%s277 + $0x15e0] sm:$0xff]
        %v1036 = vld [vmem:[%s277 + $0x15e8] sm:$0xff]
        %v1037 = vld [vmem:[%s277 + $0x15f0] sm:$0xff]
        %v1038 = vld [vmem:[%s277 + $0x15f8] sm:$0xff]
        %v1039 = vld [vmem:[%s277 + $0x1600] sm:$0xff]
        %v1040 = vld [vmem:[%s277 + $0x1608] sm:$0xff]
        %v1041 = vld [vmem:[%s277 + $0x1610] sm:$0xff]
        %v1042 = vld [vmem:[%s277 + $0x1618] sm:$0xff]
        %v1043 = vld [vmem:[%s277 + $0x1620] sm:$0xff]
        %v1044 = vld [vmem:[%s277 + $0x1628] sm:$0xff]
        %v1045 = vld [vmem:[%s277 + $0x1630] sm:$0xff]
        %v1046 = vld [vmem:[%s277 + $0x1638] sm:$0xff]
        %v1047 = vld [vmem:[%s277 + $0x1640] sm:$0xff]
        %v1048 = vld [vmem:[%s277 + $0x1648] sm:$0xff]
        %v1049 = vld [vmem:[%s277 + $0x1650] sm:$0xff]
        %v1050 = vld [vmem:[%s277 + $0x1658] sm:$0xff]
        %v1051 = vld [vmem:[%s277 + $0x1660] sm:$0xff]
        %v1052 = vld [vmem:[%s277 + $0x1668] sm:$0xff]
        %v1053 = vld [vmem:[%s277 + $0x1670] sm:$0xff]
        %v1054 = vld [vmem:[%s277 + $0x1678] sm:$0xff]
        %v1055 = vld [vmem:[%s277 + $0x1680] sm:$0xff]
        %v1056 = vld [vmem:[%s277 + $0x1688] sm:$0xff]
        %v1057 = vld [vmem:[%s277 + $0x1690] sm:$0xff]
        %v1058 = vld [vmem:[%s277 + $0x1698] sm:$0xff]
        %v1059 = vld [vmem:[%s277 + $0x16a0] sm:$0xff]
        %v1060 = vld [vmem:[%s277 + $0x16a8] sm:$0xff]
        %v1061 = vld [vmem:[%s277 + $0x16b0] sm:$0xff]
        %v1062 = vld [vmem:[%s277 + $0x16b8] sm:$0xff]
        %v1063 = vld [vmem:[%s277 + $0x16c0] sm:$0xff]
        %v1064 = vld [vmem:[%s277 + $0x16c8] sm:$0xff]
        %v1065 = vld [vmem:[%s277 + $0x16d0] sm:$0xff]
        %v1066 = vld [vmem:[%s277 + $0x16d8] sm:$0xff]
        %v1067 = vld [vmem:[%s277 + $0x16e0] sm:$0xff]
        %v1068 = vld [vmem:[%s277 + $0x16e8] sm:$0xff]
        %v1069 = vld [vmem:[%s277 + $0x16f0] sm:$0xff]
        %v1070 = vld [vmem:[%s277 + $0x16f8] sm:$0xff]
        %v1071 = vld [vmem:[%s277 + $0x1700] sm:$0xff]
        %v1072 = vld [vmem:[%s277 + $0x1708] sm:$0xff]
        %v1073 = vld [vmem:[%s277 + $0x1710] sm:$0xff]
        %v1074 = vld [vmem:[%s277 + $0x1718] sm:$0xff]
        %v1075 = vld [vmem:[%s277 + $0x1720] sm:$0xff]
        %v1076 = vld [vmem:[%s277 + $0x1728] sm:$0xff]
        %v1077 = vld [vmem:[%s277 + $0x1730] sm:$0xff]
        %v1078 = vld [vmem:[%s277 + $0x1738] sm:$0xff]
        %v1079 = vld [vmem:[%s277 + $0x1740] sm:$0xff]
        %v1080 = vld [vmem:[%s277 + $0x1748] sm:$0xff]
        %v1081 = vld [vmem:[%s277 + $0x1750] sm:$0xff]
        %v1082 = vld [vmem:[%s277 + $0x1758] sm:$0xff]
        %v1083 = vld [vmem:[%s277 + $0x1760] sm:$0xff]
        %v1084 = vld [vmem:[%s277 + $0x1768] sm:$0xff]
        %v1085 = vld [vmem:[%s277 + $0x1770] sm:$0xff]
        %v1086 = vld [vmem:[%s277 + $0x1778] sm:$0xff]
        %v1087 = vld [vmem:[%s277 + $0x1780] sm:$0xff]
        %v1088 = vld [vmem:[%s277 + $0x1788] sm:$0xff]
        %v1089 = vld [vmem:[%s277 + $0x1790] sm:$0xff]
        %v1090 = vld [vmem:[%s277 + $0x1798] sm:$0xff]
        %v1091 = vld [vmem:[%s277 + $0x17a0] sm:$0xff]
        %v1092 = vld [vmem:[%s277 + $0x17a8] sm:$0xff]
        %v1093 = vld [vmem:[%s277 + $0x17b0] sm:$0xff]
        %v1094 = vld [vmem:[%s277 + $0x17b8] sm:$0xff]
        %v1095 = vld [vmem:[%s277 + $0x17c0] sm:$0xff]
        %v1096 = vld [vmem:[%s277 + $0x17c8] sm:$0xff]
        %v1097 = vld [vmem:[%s277 + $0x17d0] sm:$0xff]
        %v1098 = vld [vmem:[%s277 + $0x17d8] sm:$0xff]
        %v1099 = vld [vmem:[%s277 + $0x17e0] sm:$0xff]
        %v1100 = vld [vmem:[%s277 + $0x17e8] sm:$0xff]
        %v1101 = vld [vmem:[%s277 + $0x17f0] sm:$0xff]
        %v1102 = vld [vmem:[%s277 + $0x17f8] sm:$0xff]
        %v1103 = vld [vmem:[%s277 + $0x1800] sm:$0xff]
        %v1104 = vld [vmem:[%s277 + $0x1808] sm:$0xff]
        %v1105 = vld [vmem:[%s277 + $0x1810] sm:$0xff]
        %v1106 = vld [vmem:[%s277 + $0x1818] sm:$0xff]
        %v1107 = vld [vmem:[%s277 + $0x1820] sm:$0xff]
        %v1108 = vld [vmem:[%s277 + $0x1828] sm:$0xff]
        %v1109 = vld [vmem:[%s277 + $0x1830] sm:$0xff]
        %v1110 = vld [vmem:[%s277 + $0x1838] sm:$0xff]
        %v1111 = vld [vmem:[%s277 + $0x1840] sm:$0xff]
        %v1112 = vld [vmem:[%s277 + $0x1848] sm:$0xff]
        %v1113 = vld [vmem:[%s277 + $0x1850] sm:$0xff]
        %v1114 = vld [vmem:[%s277 + $0x1858] sm:$0xff]
        %v1115 = vld [vmem:[%s277 + $0x1860] sm:$0xff]
        %v1116 = vld [vmem:[%s277 + $0x1868] sm:$0xff]
        %v1117 = vld [vmem:[%s277 + $0x1870] sm:$0xff]
        %v1118 = vld [vmem:[%s277 + $0x1878] sm:$0xff]
        %v1119 = vld [vmem:[%s277 + $0x1880] sm:$0xff]
        %v1120 = vld [vmem:[%s277 + $0x1888] sm:$0xff]
        %v1121 = vld [vmem:[%s277 + $0x1890] sm:$0xff]
        %v1122 = vld [vmem:[%s277 + $0x1898] sm:$0xff]
        %v1123 = vld [vmem:[%s277 + $0x18a0] sm:$0xff]
        %v1124 = vld [vmem:[%s277 + $0x18a8] sm:$0xff]
        %v1125 = vld [vmem:[%s277 + $0x18b0] sm:$0xff]
        %v1126 = vld [vmem:[%s277 + $0x18b8] sm:$0xff]
        %v1127 = vld [vmem:[%s277 + $0x18c0] sm:$0xff]
        %v1128 = vld [vmem:[%s277 + $0x18c8] sm:$0xff]
        %v1129 = vld [vmem:[%s277 + $0x18d0] sm:$0xff]
        %v1130 = vld [vmem:[%s277 + $0x18d8] sm:$0xff]
        %v1131 = vld [vmem:[%s277 + $0x18e0] sm:$0xff]
        %v1132 = vld [vmem:[%s277 + $0x18e8] sm:$0xff]
        %v1133 = vld [vmem:[%s277 + $0x18f0] sm:$0xff]
        %v1134 = vld [vmem:[%s277 + $0x18f8] sm:$0xff]
        %v1135 = vld [vmem:[%s277 + $0x1900] sm:$0xff]
        %v1136 = vld [vmem:[%s277 + $0x1908] sm:$0xff]
        %v1137 = vld [vmem:[%s277 + $0x1910] sm:$0xff]
        %v1138 = vld [vmem:[%s277 + $0x1918] sm:$0xff]
        %v1139 = vld [vmem:[%s277 + $0x1920] sm:$0xff]
        %v1140 = vld [vmem:[%s277 + $0x1928] sm:$0xff]
        %v1141 = vld [vmem:[%s277 + $0x1930] sm:$0xff]
        %v1142 = vld [vmem:[%s277 + $0x1938] sm:$0xff]
        %v1143 = vld [vmem:[%s277 + $0x1940] sm:$0xff]
        %v1144 = vld [vmem:[%s277 + $0x1948] sm:$0xff]
        %v1145 = vld [vmem:[%s277 + $0x1950] sm:$0xff]
        %v1146 = vld [vmem:[%s277 + $0x1958] sm:$0xff]
        %v1147 = vld [vmem:[%s277 + $0x1960] sm:$0xff]
        %v1148 = vld [vmem:[%s277 + $0x1968] sm:$0xff]
        %v1149 = vld [vmem:[%s277 + $0x1970] sm:$0xff]
        %v1150 = vld [vmem:[%s277 + $0x1978] sm:$0xff]
        %v1151 = vld [vmem:[%s277 + $0x1980] sm:$0xff]
        %v1152 = vld [vmem:[%s277 + $0x1988] sm:$0xff]
        %v1153 = vld [vmem:[%s277 + $0x1990] sm:$0xff]
        %v1154 = vld [vmem:[%s277 + $0x1998] sm:$0xff]
        %v1155 = vld [vmem:[%s277 + $0x19a0] sm:$0xff]
        %v1156 = vld [vmem:[%s277 + $0x19a8] sm:$0xff]
        %v1157 = vld [vmem:[%s277 + $0x19b0] sm:$0xff]
        %v1158 = vld [vmem:[%s277 + $0x19b8] sm:$0xff]
        %v1159 = vld [vmem:[%s277 + $0x19c0] sm:$0xff]
        %v1160 = vld [vmem:[%s277 + $0x19c8] sm:$0xff]
        %v1161 = vld [vmem:[%s277 + $0x19d0] sm:$0xff]
        %v1162 = vld [vmem:[%s277 + $0x19d8] sm:$0xff]
        %v1163 = vld [vmem:[%s277 + $0x19e0] sm:$0xff]
        %v1164 = vld [vmem:[%s277 + $0x19e8] sm:$0xff]
        %v1165 = vld [vmem:[%s277 + $0x19f0] sm:$0xff]
        %v1166 = vld [vmem:[%s277 + $0x19f8] sm:$0xff]
        %v1167 = vld [vmem:[%s277 + $0x1a00] sm:$0xff]
        %v1168 = vld [vmem:[%s277 + $0x1a08] sm:$0xff]
        %v1169 = vld [vmem:[%s277 + $0x1a10] sm:$0xff]
        %v1170 = vld [vmem:[%s277 + $0x1a18] sm:$0xff]
        %v1171 = vld [vmem:[%s277 + $0x1a20] sm:$0xff]
        %v1172 = vld [vmem:[%s277 + $0x1a28] sm:$0xff]
        %v1173 = vld [vmem:[%s277 + $0x1a30] sm:$0xff]
        %v1174 = vld [vmem:[%s277 + $0x1a38] sm:$0xff]
        %v1175 = vld [vmem:[%s277 + $0x1a40] sm:$0xff]
        %v1176 = vld [vmem:[%s277 + $0x1a48] sm:$0xff]
        %v1177 = vld [vmem:[%s277 + $0x1a50] sm:$0xff]
        %v1178 = vld [vmem:[%s277 + $0x1a58] sm:$0xff]
        %v1179 = vld [vmem:[%s277 + $0x1a60] sm:$0xff]
        %v1180 = vld [vmem:[%s277 + $0x1a68] sm:$0xff]
        %v1181 = vld [vmem:[%s277 + $0x1a70] sm:$0xff]
        %v1182 = vld [vmem:[%s277 + $0x1a78] sm:$0xff]
        %v1183 = vld [vmem:[%s277 + $0x1a80] sm:$0xff]
        %v1184 = vld [vmem:[%s277 + $0x1a88] sm:$0xff]
        %v1185 = vld [vmem:[%s277 + $0x1a90] sm:$0xff]
        %v1186 = vld [vmem:[%s277 + $0x1a98] sm:$0xff]
        %v1187 = vld [vmem:[%s277 + $0x1aa0] sm:$0xff]
        %v1188 = vld [vmem:[%s277 + $0x1aa8] sm:$0xff]
        %v1189 = vld [vmem:[%s277 + $0x1ab0] sm:$0xff]
        %v1190 = vld [vmem:[%s277 + $0x1ab8] sm:$0xff]
        %v1191 = vld [vmem:[%s277 + $0x1ac0] sm:$0xff]
        %v1192 = vld [vmem:[%s277 + $0x1ac8] sm:$0xff]
        %v1193 = vld [vmem:[%s277 + $0x1ad0] sm:$0xff]
        %v1194 = vld [vmem:[%s277 + $0x1ad8] sm:$0xff]
        %v1195 = vld [vmem:[%s277 + $0x1ae0] sm:$0xff]
        %v1196 = vld [vmem:[%s277 + $0x1ae8] sm:$0xff]
        %v1197 = vld [vmem:[%s277 + $0x1af0] sm:$0xff]
        %v1198 = vld [vmem:[%s277 + $0x1af8] sm:$0xff]
        %v1199 = vld [vmem:[%s277 + $0x1b00] sm:$0xff]
        %v1200 = vld [vmem:[%s277 + $0x1b08] sm:$0xff]
        %v1201 = vld [vmem:[%s277 + $0x1b10] sm:$0xff]
        %v1202 = vld [vmem:[%s277 + $0x1b18] sm:$0xff]
        %v1203 = vld [vmem:[%s277 + $0x1b20] sm:$0xff]
        %v1204 = vld [vmem:[%s277 + $0x1b28] sm:$0xff]
        %v1205 = vld [vmem:[%s277 + $0x1b30] sm:$0xff]
        %v1206 = vld [vmem:[%s277 + $0x1b38] sm:$0xff]
        %v1207 = vld [vmem:[%s277 + $0x1b40] sm:$0xff]
        %v1208 = vld [vmem:[%s277 + $0x1b48] sm:$0xff]
        %v1209 = vld [vmem:[%s277 + $0x1b50] sm:$0xff]
        %v1210 = vld [vmem:[%s277 + $0x1b58] sm:$0xff]
        %v1211 = vld [vmem:[%s277 + $0x1b60] sm:$0xff]
        %v1212 = vld [vmem:[%s277 + $0x1b68] sm:$0xff]
        %v1213 = vld [vmem:[%s277 + $0x1b70] sm:$0xff]
        %v1214 = vld [vmem:[%s277 + $0x1b78] sm:$0xff]
        %v1215 = vld [vmem:[%s277 + $0x1b80] sm:$0xff]
        %v1216 = vld [vmem:[%s277 + $0x1b88] sm:$0xff]
        %v1217 = vld [vmem:[%s277 + $0x1b90] sm:$0xff]
        %v1218 = vld [vmem:[%s277 + $0x1b98] sm:$0xff]
        %v1219 = vld [vmem:[%s277 + $0x1ba0] sm:$0xff]
        %v1220 = vld [vmem:[%s277 + $0x1ba8] sm:$0xff]
        %v1221 = vld [vmem:[%s277 + $0x1bb0] sm:$0xff]
        %v1222 = vld [vmem:[%s277 + $0x1bb8] sm:$0xff]
        %v1223 = vld [vmem:[%s277 + $0x1bc0] sm:$0xff]
        %v1224 = vld [vmem:[%s277 + $0x1bc8] sm:$0xff]
        %v1225 = vld [vmem:[%s277 + $0x1bd0] sm:$0xff]
        %v1226 = vld [vmem:[%s277 + $0x1bd8] sm:$0xff]
        %v1227 = vld [vmem:[%s277 + $0x1be0] sm:$0xff]
        %v1228 = vld [vmem:[%s277 + $0x1be8] sm:$0xff]
        %v1229 = vld [vmem:[%s277 + $0x1bf0] sm:$0xff]
        %v1230 = vld [vmem:[%s277 + $0x1bf8] sm:$0xff]
        %v1231 = vld [vmem:[%s277 + $0x1c00] sm:$0xff]
        %v1232 = vld [vmem:[%s277 + $0x1c08] sm:$0xff]
        %v1233 = vld [vmem:[%s277 + $0x1c10] sm:$0xff]
        %v1234 = vld [vmem:[%s277 + $0x1c18] sm:$0xff]
        %v1235 = vld [vmem:[%s277 + $0x1c20] sm:$0xff]
        %v1236 = vld [vmem:[%s277 + $0x1c28] sm:$0xff]
        %v1237 = vld [vmem:[%s277 + $0x1c30] sm:$0xff]
        %v1238 = vld [vmem:[%s277 + $0x1c38] sm:$0xff]
        %v1239 = vld [vmem:[%s277 + $0x1c40] sm:$0xff]
        %v1240 = vld [vmem:[%s277 + $0x1c48] sm:$0xff]
        %v1241 = vld [vmem:[%s277 + $0x1c50] sm:$0xff]
        %v1242 = vld [vmem:[%s277 + $0x1c58] sm:$0xff]
        %v1243 = vld [vmem:[%s277 + $0x1c60] sm:$0xff]
        %v1244 = vld [vmem:[%s277 + $0x1c68] sm:$0xff]
        %v1245 = vld [vmem:[%s277 + $0x1c70] sm:$0xff]
        %v1246 = vld [vmem:[%s277 + $0x1c78] sm:$0xff]
        %v1247 = vld [vmem:[%s277 + $0x1c80] sm:$0xff]
        %v1248 = vld [vmem:[%s277 + $0x1c88] sm:$0xff]
        %v1249 = vld [vmem:[%s277 + $0x1c90] sm:$0xff]
        %v1250 = vld [vmem:[%s277 + $0x1c98] sm:$0xff]
        %v1251 = vld [vmem:[%s277 + $0x1ca0] sm:$0xff]
        %v1252 = vld [vmem:[%s277 + $0x1ca8] sm:$0xff]
        %v1253 = vld [vmem:[%s277 + $0x1cb0] sm:$0xff]
        %v1254 = vld [vmem:[%s277 + $0x1cb8] sm:$0xff]
        %v1255 = vld [vmem:[%s277 + $0x1cc0] sm:$0xff]
        %v1256 = vld [vmem:[%s277 + $0x1cc8] sm:$0xff]
        %v1257 = vld [vmem:[%s277 + $0x1cd0] sm:$0xff]
        %v1258 = vld [vmem:[%s277 + $0x1cd8] sm:$0xff]
        %v1259 = vld [vmem:[%s277 + $0x1ce0] sm:$0xff]
        %v1260 = vld [vmem:[%s277 + $0x1ce8] sm:$0xff]
        %v1261 = vld [vmem:[%s277 + $0x1cf0] sm:$0xff]
        %v1262 = vld [vmem:[%s277 + $0x1cf8] sm:$0xff]
        %v1263 = vld [vmem:[%s277 + $0x1d00] sm:$0xff]
        %v1264 = vld [vmem:[%s277 + $0x1d08] sm:$0xff]
        %v1265 = vld [vmem:[%s277 + $0x1d10] sm:$0xff]
        %v1266 = vld [vmem:[%s277 + $0x1d18] sm:$0xff]
        %v1267 = vld [vmem:[%s277 + $0x1d20] sm:$0xff]
        %v1268 = vld [vmem:[%s277 + $0x1d28] sm:$0xff]
        %v1269 = vld [vmem:[%s277 + $0x1d30] sm:$0xff]
        %v1270 = vld [vmem:[%s277 + $0x1d38] sm:$0xff]
        %v1271 = vld [vmem:[%s277 + $0x1d40] sm:$0xff]
        %v1272 = vld [vmem:[%s277 + $0x1d48] sm:$0xff]
        %v1273 = vld [vmem:[%s277 + $0x1d50] sm:$0xff]
        %v1274 = vld [vmem:[%s277 + $0x1d58] sm:$0xff]
        %v1275 = vld [vmem:[%s277 + $0x1d60] sm:$0xff]
        %v1276 = vld [vmem:[%s277 + $0x1d68] sm:$0xff]
        %v1277 = vld [vmem:[%s277 + $0x1d70] sm:$0xff]
        %v1278 = vld [vmem:[%s277 + $0x1d78] sm:$0xff]
        %v1279 = vld [vmem:[%s277 + $0x1d80] sm:$0xff]
        %v1280 = vld [vmem:[%s277 + $0x1d88] sm:$0xff]
        %v1281 = vld [vmem:[%s277 + $0x1d90] sm:$0xff]
        %v1282 = vld [vmem:[%s277 + $0x1d98] sm:$0xff]
        %v1283 = vld [vmem:[%s277 + $0x1da0] sm:$0xff]
        %v1284 = vld [vmem:[%s277 + $0x1da8] sm:$0xff]
        %v1285 = vld [vmem:[%s277 + $0x1db0] sm:$0xff]
        %v1286 = vld [vmem:[%s277 + $0x1db8] sm:$0xff]
        %v1287 = vld [vmem:[%s277 + $0x1dc0] sm:$0xff]
        %v1288 = vld [vmem:[%s277 + $0x1dc8] sm:$0xff]
        %v1289 = vld [vmem:[%s277 + $0x1dd0] sm:$0xff]
        %v1290 = vld [vmem:[%s277 + $0x1dd8] sm:$0xff]
        %v1291 = vld [vmem:[%s277 + $0x1de0] sm:$0xff]
        %v1292 = vld [vmem:[%s277 + $0x1de8] sm:$0xff]
        %v1293 = vld [vmem:[%s277 + $0x1df0] sm:$0xff]
        %v1294 = vld [vmem:[%s277 + $0x1df8] sm:$0xff]
        %v1295 = vld [vmem:[%s277 + $0x1e00] sm:$0xff]
        %v1296 = vld [vmem:[%s277 + $0x1e08] sm:$0xff]
        %v1297 = vld [vmem:[%s277 + $0x1e10] sm:$0xff]
        %v1298 = vld [vmem:[%s277 + $0x1e18] sm:$0xff]
        %v1299 = vld [vmem:[%s277 + $0x1e20] sm:$0xff]
        %v1300 = vld [vmem:[%s277 + $0x1e28] sm:$0xff]
        %v1301 = vld [vmem:[%s277 + $0x1e30] sm:$0xff]
        %v1302 = vld [vmem:[%s277 + $0x1e38] sm:$0xff]
        %v1303 = vld [vmem:[%s277 + $0x1e40] sm:$0xff]
        %v1304 = vld [vmem:[%s277 + $0x1e48] sm:$0xff]
        %v1305 = vld [vmem:[%s277 + $0x1e50] sm:$0xff]
        %v1306 = vld [vmem:[%s277 + $0x1e58] sm:$0xff]
        %v1307 = vld [vmem:[%s277 + $0x1e60] sm:$0xff]
        %v1308 = vld [vmem:[%s277 + $0x1e68] sm:$0xff]
        %v1309 = vld [vmem:[%s277 + $0x1e70] sm:$0xff]
        %v1310 = vld [vmem:[%s277 + $0x1e78] sm:$0xff]
        %v1311 = vld [vmem:[%s277 + $0x1e80] sm:$0xff]
        %v1312 = vld [vmem:[%s277 + $0x1e88] sm:$0xff]
        %v1313 = vld [vmem:[%s277 + $0x1e90] sm:$0xff]
        %v1314 = vld [vmem:[%s277 + $0x1e98] sm:$0xff]
        %v1315 = vld [vmem:[%s277 + $0x1ea0] sm:$0xff]
        %v1316 = vld [vmem:[%s277 + $0x1ea8] sm:$0xff]
        %v1317 = vld [vmem:[%s277 + $0x1eb0] sm:$0xff]
        %v1318 = vld [vmem:[%s277 + $0x1eb8] sm:$0xff]
        %v1319 = vld [vmem:[%s277 + $0x1ec0] sm:$0xff]
        %v1320 = vld [vmem:[%s277 + $0x1ec8] sm:$0xff]
        %v1321 = vld [vmem:[%s277 + $0x1ed0] sm:$0xff]
        %v1322 = vld [vmem:[%s277 + $0x1ed8] sm:$0xff]
        %v1323 = vld [vmem:[%s277 + $0x1ee0] sm:$0xff]
        %v1324 = vld [vmem:[%s277 + $0x1ee8] sm:$0xff]
        %v1325 = vld [vmem:[%s277 + $0x1ef0] sm:$0xff]
        %v1326 = vld [vmem:[%s277 + $0x1ef8] sm:$0xff]
        %v1327 = vld [vmem:[%s277 + $0x1f00] sm:$0xff]
        %v1328 = vld [vmem:[%s277 + $0x1f08] sm:$0xff]
        %v1329 = vld [vmem:[%s277 + $0x1f10] sm:$0xff]
        %v1330 = vld [vmem:[%s277 + $0x1f18] sm:$0xff]
        %v1331 = vld [vmem:[%s277 + $0x1f20] sm:$0xff]
        %v1332 = vld [vmem:[%s277 + $0x1f28] sm:$0xff]
        %v1333 = vld [vmem:[%s277 + $0x1f30] sm:$0xff]
        %v1334 = vld [vmem:[%s277 + $0x1f38] sm:$0xff]
        %v1335 = vld [vmem:[%s277 + $0x1f40] sm:$0xff]
        %v1336 = vld [vmem:[%s277 + $0x1f48] sm:$0xff]
        %v1337 = vld [vmem:[%s277 + $0x1f50] sm:$0xff]
        %v1338 = vld [vmem:[%s277 + $0x1f58] sm:$0xff]
        %v1339 = vld [vmem:[%s277 + $0x1f60] sm:$0xff]
        %v1340 = vld [vmem:[%s277 + $0x1f68] sm:$0xff]
        %v1341 = vld [vmem:[%s277 + $0x1f70] sm:$0xff]
        %v1342 = vld [vmem:[%s277 + $0x1f78] sm:$0xff]
        %v1343 = vld [vmem:[%s277 + $0x1f80] sm:$0xff]
        %v1344 = vld [vmem:[%s277 + $0x1f88] sm:$0xff]
        %v1345 = vld [vmem:[%s277 + $0x1f90] sm:$0xff]
        %v1346 = vld [vmem:[%s277 + $0x1f98] sm:$0xff]
        %v1347 = vld [vmem:[%s277 + $0x1fa0] sm:$0xff]
        %v1348 = vld [vmem:[%s277 + $0x1fa8] sm:$0xff]
        %v1349 = vld [vmem:[%s277 + $0x1fb0] sm:$0xff]
        %v1350 = vld [vmem:[%s277 + $0x1fb8] sm:$0xff]
        %v1351 = vld [vmem:[%s277 + $0x1fc0] sm:$0xff]
        %v1352 = vld [vmem:[%s277 + $0x1fc8] sm:$0xff]
        %v1353 = vld [vmem:[%s277 + $0x1fd0] sm:$0xff]
        %v1354 = vld [vmem:[%s277 + $0x1fd8] sm:$0xff]
        %v1355 = vld [vmem:[%s277 + $0x1fe0] sm:$0xff]
        %v1356 = vld [vmem:[%s277 + $0x1fe8] sm:$0xff]
        %v1357 = vld [vmem:[%s277 + $0x1ff0] sm:$0xff]
        %v1358 = vld [vmem:[%s277 + $0x1ff8] sm:$0xff]
        %v1363 = vunpack.c.l.b16 %v331
        %v1364 = vunpack.c.h.b16 %v331
        %v1365 = vunpack.c.l.b16 %v332
        %v1366 = vunpack.c.h.b16 %v332
        %v1367 = vunpack.c.l.b16 %v333
        %v1368 = vunpack.c.h.b16 %v333
        %v1369 = vunpack.c.l.b16 %v334
        %v1370 = vunpack.c.h.b16 %v334
        %v1371 = vpack.c.b16 %v1363, %v1363
        %v1372 = vpack.c.b16 %v1364, %v1364
        %v1373 = vpack.c.b16 %v1365, %v1365
        %v1374 = vpack.c.b16 %v1366, %v1366
        %v1375 = vpack.c.b16 %v1367, %v1367
        %v1376 = vpack.c.b16 %v1368, %v1368
        %v1377 = vpack.c.b16 %v1369, %v1369
        %v1378 = vpack.c.b16 %v1370, %v1370
        %v2411 = vunpack.c.l.b16 %v335
        %v2412 = vunpack.c.h.b16 %v335
        %v2413 = vunpack.c.l.b16 %v336
        %v2414 = vunpack.c.h.b16 %v336
        %v2415 = vunpack.c.l.b16 %v337
        %v2416 = vunpack.c.h.b16 %v337
        %v2417 = vunpack.c.l.b16 %v338
        %v2418 = vunpack.c.h.b16 %v338
        %v2419 = vunpack.c.l.b16 %v339
        %v2420 = vunpack.c.h.b16 %v339
        %v2421 = vunpack.c.l.b16 %v340
        %v2422 = vunpack.c.h.b16 %v340
        %v2423 = vunpack.c.l.b16 %v341
        %v2424 = vunpack.c.h.b16 %v341
        %v2425 = vunpack.c.l.b16 %v342
        %v2426 = vunpack.c.h.b16 %v342
        %v2427 = vunpack.c.l.b16 %v343
        %v2428 = vunpack.c.h.b16 %v343
        %v2429 = vunpack.c.l.b16 %v344
        %v2430 = vunpack.c.h.b16 %v344
        %v2431 = vunpack.c.l.b16 %v345
        %v2432 = vunpack.c.h.b16 %v345
        %v2433 = vunpack.c.l.b16 %v346
        %v2434 = vunpack.c.h.b16 %v346
        %v2435 = vunpack.c.l.b16 %v347
        %v2436 = vunpack.c.h.b16 %v347
        %v2437 = vunpack.c.l.b16 %v348
        %v2438 = vunpack.c.h.b16 %v348
        %v2439 = vunpack.c.l.b16 %v349
        %v2440 = vunpack.c.h.b16 %v349
        %v2441 = vunpack.c.l.b16 %v350
        %v2442 = vunpack.c.h.b16 %v350
        %v2443 = vunpack.c.l.b16 %v351
        %v2444 = vunpack.c.h.b16 %v351
        %v2445 = vunpack.c.l.b16 %v352
        %v2446 = vunpack.c.h.b16 %v352
        %v2447 = vunpack.c.l.b16 %v353
        %v2448 = vunpack.c.h.b16 %v353
        %v2449 = vunpack.c.l.b16 %v354
        %v2450 = vunpack.c.h.b16 %v354
        %v2451 = vunpack.c.l.b16 %v355
        %v2452 = vunpack.c.h.b16 %v355
        %v2453 = vunpack.c.l.b16 %v356
        %v2454 = vunpack.c.h.b16 %v356
        %v2455 = vunpack.c.l.b16 %v357
        %v2456 = vunpack.c.h.b16 %v357
        %v2457 = vunpack.c.l.b16 %v358
        %v2458 = vunpack.c.h.b16 %v358
        %v2459 = vunpack.c.l.b16 %v359
        %v2460 = vunpack.c.h.b16 %v359
        %v2461 = vunpack.c.l.b16 %v360
        %v2462 = vunpack.c.h.b16 %v360
        %v2463 = vunpack.c.l.b16 %v361
        %v2464 = vunpack.c.h.b16 %v361
        %v2465 = vunpack.c.l.b16 %v362
        %v2466 = vunpack.c.h.b16 %v362
        %v2467 = vunpack.c.l.b16 %v363
        %v2468 = vunpack.c.h.b16 %v363
        %v2469 = vunpack.c.l.b16 %v364
        %v2470 = vunpack.c.h.b16 %v364
        %v2471 = vunpack.c.l.b16 %v365
        %v2472 = vunpack.c.h.b16 %v365
        %v2473 = vunpack.c.l.b16 %v366
        %v2474 = vunpack.c.h.b16 %v366
        %v2475 = vunpack.c.l.b16 %v367
        %v2476 = vunpack.c.h.b16 %v367
        %v2477 = vunpack.c.l.b16 %v368
        %v2478 = vunpack.c.h.b16 %v368
        %v2479 = vunpack.c.l.b16 %v369
        %v2480 = vunpack.c.h.b16 %v369
        %v2481 = vunpack.c.l.b16 %v370
        %v2482 = vunpack.c.h.b16 %v370
        %v2483 = vunpack.c.l.b16 %v371
        %v2484 = vunpack.c.h.b16 %v371
        %v2485 = vunpack.c.l.b16 %v372
        %v2486 = vunpack.c.h.b16 %v372
        %v2487 = vunpack.c.l.b16 %v373
        %v2488 = vunpack.c.h.b16 %v373
        %v2489 = vunpack.c.l.b16 %v374
        %v2490 = vunpack.c.h.b16 %v374
        %v2491 = vunpack.c.l.b16 %v375
        %v2492 = vunpack.c.h.b16 %v375
        %v2493 = vunpack.c.l.b16 %v376
        %v2494 = vunpack.c.h.b16 %v376
        %v2495 = vunpack.c.l.b16 %v377
        %v2496 = vunpack.c.h.b16 %v377
        %v2497 = vunpack.c.l.b16 %v378
        %v2498 = vunpack.c.h.b16 %v378
        %v2499 = vunpack.c.l.b16 %v379
        %v2500 = vunpack.c.h.b16 %v379
        %v2501 = vunpack.c.l.b16 %v380
        %v2502 = vunpack.c.h.b16 %v380
        %v2503 = vunpack.c.l.b16 %v381
        %v2504 = vunpack.c.h.b16 %v381
        %v2505 = vunpack.c.l.b16 %v382
        %v2506 = vunpack.c.h.b16 %v382
        %v2507 = vunpack.c.l.b16 %v383
        %v2508 = vunpack.c.h.b16 %v383
        %v2509 = vunpack.c.l.b16 %v384
        %v2510 = vunpack.c.h.b16 %v384
        %v2511 = vunpack.c.l.b16 %v385
        %v2512 = vunpack.c.h.b16 %v385
        %v2513 = vunpack.c.l.b16 %v386
        %v2514 = vunpack.c.h.b16 %v386
        %v2515 = vunpack.c.l.b16 %v387
        %v2516 = vunpack.c.h.b16 %v387
        %v2517 = vunpack.c.l.b16 %v388
        %v2518 = vunpack.c.h.b16 %v388
        %v2519 = vunpack.c.l.b16 %v389
        %v2520 = vunpack.c.h.b16 %v389
        %v2521 = vunpack.c.l.b16 %v390
        %v2522 = vunpack.c.h.b16 %v390
        %v2523 = vunpack.c.l.b16 %v391
        %v2524 = vunpack.c.h.b16 %v391
        %v2525 = vunpack.c.l.b16 %v392
        %v2526 = vunpack.c.h.b16 %v392
        %v2527 = vunpack.c.l.b16 %v393
        %v2528 = vunpack.c.h.b16 %v393
        %v2529 = vunpack.c.l.b16 %v394
        %v2530 = vunpack.c.h.b16 %v394
        %v2531 = vunpack.c.l.b16 %v395
        %v2532 = vunpack.c.h.b16 %v395
        %v2533 = vunpack.c.l.b16 %v396
        %v2534 = vunpack.c.h.b16 %v396
        %v2535 = vunpack.c.l.b16 %v397
        %v2536 = vunpack.c.h.b16 %v397
        %v2537 = vunpack.c.l.b16 %v398
        %v2538 = vunpack.c.h.b16 %v398
        %v2539 = vunpack.c.l.b16 %v399
        %v2540 = vunpack.c.h.b16 %v399
        %v2541 = vunpack.c.l.b16 %v400
        %v2542 = vunpack.c.h.b16 %v400
        %v2543 = vunpack.c.l.b16 %v401
        %v2544 = vunpack.c.h.b16 %v401
        %v2545 = vunpack.c.l.b16 %v402
        %v2546 = vunpack.c.h.b16 %v402
        %v2547 = vunpack.c.l.b16 %v403
        %v2548 = vunpack.c.h.b16 %v403
        %v2549 = vunpack.c.l.b16 %v404
        %v2550 = vunpack.c.h.b16 %v404
        %v2551 = vunpack.c.l.b16 %v405
        %v2552 = vunpack.c.h.b16 %v405
        %v2553 = vunpack.c.l.b16 %v406
        %v2554 = vunpack.c.h.b16 %v406
        %v2555 = vunpack.c.l.b16 %v407
        %v2556 = vunpack.c.h.b16 %v407
        %v2557 = vunpack.c.l.b16 %v408
        %v2558 = vunpack.c.h.b16 %v408
        %v2559 = vunpack.c.l.b16 %v409
        %v2560 = vunpack.c.h.b16 %v409
        %v2561 = vunpack.c.l.b16 %v410
        %v2562 = vunpack.c.h.b16 %v410
        %v2563 = vunpack.c.l.b16 %v411
        %v2564 = vunpack.c.h.b16 %v411
        %v2565 = vunpack.c.l.b16 %v412
        %v2566 = vunpack.c.h.b16 %v412
        %v2567 = vunpack.c.l.b16 %v413
        %v2568 = vunpack.c.h.b16 %v413
        %v2569 = vunpack.c.l.b16 %v414
        %v2570 = vunpack.c.h.b16 %v414
        %v2571 = vunpack.c.l.b16 %v415
        %v2572 = vunpack.c.h.b16 %v415
        %v2573 = vunpack.c.l.b16 %v416
        %v2574 = vunpack.c.h.b16 %v416
        %v2575 = vunpack.c.l.b16 %v417
        %v2576 = vunpack.c.h.b16 %v417
        %v2577 = vunpack.c.l.b16 %v418
        %v2578 = vunpack.c.h.b16 %v418
        %v2579 = vunpack.c.l.b16 %v419
        %v2580 = vunpack.c.h.b16 %v419
        %v2581 = vunpack.c.l.b16 %v420
        %v2582 = vunpack.c.h.b16 %v420
        %v2583 = vunpack.c.l.b16 %v421
        %v2584 = vunpack.c.h.b16 %v421
        %v2585 = vunpack.c.l.b16 %v422
        %v2586 = vunpack.c.h.b16 %v422
        %v2587 = vunpack.c.l.b16 %v423
        %v2588 = vunpack.c.h.b16 %v423
        %v2589 = vunpack.c.l.b16 %v424
        %v2590 = vunpack.c.h.b16 %v424
        %v2591 = vunpack.c.l.b16 %v425
        %v2592 = vunpack.c.h.b16 %v425
        %v2593 = vunpack.c.l.b16 %v426
        %v2594 = vunpack.c.h.b16 %v426
        %v2595 = vunpack.c.l.b16 %v427
        %v2596 = vunpack.c.h.b16 %v427
        %v2597 = vunpack.c.l.b16 %v428
        %v2598 = vunpack.c.h.b16 %v428
        %v2599 = vunpack.c.l.b16 %v429
        %v2600 = vunpack.c.h.b16 %v429
        %v2601 = vunpack.c.l.b16 %v430
        %v2602 = vunpack.c.h.b16 %v430
        %v2603 = vunpack.c.l.b16 %v431
        %v2604 = vunpack.c.h.b16 %v431
        %v2605 = vunpack.c.l.b16 %v432
        %v2606 = vunpack.c.h.b16 %v432
        %v2607 = vunpack.c.l.b16 %v433
        %v2608 = vunpack.c.h.b16 %v433
        %v2609 = vunpack.c.l.b16 %v434
        %v2610 = vunpack.c.h.b16 %v434
        %v2611 = vunpack.c.l.b16 %v435
        %v2612 = vunpack.c.h.b16 %v435
        %v2613 = vunpack.c.l.b16 %v436
        %v2614 = vunpack.c.h.b16 %v436
        %v2615 = vunpack.c.l.b16 %v437
        %v2616 = vunpack.c.h.b16 %v437
        %v2617 = vunpack.c.l.b16 %v438
        %v2618 = vunpack.c.h.b16 %v438
        %v2619 = vunpack.c.l.b16 %v439
        %v2620 = vunpack.c.h.b16 %v439
        %v2621 = vunpack.c.l.b16 %v440
        %v2622 = vunpack.c.h.b16 %v440
        %v2623 = vunpack.c.l.b16 %v441
        %v2624 = vunpack.c.h.b16 %v441
        %v2625 = vunpack.c.l.b16 %v442
        %v2626 = vunpack.c.h.b16 %v442
        %v2627 = vunpack.c.l.b16 %v443
        %v2628 = vunpack.c.h.b16 %v443
        %v2629 = vunpack.c.l.b16 %v444
        %v2630 = vunpack.c.h.b16 %v444
        %v2631 = vunpack.c.l.b16 %v445
        %v2632 = vunpack.c.h.b16 %v445
        %v2633 = vunpack.c.l.b16 %v446
        %v2634 = vunpack.c.h.b16 %v446
        %v2635 = vunpack.c.l.b16 %v447
        %v2636 = vunpack.c.h.b16 %v447
        %v2637 = vunpack.c.l.b16 %v448
        %v2638 = vunpack.c.h.b16 %v448
        %v2639 = vunpack.c.l.b16 %v449
        %v2640 = vunpack.c.h.b16 %v449
        %v2641 = vunpack.c.l.b16 %v450
        %v2642 = vunpack.c.h.b16 %v450
        %v2643 = vunpack.c.l.b16 %v451
        %v2644 = vunpack.c.h.b16 %v451
        %v2645 = vunpack.c.l.b16 %v452
        %v2646 = vunpack.c.h.b16 %v452
        %v2647 = vunpack.c.l.b16 %v453
        %v2648 = vunpack.c.h.b16 %v453
        %v2649 = vunpack.c.l.b16 %v454
        %v2650 = vunpack.c.h.b16 %v454
        %v2651 = vunpack.c.l.b16 %v455
        %v2652 = vunpack.c.h.b16 %v455
        %v2653 = vunpack.c.l.b16 %v456
        %v2654 = vunpack.c.h.b16 %v456
        %v2655 = vunpack.c.l.b16 %v457
        %v2656 = vunpack.c.h.b16 %v457
        %v2657 = vunpack.c.l.b16 %v458
        %v2658 = vunpack.c.h.b16 %v458
        %v2659 = vunpack.c.l.b16 %v459
        %v2660 = vunpack.c.h.b16 %v459
        %v2661 = vunpack.c.l.b16 %v460
        %v2662 = vunpack.c.h.b16 %v460
        %v2663 = vunpack.c.l.b16 %v461
        %v2664 = vunpack.c.h.b16 %v461
        %v2665 = vunpack.c.l.b16 %v462
        %v2666 = vunpack.c.h.b16 %v462
        %v2667 = vunpack.c.l.b16 %v463
        %v2668 = vunpack.c.h.b16 %v463
        %v2669 = vunpack.c.l.b16 %v464
        %v2670 = vunpack.c.h.b16 %v464
        %v2671 = vunpack.c.l.b16 %v465
        %v2672 = vunpack.c.h.b16 %v465
        %v2673 = vunpack.c.l.b16 %v466
        %v2674 = vunpack.c.h.b16 %v466
        %v2675 = vunpack.c.l.b16 %v467
        %v2676 = vunpack.c.h.b16 %v467
        %v2677 = vunpack.c.l.b16 %v468
        %v2678 = vunpack.c.h.b16 %v468
        %v2679 = vunpack.c.l.b16 %v469
        %v2680 = vunpack.c.h.b16 %v469
        %v2681 = vunpack.c.l.b16 %v470
        %v2682 = vunpack.c.h.b16 %v470
        %v2683 = vunpack.c.l.b16 %v471
        %v2684 = vunpack.c.h.b16 %v471
        %v2685 = vunpack.c.l.b16 %v472
        %v2686 = vunpack.c.h.b16 %v472
        %v2687 = vunpack.c.l.b16 %v473
        %v2688 = vunpack.c.h.b16 %v473
        %v2689 = vunpack.c.l.b16 %v474
        %v2690 = vunpack.c.h.b16 %v474
        %v2691 = vunpack.c.l.b16 %v475
        %v2692 = vunpack.c.h.b16 %v475
        %v2693 = vunpack.c.l.b16 %v476
        %v2694 = vunpack.c.h.b16 %v476
        %v2695 = vunpack.c.l.b16 %v477
        %v2696 = vunpack.c.h.b16 %v477
        %v2697 = vunpack.c.l.b16 %v478
        %v2698 = vunpack.c.h.b16 %v478
        %v2699 = vunpack.c.l.b16 %v479
        %v2700 = vunpack.c.h.b16 %v479
        %v2701 = vunpack.c.l.b16 %v480
        %v2702 = vunpack.c.h.b16 %v480
        %v2703 = vunpack.c.l.b16 %v481
        %v2704 = vunpack.c.h.b16 %v481
        %v2705 = vunpack.c.l.b16 %v482
        %v2706 = vunpack.c.h.b16 %v482
        %v2707 = vunpack.c.l.b16 %v483
        %v2708 = vunpack.c.h.b16 %v483
        %v2709 = vunpack.c.l.b16 %v484
        %v2710 = vunpack.c.h.b16 %v484
        %v2711 = vunpack.c.l.b16 %v485
        %v2712 = vunpack.c.h.b16 %v485
        %v2713 = vunpack.c.l.b16 %v486
        %v2714 = vunpack.c.h.b16 %v486
        %v2715 = vunpack.c.l.b16 %v487
        %v2716 = vunpack.c.h.b16 %v487
        %v2717 = vunpack.c.l.b16 %v488
        %v2718 = vunpack.c.h.b16 %v488
        %v2719 = vunpack.c.l.b16 %v489
        %v2720 = vunpack.c.h.b16 %v489
        %v2721 = vunpack.c.l.b16 %v490
        %v2722 = vunpack.c.h.b16 %v490
        %v2723 = vunpack.c.l.b16 %v491
        %v2724 = vunpack.c.h.b16 %v491
        %v2725 = vunpack.c.l.b16 %v492
        %v2726 = vunpack.c.h.b16 %v492
        %v2727 = vunpack.c.l.b16 %v493
        %v2728 = vunpack.c.h.b16 %v493
        %v2729 = vunpack.c.l.b16 %v494
        %v2730 = vunpack.c.h.b16 %v494
        %v2731 = vunpack.c.l.b16 %v495
        %v2732 = vunpack.c.h.b16 %v495
        %v2733 = vunpack.c.l.b16 %v496
        %v2734 = vunpack.c.h.b16 %v496
        %v2735 = vunpack.c.l.b16 %v497
        %v2736 = vunpack.c.h.b16 %v497
        %v2737 = vunpack.c.l.b16 %v498
        %v2738 = vunpack.c.h.b16 %v498
        %v2739 = vunpack.c.l.b16 %v499
        %v2740 = vunpack.c.h.b16 %v499
        %v2741 = vunpack.c.l.b16 %v500
        %v2742 = vunpack.c.h.b16 %v500
        %v2743 = vunpack.c.l.b16 %v501
        %v2744 = vunpack.c.h.b16 %v501
        %v2745 = vunpack.c.l.b16 %v502
        %v2746 = vunpack.c.h.b16 %v502
        %v2747 = vunpack.c.l.b16 %v503
        %v2748 = vunpack.c.h.b16 %v503
        %v2749 = vunpack.c.l.b16 %v504
        %v2750 = vunpack.c.h.b16 %v504
        %v2751 = vunpack.c.l.b16 %v505
        %v2752 = vunpack.c.h.b16 %v505
        %v2753 = vunpack.c.l.b16 %v506
        %v2754 = vunpack.c.h.b16 %v506
        %v2755 = vunpack.c.l.b16 %v507
        %v2756 = vunpack.c.h.b16 %v507
        %v2757 = vunpack.c.l.b16 %v508
        %v2758 = vunpack.c.h.b16 %v508
        %v2759 = vunpack.c.l.b16 %v509
        %v2760 = vunpack.c.h.b16 %v509
        %v2761 = vunpack.c.l.b16 %v510
        %v2762 = vunpack.c.h.b16 %v510
        %v2763 = vunpack.c.l.b16 %v511
        %v2764 = vunpack.c.h.b16 %v511
        %v2765 = vunpack.c.l.b16 %v512
        %v2766 = vunpack.c.h.b16 %v512
        %v2767 = vunpack.c.l.b16 %v513
        %v2768 = vunpack.c.h.b16 %v513
        %v2769 = vunpack.c.l.b16 %v514
        %v2770 = vunpack.c.h.b16 %v514
        %v2771 = vunpack.c.l.b16 %v515
        %v2772 = vunpack.c.h.b16 %v515
        %v2773 = vunpack.c.l.b16 %v516
        %v2774 = vunpack.c.h.b16 %v516
        %v2775 = vunpack.c.l.b16 %v517
        %v2776 = vunpack.c.h.b16 %v517
        %v2777 = vunpack.c.l.b16 %v518
        %v2778 = vunpack.c.h.b16 %v518
        %v2779 = vunpack.c.l.b16 %v519
        %v2780 = vunpack.c.h.b16 %v519
        %v2781 = vunpack.c.l.b16 %v520
        %v2782 = vunpack.c.h.b16 %v520
        %v2783 = vunpack.c.l.b16 %v521
        %v2784 = vunpack.c.h.b16 %v521
        %v2785 = vunpack.c.l.b16 %v522
        %v2786 = vunpack.c.h.b16 %v522
        %v2787 = vunpack.c.l.b16 %v523
        %v2788 = vunpack.c.h.b16 %v523
        %v2789 = vunpack.c.l.b16 %v524
        %v2790 = vunpack.c.h.b16 %v524
        %v2791 = vunpack.c.l.b16 %v525
        %v2792 = vunpack.c.h.b16 %v525
        %v2793 = vunpack.c.l.b16 %v526
        %v2794 = vunpack.c.h.b16 %v526
        %v2795 = vunpack.c.l.b16 %v527
        %v2796 = vunpack.c.h.b16 %v527
        %v2797 = vunpack.c.l.b16 %v528
        %v2798 = vunpack.c.h.b16 %v528
        %v2799 = vunpack.c.l.b16 %v529
        %v2800 = vunpack.c.h.b16 %v529
        %v2801 = vunpack.c.l.b16 %v530
        %v2802 = vunpack.c.h.b16 %v530
        %v2803 = vunpack.c.l.b16 %v531
        %v2804 = vunpack.c.h.b16 %v531
        %v2805 = vunpack.c.l.b16 %v532
        %v2806 = vunpack.c.h.b16 %v532
        %v2807 = vunpack.c.l.b16 %v533
        %v2808 = vunpack.c.h.b16 %v533
        %v2809 = vunpack.c.l.b16 %v534
        %v2810 = vunpack.c.h.b16 %v534
        %v2811 = vunpack.c.l.b16 %v535
        %v2812 = vunpack.c.h.b16 %v535
        %v2813 = vunpack.c.l.b16 %v536
        %v2814 = vunpack.c.h.b16 %v536
        %v2815 = vunpack.c.l.b16 %v537
        %v2816 = vunpack.c.h.b16 %v537
        %v2817 = vunpack.c.l.b16 %v538
        %v2818 = vunpack.c.h.b16 %v538
        %v2819 = vunpack.c.l.b16 %v539
        %v2820 = vunpack.c.h.b16 %v539
        %v2821 = vunpack.c.l.b16 %v540
        %v2822 = vunpack.c.h.b16 %v540
        %v2823 = vunpack.c.l.b16 %v541
        %v2824 = vunpack.c.h.b16 %v541
        %v2825 = vunpack.c.l.b16 %v542
        %v2826 = vunpack.c.h.b16 %v542
        %v2827 = vunpack.c.l.b16 %v543
        %v2828 = vunpack.c.h.b16 %v543
        %v2829 = vunpack.c.l.b16 %v544
        %v2830 = vunpack.c.h.b16 %v544
        %v2831 = vunpack.c.l.b16 %v545
        %v2832 = vunpack.c.h.b16 %v545
        %v2833 = vunpack.c.l.b16 %v546
        %v2834 = vunpack.c.h.b16 %v546
        %v2835 = vunpack.c.l.b16 %v547
        %v2836 = vunpack.c.h.b16 %v547
        %v2837 = vunpack.c.l.b16 %v548
        %v2838 = vunpack.c.h.b16 %v548
        %v2839 = vunpack.c.l.b16 %v549
        %v2840 = vunpack.c.h.b16 %v549
        %v2841 = vunpack.c.l.b16 %v550
        %v2842 = vunpack.c.h.b16 %v550
        %v2843 = vunpack.c.l.b16 %v551
        %v2844 = vunpack.c.h.b16 %v551
        %v2845 = vunpack.c.l.b16 %v552
        %v2846 = vunpack.c.h.b16 %v552
        %v2847 = vunpack.c.l.b16 %v553
        %v2848 = vunpack.c.h.b16 %v553
        %v2849 = vunpack.c.l.b16 %v554
        %v2850 = vunpack.c.h.b16 %v554
        %v2851 = vunpack.c.l.b16 %v555
        %v2852 = vunpack.c.h.b16 %v555
        %v2853 = vunpack.c.l.b16 %v556
        %v2854 = vunpack.c.h.b16 %v556
        %v2855 = vunpack.c.l.b16 %v557
        %v2856 = vunpack.c.h.b16 %v557
        %v2857 = vunpack.c.l.b16 %v558
        %v2858 = vunpack.c.h.b16 %v558
        %v2859 = vunpack.c.l.b16 %v559
        %v2860 = vunpack.c.h.b16 %v559
        %v2861 = vunpack.c.l.b16 %v560
        %v2862 = vunpack.c.h.b16 %v560
        %v2863 = vunpack.c.l.b16 %v561
        %v2864 = vunpack.c.h.b16 %v561
        %v2865 = vunpack.c.l.b16 %v562
        %v2866 = vunpack.c.h.b16 %v562
        %v2867 = vunpack.c.l.b16 %v563
        %v2868 = vunpack.c.h.b16 %v563
        %v2869 = vunpack.c.l.b16 %v564
        %v2870 = vunpack.c.h.b16 %v564
        %v2871 = vunpack.c.l.b16 %v565
        %v2872 = vunpack.c.h.b16 %v565
        %v2873 = vunpack.c.l.b16 %v566
        %v2874 = vunpack.c.h.b16 %v566
        %v2875 = vunpack.c.l.b16 %v567
        %v2876 = vunpack.c.h.b16 %v567
        %v2877 = vunpack.c.l.b16 %v568
        %v2878 = vunpack.c.h.b16 %v568
        %v2879 = vunpack.c.l.b16 %v569
        %v2880 = vunpack.c.h.b16 %v569
        %v2881 = vunpack.c.l.b16 %v570
        %v2882 = vunpack.c.h.b16 %v570
        %v2883 = vunpack.c.l.b16 %v571
        %v2884 = vunpack.c.h.b16 %v571
        %v2885 = vunpack.c.l.b16 %v572
        %v2886 = vunpack.c.h.b16 %v572
        %v2887 = vunpack.c.l.b16 %v573
        %v2888 = vunpack.c.h.b16 %v573
        %v2889 = vunpack.c.l.b16 %v574
        %v2890 = vunpack.c.h.b16 %v574
        %v2891 = vunpack.c.l.b16 %v575
        %v2892 = vunpack.c.h.b16 %v575
        %v2893 = vunpack.c.l.b16 %v576
        %v2894 = vunpack.c.h.b16 %v576
        %v2895 = vunpack.c.l.b16 %v577
        %v2896 = vunpack.c.h.b16 %v577
        %v2897 = vunpack.c.l.b16 %v578
        %v2898 = vunpack.c.h.b16 %v578
        %v2899 = vunpack.c.l.b16 %v579
        %v2900 = vunpack.c.h.b16 %v579
        %v2901 = vunpack.c.l.b16 %v580
        %v2902 = vunpack.c.h.b16 %v580
        %v2903 = vunpack.c.l.b16 %v581
        %v2904 = vunpack.c.h.b16 %v581
        %v2905 = vunpack.c.l.b16 %v582
        %v2906 = vunpack.c.h.b16 %v582
        %v2907 = vunpack.c.l.b16 %v583
        %v2908 = vunpack.c.h.b16 %v583
        %v2909 = vunpack.c.l.b16 %v584
        %v2910 = vunpack.c.h.b16 %v584
        %v2911 = vunpack.c.l.b16 %v585
        %v2912 = vunpack.c.h.b16 %v585
        %v2913 = vunpack.c.l.b16 %v586
        %v2914 = vunpack.c.h.b16 %v586
        %v2915 = vunpack.c.l.b16 %v587
        %v2916 = vunpack.c.h.b16 %v587
        %v2917 = vunpack.c.l.b16 %v588
        %v2918 = vunpack.c.h.b16 %v588
        %v2919 = vunpack.c.l.b16 %v589
        %v2920 = vunpack.c.h.b16 %v589
        %v2921 = vunpack.c.l.b16 %v590
        %v2922 = vunpack.c.h.b16 %v590
        %v2923 = vunpack.c.l.b16 %v591
        %v2924 = vunpack.c.h.b16 %v591
        %v2925 = vunpack.c.l.b16 %v592
        %v2926 = vunpack.c.h.b16 %v592
        %v2927 = vunpack.c.l.b16 %v593
        %v2928 = vunpack.c.h.b16 %v593
        %v2929 = vunpack.c.l.b16 %v594
        %v2930 = vunpack.c.h.b16 %v594
        %v2931 = vunpack.c.l.b16 %v595
        %v2932 = vunpack.c.h.b16 %v595
        %v2933 = vunpack.c.l.b16 %v596
        %v2934 = vunpack.c.h.b16 %v596
        %v2935 = vunpack.c.l.b16 %v597
        %v2936 = vunpack.c.h.b16 %v597
        %v2937 = vunpack.c.l.b16 %v598
        %v2938 = vunpack.c.h.b16 %v598
        %v2939 = vunpack.c.l.b16 %v599
        %v2940 = vunpack.c.h.b16 %v599
        %v2941 = vunpack.c.l.b16 %v600
        %v2942 = vunpack.c.h.b16 %v600
        %v2943 = vunpack.c.l.b16 %v601
        %v2944 = vunpack.c.h.b16 %v601
        %v2945 = vunpack.c.l.b16 %v602
        %v2946 = vunpack.c.h.b16 %v602
        %v2947 = vunpack.c.l.b16 %v603
        %v2948 = vunpack.c.h.b16 %v603
        %v2949 = vunpack.c.l.b16 %v604
        %v2950 = vunpack.c.h.b16 %v604
        %v2951 = vunpack.c.l.b16 %v605
        %v2952 = vunpack.c.h.b16 %v605
        %v2953 = vunpack.c.l.b16 %v606
        %v2954 = vunpack.c.h.b16 %v606
        %v2955 = vunpack.c.l.b16 %v607
        %v2956 = vunpack.c.h.b16 %v607
        %v2957 = vunpack.c.l.b16 %v608
        %v2958 = vunpack.c.h.b16 %v608
        %v2959 = vunpack.c.l.b16 %v609
        %v2960 = vunpack.c.h.b16 %v609
        %v2961 = vunpack.c.l.b16 %v610
        %v2962 = vunpack.c.h.b16 %v610
        %v2963 = vunpack.c.l.b16 %v611
        %v2964 = vunpack.c.h.b16 %v611
        %v2965 = vunpack.c.l.b16 %v612
        %v2966 = vunpack.c.h.b16 %v612
        %v2967 = vunpack.c.l.b16 %v613
        %v2968 = vunpack.c.h.b16 %v613
        %v2969 = vunpack.c.l.b16 %v614
        %v2970 = vunpack.c.h.b16 %v614
        %v2971 = vunpack.c.l.b16 %v615
        %v2972 = vunpack.c.h.b16 %v615
        %v2973 = vunpack.c.l.b16 %v616
        %v2974 = vunpack.c.h.b16 %v616
        %v2975 = vunpack.c.l.b16 %v617
        %v2976 = vunpack.c.h.b16 %v617
        %v2977 = vunpack.c.l.b16 %v618
        %v2978 = vunpack.c.h.b16 %v618
        %v2979 = vunpack.c.l.b16 %v619
        %v2980 = vunpack.c.h.b16 %v619
        %v2981 = vunpack.c.l.b16 %v620
        %v2982 = vunpack.c.h.b16 %v620
        %v2983 = vunpack.c.l.b16 %v621
        %v2984 = vunpack.c.h.b16 %v621
        %v2985 = vunpack.c.l.b16 %v622
        %v2986 = vunpack.c.h.b16 %v622
        %v2987 = vunpack.c.l.b16 %v623
        %v2988 = vunpack.c.h.b16 %v623
        %v2989 = vunpack.c.l.b16 %v624
        %v2990 = vunpack.c.h.b16 %v624
        %v2991 = vunpack.c.l.b16 %v625
        %v2992 = vunpack.c.h.b16 %v625
        %v2993 = vunpack.c.l.b16 %v626
        %v2994 = vunpack.c.h.b16 %v626
        %v2995 = vunpack.c.l.b16 %v627
        %v2996 = vunpack.c.h.b16 %v627
        %v2997 = vunpack.c.l.b16 %v628
        %v2998 = vunpack.c.h.b16 %v628
        %v2999 = vunpack.c.l.b16 %v629
        %v3000 = vunpack.c.h.b16 %v629
        %v3001 = vunpack.c.l.b16 %v630
        %v3002 = vunpack.c.h.b16 %v630
        %v3003 = vunpack.c.l.b16 %v631
        %v3004 = vunpack.c.h.b16 %v631
        %v3005 = vunpack.c.l.b16 %v632
        %v3006 = vunpack.c.h.b16 %v632
        %v3007 = vunpack.c.l.b16 %v633
        %v3008 = vunpack.c.h.b16 %v633
        %v3009 = vunpack.c.l.b16 %v634
        %v3010 = vunpack.c.h.b16 %v634
        %v3011 = vunpack.c.l.b16 %v635
        %v3012 = vunpack.c.h.b16 %v635
        %v3013 = vunpack.c.l.b16 %v636
        %v3014 = vunpack.c.h.b16 %v636
        %v3015 = vunpack.c.l.b16 %v637
        %v3016 = vunpack.c.h.b16 %v637
        %v3017 = vunpack.c.l.b16 %v638
        %v3018 = vunpack.c.h.b16 %v638
        %v3019 = vunpack.c.l.b16 %v639
        %v3020 = vunpack.c.h.b16 %v639
        %v3021 = vunpack.c.l.b16 %v640
        %v3022 = vunpack.c.h.b16 %v640
        %v3023 = vunpack.c.l.b16 %v641
        %v3024 = vunpack.c.h.b16 %v641
        %v3025 = vunpack.c.l.b16 %v642
        %v3026 = vunpack.c.h.b16 %v642
        %v3027 = vunpack.c.l.b16 %v643
        %v3028 = vunpack.c.h.b16 %v643
        %v3029 = vunpack.c.l.b16 %v644
        %v3030 = vunpack.c.h.b16 %v644
        %v3031 = vunpack.c.l.b16 %v645
        %v3032 = vunpack.c.h.b16 %v645
        %v3033 = vunpack.c.l.b16 %v646
        %v3034 = vunpack.c.h.b16 %v646
        %v3035 = vunpack.c.l.b16 %v647
        %v3036 = vunpack.c.h.b16 %v647
        %v3037 = vunpack.c.l.b16 %v648
        %v3038 = vunpack.c.h.b16 %v648
        %v3039 = vunpack.c.l.b16 %v649
        %v3040 = vunpack.c.h.b16 %v649
        %v3041 = vunpack.c.l.b16 %v650
        %v3042 = vunpack.c.h.b16 %v650
        %v3043 = vunpack.c.l.b16 %v651
        %v3044 = vunpack.c.h.b16 %v651
        %v3045 = vunpack.c.l.b16 %v652
        %v3046 = vunpack.c.h.b16 %v652
        %v3047 = vunpack.c.l.b16 %v653
        %v3048 = vunpack.c.h.b16 %v653
        %v3049 = vunpack.c.l.b16 %v654
        %v3050 = vunpack.c.h.b16 %v654
        %v3051 = vunpack.c.l.b16 %v655
        %v3052 = vunpack.c.h.b16 %v655
        %v3053 = vunpack.c.l.b16 %v656
        %v3054 = vunpack.c.h.b16 %v656
        %v3055 = vunpack.c.l.b16 %v657
        %v3056 = vunpack.c.h.b16 %v657
        %v3057 = vunpack.c.l.b16 %v658
        %v3058 = vunpack.c.h.b16 %v658
        %v3059 = vunpack.c.l.b16 %v659
        %v3060 = vunpack.c.h.b16 %v659
        %v3061 = vunpack.c.l.b16 %v660
        %v3062 = vunpack.c.h.b16 %v660
        %v3063 = vunpack.c.l.b16 %v661
        %v3064 = vunpack.c.h.b16 %v661
        %v3065 = vunpack.c.l.b16 %v662
        %v3066 = vunpack.c.h.b16 %v662
        %v3067 = vunpack.c.l.b16 %v663
        %v3068 = vunpack.c.h.b16 %v663
        %v3069 = vunpack.c.l.b16 %v664
        %v3070 = vunpack.c.h.b16 %v664
        %v3071 = vunpack.c.l.b16 %v665
        %v3072 = vunpack.c.h.b16 %v665
        %v3073 = vunpack.c.l.b16 %v666
        %v3074 = vunpack.c.h.b16 %v666
        %v3075 = vunpack.c.l.b16 %v667
        %v3076 = vunpack.c.h.b16 %v667
        %v3077 = vunpack.c.l.b16 %v668
        %v3078 = vunpack.c.h.b16 %v668
        %v3079 = vunpack.c.l.b16 %v669
        %v3080 = vunpack.c.h.b16 %v669
        %v3081 = vunpack.c.l.b16 %v670
        %v3082 = vunpack.c.h.b16 %v670
        %v3083 = vunpack.c.l.b16 %v671
        %v3084 = vunpack.c.h.b16 %v671
        %v3085 = vunpack.c.l.b16 %v672
        %v3086 = vunpack.c.h.b16 %v672
        %v3087 = vunpack.c.l.b16 %v673
        %v3088 = vunpack.c.h.b16 %v673
        %v3089 = vunpack.c.l.b16 %v674
        %v3090 = vunpack.c.h.b16 %v674
        %v3091 = vunpack.c.l.b16 %v675
        %v3092 = vunpack.c.h.b16 %v675
        %v3093 = vunpack.c.l.b16 %v676
        %v3094 = vunpack.c.h.b16 %v676
        %v3095 = vunpack.c.l.b16 %v677
        %v3096 = vunpack.c.h.b16 %v677
        %v3097 = vunpack.c.l.b16 %v678
        %v3098 = vunpack.c.h.b16 %v678
        %v3099 = vunpack.c.l.b16 %v679
        %v3100 = vunpack.c.h.b16 %v679
        %v3101 = vunpack.c.l.b16 %v680
        %v3102 = vunpack.c.h.b16 %v680
        %v3103 = vunpack.c.l.b16 %v681
        %v3104 = vunpack.c.h.b16 %v681
        %v3105 = vunpack.c.l.b16 %v682
        %v3106 = vunpack.c.h.b16 %v682
        %v3107 = vunpack.c.l.b16 %v683
        %v3108 = vunpack.c.h.b16 %v683
        %v3109 = vunpack.c.l.b16 %v684
        %v3110 = vunpack.c.h.b16 %v684
        %v3111 = vunpack.c.l.b16 %v685
        %v3112 = vunpack.c.h.b16 %v685
        %v3113 = vunpack.c.l.b16 %v686
        %v3114 = vunpack.c.h.b16 %v686
        %v3115 = vunpack.c.l.b16 %v687
        %v3116 = vunpack.c.h.b16 %v687
        %v3117 = vunpack.c.l.b16 %v688
        %v3118 = vunpack.c.h.b16 %v688
        %v3119 = vunpack.c.l.b16 %v689
        %v3120 = vunpack.c.h.b16 %v689
        %v3121 = vunpack.c.l.b16 %v690
        %v3122 = vunpack.c.h.b16 %v690
        %v3123 = vunpack.c.l.b16 %v691
        %v3124 = vunpack.c.h.b16 %v691
        %v3125 = vunpack.c.l.b16 %v692
        %v3126 = vunpack.c.h.b16 %v692
        %v3127 = vunpack.c.l.b16 %v693
        %v3128 = vunpack.c.h.b16 %v693
        %v3129 = vunpack.c.l.b16 %v694
        %v3130 = vunpack.c.h.b16 %v694
        %v3131 = vunpack.c.l.b16 %v695
        %v3132 = vunpack.c.h.b16 %v695
        %v3133 = vunpack.c.l.b16 %v696
        %v3134 = vunpack.c.h.b16 %v696
        %v3135 = vunpack.c.l.b16 %v697
        %v3136 = vunpack.c.h.b16 %v697
        %v3137 = vunpack.c.l.b16 %v698
        %v3138 = vunpack.c.h.b16 %v698
        %v3139 = vunpack.c.l.b16 %v699
        %v3140 = vunpack.c.h.b16 %v699
        %v3141 = vunpack.c.l.b16 %v700
        %v3142 = vunpack.c.h.b16 %v700
        %v3143 = vunpack.c.l.b16 %v701
        %v3144 = vunpack.c.h.b16 %v701
        %v3145 = vunpack.c.l.b16 %v702
        %v3146 = vunpack.c.h.b16 %v702
        %v3147 = vunpack.c.l.b16 %v703
        %v3148 = vunpack.c.h.b16 %v703
        %v3149 = vunpack.c.l.b16 %v704
        %v3150 = vunpack.c.h.b16 %v704
        %v3151 = vunpack.c.l.b16 %v705
        %v3152 = vunpack.c.h.b16 %v705
        %v3153 = vunpack.c.l.b16 %v706
        %v3154 = vunpack.c.h.b16 %v706
        %v3155 = vunpack.c.l.b16 %v707
        %v3156 = vunpack.c.h.b16 %v707
        %v3157 = vunpack.c.l.b16 %v708
        %v3158 = vunpack.c.h.b16 %v708
        %v3159 = vunpack.c.l.b16 %v709
        %v3160 = vunpack.c.h.b16 %v709
        %v3161 = vunpack.c.l.b16 %v710
        %v3162 = vunpack.c.h.b16 %v710
        %v3163 = vunpack.c.l.b16 %v711
        %v3164 = vunpack.c.h.b16 %v711
        %v3165 = vunpack.c.l.b16 %v712
        %v3166 = vunpack.c.h.b16 %v712
        %v3167 = vunpack.c.l.b16 %v713
        %v3168 = vunpack.c.h.b16 %v713
        %v3169 = vunpack.c.l.b16 %v714
        %v3170 = vunpack.c.h.b16 %v714
        %v3171 = vunpack.c.l.b16 %v715
        %v3172 = vunpack.c.h.b16 %v715
        %v3173 = vunpack.c.l.b16 %v716
        %v3174 = vunpack.c.h.b16 %v716
        %v3175 = vunpack.c.l.b16 %v717
        %v3176 = vunpack.c.h.b16 %v717
        %v3177 = vunpack.c.l.b16 %v718
        %v3178 = vunpack.c.h.b16 %v718
        %v3179 = vunpack.c.l.b16 %v719
        %v3180 = vunpack.c.h.b16 %v719
        %v3181 = vunpack.c.l.b16 %v720
        %v3182 = vunpack.c.h.b16 %v720
        %v3183 = vunpack.c.l.b16 %v721
        %v3184 = vunpack.c.h.b16 %v721
        %v3185 = vunpack.c.l.b16 %v722
        %v3186 = vunpack.c.h.b16 %v722
        %v3187 = vunpack.c.l.b16 %v723
        %v3188 = vunpack.c.h.b16 %v723
        %v3189 = vunpack.c.l.b16 %v724
        %v3190 = vunpack.c.h.b16 %v724
        %v3191 = vunpack.c.l.b16 %v725
        %v3192 = vunpack.c.h.b16 %v725
        %v3193 = vunpack.c.l.b16 %v726
        %v3194 = vunpack.c.h.b16 %v726
        %v3195 = vunpack.c.l.b16 %v727
        %v3196 = vunpack.c.h.b16 %v727
        %v3197 = vunpack.c.l.b16 %v728
        %v3198 = vunpack.c.h.b16 %v728
        %v3199 = vunpack.c.l.b16 %v729
        %v3200 = vunpack.c.h.b16 %v729
        %v3201 = vunpack.c.l.b16 %v730
        %v3202 = vunpack.c.h.b16 %v730
        %v3203 = vunpack.c.l.b16 %v731
        %v3204 = vunpack.c.h.b16 %v731
        %v3205 = vunpack.c.l.b16 %v732
        %v3206 = vunpack.c.h.b16 %v732
        %v3207 = vunpack.c.l.b16 %v733
        %v3208 = vunpack.c.h.b16 %v733
        %v3209 = vunpack.c.l.b16 %v734
        %v3210 = vunpack.c.h.b16 %v734
        %v3211 = vunpack.c.l.b16 %v735
        %v3212 = vunpack.c.h.b16 %v735
        %v3213 = vunpack.c.l.b16 %v736
        %v3214 = vunpack.c.h.b16 %v736
        %v3215 = vunpack.c.l.b16 %v737
        %v3216 = vunpack.c.h.b16 %v737
        %v3217 = vunpack.c.l.b16 %v738
        %v3218 = vunpack.c.h.b16 %v738
        %v3219 = vunpack.c.l.b16 %v739
        %v3220 = vunpack.c.h.b16 %v739
        %v3221 = vunpack.c.l.b16 %v740
        %v3222 = vunpack.c.h.b16 %v740
        %v3223 = vunpack.c.l.b16 %v741
        %v3224 = vunpack.c.h.b16 %v741
        %v3225 = vunpack.c.l.b16 %v742
        %v3226 = vunpack.c.h.b16 %v742
        %v3227 = vunpack.c.l.b16 %v743
        %v3228 = vunpack.c.h.b16 %v743
        %v3229 = vunpack.c.l.b16 %v744
        %v3230 = vunpack.c.h.b16 %v744
        %v3231 = vunpack.c.l.b16 %v745
        %v3232 = vunpack.c.h.b16 %v745
        %v3233 = vunpack.c.l.b16 %v746
        %v3234 = vunpack.c.h.b16 %v746
        %v3235 = vunpack.c.l.b16 %v747
        %v3236 = vunpack.c.h.b16 %v747
        %v3237 = vunpack.c.l.b16 %v748
        %v3238 = vunpack.c.h.b16 %v748
        %v3239 = vunpack.c.l.b16 %v749
        %v3240 = vunpack.c.h.b16 %v749
        %v3241 = vunpack.c.l.b16 %v750
        %v3242 = vunpack.c.h.b16 %v750
        %v3243 = vunpack.c.l.b16 %v751
        %v3244 = vunpack.c.h.b16 %v751
        %v3245 = vunpack.c.l.b16 %v752
        %v3246 = vunpack.c.h.b16 %v752
        %v3247 = vunpack.c.l.b16 %v753
        %v3248 = vunpack.c.h.b16 %v753
        %v3249 = vunpack.c.l.b16 %v754
        %v3250 = vunpack.c.h.b16 %v754
        %v3251 = vunpack.c.l.b16 %v755
        %v3252 = vunpack.c.h.b16 %v755
        %v3253 = vunpack.c.l.b16 %v756
        %v3254 = vunpack.c.h.b16 %v756
        %v3255 = vunpack.c.l.b16 %v757
        %v3256 = vunpack.c.h.b16 %v757
        %v3257 = vunpack.c.l.b16 %v758
        %v3258 = vunpack.c.h.b16 %v758
        %v3259 = vunpack.c.l.b16 %v759
        %v3260 = vunpack.c.h.b16 %v759
        %v3261 = vunpack.c.l.b16 %v760
        %v3262 = vunpack.c.h.b16 %v760
        %v3263 = vunpack.c.l.b16 %v761
        %v3264 = vunpack.c.h.b16 %v761
        %v3265 = vunpack.c.l.b16 %v762
        %v3266 = vunpack.c.h.b16 %v762
        %v3267 = vunpack.c.l.b16 %v763
        %v3268 = vunpack.c.h.b16 %v763
        %v3269 = vunpack.c.l.b16 %v764
        %v3270 = vunpack.c.h.b16 %v764
        %v3271 = vunpack.c.l.b16 %v765
        %v3272 = vunpack.c.h.b16 %v765
        %v3273 = vunpack.c.l.b16 %v766
        %v3274 = vunpack.c.h.b16 %v766
        %v3275 = vunpack.c.l.b16 %v767
        %v3276 = vunpack.c.h.b16 %v767
        %v3277 = vunpack.c.l.b16 %v768
        %v3278 = vunpack.c.h.b16 %v768
        %v3279 = vunpack.c.l.b16 %v769
        %v3280 = vunpack.c.h.b16 %v769
        %v3281 = vunpack.c.l.b16 %v770
        %v3282 = vunpack.c.h.b16 %v770
        %v3283 = vunpack.c.l.b16 %v771
        %v3284 = vunpack.c.h.b16 %v771
        %v3285 = vunpack.c.l.b16 %v772
        %v3286 = vunpack.c.h.b16 %v772
        %v3287 = vunpack.c.l.b16 %v773
        %v3288 = vunpack.c.h.b16 %v773
        %v3289 = vunpack.c.l.b16 %v774
        %v3290 = vunpack.c.h.b16 %v774
        %v3291 = vunpack.c.l.b16 %v775
        %v3292 = vunpack.c.h.b16 %v775
        %v3293 = vunpack.c.l.b16 %v776
        %v3294 = vunpack.c.h.b16 %v776
        %v3295 = vunpack.c.l.b16 %v777
        %v3296 = vunpack.c.h.b16 %v777
        %v3297 = vunpack.c.l.b16 %v778
        %v3298 = vunpack.c.h.b16 %v778
        %v3299 = vunpack.c.l.b16 %v779
        %v3300 = vunpack.c.h.b16 %v779
        %v3301 = vunpack.c.l.b16 %v780
        %v3302 = vunpack.c.h.b16 %v780
        %v3303 = vunpack.c.l.b16 %v781
        %v3304 = vunpack.c.h.b16 %v781
        %v3305 = vunpack.c.l.b16 %v782
        %v3306 = vunpack.c.h.b16 %v782
        %v3307 = vunpack.c.l.b16 %v783
        %v3308 = vunpack.c.h.b16 %v783
        %v3309 = vunpack.c.l.b16 %v784
        %v3310 = vunpack.c.h.b16 %v784
        %v3311 = vunpack.c.l.b16 %v785
        %v3312 = vunpack.c.h.b16 %v785
        %v3313 = vunpack.c.l.b16 %v786
        %v3314 = vunpack.c.h.b16 %v786
        %v3315 = vunpack.c.l.b16 %v787
        %v3316 = vunpack.c.h.b16 %v787
        %v3317 = vunpack.c.l.b16 %v788
        %v3318 = vunpack.c.h.b16 %v788
        %v3319 = vunpack.c.l.b16 %v789
        %v3320 = vunpack.c.h.b16 %v789
        %v3321 = vunpack.c.l.b16 %v790
        %v3322 = vunpack.c.h.b16 %v790
        %v3323 = vunpack.c.l.b16 %v791
        %v3324 = vunpack.c.h.b16 %v791
        %v3325 = vunpack.c.l.b16 %v792
        %v3326 = vunpack.c.h.b16 %v792
        %v3327 = vunpack.c.l.b16 %v793
        %v3328 = vunpack.c.h.b16 %v793
        %v3329 = vunpack.c.l.b16 %v794
        %v3330 = vunpack.c.h.b16 %v794
        %v3331 = vunpack.c.l.b16 %v795
        %v3332 = vunpack.c.h.b16 %v795
        %v3333 = vunpack.c.l.b16 %v796
        %v3334 = vunpack.c.h.b16 %v796
        %v3335 = vunpack.c.l.b16 %v797
        %v3336 = vunpack.c.h.b16 %v797
        %v3337 = vunpack.c.l.b16 %v798
        %v3338 = vunpack.c.h.b16 %v798
        %v3339 = vunpack.c.l.b16 %v799
        %v3340 = vunpack.c.h.b16 %v799
        %v3341 = vunpack.c.l.b16 %v800
        %v3342 = vunpack.c.h.b16 %v800
        %v3343 = vunpack.c.l.b16 %v801
        %v3344 = vunpack.c.h.b16 %v801
        %v3345 = vunpack.c.l.b16 %v802
        %v3346 = vunpack.c.h.b16 %v802
        %v3347 = vunpack.c.l.b16 %v803
        %v3348 = vunpack.c.h.b16 %v803
        %v3349 = vunpack.c.l.b16 %v804
        %v3350 = vunpack.c.h.b16 %v804
        %v3351 = vunpack.c.l.b16 %v805
        %v3352 = vunpack.c.h.b16 %v805
        %v3353 = vunpack.c.l.b16 %v806
        %v3354 = vunpack.c.h.b16 %v806
        %v3355 = vunpack.c.l.b16 %v807
        %v3356 = vunpack.c.h.b16 %v807
        %v3357 = vunpack.c.l.b16 %v808
        %v3358 = vunpack.c.h.b16 %v808
        %v3359 = vunpack.c.l.b16 %v809
        %v3360 = vunpack.c.h.b16 %v809
        %v3361 = vunpack.c.l.b16 %v810
        %v3362 = vunpack.c.h.b16 %v810
        %v3363 = vunpack.c.l.b16 %v811
        %v3364 = vunpack.c.h.b16 %v811
        %v3365 = vunpack.c.l.b16 %v812
        %v3366 = vunpack.c.h.b16 %v812
        %v3367 = vunpack.c.l.b16 %v813
        %v3368 = vunpack.c.h.b16 %v813
        %v3369 = vunpack.c.l.b16 %v814
        %v3370 = vunpack.c.h.b16 %v814
        %v3371 = vunpack.c.l.b16 %v815
        %v3372 = vunpack.c.h.b16 %v815
        %v3373 = vunpack.c.l.b16 %v816
        %v3374 = vunpack.c.h.b16 %v816
        %v3375 = vunpack.c.l.b16 %v817
        %v3376 = vunpack.c.h.b16 %v817
        %v3377 = vunpack.c.l.b16 %v818
        %v3378 = vunpack.c.h.b16 %v818
        %v3379 = vunpack.c.l.b16 %v819
        %v3380 = vunpack.c.h.b16 %v819
        %v3381 = vunpack.c.l.b16 %v820
        %v3382 = vunpack.c.h.b16 %v820
        %v3383 = vunpack.c.l.b16 %v821
        %v3384 = vunpack.c.h.b16 %v821
        %v3385 = vunpack.c.l.b16 %v822
        %v3386 = vunpack.c.h.b16 %v822
        %v3387 = vunpack.c.l.b16 %v823
        %v3388 = vunpack.c.h.b16 %v823
        %v3389 = vunpack.c.l.b16 %v824
        %v3390 = vunpack.c.h.b16 %v824
        %v3391 = vunpack.c.l.b16 %v825
        %v3392 = vunpack.c.h.b16 %v825
        %v3393 = vunpack.c.l.b16 %v826
        %v3394 = vunpack.c.h.b16 %v826
        %v3395 = vunpack.c.l.b16 %v827
        %v3396 = vunpack.c.h.b16 %v827
        %v3397 = vunpack.c.l.b16 %v828
        %v3398 = vunpack.c.h.b16 %v828
        %v3399 = vunpack.c.l.b16 %v829
        %v3400 = vunpack.c.h.b16 %v829
        %v3401 = vunpack.c.l.b16 %v830
        %v3402 = vunpack.c.h.b16 %v830
        %v3403 = vunpack.c.l.b16 %v831
        %v3404 = vunpack.c.h.b16 %v831
        %v3405 = vunpack.c.l.b16 %v832
        %v3406 = vunpack.c.h.b16 %v832
        %v3407 = vunpack.c.l.b16 %v833
        %v3408 = vunpack.c.h.b16 %v833
        %v3409 = vunpack.c.l.b16 %v834
        %v3410 = vunpack.c.h.b16 %v834
        %v3411 = vunpack.c.l.b16 %v835
        %v3412 = vunpack.c.h.b16 %v835
        %v3413 = vunpack.c.l.b16 %v836
        %v3414 = vunpack.c.h.b16 %v836
        %v3415 = vunpack.c.l.b16 %v837
        %v3416 = vunpack.c.h.b16 %v837
        %v3417 = vunpack.c.l.b16 %v838
        %v3418 = vunpack.c.h.b16 %v838
        %v3419 = vunpack.c.l.b16 %v839
        %v3420 = vunpack.c.h.b16 %v839
        %v3421 = vunpack.c.l.b16 %v840
        %v3422 = vunpack.c.h.b16 %v840
        %v3423 = vunpack.c.l.b16 %v841
        %v3424 = vunpack.c.h.b16 %v841
        %v3425 = vunpack.c.l.b16 %v842
        %v3426 = vunpack.c.h.b16 %v842
        %v3427 = vunpack.c.l.b16 %v843
        %v3428 = vunpack.c.h.b16 %v843
        %v3429 = vunpack.c.l.b16 %v844
        %v3430 = vunpack.c.h.b16 %v844
        %v3431 = vunpack.c.l.b16 %v845
        %v3432 = vunpack.c.h.b16 %v845
        %v3433 = vunpack.c.l.b16 %v846
        %v3434 = vunpack.c.h.b16 %v846
        %v3435 = vunpack.c.l.b16 %v847
        %v3436 = vunpack.c.h.b16 %v847
        %v3437 = vunpack.c.l.b16 %v848
        %v3438 = vunpack.c.h.b16 %v848
        %v3439 = vunpack.c.l.b16 %v849
        %v3440 = vunpack.c.h.b16 %v849
        %v3441 = vunpack.c.l.b16 %v850
        %v3442 = vunpack.c.h.b16 %v850
        %v3443 = vunpack.c.l.b16 %v851
        %v3444 = vunpack.c.h.b16 %v851
        %v3445 = vunpack.c.l.b16 %v852
        %v3446 = vunpack.c.h.b16 %v852
        %v3447 = vunpack.c.l.b16 %v853
        %v3448 = vunpack.c.h.b16 %v853
        %v3449 = vunpack.c.l.b16 %v854
        %v3450 = vunpack.c.h.b16 %v854
        %v3451 = vunpack.c.l.b16 %v855
        %v3452 = vunpack.c.h.b16 %v855
        %v3453 = vunpack.c.l.b16 %v856
        %v3454 = vunpack.c.h.b16 %v856
        %v3455 = vunpack.c.l.b16 %v857
        %v3456 = vunpack.c.h.b16 %v857
        %v3457 = vunpack.c.l.b16 %v858
        %v3458 = vunpack.c.h.b16 %v858
        %v3459 = vunpack.c.l.b16 %v859
        %v3460 = vunpack.c.h.b16 %v859
        %v3461 = vunpack.c.l.b16 %v860
        %v3462 = vunpack.c.h.b16 %v860
        %v3463 = vunpack.c.l.b16 %v861
        %v3464 = vunpack.c.h.b16 %v861
        %v3465 = vunpack.c.l.b16 %v862
        %v3466 = vunpack.c.h.b16 %v862
        %v3467 = vunpack.c.l.b16 %v863
        %v3468 = vunpack.c.h.b16 %v863
        %v3469 = vunpack.c.l.b16 %v864
        %v3470 = vunpack.c.h.b16 %v864
        %v3471 = vunpack.c.l.b16 %v865
        %v3472 = vunpack.c.h.b16 %v865
        %v3473 = vunpack.c.l.b16 %v866
        %v3474 = vunpack.c.h.b16 %v866
        %v3475 = vunpack.c.l.b16 %v867
        %v3476 = vunpack.c.h.b16 %v867
        %v3477 = vunpack.c.l.b16 %v868
        %v3478 = vunpack.c.h.b16 %v868
        %v3479 = vunpack.c.l.b16 %v869
        %v3480 = vunpack.c.h.b16 %v869
        %v3481 = vunpack.c.l.b16 %v870
        %v3482 = vunpack.c.h.b16 %v870
        %v3483 = vunpack.c.l.b16 %v871
        %v3484 = vunpack.c.h.b16 %v871
        %v3485 = vunpack.c.l.b16 %v872
        %v3486 = vunpack.c.h.b16 %v872
        %v3487 = vunpack.c.l.b16 %v873
        %v3488 = vunpack.c.h.b16 %v873
        %v3489 = vunpack.c.l.b16 %v874
        %v3490 = vunpack.c.h.b16 %v874
        %v3491 = vunpack.c.l.b16 %v875
        %v3492 = vunpack.c.h.b16 %v875
        %v3493 = vunpack.c.l.b16 %v876
        %v3494 = vunpack.c.h.b16 %v876
        %v3495 = vunpack.c.l.b16 %v877
        %v3496 = vunpack.c.h.b16 %v877
        %v3497 = vunpack.c.l.b16 %v878
        %v3498 = vunpack.c.h.b16 %v878
        %v3499 = vunpack.c.l.b16 %v879
        %v3500 = vunpack.c.h.b16 %v879
        %v3501 = vunpack.c.l.b16 %v880
        %v3502 = vunpack.c.h.b16 %v880
        %v3503 = vunpack.c.l.b16 %v881
        %v3504 = vunpack.c.h.b16 %v881
        %v3505 = vunpack.c.l.b16 %v882
        %v3506 = vunpack.c.h.b16 %v882
        %v3507 = vunpack.c.l.b16 %v883
        %v3508 = vunpack.c.h.b16 %v883
        %v3509 = vunpack.c.l.b16 %v884
        %v3510 = vunpack.c.h.b16 %v884
        %v3511 = vunpack.c.l.b16 %v885
        %v3512 = vunpack.c.h.b16 %v885
        %v3513 = vunpack.c.l.b16 %v886
        %v3514 = vunpack.c.h.b16 %v886
        %v3515 = vunpack.c.l.b16 %v887
        %v3516 = vunpack.c.h.b16 %v887
        %v3517 = vunpack.c.l.b16 %v888
        %v3518 = vunpack.c.h.b16 %v888
        %v3519 = vunpack.c.l.b16 %v889
        %v3520 = vunpack.c.h.b16 %v889
        %v3521 = vunpack.c.l.b16 %v890
        %v3522 = vunpack.c.h.b16 %v890
        %v3523 = vunpack.c.l.b16 %v891
        %v3524 = vunpack.c.h.b16 %v891
        %v3525 = vunpack.c.l.b16 %v892
        %v3526 = vunpack.c.h.b16 %v892
        %v3527 = vunpack.c.l.b16 %v893
        %v3528 = vunpack.c.h.b16 %v893
        %v3529 = vunpack.c.l.b16 %v894
        %v3530 = vunpack.c.h.b16 %v894
        %v3531 = vunpack.c.l.b16 %v895
        %v3532 = vunpack.c.h.b16 %v895
        %v3533 = vunpack.c.l.b16 %v896
        %v3534 = vunpack.c.h.b16 %v896
        %v3535 = vunpack.c.l.b16 %v897
        %v3536 = vunpack.c.h.b16 %v897
        %v3537 = vunpack.c.l.b16 %v898
        %v3538 = vunpack.c.h.b16 %v898
        %v3539 = vunpack.c.l.b16 %v899
        %v3540 = vunpack.c.h.b16 %v899
        %v3541 = vunpack.c.l.b16 %v900
        %v3542 = vunpack.c.h.b16 %v900
        %v3543 = vunpack.c.l.b16 %v901
        %v3544 = vunpack.c.h.b16 %v901
        %v3545 = vunpack.c.l.b16 %v902
        %v3546 = vunpack.c.h.b16 %v902
        %v3547 = vunpack.c.l.b16 %v903
        %v3548 = vunpack.c.h.b16 %v903
        %v3549 = vunpack.c.l.b16 %v904
        %v3550 = vunpack.c.h.b16 %v904
        %v3551 = vunpack.c.l.b16 %v905
        %v3552 = vunpack.c.h.b16 %v905
        %v3553 = vunpack.c.l.b16 %v906
        %v3554 = vunpack.c.h.b16 %v906
        %v3555 = vunpack.c.l.b16 %v907
        %v3556 = vunpack.c.h.b16 %v907
        %v3557 = vunpack.c.l.b16 %v908
        %v3558 = vunpack.c.h.b16 %v908
        %v3559 = vunpack.c.l.b16 %v909
        %v3560 = vunpack.c.h.b16 %v909
        %v3561 = vunpack.c.l.b16 %v910
        %v3562 = vunpack.c.h.b16 %v910
        %v3563 = vunpack.c.l.b16 %v911
        %v3564 = vunpack.c.h.b16 %v911
        %v3565 = vunpack.c.l.b16 %v912
        %v3566 = vunpack.c.h.b16 %v912
        %v3567 = vunpack.c.l.b16 %v913
        %v3568 = vunpack.c.h.b16 %v913
        %v3569 = vunpack.c.l.b16 %v914
        %v3570 = vunpack.c.h.b16 %v914
        %v3571 = vunpack.c.l.b16 %v915
        %v3572 = vunpack.c.h.b16 %v915
        %v3573 = vunpack.c.l.b16 %v916
        %v3574 = vunpack.c.h.b16 %v916
        %v3575 = vunpack.c.l.b16 %v917
        %v3576 = vunpack.c.h.b16 %v917
        %v3577 = vunpack.c.l.b16 %v918
        %v3578 = vunpack.c.h.b16 %v918
        %v3579 = vunpack.c.l.b16 %v919
        %v3580 = vunpack.c.h.b16 %v919
        %v3581 = vunpack.c.l.b16 %v920
        %v3582 = vunpack.c.h.b16 %v920
        %v3583 = vunpack.c.l.b16 %v921
        %v3584 = vunpack.c.h.b16 %v921
        %v3585 = vunpack.c.l.b16 %v922
        %v3586 = vunpack.c.h.b16 %v922
        %v3587 = vunpack.c.l.b16 %v923
        %v3588 = vunpack.c.h.b16 %v923
        %v3589 = vunpack.c.l.b16 %v924
        %v3590 = vunpack.c.h.b16 %v924
        %v3591 = vunpack.c.l.b16 %v925
        %v3592 = vunpack.c.h.b16 %v925
        %v3593 = vunpack.c.l.b16 %v926
        %v3594 = vunpack.c.h.b16 %v926
        %v3595 = vunpack.c.l.b16 %v927
        %v3596 = vunpack.c.h.b16 %v927
        %v3597 = vunpack.c.l.b16 %v928
        %v3598 = vunpack.c.h.b16 %v928
        %v3599 = vunpack.c.l.b16 %v929
        %v3600 = vunpack.c.h.b16 %v929
        %v3601 = vunpack.c.l.b16 %v930
        %v3602 = vunpack.c.h.b16 %v930
        %v3603 = vunpack.c.l.b16 %v931
        %v3604 = vunpack.c.h.b16 %v931
        %v3605 = vunpack.c.l.b16 %v932
        %v3606 = vunpack.c.h.b16 %v932
        %v3607 = vunpack.c.l.b16 %v933
        %v3608 = vunpack.c.h.b16 %v933
        %v3609 = vunpack.c.l.b16 %v934
        %v3610 = vunpack.c.h.b16 %v934
        %v3611 = vunpack.c.l.b16 %v935
        %v3612 = vunpack.c.h.b16 %v935
        %v3613 = vunpack.c.l.b16 %v936
        %v3614 = vunpack.c.h.b16 %v936
        %v3615 = vunpack.c.l.b16 %v937
        %v3616 = vunpack.c.h.b16 %v937
        %v3617 = vunpack.c.l.b16 %v938
        %v3618 = vunpack.c.h.b16 %v938
        %v3619 = vunpack.c.l.b16 %v939
        %v3620 = vunpack.c.h.b16 %v939
        %v3621 = vunpack.c.l.b16 %v940
        %v3622 = vunpack.c.h.b16 %v940
        %v3623 = vunpack.c.l.b16 %v941
        %v3624 = vunpack.c.h.b16 %v941
        %v3625 = vunpack.c.l.b16 %v942
        %v3626 = vunpack.c.h.b16 %v942
        %v3627 = vunpack.c.l.b16 %v943
        %v3628 = vunpack.c.h.b16 %v943
        %v3629 = vunpack.c.l.b16 %v944
        %v3630 = vunpack.c.h.b16 %v944
        %v3631 = vunpack.c.l.b16 %v945
        %v3632 = vunpack.c.h.b16 %v945
        %v3633 = vunpack.c.l.b16 %v946
        %v3634 = vunpack.c.h.b16 %v946
        %v3635 = vunpack.c.l.b16 %v947
        %v3636 = vunpack.c.h.b16 %v947
        %v3637 = vunpack.c.l.b16 %v948
        %v3638 = vunpack.c.h.b16 %v948
        %v3639 = vunpack.c.l.b16 %v949
        %v3640 = vunpack.c.h.b16 %v949
        %v3641 = vunpack.c.l.b16 %v950
        %v3642 = vunpack.c.h.b16 %v950
        %v3643 = vunpack.c.l.b16 %v951
        %v3644 = vunpack.c.h.b16 %v951
        %v3645 = vunpack.c.l.b16 %v952
        %v3646 = vunpack.c.h.b16 %v952
        %v3647 = vunpack.c.l.b16 %v953
        %v3648 = vunpack.c.h.b16 %v953
        %v3649 = vunpack.c.l.b16 %v954
        %v3650 = vunpack.c.h.b16 %v954
        %v3651 = vunpack.c.l.b16 %v955
        %v3652 = vunpack.c.h.b16 %v955
        %v3653 = vunpack.c.l.b16 %v956
        %v3654 = vunpack.c.h.b16 %v956
        %v3655 = vunpack.c.l.b16 %v957
        %v3656 = vunpack.c.h.b16 %v957
        %v3657 = vunpack.c.l.b16 %v958
        %v3658 = vunpack.c.h.b16 %v958
        %v3659 = vunpack.c.l.b16 %v959
        %v3660 = vunpack.c.h.b16 %v959
        %v3661 = vunpack.c.l.b16 %v960
        %v3662 = vunpack.c.h.b16 %v960
        %v3663 = vunpack.c.l.b16 %v961
        %v3664 = vunpack.c.h.b16 %v961
        %v3665 = vunpack.c.l.b16 %v962
        %v3666 = vunpack.c.h.b16 %v962
        %v3667 = vunpack.c.l.b16 %v963
        %v3668 = vunpack.c.h.b16 %v963
        %v3669 = vunpack.c.l.b16 %v964
        %v3670 = vunpack.c.h.b16 %v964
        %v3671 = vunpack.c.l.b16 %v965
        %v3672 = vunpack.c.h.b16 %v965
        %v3673 = vunpack.c.l.b16 %v966
        %v3674 = vunpack.c.h.b16 %v966
        %v3675 = vunpack.c.l.b16 %v967
        %v3676 = vunpack.c.h.b16 %v967
        %v3677 = vunpack.c.l.b16 %v968
        %v3678 = vunpack.c.h.b16 %v968
        %v3679 = vunpack.c.l.b16 %v969
        %v3680 = vunpack.c.h.b16 %v969
        %v3681 = vunpack.c.l.b16 %v970
        %v3682 = vunpack.c.h.b16 %v970
        %v3683 = vunpack.c.l.b16 %v971
        %v3684 = vunpack.c.h.b16 %v971
        %v3685 = vunpack.c.l.b16 %v972
        %v3686 = vunpack.c.h.b16 %v972
        %v3687 = vunpack.c.l.b16 %v973
        %v3688 = vunpack.c.h.b16 %v973
        %v3689 = vunpack.c.l.b16 %v974
        %v3690 = vunpack.c.h.b16 %v974
        %v3691 = vunpack.c.l.b16 %v975
        %v3692 = vunpack.c.h.b16 %v975
        %v3693 = vunpack.c.l.b16 %v976
        %v3694 = vunpack.c.h.b16 %v976
        %v3695 = vunpack.c.l.b16 %v977
        %v3696 = vunpack.c.h.b16 %v977
        %v3697 = vunpack.c.l.b16 %v978
        %v3698 = vunpack.c.h.b16 %v978
        %v3699 = vunpack.c.l.b16 %v979
        %v3700 = vunpack.c.h.b16 %v979
        %v3701 = vunpack.c.l.b16 %v980
        %v3702 = vunpack.c.h.b16 %v980
        %v3703 = vunpack.c.l.b16 %v981
        %v3704 = vunpack.c.h.b16 %v981
        %v3705 = vunpack.c.l.b16 %v982
        %v3706 = vunpack.c.h.b16 %v982
        %v3707 = vunpack.c.l.b16 %v983
        %v3708 = vunpack.c.h.b16 %v983
        %v3709 = vunpack.c.l.b16 %v984
        %v3710 = vunpack.c.h.b16 %v984
        %v3711 = vunpack.c.l.b16 %v985
        %v3712 = vunpack.c.h.b16 %v985
        %v3713 = vunpack.c.l.b16 %v986
        %v3714 = vunpack.c.h.b16 %v986
        %v3715 = vunpack.c.l.b16 %v987
        %v3716 = vunpack.c.h.b16 %v987
        %v3717 = vunpack.c.l.b16 %v988
        %v3718 = vunpack.c.h.b16 %v988
        %v3719 = vunpack.c.l.b16 %v989
        %v3720 = vunpack.c.h.b16 %v989
        %v3721 = vunpack.c.l.b16 %v990
        %v3722 = vunpack.c.h.b16 %v990
        %v3723 = vunpack.c.l.b16 %v991
        %v3724 = vunpack.c.h.b16 %v991
        %v3725 = vunpack.c.l.b16 %v992
        %v3726 = vunpack.c.h.b16 %v992
        %v3727 = vunpack.c.l.b16 %v993
        %v3728 = vunpack.c.h.b16 %v993
        %v3729 = vunpack.c.l.b16 %v994
        %v3730 = vunpack.c.h.b16 %v994
        %v3731 = vunpack.c.l.b16 %v995
        %v3732 = vunpack.c.h.b16 %v995
        %v3733 = vunpack.c.l.b16 %v996
        %v3734 = vunpack.c.h.b16 %v996
        %v3735 = vunpack.c.l.b16 %v997
        %v3736 = vunpack.c.h.b16 %v997
        %v3737 = vunpack.c.l.b16 %v998
        %v3738 = vunpack.c.h.b16 %v998
        %v3739 = vunpack.c.l.b16 %v999
        %v3740 = vunpack.c.h.b16 %v999
        %v3741 = vunpack.c.l.b16 %v1000
        %v3742 = vunpack.c.h.b16 %v1000
        %v3743 = vunpack.c.l.b16 %v1001
        %v3744 = vunpack.c.h.b16 %v1001
        %v3745 = vunpack.c.l.b16 %v1002
        %v3746 = vunpack.c.h.b16 %v1002
        %v3747 = vunpack.c.l.b16 %v1003
        %v3748 = vunpack.c.h.b16 %v1003
        %v3749 = vunpack.c.l.b16 %v1004
        %v3750 = vunpack.c.h.b16 %v1004
        %v3751 = vunpack.c.l.b16 %v1005
        %v3752 = vunpack.c.h.b16 %v1005
        %v3753 = vunpack.c.l.b16 %v1006
        %v3754 = vunpack.c.h.b16 %v1006
        %v3755 = vunpack.c.l.b16 %v1007
        %v3756 = vunpack.c.h.b16 %v1007
        %v3757 = vunpack.c.l.b16 %v1008
        %v3758 = vunpack.c.h.b16 %v1008
        %v3759 = vunpack.c.l.b16 %v1009
        %v3760 = vunpack.c.h.b16 %v1009
        %v3761 = vunpack.c.l.b16 %v1010
        %v3762 = vunpack.c.h.b16 %v1010
        %v3763 = vunpack.c.l.b16 %v1011
        %v3764 = vunpack.c.h.b16 %v1011
        %v3765 = vunpack.c.l.b16 %v1012
        %v3766 = vunpack.c.h.b16 %v1012
        %v3767 = vunpack.c.l.b16 %v1013
        %v3768 = vunpack.c.h.b16 %v1013
        %v3769 = vunpack.c.l.b16 %v1014
        %v3770 = vunpack.c.h.b16 %v1014
        %v3771 = vunpack.c.l.b16 %v1015
        %v3772 = vunpack.c.h.b16 %v1015
        %v3773 = vunpack.c.l.b16 %v1016
        %v3774 = vunpack.c.h.b16 %v1016
        %v3775 = vunpack.c.l.b16 %v1017
        %v3776 = vunpack.c.h.b16 %v1017
        %v3777 = vunpack.c.l.b16 %v1018
        %v3778 = vunpack.c.h.b16 %v1018
        %v3779 = vunpack.c.l.b16 %v1019
        %v3780 = vunpack.c.h.b16 %v1019
        %v3781 = vunpack.c.l.b16 %v1020
        %v3782 = vunpack.c.h.b16 %v1020
        %v3783 = vunpack.c.l.b16 %v1021
        %v3784 = vunpack.c.h.b16 %v1021
        %v3785 = vunpack.c.l.b16 %v1022
        %v3786 = vunpack.c.h.b16 %v1022
        %v3787 = vunpack.c.l.b16 %v1023
        %v3788 = vunpack.c.h.b16 %v1023
        %v3789 = vunpack.c.l.b16 %v1024
        %v3790 = vunpack.c.h.b16 %v1024
        %v3791 = vunpack.c.l.b16 %v1025
        %v3792 = vunpack.c.h.b16 %v1025
        %v3793 = vunpack.c.l.b16 %v1026
        %v3794 = vunpack.c.h.b16 %v1026
        %v3795 = vunpack.c.l.b16 %v1027
        %v3796 = vunpack.c.h.b16 %v1027
        %v3797 = vunpack.c.l.b16 %v1028
        %v3798 = vunpack.c.h.b16 %v1028
        %v3799 = vunpack.c.l.b16 %v1029
        %v3800 = vunpack.c.h.b16 %v1029
        %v3801 = vunpack.c.l.b16 %v1030
        %v3802 = vunpack.c.h.b16 %v1030
        %v3803 = vunpack.c.l.b16 %v1031
        %v3804 = vunpack.c.h.b16 %v1031
        %v3805 = vunpack.c.l.b16 %v1032
        %v3806 = vunpack.c.h.b16 %v1032
        %v3807 = vunpack.c.l.b16 %v1033
        %v3808 = vunpack.c.h.b16 %v1033
        %v3809 = vunpack.c.l.b16 %v1034
        %v3810 = vunpack.c.h.b16 %v1034
        %v3811 = vunpack.c.l.b16 %v1035
        %v3812 = vunpack.c.h.b16 %v1035
        %v3813 = vunpack.c.l.b16 %v1036
        %v3814 = vunpack.c.h.b16 %v1036
        %v3815 = vunpack.c.l.b16 %v1037
        %v3816 = vunpack.c.h.b16 %v1037
        %v3817 = vunpack.c.l.b16 %v1038
        %v3818 = vunpack.c.h.b16 %v1038
        %v3819 = vunpack.c.l.b16 %v1039
        %v3820 = vunpack.c.h.b16 %v1039
        %v3821 = vunpack.c.l.b16 %v1040
        %v3822 = vunpack.c.h.b16 %v1040
        %v3823 = vunpack.c.l.b16 %v1041
        %v3824 = vunpack.c.h.b16 %v1041
        %v3825 = vunpack.c.l.b16 %v1042
        %v3826 = vunpack.c.h.b16 %v1042
        %v3827 = vunpack.c.l.b16 %v1043
        %v3828 = vunpack.c.h.b16 %v1043
        %v3829 = vunpack.c.l.b16 %v1044
        %v3830 = vunpack.c.h.b16 %v1044
        %v3831 = vunpack.c.l.b16 %v1045
        %v3832 = vunpack.c.h.b16 %v1045
        %v3833 = vunpack.c.l.b16 %v1046
        %v3834 = vunpack.c.h.b16 %v1046
        %v3835 = vunpack.c.l.b16 %v1047
        %v3836 = vunpack.c.h.b16 %v1047
        %v3837 = vunpack.c.l.b16 %v1048
        %v3838 = vunpack.c.h.b16 %v1048
        %v3839 = vunpack.c.l.b16 %v1049
        %v3840 = vunpack.c.h.b16 %v1049
        %v3841 = vunpack.c.l.b16 %v1050
        %v3842 = vunpack.c.h.b16 %v1050
        %v3843 = vunpack.c.l.b16 %v1051
        %v3844 = vunpack.c.h.b16 %v1051
        %v3845 = vunpack.c.l.b16 %v1052
        %v3846 = vunpack.c.h.b16 %v1052
        %v3847 = vunpack.c.l.b16 %v1053
        %v3848 = vunpack.c.h.b16 %v1053
        %v3849 = vunpack.c.l.b16 %v1054
        %v3850 = vunpack.c.h.b16 %v1054
        %v3851 = vunpack.c.l.b16 %v1055
        %v3852 = vunpack.c.h.b16 %v1055
        %v3853 = vunpack.c.l.b16 %v1056
        %v3854 = vunpack.c.h.b16 %v1056
        %v3855 = vunpack.c.l.b16 %v1057
        %v3856 = vunpack.c.h.b16 %v1057
        %v3857 = vunpack.c.l.b16 %v1058
        %v3858 = vunpack.c.h.b16 %v1058
        %v3859 = vunpack.c.l.b16 %v1059
        %v3860 = vunpack.c.h.b16 %v1059
        %v3861 = vunpack.c.l.b16 %v1060
        %v3862 = vunpack.c.h.b16 %v1060
        %v3863 = vunpack.c.l.b16 %v1061
        %v3864 = vunpack.c.h.b16 %v1061
        %v3865 = vunpack.c.l.b16 %v1062
        %v3866 = vunpack.c.h.b16 %v1062
        %v3867 = vunpack.c.l.b16 %v1063
        %v3868 = vunpack.c.h.b16 %v1063
        %v3869 = vunpack.c.l.b16 %v1064
        %v3870 = vunpack.c.h.b16 %v1064
        %v3871 = vunpack.c.l.b16 %v1065
        %v3872 = vunpack.c.h.b16 %v1065
        %v3873 = vunpack.c.l.b16 %v1066
        %v3874 = vunpack.c.h.b16 %v1066
        %v3875 = vunpack.c.l.b16 %v1067
        %v3876 = vunpack.c.h.b16 %v1067
        %v3877 = vunpack.c.l.b16 %v1068
        %v3878 = vunpack.c.h.b16 %v1068
        %v3879 = vunpack.c.l.b16 %v1069
        %v3880 = vunpack.c.h.b16 %v1069
        %v3881 = vunpack.c.l.b16 %v1070
        %v3882 = vunpack.c.h.b16 %v1070
        %v3883 = vunpack.c.l.b16 %v1071
        %v3884 = vunpack.c.h.b16 %v1071
        %v3885 = vunpack.c.l.b16 %v1072
        %v3886 = vunpack.c.h.b16 %v1072
        %v3887 = vunpack.c.l.b16 %v1073
        %v3888 = vunpack.c.h.b16 %v1073
        %v3889 = vunpack.c.l.b16 %v1074
        %v3890 = vunpack.c.h.b16 %v1074
        %v3891 = vunpack.c.l.b16 %v1075
        %v3892 = vunpack.c.h.b16 %v1075
        %v3893 = vunpack.c.l.b16 %v1076
        %v3894 = vunpack.c.h.b16 %v1076
        %v3895 = vunpack.c.l.b16 %v1077
        %v3896 = vunpack.c.h.b16 %v1077
        %v3897 = vunpack.c.l.b16 %v1078
        %v3898 = vunpack.c.h.b16 %v1078
        %v3899 = vunpack.c.l.b16 %v1079
        %v3900 = vunpack.c.h.b16 %v1079
        %v3901 = vunpack.c.l.b16 %v1080
        %v3902 = vunpack.c.h.b16 %v1080
        %v3903 = vunpack.c.l.b16 %v1081
        %v3904 = vunpack.c.h.b16 %v1081
        %v3905 = vunpack.c.l.b16 %v1082
        %v3906 = vunpack.c.h.b16 %v1082
        %v3907 = vunpack.c.l.b16 %v1083
        %v3908 = vunpack.c.h.b16 %v1083
        %v3909 = vunpack.c.l.b16 %v1084
        %v3910 = vunpack.c.h.b16 %v1084
        %v3911 = vunpack.c.l.b16 %v1085
        %v3912 = vunpack.c.h.b16 %v1085
        %v3913 = vunpack.c.l.b16 %v1086
        %v3914 = vunpack.c.h.b16 %v1086
        %v3915 = vunpack.c.l.b16 %v1087
        %v3916 = vunpack.c.h.b16 %v1087
        %v3917 = vunpack.c.l.b16 %v1088
        %v3918 = vunpack.c.h.b16 %v1088
        %v3919 = vunpack.c.l.b16 %v1089
        %v3920 = vunpack.c.h.b16 %v1089
        %v3921 = vunpack.c.l.b16 %v1090
        %v3922 = vunpack.c.h.b16 %v1090
        %v3923 = vunpack.c.l.b16 %v1091
        %v3924 = vunpack.c.h.b16 %v1091
        %v3925 = vunpack.c.l.b16 %v1092
        %v3926 = vunpack.c.h.b16 %v1092
        %v3927 = vunpack.c.l.b16 %v1093
        %v3928 = vunpack.c.h.b16 %v1093
        %v3929 = vunpack.c.l.b16 %v1094
        %v3930 = vunpack.c.h.b16 %v1094
        %v3931 = vunpack.c.l.b16 %v1095
        %v3932 = vunpack.c.h.b16 %v1095
        %v3933 = vunpack.c.l.b16 %v1096
        %v3934 = vunpack.c.h.b16 %v1096
        %v3935 = vunpack.c.l.b16 %v1097
        %v3936 = vunpack.c.h.b16 %v1097
        %v3937 = vunpack.c.l.b16 %v1098
        %v3938 = vunpack.c.h.b16 %v1098
        %v3939 = vunpack.c.l.b16 %v1099
        %v3940 = vunpack.c.h.b16 %v1099
        %v3941 = vunpack.c.l.b16 %v1100
        %v3942 = vunpack.c.h.b16 %v1100
        %v3943 = vunpack.c.l.b16 %v1101
        %v3944 = vunpack.c.h.b16 %v1101
        %v3945 = vunpack.c.l.b16 %v1102
        %v3946 = vunpack.c.h.b16 %v1102
        %v3947 = vunpack.c.l.b16 %v1103
        %v3948 = vunpack.c.h.b16 %v1103
        %v3949 = vunpack.c.l.b16 %v1104
        %v3950 = vunpack.c.h.b16 %v1104
        %v3951 = vunpack.c.l.b16 %v1105
        %v3952 = vunpack.c.h.b16 %v1105
        %v3953 = vunpack.c.l.b16 %v1106
        %v3954 = vunpack.c.h.b16 %v1106
        %v3955 = vunpack.c.l.b16 %v1107
        %v3956 = vunpack.c.h.b16 %v1107
        %v3957 = vunpack.c.l.b16 %v1108
        %v3958 = vunpack.c.h.b16 %v1108
        %v3959 = vunpack.c.l.b16 %v1109
        %v3960 = vunpack.c.h.b16 %v1109
        %v3961 = vunpack.c.l.b16 %v1110
        %v3962 = vunpack.c.h.b16 %v1110
        %v3963 = vunpack.c.l.b16 %v1111
        %v3964 = vunpack.c.h.b16 %v1111
        %v3965 = vunpack.c.l.b16 %v1112
        %v3966 = vunpack.c.h.b16 %v1112
        %v3967 = vunpack.c.l.b16 %v1113
        %v3968 = vunpack.c.h.b16 %v1113
        %v3969 = vunpack.c.l.b16 %v1114
        %v3970 = vunpack.c.h.b16 %v1114
        %v3971 = vunpack.c.l.b16 %v1115
        %v3972 = vunpack.c.h.b16 %v1115
        %v3973 = vunpack.c.l.b16 %v1116
        %v3974 = vunpack.c.h.b16 %v1116
        %v3975 = vunpack.c.l.b16 %v1117
        %v3976 = vunpack.c.h.b16 %v1117
        %v3977 = vunpack.c.l.b16 %v1118
        %v3978 = vunpack.c.h.b16 %v1118
        %v3979 = vunpack.c.l.b16 %v1119
        %v3980 = vunpack.c.h.b16 %v1119
        %v3981 = vunpack.c.l.b16 %v1120
        %v3982 = vunpack.c.h.b16 %v1120
        %v3983 = vunpack.c.l.b16 %v1121
        %v3984 = vunpack.c.h.b16 %v1121
        %v3985 = vunpack.c.l.b16 %v1122
        %v3986 = vunpack.c.h.b16 %v1122
        %v3987 = vunpack.c.l.b16 %v1123
        %v3988 = vunpack.c.h.b16 %v1123
        %v3989 = vunpack.c.l.b16 %v1124
        %v3990 = vunpack.c.h.b16 %v1124
        %v3991 = vunpack.c.l.b16 %v1125
        %v3992 = vunpack.c.h.b16 %v1125
        %v3993 = vunpack.c.l.b16 %v1126
        %v3994 = vunpack.c.h.b16 %v1126
        %v3995 = vunpack.c.l.b16 %v1127
        %v3996 = vunpack.c.h.b16 %v1127
        %v3997 = vunpack.c.l.b16 %v1128
        %v3998 = vunpack.c.h.b16 %v1128
        %v3999 = vunpack.c.l.b16 %v1129
        %v4000 = vunpack.c.h.b16 %v1129
        %v4001 = vunpack.c.l.b16 %v1130
        %v4002 = vunpack.c.h.b16 %v1130
        %v4003 = vunpack.c.l.b16 %v1131
        %v4004 = vunpack.c.h.b16 %v1131
        %v4005 = vunpack.c.l.b16 %v1132
        %v4006 = vunpack.c.h.b16 %v1132
        %v4007 = vunpack.c.l.b16 %v1133
        %v4008 = vunpack.c.h.b16 %v1133
        %v4009 = vunpack.c.l.b16 %v1134
        %v4010 = vunpack.c.h.b16 %v1134
        %v4011 = vunpack.c.l.b16 %v1135
        %v4012 = vunpack.c.h.b16 %v1135
        %v4013 = vunpack.c.l.b16 %v1136
        %v4014 = vunpack.c.h.b16 %v1136
        %v4015 = vunpack.c.l.b16 %v1137
        %v4016 = vunpack.c.h.b16 %v1137
        %v4017 = vunpack.c.l.b16 %v1138
        %v4018 = vunpack.c.h.b16 %v1138
        %v4019 = vunpack.c.l.b16 %v1139
        %v4020 = vunpack.c.h.b16 %v1139
        %v4021 = vunpack.c.l.b16 %v1140
        %v4022 = vunpack.c.h.b16 %v1140
        %v4023 = vunpack.c.l.b16 %v1141
        %v4024 = vunpack.c.h.b16 %v1141
        %v4025 = vunpack.c.l.b16 %v1142
        %v4026 = vunpack.c.h.b16 %v1142
        %v4027 = vunpack.c.l.b16 %v1143
        %v4028 = vunpack.c.h.b16 %v1143
        %v4029 = vunpack.c.l.b16 %v1144
        %v4030 = vunpack.c.h.b16 %v1144
        %v4031 = vunpack.c.l.b16 %v1145
        %v4032 = vunpack.c.h.b16 %v1145
        %v4033 = vunpack.c.l.b16 %v1146
        %v4034 = vunpack.c.h.b16 %v1146
        %v4035 = vunpack.c.l.b16 %v1147
        %v4036 = vunpack.c.h.b16 %v1147
        %v4037 = vunpack.c.l.b16 %v1148
        %v4038 = vunpack.c.h.b16 %v1148
        %v4039 = vunpack.c.l.b16 %v1149
        %v4040 = vunpack.c.h.b16 %v1149
        %v4041 = vunpack.c.l.b16 %v1150
        %v4042 = vunpack.c.h.b16 %v1150
        %v4043 = vunpack.c.l.b16 %v1151
        %v4044 = vunpack.c.h.b16 %v1151
        %v4045 = vunpack.c.l.b16 %v1152
        %v4046 = vunpack.c.h.b16 %v1152
        %v4047 = vunpack.c.l.b16 %v1153
        %v4048 = vunpack.c.h.b16 %v1153
        %v4049 = vunpack.c.l.b16 %v1154
        %v4050 = vunpack.c.h.b16 %v1154
        %v4051 = vunpack.c.l.b16 %v1155
        %v4052 = vunpack.c.h.b16 %v1155
        %v4053 = vunpack.c.l.b16 %v1156
        %v4054 = vunpack.c.h.b16 %v1156
        %v4055 = vunpack.c.l.b16 %v1157
        %v4056 = vunpack.c.h.b16 %v1157
        %v4057 = vunpack.c.l.b16 %v1158
        %v4058 = vunpack.c.h.b16 %v1158
        %v4059 = vunpack.c.l.b16 %v1159
        %v4060 = vunpack.c.h.b16 %v1159
        %v4061 = vunpack.c.l.b16 %v1160
        %v4062 = vunpack.c.h.b16 %v1160
        %v4063 = vunpack.c.l.b16 %v1161
        %v4064 = vunpack.c.h.b16 %v1161
        %v4065 = vunpack.c.l.b16 %v1162
        %v4066 = vunpack.c.h.b16 %v1162
        %v4067 = vunpack.c.l.b16 %v1163
        %v4068 = vunpack.c.h.b16 %v1163
        %v4069 = vunpack.c.l.b16 %v1164
        %v4070 = vunpack.c.h.b16 %v1164
        %v4071 = vunpack.c.l.b16 %v1165
        %v4072 = vunpack.c.h.b16 %v1165
        %v4073 = vunpack.c.l.b16 %v1166
        %v4074 = vunpack.c.h.b16 %v1166
        %v4075 = vunpack.c.l.b16 %v1167
        %v4076 = vunpack.c.h.b16 %v1167
        %v4077 = vunpack.c.l.b16 %v1168
        %v4078 = vunpack.c.h.b16 %v1168
        %v4079 = vunpack.c.l.b16 %v1169
        %v4080 = vunpack.c.h.b16 %v1169
        %v4081 = vunpack.c.l.b16 %v1170
        %v4082 = vunpack.c.h.b16 %v1170
        %v4083 = vunpack.c.l.b16 %v1171
        %v4084 = vunpack.c.h.b16 %v1171
        %v4085 = vunpack.c.l.b16 %v1172
        %v4086 = vunpack.c.h.b16 %v1172
        %v4087 = vunpack.c.l.b16 %v1173
        %v4088 = vunpack.c.h.b16 %v1173
        %v4089 = vunpack.c.l.b16 %v1174
        %v4090 = vunpack.c.h.b16 %v1174
        %v4091 = vunpack.c.l.b16 %v1175
        %v4092 = vunpack.c.h.b16 %v1175
        %v4093 = vunpack.c.l.b16 %v1176
        %v4094 = vunpack.c.h.b16 %v1176
        %v4095 = vunpack.c.l.b16 %v1177
        %v4096 = vunpack.c.h.b16 %v1177
        %v4097 = vunpack.c.l.b16 %v1178
        %v4098 = vunpack.c.h.b16 %v1178
        %v4099 = vunpack.c.l.b16 %v1179
        %v4100 = vunpack.c.h.b16 %v1179
        %v4101 = vunpack.c.l.b16 %v1180
        %v4102 = vunpack.c.h.b16 %v1180
        %v4103 = vunpack.c.l.b16 %v1181
        %v4104 = vunpack.c.h.b16 %v1181
        %v4105 = vunpack.c.l.b16 %v1182
        %v4106 = vunpack.c.h.b16 %v1182
        %v4107 = vunpack.c.l.b16 %v1183
        %v4108 = vunpack.c.h.b16 %v1183
        %v4109 = vunpack.c.l.b16 %v1184
        %v4110 = vunpack.c.h.b16 %v1184
        %v4111 = vunpack.c.l.b16 %v1185
        %v4112 = vunpack.c.h.b16 %v1185
        %v4113 = vunpack.c.l.b16 %v1186
        %v4114 = vunpack.c.h.b16 %v1186
        %v4115 = vunpack.c.l.b16 %v1187
        %v4116 = vunpack.c.h.b16 %v1187
        %v4117 = vunpack.c.l.b16 %v1188
        %v4118 = vunpack.c.h.b16 %v1188
        %v4119 = vunpack.c.l.b16 %v1189
        %v4120 = vunpack.c.h.b16 %v1189
        %v4121 = vunpack.c.l.b16 %v1190
        %v4122 = vunpack.c.h.b16 %v1190
        %v4123 = vunpack.c.l.b16 %v1191
        %v4124 = vunpack.c.h.b16 %v1191
        %v4125 = vunpack.c.l.b16 %v1192
        %v4126 = vunpack.c.h.b16 %v1192
        %v4127 = vunpack.c.l.b16 %v1193
        %v4128 = vunpack.c.h.b16 %v1193
        %v4129 = vunpack.c.l.b16 %v1194
        %v4130 = vunpack.c.h.b16 %v1194
        %v4131 = vunpack.c.l.b16 %v1195
        %v4132 = vunpack.c.h.b16 %v1195
        %v4133 = vunpack.c.l.b16 %v1196
        %v4134 = vunpack.c.h.b16 %v1196
        %v4135 = vunpack.c.l.b16 %v1197
        %v4136 = vunpack.c.h.b16 %v1197
        %v4137 = vunpack.c.l.b16 %v1198
        %v4138 = vunpack.c.h.b16 %v1198
        %v4139 = vunpack.c.l.b16 %v1199
        %v4140 = vunpack.c.h.b16 %v1199
        %v4141 = vunpack.c.l.b16 %v1200
        %v4142 = vunpack.c.h.b16 %v1200
        %v4143 = vunpack.c.l.b16 %v1201
        %v4144 = vunpack.c.h.b16 %v1201
        %v4145 = vunpack.c.l.b16 %v1202
        %v4146 = vunpack.c.h.b16 %v1202
        %v4147 = vunpack.c.l.b16 %v1203
        %v4148 = vunpack.c.h.b16 %v1203
        %v4149 = vunpack.c.l.b16 %v1204
        %v4150 = vunpack.c.h.b16 %v1204
        %v4151 = vunpack.c.l.b16 %v1205
        %v4152 = vunpack.c.h.b16 %v1205
        %v4153 = vunpack.c.l.b16 %v1206
        %v4154 = vunpack.c.h.b16 %v1206
        %v4155 = vunpack.c.l.b16 %v1207
        %v4156 = vunpack.c.h.b16 %v1207
        %v4157 = vunpack.c.l.b16 %v1208
        %v4158 = vunpack.c.h.b16 %v1208
        %v4159 = vunpack.c.l.b16 %v1209
        %v4160 = vunpack.c.h.b16 %v1209
        %v4161 = vunpack.c.l.b16 %v1210
        %v4162 = vunpack.c.h.b16 %v1210
        %v4163 = vunpack.c.l.b16 %v1211
        %v4164 = vunpack.c.h.b16 %v1211
        %v4165 = vunpack.c.l.b16 %v1212
        %v4166 = vunpack.c.h.b16 %v1212
        %v4167 = vunpack.c.l.b16 %v1213
        %v4168 = vunpack.c.h.b16 %v1213
        %v4169 = vunpack.c.l.b16 %v1214
        %v4170 = vunpack.c.h.b16 %v1214
        %v4171 = vunpack.c.l.b16 %v1215
        %v4172 = vunpack.c.h.b16 %v1215
        %v4173 = vunpack.c.l.b16 %v1216
        %v4174 = vunpack.c.h.b16 %v1216
        %v4175 = vunpack.c.l.b16 %v1217
        %v4176 = vunpack.c.h.b16 %v1217
        %v4177 = vunpack.c.l.b16 %v1218
        %v4178 = vunpack.c.h.b16 %v1218
        %v4179 = vunpack.c.l.b16 %v1219
        %v4180 = vunpack.c.h.b16 %v1219
        %v4181 = vunpack.c.l.b16 %v1220
        %v4182 = vunpack.c.h.b16 %v1220
        %v4183 = vunpack.c.l.b16 %v1221
        %v4184 = vunpack.c.h.b16 %v1221
        %v4185 = vunpack.c.l.b16 %v1222
        %v4186 = vunpack.c.h.b16 %v1222
        %v4187 = vunpack.c.l.b16 %v1223
        %v4188 = vunpack.c.h.b16 %v1223
        %v4189 = vunpack.c.l.b16 %v1224
        %v4190 = vunpack.c.h.b16 %v1224
        %v4191 = vunpack.c.l.b16 %v1225
        %v4192 = vunpack.c.h.b16 %v1225
        %v4193 = vunpack.c.l.b16 %v1226
        %v4194 = vunpack.c.h.b16 %v1226
        %v4195 = vunpack.c.l.b16 %v1227
        %v4196 = vunpack.c.h.b16 %v1227
        %v4197 = vunpack.c.l.b16 %v1228
        %v4198 = vunpack.c.h.b16 %v1228
        %v4199 = vunpack.c.l.b16 %v1229
        %v4200 = vunpack.c.h.b16 %v1229
        %v4201 = vunpack.c.l.b16 %v1230
        %v4202 = vunpack.c.h.b16 %v1230
        %v4203 = vunpack.c.l.b16 %v1231
        %v4204 = vunpack.c.h.b16 %v1231
        %v4205 = vunpack.c.l.b16 %v1232
        %v4206 = vunpack.c.h.b16 %v1232
        %v4207 = vunpack.c.l.b16 %v1233
        %v4208 = vunpack.c.h.b16 %v1233
        %v4209 = vunpack.c.l.b16 %v1234
        %v4210 = vunpack.c.h.b16 %v1234
        %v4211 = vunpack.c.l.b16 %v1235
        %v4212 = vunpack.c.h.b16 %v1235
        %v4213 = vunpack.c.l.b16 %v1236
        %v4214 = vunpack.c.h.b16 %v1236
        %v4215 = vunpack.c.l.b16 %v1237
        %v4216 = vunpack.c.h.b16 %v1237
        %v4217 = vunpack.c.l.b16 %v1238
        %v4218 = vunpack.c.h.b16 %v1238
        %v4219 = vunpack.c.l.b16 %v1239
        %v4220 = vunpack.c.h.b16 %v1239
        %v4221 = vunpack.c.l.b16 %v1240
        %v4222 = vunpack.c.h.b16 %v1240
        %v4223 = vunpack.c.l.b16 %v1241
        %v4224 = vunpack.c.h.b16 %v1241
        %v4225 = vunpack.c.l.b16 %v1242
        %v4226 = vunpack.c.h.b16 %v1242
        %v4227 = vunpack.c.l.b16 %v1243
        %v4228 = vunpack.c.h.b16 %v1243
        %v4229 = vunpack.c.l.b16 %v1244
        %v4230 = vunpack.c.h.b16 %v1244
        %v4231 = vunpack.c.l.b16 %v1245
        %v4232 = vunpack.c.h.b16 %v1245
        %v4233 = vunpack.c.l.b16 %v1246
        %v4234 = vunpack.c.h.b16 %v1246
        %v4235 = vunpack.c.l.b16 %v1247
        %v4236 = vunpack.c.h.b16 %v1247
        %v4237 = vunpack.c.l.b16 %v1248
        %v4238 = vunpack.c.h.b16 %v1248
        %v4239 = vunpack.c.l.b16 %v1249
        %v4240 = vunpack.c.h.b16 %v1249
        %v4241 = vunpack.c.l.b16 %v1250
        %v4242 = vunpack.c.h.b16 %v1250
        %v4243 = vunpack.c.l.b16 %v1251
        %v4244 = vunpack.c.h.b16 %v1251
        %v4245 = vunpack.c.l.b16 %v1252
        %v4246 = vunpack.c.h.b16 %v1252
        %v4247 = vunpack.c.l.b16 %v1253
        %v4248 = vunpack.c.h.b16 %v1253
        %v4249 = vunpack.c.l.b16 %v1254
        %v4250 = vunpack.c.h.b16 %v1254
        %v4251 = vunpack.c.l.b16 %v1255
        %v4252 = vunpack.c.h.b16 %v1255
        %v4253 = vunpack.c.l.b16 %v1256
        %v4254 = vunpack.c.h.b16 %v1256
        %v4255 = vunpack.c.l.b16 %v1257
        %v4256 = vunpack.c.h.b16 %v1257
        %v4257 = vunpack.c.l.b16 %v1258
        %v4258 = vunpack.c.h.b16 %v1258
        %v4259 = vunpack.c.l.b16 %v1259
        %v4260 = vunpack.c.h.b16 %v1259
        %v4261 = vunpack.c.l.b16 %v1260
        %v4262 = vunpack.c.h.b16 %v1260
        %v4263 = vunpack.c.l.b16 %v1261
        %v4264 = vunpack.c.h.b16 %v1261
        %v4265 = vunpack.c.l.b16 %v1262
        %v4266 = vunpack.c.h.b16 %v1262
        %v4267 = vunpack.c.l.b16 %v1263
        %v4268 = vunpack.c.h.b16 %v1263
        %v4269 = vunpack.c.l.b16 %v1264
        %v4270 = vunpack.c.h.b16 %v1264
        %v4271 = vunpack.c.l.b16 %v1265
        %v4272 = vunpack.c.h.b16 %v1265
        %v4273 = vunpack.c.l.b16 %v1266
        %v4274 = vunpack.c.h.b16 %v1266
        %v4275 = vunpack.c.l.b16 %v1267
        %v4276 = vunpack.c.h.b16 %v1267
        %v4277 = vunpack.c.l.b16 %v1268
        %v4278 = vunpack.c.h.b16 %v1268
        %v4279 = vunpack.c.l.b16 %v1269
        %v4280 = vunpack.c.h.b16 %v1269
        %v4281 = vunpack.c.l.b16 %v1270
        %v4282 = vunpack.c.h.b16 %v1270
        %v4283 = vunpack.c.l.b16 %v1271
        %v4284 = vunpack.c.h.b16 %v1271
        %v4285 = vunpack.c.l.b16 %v1272
        %v4286 = vunpack.c.h.b16 %v1272
        %v4287 = vunpack.c.l.b16 %v1273
        %v4288 = vunpack.c.h.b16 %v1273
        %v4289 = vunpack.c.l.b16 %v1274
        %v4290 = vunpack.c.h.b16 %v1274
        %v4291 = vunpack.c.l.b16 %v1275
        %v4292 = vunpack.c.h.b16 %v1275
        %v4293 = vunpack.c.l.b16 %v1276
        %v4294 = vunpack.c.h.b16 %v1276
        %v4295 = vunpack.c.l.b16 %v1277
        %v4296 = vunpack.c.h.b16 %v1277
        %v4297 = vunpack.c.l.b16 %v1278
        %v4298 = vunpack.c.h.b16 %v1278
        %v4299 = vunpack.c.l.b16 %v1279
        %v4300 = vunpack.c.h.b16 %v1279
        %v4301 = vunpack.c.l.b16 %v1280
        %v4302 = vunpack.c.h.b16 %v1280
        %v4303 = vunpack.c.l.b16 %v1281
        %v4304 = vunpack.c.h.b16 %v1281
        %v4305 = vunpack.c.l.b16 %v1282
        %v4306 = vunpack.c.h.b16 %v1282
        %v4307 = vunpack.c.l.b16 %v1283
        %v4308 = vunpack.c.h.b16 %v1283
        %v4309 = vunpack.c.l.b16 %v1284
        %v4310 = vunpack.c.h.b16 %v1284
        %v4311 = vunpack.c.l.b16 %v1285
        %v4312 = vunpack.c.h.b16 %v1285
        %v4313 = vunpack.c.l.b16 %v1286
        %v4314 = vunpack.c.h.b16 %v1286
        %v4315 = vunpack.c.l.b16 %v1287
        %v4316 = vunpack.c.h.b16 %v1287
        %v4317 = vunpack.c.l.b16 %v1288
        %v4318 = vunpack.c.h.b16 %v1288
        %v4319 = vunpack.c.l.b16 %v1289
        %v4320 = vunpack.c.h.b16 %v1289
        %v4321 = vunpack.c.l.b16 %v1290
        %v4322 = vunpack.c.h.b16 %v1290
        %v4323 = vunpack.c.l.b16 %v1291
        %v4324 = vunpack.c.h.b16 %v1291
        %v4325 = vunpack.c.l.b16 %v1292
        %v4326 = vunpack.c.h.b16 %v1292
        %v4327 = vunpack.c.l.b16 %v1293
        %v4328 = vunpack.c.h.b16 %v1293
        %v4329 = vunpack.c.l.b16 %v1294
        %v4330 = vunpack.c.h.b16 %v1294
        %v4331 = vunpack.c.l.b16 %v1295
        %v4332 = vunpack.c.h.b16 %v1295
        %v4333 = vunpack.c.l.b16 %v1296
        %v4334 = vunpack.c.h.b16 %v1296
        %v4335 = vunpack.c.l.b16 %v1297
        %v4336 = vunpack.c.h.b16 %v1297
        %v4337 = vunpack.c.l.b16 %v1298
        %v4338 = vunpack.c.h.b16 %v1298
        %v4339 = vunpack.c.l.b16 %v1299
        %v4340 = vunpack.c.h.b16 %v1299
        %v4341 = vunpack.c.l.b16 %v1300
        %v4342 = vunpack.c.h.b16 %v1300
        %v4343 = vunpack.c.l.b16 %v1301
        %v4344 = vunpack.c.h.b16 %v1301
        %v4345 = vunpack.c.l.b16 %v1302
        %v4346 = vunpack.c.h.b16 %v1302
        %v4347 = vunpack.c.l.b16 %v1303
        %v4348 = vunpack.c.h.b16 %v1303
        %v4349 = vunpack.c.l.b16 %v1304
        %v4350 = vunpack.c.h.b16 %v1304
        %v4351 = vunpack.c.l.b16 %v1305
        %v4352 = vunpack.c.h.b16 %v1305
        %v4353 = vunpack.c.l.b16 %v1306
        %v4354 = vunpack.c.h.b16 %v1306
        %v4355 = vunpack.c.l.b16 %v1307
        %v4356 = vunpack.c.h.b16 %v1307
        %v4357 = vunpack.c.l.b16 %v1308
        %v4358 = vunpack.c.h.b16 %v1308
        %v4359 = vunpack.c.l.b16 %v1309
        %v4360 = vunpack.c.h.b16 %v1309
        %v4361 = vunpack.c.l.b16 %v1310
        %v4362 = vunpack.c.h.b16 %v1310
        %v4363 = vunpack.c.l.b16 %v1311
        %v4364 = vunpack.c.h.b16 %v1311
        %v4365 = vunpack.c.l.b16 %v1312
        %v4366 = vunpack.c.h.b16 %v1312
        %v4367 = vunpack.c.l.b16 %v1313
        %v4368 = vunpack.c.h.b16 %v1313
        %v4369 = vunpack.c.l.b16 %v1314
        %v4370 = vunpack.c.h.b16 %v1314
        %v4371 = vunpack.c.l.b16 %v1315
        %v4372 = vunpack.c.h.b16 %v1315
        %v4373 = vunpack.c.l.b16 %v1316
        %v4374 = vunpack.c.h.b16 %v1316
        %v4375 = vunpack.c.l.b16 %v1317
        %v4376 = vunpack.c.h.b16 %v1317
        %v4377 = vunpack.c.l.b16 %v1318
        %v4378 = vunpack.c.h.b16 %v1318
        %v4379 = vunpack.c.l.b16 %v1319
        %v4380 = vunpack.c.h.b16 %v1319
        %v4381 = vunpack.c.l.b16 %v1320
        %v4382 = vunpack.c.h.b16 %v1320
        %v4383 = vunpack.c.l.b16 %v1321
        %v4384 = vunpack.c.h.b16 %v1321
        %v4385 = vunpack.c.l.b16 %v1322
        %v4386 = vunpack.c.h.b16 %v1322
        %v4387 = vunpack.c.l.b16 %v1323
        %v4388 = vunpack.c.h.b16 %v1323
        %v4389 = vunpack.c.l.b16 %v1324
        %v4390 = vunpack.c.h.b16 %v1324
        %v4391 = vunpack.c.l.b16 %v1325
        %v4392 = vunpack.c.h.b16 %v1325
        %v4393 = vunpack.c.l.b16 %v1326
        %v4394 = vunpack.c.h.b16 %v1326
        %v4395 = vunpack.c.l.b16 %v1327
        %v4396 = vunpack.c.h.b16 %v1327
        %v4397 = vunpack.c.l.b16 %v1328
        %v4398 = vunpack.c.h.b16 %v1328
        %v4399 = vunpack.c.l.b16 %v1329
        %v4400 = vunpack.c.h.b16 %v1329
        %v4401 = vunpack.c.l.b16 %v1330
        %v4402 = vunpack.c.h.b16 %v1330
        %v4403 = vunpack.c.l.b16 %v1331
        %v4404 = vunpack.c.h.b16 %v1331
        %v4405 = vunpack.c.l.b16 %v1332
        %v4406 = vunpack.c.h.b16 %v1332
        %v4407 = vunpack.c.l.b16 %v1333
        %v4408 = vunpack.c.h.b16 %v1333
        %v4409 = vunpack.c.l.b16 %v1334
        %v4410 = vunpack.c.h.b16 %v1334
        %v4411 = vunpack.c.l.b16 %v1335
        %v4412 = vunpack.c.h.b16 %v1335
        %v4413 = vunpack.c.l.b16 %v1336
        %v4414 = vunpack.c.h.b16 %v1336
        %v4415 = vunpack.c.l.b16 %v1337
        %v4416 = vunpack.c.h.b16 %v1337
        %v4417 = vunpack.c.l.b16 %v1338
        %v4418 = vunpack.c.h.b16 %v1338
        %v4419 = vunpack.c.l.b16 %v1339
        %v4420 = vunpack.c.h.b16 %v1339
        %v4421 = vunpack.c.l.b16 %v1340
        %v4422 = vunpack.c.h.b16 %v1340
        %v4423 = vunpack.c.l.b16 %v1341
        %v4424 = vunpack.c.h.b16 %v1341
        %v4425 = vunpack.c.l.b16 %v1342
        %v4426 = vunpack.c.h.b16 %v1342
        %v4427 = vunpack.c.l.b16 %v1343
        %v4428 = vunpack.c.h.b16 %v1343
        %v4429 = vunpack.c.l.b16 %v1344
        %v4430 = vunpack.c.h.b16 %v1344
        %v4431 = vunpack.c.l.b16 %v1345
        %v4432 = vunpack.c.h.b16 %v1345
        %v4433 = vunpack.c.l.b16 %v1346
        %v4434 = vunpack.c.h.b16 %v1346
        %v4435 = vunpack.c.l.b16 %v1347
        %v4436 = vunpack.c.h.b16 %v1347
        %v4437 = vunpack.c.l.b16 %v1348
        %v4438 = vunpack.c.h.b16 %v1348
        %v4439 = vunpack.c.l.b16 %v1349
        %v4440 = vunpack.c.h.b16 %v1349
        %v4441 = vunpack.c.l.b16 %v1350
        %v4442 = vunpack.c.h.b16 %v1350
        %v4443 = vunpack.c.l.b16 %v1351
        %v4444 = vunpack.c.h.b16 %v1351
        %v4445 = vunpack.c.l.b16 %v1352
        %v4446 = vunpack.c.h.b16 %v1352
        %v4447 = vunpack.c.l.b16 %v1353
        %v4448 = vunpack.c.h.b16 %v1353
        %v4449 = vunpack.c.l.b16 %v1354
        %v4450 = vunpack.c.h.b16 %v1354
        %v4451 = vunpack.c.l.b16 %v1355
        %v4452 = vunpack.c.h.b16 %v1355
        %v4453 = vunpack.c.l.b16 %v1356
        %v4454 = vunpack.c.h.b16 %v1356
        %v4455 = vunpack.c.l.b16 %v1357
        %v4456 = vunpack.c.h.b16 %v1357
        %v4457 = vunpack.c.l.b16 %v1358
        %v4458 = vunpack.c.h.b16 %v1358
        %v4459 = vpack.c.b16 %v2427, %v2411
        %v4460 = vpack.c.b16 %v2428, %v2412
        %v4461 = vpack.c.b16 %v2429, %v2413
        %v4462 = vpack.c.b16 %v2430, %v2414
        %v4463 = vpack.c.b16 %v2431, %v2415
        %v4464 = vpack.c.b16 %v2432, %v2416
        %v4465 = vpack.c.b16 %v2433, %v2417
        %v4466 = vpack.c.b16 %v2434, %v2418
        %v4467 = vpack.c.b16 %v2435, %v2419
        %v4468 = vpack.c.b16 %v2436, %v2420
        %v4469 = vpack.c.b16 %v2437, %v2421
        %v4470 = vpack.c.b16 %v2438, %v2422
        %v4471 = vpack.c.b16 %v2439, %v2423
        %v4472 = vpack.c.b16 %v2440, %v2424
        %v4473 = vpack.c.b16 %v2441, %v2425
        %v4474 = vpack.c.b16 %v2442, %v2426
        %v4475 = vpack.c.b16 %v2459, %v2443
        %v4476 = vpack.c.b16 %v2460, %v2444
        %v4477 = vpack.c.b16 %v2461, %v2445
        %v4478 = vpack.c.b16 %v2462, %v2446
        %v4479 = vpack.c.b16 %v2463, %v2447
        %v4480 = vpack.c.b16 %v2464, %v2448
        %v4481 = vpack.c.b16 %v2465, %v2449
        %v4482 = vpack.c.b16 %v2466, %v2450
        %v4483 = vpack.c.b16 %v2467, %v2451
        %v4484 = vpack.c.b16 %v2468, %v2452
        %v4485 = vpack.c.b16 %v2469, %v2453
        %v4486 = vpack.c.b16 %v2470, %v2454
        %v4487 = vpack.c.b16 %v2471, %v2455
        %v4488 = vpack.c.b16 %v2472, %v2456
        %v4489 = vpack.c.b16 %v2473, %v2457
        %v4490 = vpack.c.b16 %v2474, %v2458
        %v4491 = vpack.c.b16 %v2491, %v2475
        %v4492 = vpack.c.b16 %v2492, %v2476
        %v4493 = vpack.c.b16 %v2493, %v2477
        %v4494 = vpack.c.b16 %v2494, %v2478
        %v4495 = vpack.c.b16 %v2495, %v2479
        %v4496 = vpack.c.b16 %v2496, %v2480
        %v4497 = vpack.c.b16 %v2497, %v2481
        %v4498 = vpack.c.b16 %v2498, %v2482
        %v4499 = vpack.c.b16 %v2499, %v2483
        %v4500 = vpack.c.b16 %v2500, %v2484
        %v4501 = vpack.c.b16 %v2501, %v2485
        %v4502 = vpack.c.b16 %v2502, %v2486
        %v4503 = vpack.c.b16 %v2503, %v2487
        %v4504 = vpack.c.b16 %v2504, %v2488
        %v4505 = vpack.c.b16 %v2505, %v2489
        %v4506 = vpack.c.b16 %v2506, %v2490
        %v4507 = vpack.c.b16 %v2523, %v2507
        %v4508 = vpack.c.b16 %v2524, %v2508
        %v4509 = vpack.c.b16 %v2525, %v2509
        %v4510 = vpack.c.b16 %v2526, %v2510
        %v4511 = vpack.c.b16 %v2527, %v2511
        %v4512 = vpack.c.b16 %v2528, %v2512
        %v4513 = vpack.c.b16 %v2529, %v2513
        %v4514 = vpack.c.b16 %v2530, %v2514
        %v4515 = vpack.c.b16 %v2531, %v2515
        %v4516 = vpack.c.b16 %v2532, %v2516
        %v4517 = vpack.c.b16 %v2533, %v2517
        %v4518 = vpack.c.b16 %v2534, %v2518
        %v4519 = vpack.c.b16 %v2535, %v2519
        %v4520 = vpack.c.b16 %v2536, %v2520
        %v4521 = vpack.c.b16 %v2537, %v2521
        %v4522 = vpack.c.b16 %v2538, %v2522
        %v4523 = vpack.c.b16 %v2555, %v2539
        %v4524 = vpack.c.b16 %v2556, %v2540
        %v4525 = vpack.c.b16 %v2557, %v2541
        %v4526 = vpack.c.b16 %v2558, %v2542
        %v4527 = vpack.c.b16 %v2559, %v2543
        %v4528 = vpack.c.b16 %v2560, %v2544
        %v4529 = vpack.c.b16 %v2561, %v2545
        %v4530 = vpack.c.b16 %v2562, %v2546
        %v4531 = vpack.c.b16 %v2563, %v2547
        %v4532 = vpack.c.b16 %v2564, %v2548
        %v4533 = vpack.c.b16 %v2565, %v2549
        %v4534 = vpack.c.b16 %v2566, %v2550
        %v4535 = vpack.c.b16 %v2567, %v2551
        %v4536 = vpack.c.b16 %v2568, %v2552
        %v4537 = vpack.c.b16 %v2569, %v2553
        %v4538 = vpack.c.b16 %v2570, %v2554
        %v4539 = vpack.c.b16 %v2587, %v2571
        %v4540 = vpack.c.b16 %v2588, %v2572
        %v4541 = vpack.c.b16 %v2589, %v2573
        %v4542 = vpack.c.b16 %v2590, %v2574
        %v4543 = vpack.c.b16 %v2591, %v2575
        %v4544 = vpack.c.b16 %v2592, %v2576
        %v4545 = vpack.c.b16 %v2593, %v2577
        %v4546 = vpack.c.b16 %v2594, %v2578
        %v4547 = vpack.c.b16 %v2595, %v2579
        %v4548 = vpack.c.b16 %v2596, %v2580
        %v4549 = vpack.c.b16 %v2597, %v2581
        %v4550 = vpack.c.b16 %v2598, %v2582
        %v4551 = vpack.c.b16 %v2599, %v2583
        %v4552 = vpack.c.b16 %v2600, %v2584
        %v4553 = vpack.c.b16 %v2601, %v2585
        %v4554 = vpack.c.b16 %v2602, %v2586
        %v4555 = vpack.c.b16 %v2619, %v2603
        %v4556 = vpack.c.b16 %v2620, %v2604
        %v4557 = vpack.c.b16 %v2621, %v2605
        %v4558 = vpack.c.b16 %v2622, %v2606
        %v4559 = vpack.c.b16 %v2623, %v2607
        %v4560 = vpack.c.b16 %v2624, %v2608
        %v4561 = vpack.c.b16 %v2625, %v2609
        %v4562 = vpack.c.b16 %v2626, %v2610
        %v4563 = vpack.c.b16 %v2627, %v2611
        %v4564 = vpack.c.b16 %v2628, %v2612
        %v4565 = vpack.c.b16 %v2629, %v2613
        %v4566 = vpack.c.b16 %v2630, %v2614
        %v4567 = vpack.c.b16 %v2631, %v2615
        %v4568 = vpack.c.b16 %v2632, %v2616
        %v4569 = vpack.c.b16 %v2633, %v2617
        %v4570 = vpack.c.b16 %v2634, %v2618
        %v4571 = vpack.c.b16 %v2651, %v2635
        %v4572 = vpack.c.b16 %v2652, %v2636
        %v4573 = vpack.c.b16 %v2653, %v2637
        %v4574 = vpack.c.b16 %v2654, %v2638
        %v4575 = vpack.c.b16 %v2655, %v2639
        %v4576 = vpack.c.b16 %v2656, %v2640
        %v4577 = vpack.c.b16 %v2657, %v2641
        %v4578 = vpack.c.b16 %v2658, %v2642
        %v4579 = vpack.c.b16 %v2659, %v2643
        %v4580 = vpack.c.b16 %v2660, %v2644
        %v4581 = vpack.c.b16 %v2661, %v2645
        %v4582 = vpack.c.b16 %v2662, %v2646
        %v4583 = vpack.c.b16 %v2663, %v2647
        %v4584 = vpack.c.b16 %v2664, %v2648
        %v4585 = vpack.c.b16 %v2665, %v2649
        %v4586 = vpack.c.b16 %v2666, %v2650
        %v4587 = vpack.c.b16 %v2683, %v2667
        %v4588 = vpack.c.b16 %v2684, %v2668
        %v4589 = vpack.c.b16 %v2685, %v2669
        %v4590 = vpack.c.b16 %v2686, %v2670
        %v4591 = vpack.c.b16 %v2687, %v2671
        %v4592 = vpack.c.b16 %v2688, %v2672
        %v4593 = vpack.c.b16 %v2689, %v2673
        %v4594 = vpack.c.b16 %v2690, %v2674
        %v4595 = vpack.c.b16 %v2691, %v2675
        %v4596 = vpack.c.b16 %v2692, %v2676
        %v4597 = vpack.c.b16 %v2693, %v2677
        %v4598 = vpack.c.b16 %v2694, %v2678
        %v4599 = vpack.c.b16 %v2695, %v2679
        %v4600 = vpack.c.b16 %v2696, %v2680
        %v4601 = vpack.c.b16 %v2697, %v2681
        %v4602 = vpack.c.b16 %v2698, %v2682
        %v4603 = vpack.c.b16 %v2715, %v2699
        %v4604 = vpack.c.b16 %v2716, %v2700
        %v4605 = vpack.c.b16 %v2717, %v2701
        %v4606 = vpack.c.b16 %v2718, %v2702
        %v4607 = vpack.c.b16 %v2719, %v2703
        %v4608 = vpack.c.b16 %v2720, %v2704
        %v4609 = vpack.c.b16 %v2721, %v2705
        %v4610 = vpack.c.b16 %v2722, %v2706
        %v4611 = vpack.c.b16 %v2723, %v2707
        %v4612 = vpack.c.b16 %v2724, %v2708
        %v4613 = vpack.c.b16 %v2725, %v2709
        %v4614 = vpack.c.b16 %v2726, %v2710
        %v4615 = vpack.c.b16 %v2727, %v2711
        %v4616 = vpack.c.b16 %v2728, %v2712
        %v4617 = vpack.c.b16 %v2729, %v2713
        %v4618 = vpack.c.b16 %v2730, %v2714
        %v4619 = vpack.c.b16 %v2747, %v2731
        %v4620 = vpack.c.b16 %v2748, %v2732
        %v4621 = vpack.c.b16 %v2749, %v2733
        %v4622 = vpack.c.b16 %v2750, %v2734
        %v4623 = vpack.c.b16 %v2751, %v2735
        %v4624 = vpack.c.b16 %v2752, %v2736
        %v4625 = vpack.c.b16 %v2753, %v2737
        %v4626 = vpack.c.b16 %v2754, %v2738
        %v4627 = vpack.c.b16 %v2755, %v2739
        %v4628 = vpack.c.b16 %v2756, %v2740
        %v4629 = vpack.c.b16 %v2757, %v2741
        %v4630 = vpack.c.b16 %v2758, %v2742
        %v4631 = vpack.c.b16 %v2759, %v2743
        %v4632 = vpack.c.b16 %v2760, %v2744
        %v4633 = vpack.c.b16 %v2761, %v2745
        %v4634 = vpack.c.b16 %v2762, %v2746
        %v4635 = vpack.c.b16 %v2779, %v2763
        %v4636 = vpack.c.b16 %v2780, %v2764
        %v4637 = vpack.c.b16 %v2781, %v2765
        %v4638 = vpack.c.b16 %v2782, %v2766
        %v4639 = vpack.c.b16 %v2783, %v2767
        %v4640 = vpack.c.b16 %v2784, %v2768
        %v4641 = vpack.c.b16 %v2785, %v2769
        %v4642 = vpack.c.b16 %v2786, %v2770
        %v4643 = vpack.c.b16 %v2787, %v2771
        %v4644 = vpack.c.b16 %v2788, %v2772
        %v4645 = vpack.c.b16 %v2789, %v2773
        %v4646 = vpack.c.b16 %v2790, %v2774
        %v4647 = vpack.c.b16 %v2791, %v2775
        %v4648 = vpack.c.b16 %v2792, %v2776
        %v4649 = vpack.c.b16 %v2793, %v2777
        %v4650 = vpack.c.b16 %v2794, %v2778
        %v4651 = vpack.c.b16 %v2811, %v2795
        %v4652 = vpack.c.b16 %v2812, %v2796
        %v4653 = vpack.c.b16 %v2813, %v2797
        %v4654 = vpack.c.b16 %v2814, %v2798
        %v4655 = vpack.c.b16 %v2815, %v2799
        %v4656 = vpack.c.b16 %v2816, %v2800
        %v4657 = vpack.c.b16 %v2817, %v2801
        %v4658 = vpack.c.b16 %v2818, %v2802
        %v4659 = vpack.c.b16 %v2819, %v2803
        %v4660 = vpack.c.b16 %v2820, %v2804
        %v4661 = vpack.c.b16 %v2821, %v2805
        %v4662 = vpack.c.b16 %v2822, %v2806
        %v4663 = vpack.c.b16 %v2823, %v2807
        %v4664 = vpack.c.b16 %v2824, %v2808
        %v4665 = vpack.c.b16 %v2825, %v2809
        %v4666 = vpack.c.b16 %v2826, %v2810
        %v4667 = vpack.c.b16 %v2843, %v2827
        %v4668 = vpack.c.b16 %v2844, %v2828
        %v4669 = vpack.c.b16 %v2845, %v2829
        %v4670 = vpack.c.b16 %v2846, %v2830
        %v4671 = vpack.c.b16 %v2847, %v2831
        %v4672 = vpack.c.b16 %v2848, %v2832
        %v4673 = vpack.c.b16 %v2849, %v2833
        %v4674 = vpack.c.b16 %v2850, %v2834
        %v4675 = vpack.c.b16 %v2851, %v2835
        %v4676 = vpack.c.b16 %v2852, %v2836
        %v4677 = vpack.c.b16 %v2853, %v2837
        %v4678 = vpack.c.b16 %v2854, %v2838
        %v4679 = vpack.c.b16 %v2855, %v2839
        %v4680 = vpack.c.b16 %v2856, %v2840
        %v4681 = vpack.c.b16 %v2857, %v2841
        %v4682 = vpack.c.b16 %v2858, %v2842
        %v4683 = vpack.c.b16 %v2875, %v2859
        %v4684 = vpack.c.b16 %v2876, %v2860
        %v4685 = vpack.c.b16 %v2877, %v2861
        %v4686 = vpack.c.b16 %v2878, %v2862
        %v4687 = vpack.c.b16 %v2879, %v2863
        %v4688 = vpack.c.b16 %v2880, %v2864
        %v4689 = vpack.c.b16 %v2881, %v2865
        %v4690 = vpack.c.b16 %v2882, %v2866
        %v4691 = vpack.c.b16 %v2883, %v2867
        %v4692 = vpack.c.b16 %v2884, %v2868
        %v4693 = vpack.c.b16 %v2885, %v2869
        %v4694 = vpack.c.b16 %v2886, %v2870
        %v4695 = vpack.c.b16 %v2887, %v2871
        %v4696 = vpack.c.b16 %v2888, %v2872
        %v4697 = vpack.c.b16 %v2889, %v2873
        %v4698 = vpack.c.b16 %v2890, %v2874
        %v4699 = vpack.c.b16 %v2907, %v2891
        %v4700 = vpack.c.b16 %v2908, %v2892
        %v4701 = vpack.c.b16 %v2909, %v2893
        %v4702 = vpack.c.b16 %v2910, %v2894
        %v4703 = vpack.c.b16 %v2911, %v2895
        %v4704 = vpack.c.b16 %v2912, %v2896
        %v4705 = vpack.c.b16 %v2913, %v2897
        %v4706 = vpack.c.b16 %v2914, %v2898
        %v4707 = vpack.c.b16 %v2915, %v2899
        %v4708 = vpack.c.b16 %v2916, %v2900
        %v4709 = vpack.c.b16 %v2917, %v2901
        %v4710 = vpack.c.b16 %v2918, %v2902
        %v4711 = vpack.c.b16 %v2919, %v2903
        %v4712 = vpack.c.b16 %v2920, %v2904
        %v4713 = vpack.c.b16 %v2921, %v2905
        %v4714 = vpack.c.b16 %v2922, %v2906
        %v4715 = vpack.c.b16 %v2939, %v2923
        %v4716 = vpack.c.b16 %v2940, %v2924
        %v4717 = vpack.c.b16 %v2941, %v2925
        %v4718 = vpack.c.b16 %v2942, %v2926
        %v4719 = vpack.c.b16 %v2943, %v2927
        %v4720 = vpack.c.b16 %v2944, %v2928
        %v4721 = vpack.c.b16 %v2945, %v2929
        %v4722 = vpack.c.b16 %v2946, %v2930
        %v4723 = vpack.c.b16 %v2947, %v2931
        %v4724 = vpack.c.b16 %v2948, %v2932
        %v4725 = vpack.c.b16 %v2949, %v2933
        %v4726 = vpack.c.b16 %v2950, %v2934
        %v4727 = vpack.c.b16 %v2951, %v2935
        %v4728 = vpack.c.b16 %v2952, %v2936
        %v4729 = vpack.c.b16 %v2953, %v2937
        %v4730 = vpack.c.b16 %v2954, %v2938
        %v4731 = vpack.c.b16 %v2971, %v2955
        %v4732 = vpack.c.b16 %v2972, %v2956
        %v4733 = vpack.c.b16 %v2973, %v2957
        %v4734 = vpack.c.b16 %v2974, %v2958
        %v4735 = vpack.c.b16 %v2975, %v2959
        %v4736 = vpack.c.b16 %v2976, %v2960
        %v4737 = vpack.c.b16 %v2977, %v2961
        %v4738 = vpack.c.b16 %v2978, %v2962
        %v4739 = vpack.c.b16 %v2979, %v2963
        %v4740 = vpack.c.b16 %v2980, %v2964
        %v4741 = vpack.c.b16 %v2981, %v2965
        %v4742 = vpack.c.b16 %v2982, %v2966
        %v4743 = vpack.c.b16 %v2983, %v2967
        %v4744 = vpack.c.b16 %v2984, %v2968
        %v4745 = vpack.c.b16 %v2985, %v2969
        %v4746 = vpack.c.b16 %v2986, %v2970
        %v4747 = vpack.c.b16 %v3003, %v2987
        %v4748 = vpack.c.b16 %v3004, %v2988
        %v4749 = vpack.c.b16 %v3005, %v2989
        %v4750 = vpack.c.b16 %v3006, %v2990
        %v4751 = vpack.c.b16 %v3007, %v2991
        %v4752 = vpack.c.b16 %v3008, %v2992
        %v4753 = vpack.c.b16 %v3009, %v2993
        %v4754 = vpack.c.b16 %v3010, %v2994
        %v4755 = vpack.c.b16 %v3011, %v2995
        %v4756 = vpack.c.b16 %v3012, %v2996
        %v4757 = vpack.c.b16 %v3013, %v2997
        %v4758 = vpack.c.b16 %v3014, %v2998
        %v4759 = vpack.c.b16 %v3015, %v2999
        %v4760 = vpack.c.b16 %v3016, %v3000
        %v4761 = vpack.c.b16 %v3017, %v3001
        %v4762 = vpack.c.b16 %v3018, %v3002
        %v4763 = vpack.c.b16 %v3035, %v3019
        %v4764 = vpack.c.b16 %v3036, %v3020
        %v4765 = vpack.c.b16 %v3037, %v3021
        %v4766 = vpack.c.b16 %v3038, %v3022
        %v4767 = vpack.c.b16 %v3039, %v3023
        %v4768 = vpack.c.b16 %v3040, %v3024
        %v4769 = vpack.c.b16 %v3041, %v3025
        %v4770 = vpack.c.b16 %v3042, %v3026
        %v4771 = vpack.c.b16 %v3043, %v3027
        %v4772 = vpack.c.b16 %v3044, %v3028
        %v4773 = vpack.c.b16 %v3045, %v3029
        %v4774 = vpack.c.b16 %v3046, %v3030
        %v4775 = vpack.c.b16 %v3047, %v3031
        %v4776 = vpack.c.b16 %v3048, %v3032
        %v4777 = vpack.c.b16 %v3049, %v3033
        %v4778 = vpack.c.b16 %v3050, %v3034
        %v4779 = vpack.c.b16 %v3067, %v3051
        %v4780 = vpack.c.b16 %v3068, %v3052
        %v4781 = vpack.c.b16 %v3069, %v3053
        %v4782 = vpack.c.b16 %v3070, %v3054
        %v4783 = vpack.c.b16 %v3071, %v3055
        %v4784 = vpack.c.b16 %v3072, %v3056
        %v4785 = vpack.c.b16 %v3073, %v3057
        %v4786 = vpack.c.b16 %v3074, %v3058
        %v4787 = vpack.c.b16 %v3075, %v3059
        %v4788 = vpack.c.b16 %v3076, %v3060
        %v4789 = vpack.c.b16 %v3077, %v3061
        %v4790 = vpack.c.b16 %v3078, %v3062
        %v4791 = vpack.c.b16 %v3079, %v3063
        %v4792 = vpack.c.b16 %v3080, %v3064
        %v4793 = vpack.c.b16 %v3081, %v3065
        %v4794 = vpack.c.b16 %v3082, %v3066
        %v4795 = vpack.c.b16 %v3099, %v3083
        %v4796 = vpack.c.b16 %v3100, %v3084
        %v4797 = vpack.c.b16 %v3101, %v3085
        %v4798 = vpack.c.b16 %v3102, %v3086
        %v4799 = vpack.c.b16 %v3103, %v3087
        %v4800 = vpack.c.b16 %v3104, %v3088
        %v4801 = vpack.c.b16 %v3105, %v3089
        %v4802 = vpack.c.b16 %v3106, %v3090
        %v4803 = vpack.c.b16 %v3107, %v3091
        %v4804 = vpack.c.b16 %v3108, %v3092
        %v4805 = vpack.c.b16 %v3109, %v3093
        %v4806 = vpack.c.b16 %v3110, %v3094
        %v4807 = vpack.c.b16 %v3111, %v3095
        %v4808 = vpack.c.b16 %v3112, %v3096
        %v4809 = vpack.c.b16 %v3113, %v3097
        %v4810 = vpack.c.b16 %v3114, %v3098
        %v4811 = vpack.c.b16 %v3131, %v3115
        %v4812 = vpack.c.b16 %v3132, %v3116
        %v4813 = vpack.c.b16 %v3133, %v3117
        %v4814 = vpack.c.b16 %v3134, %v3118
        %v4815 = vpack.c.b16 %v3135, %v3119
        %v4816 = vpack.c.b16 %v3136, %v3120
        %v4817 = vpack.c.b16 %v3137, %v3121
        %v4818 = vpack.c.b16 %v3138, %v3122
        %v4819 = vpack.c.b16 %v3139, %v3123
        %v4820 = vpack.c.b16 %v3140, %v3124
        %v4821 = vpack.c.b16 %v3141, %v3125
        %v4822 = vpack.c.b16 %v3142, %v3126
        %v4823 = vpack.c.b16 %v3143, %v3127
        %v4824 = vpack.c.b16 %v3144, %v3128
        %v4825 = vpack.c.b16 %v3145, %v3129
        %v4826 = vpack.c.b16 %v3146, %v3130
        %v4827 = vpack.c.b16 %v3163, %v3147
        %v4828 = vpack.c.b16 %v3164, %v3148
        %v4829 = vpack.c.b16 %v3165, %v3149
        %v4830 = vpack.c.b16 %v3166, %v3150
        %v4831 = vpack.c.b16 %v3167, %v3151
        %v4832 = vpack.c.b16 %v3168, %v3152
        %v4833 = vpack.c.b16 %v3169, %v3153
        %v4834 = vpack.c.b16 %v3170, %v3154
        %v4835 = vpack.c.b16 %v3171, %v3155
        %v4836 = vpack.c.b16 %v3172, %v3156
        %v4837 = vpack.c.b16 %v3173, %v3157
        %v4838 = vpack.c.b16 %v3174, %v3158
        %v4839 = vpack.c.b16 %v3175, %v3159
        %v4840 = vpack.c.b16 %v3176, %v3160
        %v4841 = vpack.c.b16 %v3177, %v3161
        %v4842 = vpack.c.b16 %v3178, %v3162
        %v4843 = vpack.c.b16 %v3195, %v3179
        %v4844 = vpack.c.b16 %v3196, %v3180
        %v4845 = vpack.c.b16 %v3197, %v3181
        %v4846 = vpack.c.b16 %v3198, %v3182
        %v4847 = vpack.c.b16 %v3199, %v3183
        %v4848 = vpack.c.b16 %v3200, %v3184
        %v4849 = vpack.c.b16 %v3201, %v3185
        %v4850 = vpack.c.b16 %v3202, %v3186
        %v4851 = vpack.c.b16 %v3203, %v3187
        %v4852 = vpack.c.b16 %v3204, %v3188
        %v4853 = vpack.c.b16 %v3205, %v3189
        %v4854 = vpack.c.b16 %v3206, %v3190
        %v4855 = vpack.c.b16 %v3207, %v3191
        %v4856 = vpack.c.b16 %v3208, %v3192
        %v4857 = vpack.c.b16 %v3209, %v3193
        %v4858 = vpack.c.b16 %v3210, %v3194
        %v4859 = vpack.c.b16 %v3227, %v3211
        %v4860 = vpack.c.b16 %v3228, %v3212
        %v4861 = vpack.c.b16 %v3229, %v3213
        %v4862 = vpack.c.b16 %v3230, %v3214
        %v4863 = vpack.c.b16 %v3231, %v3215
        %v4864 = vpack.c.b16 %v3232, %v3216
        %v4865 = vpack.c.b16 %v3233, %v3217
        %v4866 = vpack.c.b16 %v3234, %v3218
        %v4867 = vpack.c.b16 %v3235, %v3219
        %v4868 = vpack.c.b16 %v3236, %v3220
        %v4869 = vpack.c.b16 %v3237, %v3221
        %v4870 = vpack.c.b16 %v3238, %v3222
        %v4871 = vpack.c.b16 %v3239, %v3223
        %v4872 = vpack.c.b16 %v3240, %v3224
        %v4873 = vpack.c.b16 %v3241, %v3225
        %v4874 = vpack.c.b16 %v3242, %v3226
        %v4875 = vpack.c.b16 %v3259, %v3243
        %v4876 = vpack.c.b16 %v3260, %v3244
        %v4877 = vpack.c.b16 %v3261, %v3245
        %v4878 = vpack.c.b16 %v3262, %v3246
        %v4879 = vpack.c.b16 %v3263, %v3247
        %v4880 = vpack.c.b16 %v3264, %v3248
        %v4881 = vpack.c.b16 %v3265, %v3249
        %v4882 = vpack.c.b16 %v3266, %v3250
        %v4883 = vpack.c.b16 %v3267, %v3251
        %v4884 = vpack.c.b16 %v3268, %v3252
        %v4885 = vpack.c.b16 %v3269, %v3253
        %v4886 = vpack.c.b16 %v3270, %v3254
        %v4887 = vpack.c.b16 %v3271, %v3255
        %v4888 = vpack.c.b16 %v3272, %v3256
        %v4889 = vpack.c.b16 %v3273, %v3257
        %v4890 = vpack.c.b16 %v3274, %v3258
        %v4891 = vpack.c.b16 %v3291, %v3275
        %v4892 = vpack.c.b16 %v3292, %v3276
        %v4893 = vpack.c.b16 %v3293, %v3277
        %v4894 = vpack.c.b16 %v3294, %v3278
        %v4895 = vpack.c.b16 %v3295, %v3279
        %v4896 = vpack.c.b16 %v3296, %v3280
        %v4897 = vpack.c.b16 %v3297, %v3281
        %v4898 = vpack.c.b16 %v3298, %v3282
        %v4899 = vpack.c.b16 %v3299, %v3283
        %v4900 = vpack.c.b16 %v3300, %v3284
        %v4901 = vpack.c.b16 %v3301, %v3285
        %v4902 = vpack.c.b16 %v3302, %v3286
        %v4903 = vpack.c.b16 %v3303, %v3287
        %v4904 = vpack.c.b16 %v3304, %v3288
        %v4905 = vpack.c.b16 %v3305, %v3289
        %v4906 = vpack.c.b16 %v3306, %v3290
        %v4907 = vpack.c.b16 %v3323, %v3307
        %v4908 = vpack.c.b16 %v3324, %v3308
        %v4909 = vpack.c.b16 %v3325, %v3309
        %v4910 = vpack.c.b16 %v3326, %v3310
        %v4911 = vpack.c.b16 %v3327, %v3311
        %v4912 = vpack.c.b16 %v3328, %v3312
        %v4913 = vpack.c.b16 %v3329, %v3313
        %v4914 = vpack.c.b16 %v3330, %v3314
        %v4915 = vpack.c.b16 %v3331, %v3315
        %v4916 = vpack.c.b16 %v3332, %v3316
        %v4917 = vpack.c.b16 %v3333, %v3317
        %v4918 = vpack.c.b16 %v3334, %v3318
        %v4919 = vpack.c.b16 %v3335, %v3319
        %v4920 = vpack.c.b16 %v3336, %v3320
        %v4921 = vpack.c.b16 %v3337, %v3321
        %v4922 = vpack.c.b16 %v3338, %v3322
        %v4923 = vpack.c.b16 %v3355, %v3339
        %v4924 = vpack.c.b16 %v3356, %v3340
        %v4925 = vpack.c.b16 %v3357, %v3341
        %v4926 = vpack.c.b16 %v3358, %v3342
        %v4927 = vpack.c.b16 %v3359, %v3343
        %v4928 = vpack.c.b16 %v3360, %v3344
        %v4929 = vpack.c.b16 %v3361, %v3345
        %v4930 = vpack.c.b16 %v3362, %v3346
        %v4931 = vpack.c.b16 %v3363, %v3347
        %v4932 = vpack.c.b16 %v3364, %v3348
        %v4933 = vpack.c.b16 %v3365, %v3349
        %v4934 = vpack.c.b16 %v3366, %v3350
        %v4935 = vpack.c.b16 %v3367, %v3351
        %v4936 = vpack.c.b16 %v3368, %v3352
        %v4937 = vpack.c.b16 %v3369, %v3353
        %v4938 = vpack.c.b16 %v3370, %v3354
        %v4939 = vpack.c.b16 %v3387, %v3371
        %v4940 = vpack.c.b16 %v3388, %v3372
        %v4941 = vpack.c.b16 %v3389, %v3373
        %v4942 = vpack.c.b16 %v3390, %v3374
        %v4943 = vpack.c.b16 %v3391, %v3375
        %v4944 = vpack.c.b16 %v3392, %v3376
        %v4945 = vpack.c.b16 %v3393, %v3377
        %v4946 = vpack.c.b16 %v3394, %v3378
        %v4947 = vpack.c.b16 %v3395, %v3379
        %v4948 = vpack.c.b16 %v3396, %v3380
        %v4949 = vpack.c.b16 %v3397, %v3381
        %v4950 = vpack.c.b16 %v3398, %v3382
        %v4951 = vpack.c.b16 %v3399, %v3383
        %v4952 = vpack.c.b16 %v3400, %v3384
        %v4953 = vpack.c.b16 %v3401, %v3385
        %v4954 = vpack.c.b16 %v3402, %v3386
        %v4955 = vpack.c.b16 %v3419, %v3403
        %v4956 = vpack.c.b16 %v3420, %v3404
        %v4957 = vpack.c.b16 %v3421, %v3405
        %v4958 = vpack.c.b16 %v3422, %v3406
        %v4959 = vpack.c.b16 %v3423, %v3407
        %v4960 = vpack.c.b16 %v3424, %v3408
        %v4961 = vpack.c.b16 %v3425, %v3409
        %v4962 = vpack.c.b16 %v3426, %v3410
        %v4963 = vpack.c.b16 %v3427, %v3411
        %v4964 = vpack.c.b16 %v3428, %v3412
        %v4965 = vpack.c.b16 %v3429, %v3413
        %v4966 = vpack.c.b16 %v3430, %v3414
        %v4967 = vpack.c.b16 %v3431, %v3415
        %v4968 = vpack.c.b16 %v3432, %v3416
        %v4969 = vpack.c.b16 %v3433, %v3417
        %v4970 = vpack.c.b16 %v3434, %v3418
        %v4971 = vpack.c.b16 %v3451, %v3435
        %v4972 = vpack.c.b16 %v3452, %v3436
        %v4973 = vpack.c.b16 %v3453, %v3437
        %v4974 = vpack.c.b16 %v3454, %v3438
        %v4975 = vpack.c.b16 %v3455, %v3439
        %v4976 = vpack.c.b16 %v3456, %v3440
        %v4977 = vpack.c.b16 %v3457, %v3441
        %v4978 = vpack.c.b16 %v3458, %v3442
        %v4979 = vpack.c.b16 %v3459, %v3443
        %v4980 = vpack.c.b16 %v3460, %v3444
        %v4981 = vpack.c.b16 %v3461, %v3445
        %v4982 = vpack.c.b16 %v3462, %v3446
        %v4983 = vpack.c.b16 %v3463, %v3447
        %v4984 = vpack.c.b16 %v3464, %v3448
        %v4985 = vpack.c.b16 %v3465, %v3449
        %v4986 = vpack.c.b16 %v3466, %v3450
        %v4987 = vpack.c.b16 %v3483, %v3467
        %v4988 = vpack.c.b16 %v3484, %v3468
        %v4989 = vpack.c.b16 %v3485, %v3469
        %v4990 = vpack.c.b16 %v3486, %v3470
        %v4991 = vpack.c.b16 %v3487, %v3471
        %v4992 = vpack.c.b16 %v3488, %v3472
        %v4993 = vpack.c.b16 %v3489, %v3473
        %v4994 = vpack.c.b16 %v3490, %v3474
        %v4995 = vpack.c.b16 %v3491, %v3475
        %v4996 = vpack.c.b16 %v3492, %v3476
        %v4997 = vpack.c.b16 %v3493, %v3477
        %v4998 = vpack.c.b16 %v3494, %v3478
        %v4999 = vpack.c.b16 %v3495, %v3479
        %v5000 = vpack.c.b16 %v3496, %v3480
        %v5001 = vpack.c.b16 %v3497, %v3481
        %v5002 = vpack.c.b16 %v3498, %v3482
        %v5003 = vpack.c.b16 %v3515, %v3499
        %v5004 = vpack.c.b16 %v3516, %v3500
        %v5005 = vpack.c.b16 %v3517, %v3501
        %v5006 = vpack.c.b16 %v3518, %v3502
        %v5007 = vpack.c.b16 %v3519, %v3503
        %v5008 = vpack.c.b16 %v3520, %v3504
        %v5009 = vpack.c.b16 %v3521, %v3505
        %v5010 = vpack.c.b16 %v3522, %v3506
        %v5011 = vpack.c.b16 %v3523, %v3507
        %v5012 = vpack.c.b16 %v3524, %v3508
        %v5013 = vpack.c.b16 %v3525, %v3509
        %v5014 = vpack.c.b16 %v3526, %v3510
        %v5015 = vpack.c.b16 %v3527, %v3511
        %v5016 = vpack.c.b16 %v3528, %v3512
        %v5017 = vpack.c.b16 %v3529, %v3513
        %v5018 = vpack.c.b16 %v3530, %v3514
        %v5019 = vpack.c.b16 %v3547, %v3531
        %v5020 = vpack.c.b16 %v3548, %v3532
        %v5021 = vpack.c.b16 %v3549, %v3533
        %v5022 = vpack.c.b16 %v3550, %v3534
        %v5023 = vpack.c.b16 %v3551, %v3535
        %v5024 = vpack.c.b16 %v3552, %v3536
        %v5025 = vpack.c.b16 %v3553, %v3537
        %v5026 = vpack.c.b16 %v3554, %v3538
        %v5027 = vpack.c.b16 %v3555, %v3539
        %v5028 = vpack.c.b16 %v3556, %v3540
        %v5029 = vpack.c.b16 %v3557, %v3541
        %v5030 = vpack.c.b16 %v3558, %v3542
        %v5031 = vpack.c.b16 %v3559, %v3543
        %v5032 = vpack.c.b16 %v3560, %v3544
        %v5033 = vpack.c.b16 %v3561, %v3545
        %v5034 = vpack.c.b16 %v3562, %v3546
        %v5035 = vpack.c.b16 %v3579, %v3563
        %v5036 = vpack.c.b16 %v3580, %v3564
        %v5037 = vpack.c.b16 %v3581, %v3565
        %v5038 = vpack.c.b16 %v3582, %v3566
        %v5039 = vpack.c.b16 %v3583, %v3567
        %v5040 = vpack.c.b16 %v3584, %v3568
        %v5041 = vpack.c.b16 %v3585, %v3569
        %v5042 = vpack.c.b16 %v3586, %v3570
        %v5043 = vpack.c.b16 %v3587, %v3571
        %v5044 = vpack.c.b16 %v3588, %v3572
        %v5045 = vpack.c.b16 %v3589, %v3573
        %v5046 = vpack.c.b16 %v3590, %v3574
        %v5047 = vpack.c.b16 %v3591, %v3575
        %v5048 = vpack.c.b16 %v3592, %v3576
        %v5049 = vpack.c.b16 %v3593, %v3577
        %v5050 = vpack.c.b16 %v3594, %v3578
        %v5051 = vpack.c.b16 %v3611, %v3595
        %v5052 = vpack.c.b16 %v3612, %v3596
        %v5053 = vpack.c.b16 %v3613, %v3597
        %v5054 = vpack.c.b16 %v3614, %v3598
        %v5055 = vpack.c.b16 %v3615, %v3599
        %v5056 = vpack.c.b16 %v3616, %v3600
        %v5057 = vpack.c.b16 %v3617, %v3601
        %v5058 = vpack.c.b16 %v3618, %v3602
        %v5059 = vpack.c.b16 %v3619, %v3603
        %v5060 = vpack.c.b16 %v3620, %v3604
        %v5061 = vpack.c.b16 %v3621, %v3605
        %v5062 = vpack.c.b16 %v3622, %v3606
        %v5063 = vpack.c.b16 %v3623, %v3607
        %v5064 = vpack.c.b16 %v3624, %v3608
        %v5065 = vpack.c.b16 %v3625, %v3609
        %v5066 = vpack.c.b16 %v3626, %v3610
        %v5067 = vpack.c.b16 %v3643, %v3627
        %v5068 = vpack.c.b16 %v3644, %v3628
        %v5069 = vpack.c.b16 %v3645, %v3629
        %v5070 = vpack.c.b16 %v3646, %v3630
        %v5071 = vpack.c.b16 %v3647, %v3631
        %v5072 = vpack.c.b16 %v3648, %v3632
        %v5073 = vpack.c.b16 %v3649, %v3633
        %v5074 = vpack.c.b16 %v3650, %v3634
        %v5075 = vpack.c.b16 %v3651, %v3635
        %v5076 = vpack.c.b16 %v3652, %v3636
        %v5077 = vpack.c.b16 %v3653, %v3637
        %v5078 = vpack.c.b16 %v3654, %v3638
        %v5079 = vpack.c.b16 %v3655, %v3639
        %v5080 = vpack.c.b16 %v3656, %v3640
        %v5081 = vpack.c.b16 %v3657, %v3641
        %v5082 = vpack.c.b16 %v3658, %v3642
        %v5083 = vpack.c.b16 %v3675, %v3659
        %v5084 = vpack.c.b16 %v3676, %v3660
        %v5085 = vpack.c.b16 %v3677, %v3661
        %v5086 = vpack.c.b16 %v3678, %v3662
        %v5087 = vpack.c.b16 %v3679, %v3663
        %v5088 = vpack.c.b16 %v3680, %v3664
        %v5089 = vpack.c.b16 %v3681, %v3665
        %v5090 = vpack.c.b16 %v3682, %v3666
        %v5091 = vpack.c.b16 %v3683, %v3667
        %v5092 = vpack.c.b16 %v3684, %v3668
        %v5093 = vpack.c.b16 %v3685, %v3669
        %v5094 = vpack.c.b16 %v3686, %v3670
        %v5095 = vpack.c.b16 %v3687, %v3671
        %v5096 = vpack.c.b16 %v3688, %v3672
        %v5097 = vpack.c.b16 %v3689, %v3673
        %v5098 = vpack.c.b16 %v3690, %v3674
        %v5099 = vpack.c.b16 %v3707, %v3691
        %v5100 = vpack.c.b16 %v3708, %v3692
        %v5101 = vpack.c.b16 %v3709, %v3693
        %v5102 = vpack.c.b16 %v3710, %v3694
        %v5103 = vpack.c.b16 %v3711, %v3695
        %v5104 = vpack.c.b16 %v3712, %v3696
        %v5105 = vpack.c.b16 %v3713, %v3697
        %v5106 = vpack.c.b16 %v3714, %v3698
        %v5107 = vpack.c.b16 %v3715, %v3699
        %v5108 = vpack.c.b16 %v3716, %v3700
        %v5109 = vpack.c.b16 %v3717, %v3701
        %v5110 = vpack.c.b16 %v3718, %v3702
        %v5111 = vpack.c.b16 %v3719, %v3703
        %v5112 = vpack.c.b16 %v3720, %v3704
        %v5113 = vpack.c.b16 %v3721, %v3705
        %v5114 = vpack.c.b16 %v3722, %v3706
        %v5115 = vpack.c.b16 %v3739, %v3723
        %v5116 = vpack.c.b16 %v3740, %v3724
        %v5117 = vpack.c.b16 %v3741, %v3725
        %v5118 = vpack.c.b16 %v3742, %v3726
        %v5119 = vpack.c.b16 %v3743, %v3727
        %v5120 = vpack.c.b16 %v3744, %v3728
        %v5121 = vpack.c.b16 %v3745, %v3729
        %v5122 = vpack.c.b16 %v3746, %v3730
        %v5123 = vpack.c.b16 %v3747, %v3731
        %v5124 = vpack.c.b16 %v3748, %v3732
        %v5125 = vpack.c.b16 %v3749, %v3733
        %v5126 = vpack.c.b16 %v3750, %v3734
        %v5127 = vpack.c.b16 %v3751, %v3735
        %v5128 = vpack.c.b16 %v3752, %v3736
        %v5129 = vpack.c.b16 %v3753, %v3737
        %v5130 = vpack.c.b16 %v3754, %v3738
        %v5131 = vpack.c.b16 %v3771, %v3755
        %v5132 = vpack.c.b16 %v3772, %v3756
        %v5133 = vpack.c.b16 %v3773, %v3757
        %v5134 = vpack.c.b16 %v3774, %v3758
        %v5135 = vpack.c.b16 %v3775, %v3759
        %v5136 = vpack.c.b16 %v3776, %v3760
        %v5137 = vpack.c.b16 %v3777, %v3761
        %v5138 = vpack.c.b16 %v3778, %v3762
        %v5139 = vpack.c.b16 %v3779, %v3763
        %v5140 = vpack.c.b16 %v3780, %v3764
        %v5141 = vpack.c.b16 %v3781, %v3765
        %v5142 = vpack.c.b16 %v3782, %v3766
        %v5143 = vpack.c.b16 %v3783, %v3767
        %v5144 = vpack.c.b16 %v3784, %v3768
        %v5145 = vpack.c.b16 %v3785, %v3769
        %v5146 = vpack.c.b16 %v3786, %v3770
        %v5147 = vpack.c.b16 %v3803, %v3787
        %v5148 = vpack.c.b16 %v3804, %v3788
        %v5149 = vpack.c.b16 %v3805, %v3789
        %v5150 = vpack.c.b16 %v3806, %v3790
        %v5151 = vpack.c.b16 %v3807, %v3791
        %v5152 = vpack.c.b16 %v3808, %v3792
        %v5153 = vpack.c.b16 %v3809, %v3793
        %v5154 = vpack.c.b16 %v3810, %v3794
        %v5155 = vpack.c.b16 %v3811, %v3795
        %v5156 = vpack.c.b16 %v3812, %v3796
        %v5157 = vpack.c.b16 %v3813, %v3797
        %v5158 = vpack.c.b16 %v3814, %v3798
        %v5159 = vpack.c.b16 %v3815, %v3799
        %v5160 = vpack.c.b16 %v3816, %v3800
        %v5161 = vpack.c.b16 %v3817, %v3801
        %v5162 = vpack.c.b16 %v3818, %v3802
        %v5163 = vpack.c.b16 %v3835, %v3819
        %v5164 = vpack.c.b16 %v3836, %v3820
        %v5165 = vpack.c.b16 %v3837, %v3821
        %v5166 = vpack.c.b16 %v3838, %v3822
        %v5167 = vpack.c.b16 %v3839, %v3823
        %v5168 = vpack.c.b16 %v3840, %v3824
        %v5169 = vpack.c.b16 %v3841, %v3825
        %v5170 = vpack.c.b16 %v3842, %v3826
        %v5171 = vpack.c.b16 %v3843, %v3827
        %v5172 = vpack.c.b16 %v3844, %v3828
        %v5173 = vpack.c.b16 %v3845, %v3829
        %v5174 = vpack.c.b16 %v3846, %v3830
        %v5175 = vpack.c.b16 %v3847, %v3831
        %v5176 = vpack.c.b16 %v3848, %v3832
        %v5177 = vpack.c.b16 %v3849, %v3833
        %v5178 = vpack.c.b16 %v3850, %v3834
        %v5179 = vpack.c.b16 %v3867, %v3851
        %v5180 = vpack.c.b16 %v3868, %v3852
        %v5181 = vpack.c.b16 %v3869, %v3853
        %v5182 = vpack.c.b16 %v3870, %v3854
        %v5183 = vpack.c.b16 %v3871, %v3855
        %v5184 = vpack.c.b16 %v3872, %v3856
        %v5185 = vpack.c.b16 %v3873, %v3857
        %v5186 = vpack.c.b16 %v3874, %v3858
        %v5187 = vpack.c.b16 %v3875, %v3859
        %v5188 = vpack.c.b16 %v3876, %v3860
        %v5189 = vpack.c.b16 %v3877, %v3861
        %v5190 = vpack.c.b16 %v3878, %v3862
        %v5191 = vpack.c.b16 %v3879, %v3863
        %v5192 = vpack.c.b16 %v3880, %v3864
        %v5193 = vpack.c.b16 %v3881, %v3865
        %v5194 = vpack.c.b16 %v3882, %v3866
        %v5195 = vpack.c.b16 %v3899, %v3883
        %v5196 = vpack.c.b16 %v3900, %v3884
        %v5197 = vpack.c.b16 %v3901, %v3885
        %v5198 = vpack.c.b16 %v3902, %v3886
        %v5199 = vpack.c.b16 %v3903, %v3887
        %v5200 = vpack.c.b16 %v3904, %v3888
        %v5201 = vpack.c.b16 %v3905, %v3889
        %v5202 = vpack.c.b16 %v3906, %v3890
        %v5203 = vpack.c.b16 %v3907, %v3891
        %v5204 = vpack.c.b16 %v3908, %v3892
        %v5205 = vpack.c.b16 %v3909, %v3893
        %v5206 = vpack.c.b16 %v3910, %v3894
        %v5207 = vpack.c.b16 %v3911, %v3895
        %v5208 = vpack.c.b16 %v3912, %v3896
        %v5209 = vpack.c.b16 %v3913, %v3897
        %v5210 = vpack.c.b16 %v3914, %v3898
        %v5211 = vpack.c.b16 %v3931, %v3915
        %v5212 = vpack.c.b16 %v3932, %v3916
        %v5213 = vpack.c.b16 %v3933, %v3917
        %v5214 = vpack.c.b16 %v3934, %v3918
        %v5215 = vpack.c.b16 %v3935, %v3919
        %v5216 = vpack.c.b16 %v3936, %v3920
        %v5217 = vpack.c.b16 %v3937, %v3921
        %v5218 = vpack.c.b16 %v3938, %v3922
        %v5219 = vpack.c.b16 %v3939, %v3923
        %v5220 = vpack.c.b16 %v3940, %v3924
        %v5221 = vpack.c.b16 %v3941, %v3925
        %v5222 = vpack.c.b16 %v3942, %v3926
        %v5223 = vpack.c.b16 %v3943, %v3927
        %v5224 = vpack.c.b16 %v3944, %v3928
        %v5225 = vpack.c.b16 %v3945, %v3929
        %v5226 = vpack.c.b16 %v3946, %v3930
        %v5227 = vpack.c.b16 %v3963, %v3947
        %v5228 = vpack.c.b16 %v3964, %v3948
        %v5229 = vpack.c.b16 %v3965, %v3949
        %v5230 = vpack.c.b16 %v3966, %v3950
        %v5231 = vpack.c.b16 %v3967, %v3951
        %v5232 = vpack.c.b16 %v3968, %v3952
        %v5233 = vpack.c.b16 %v3969, %v3953
        %v5234 = vpack.c.b16 %v3970, %v3954
        %v5235 = vpack.c.b16 %v3971, %v3955
        %v5236 = vpack.c.b16 %v3972, %v3956
        %v5237 = vpack.c.b16 %v3973, %v3957
        %v5238 = vpack.c.b16 %v3974, %v3958
        %v5239 = vpack.c.b16 %v3975, %v3959
        %v5240 = vpack.c.b16 %v3976, %v3960
        %v5241 = vpack.c.b16 %v3977, %v3961
        %v5242 = vpack.c.b16 %v3978, %v3962
        %v5243 = vpack.c.b16 %v3995, %v3979
        %v5244 = vpack.c.b16 %v3996, %v3980
        %v5245 = vpack.c.b16 %v3997, %v3981
        %v5246 = vpack.c.b16 %v3998, %v3982
        %v5247 = vpack.c.b16 %v3999, %v3983
        %v5248 = vpack.c.b16 %v4000, %v3984
        %v5249 = vpack.c.b16 %v4001, %v3985
        %v5250 = vpack.c.b16 %v4002, %v3986
        %v5251 = vpack.c.b16 %v4003, %v3987
        %v5252 = vpack.c.b16 %v4004, %v3988
        %v5253 = vpack.c.b16 %v4005, %v3989
        %v5254 = vpack.c.b16 %v4006, %v3990
        %v5255 = vpack.c.b16 %v4007, %v3991
        %v5256 = vpack.c.b16 %v4008, %v3992
        %v5257 = vpack.c.b16 %v4009, %v3993
        %v5258 = vpack.c.b16 %v4010, %v3994
        %v5259 = vpack.c.b16 %v4027, %v4011
        %v5260 = vpack.c.b16 %v4028, %v4012
        %v5261 = vpack.c.b16 %v4029, %v4013
        %v5262 = vpack.c.b16 %v4030, %v4014
        %v5263 = vpack.c.b16 %v4031, %v4015
        %v5264 = vpack.c.b16 %v4032, %v4016
        %v5265 = vpack.c.b16 %v4033, %v4017
        %v5266 = vpack.c.b16 %v4034, %v4018
        %v5267 = vpack.c.b16 %v4035, %v4019
        %v5268 = vpack.c.b16 %v4036, %v4020
        %v5269 = vpack.c.b16 %v4037, %v4021
        %v5270 = vpack.c.b16 %v4038, %v4022
        %v5271 = vpack.c.b16 %v4039, %v4023
        %v5272 = vpack.c.b16 %v4040, %v4024
        %v5273 = vpack.c.b16 %v4041, %v4025
        %v5274 = vpack.c.b16 %v4042, %v4026
        %v5275 = vpack.c.b16 %v4059, %v4043
        %v5276 = vpack.c.b16 %v4060, %v4044
        %v5277 = vpack.c.b16 %v4061, %v4045
        %v5278 = vpack.c.b16 %v4062, %v4046
        %v5279 = vpack.c.b16 %v4063, %v4047
        %v5280 = vpack.c.b16 %v4064, %v4048
        %v5281 = vpack.c.b16 %v4065, %v4049
        %v5282 = vpack.c.b16 %v4066, %v4050
        %v5283 = vpack.c.b16 %v4067, %v4051
        %v5284 = vpack.c.b16 %v4068, %v4052
        %v5285 = vpack.c.b16 %v4069, %v4053
        %v5286 = vpack.c.b16 %v4070, %v4054
        %v5287 = vpack.c.b16 %v4071, %v4055
        %v5288 = vpack.c.b16 %v4072, %v4056
        %v5289 = vpack.c.b16 %v4073, %v4057
        %v5290 = vpack.c.b16 %v4074, %v4058
        %v5291 = vpack.c.b16 %v4091, %v4075
        %v5292 = vpack.c.b16 %v4092, %v4076
        %v5293 = vpack.c.b16 %v4093, %v4077
        %v5294 = vpack.c.b16 %v4094, %v4078
        %v5295 = vpack.c.b16 %v4095, %v4079
        %v5296 = vpack.c.b16 %v4096, %v4080
        %v5297 = vpack.c.b16 %v4097, %v4081
        %v5298 = vpack.c.b16 %v4098, %v4082
        %v5299 = vpack.c.b16 %v4099, %v4083
        %v5300 = vpack.c.b16 %v4100, %v4084
        %v5301 = vpack.c.b16 %v4101, %v4085
        %v5302 = vpack.c.b16 %v4102, %v4086
        %v5303 = vpack.c.b16 %v4103, %v4087
        %v5304 = vpack.c.b16 %v4104, %v4088
        %v5305 = vpack.c.b16 %v4105, %v4089
        %v5306 = vpack.c.b16 %v4106, %v4090
        %v5307 = vpack.c.b16 %v4123, %v4107
        %v5308 = vpack.c.b16 %v4124, %v4108
        %v5309 = vpack.c.b16 %v4125, %v4109
        %v5310 = vpack.c.b16 %v4126, %v4110
        %v5311 = vpack.c.b16 %v4127, %v4111
        %v5312 = vpack.c.b16 %v4128, %v4112
        %v5313 = vpack.c.b16 %v4129, %v4113
        %v5314 = vpack.c.b16 %v4130, %v4114
        %v5315 = vpack.c.b16 %v4131, %v4115
        %v5316 = vpack.c.b16 %v4132, %v4116
        %v5317 = vpack.c.b16 %v4133, %v4117
        %v5318 = vpack.c.b16 %v4134, %v4118
        %v5319 = vpack.c.b16 %v4135, %v4119
        %v5320 = vpack.c.b16 %v4136, %v4120
        %v5321 = vpack.c.b16 %v4137, %v4121
        %v5322 = vpack.c.b16 %v4138, %v4122
        %v5323 = vpack.c.b16 %v4155, %v4139
        %v5324 = vpack.c.b16 %v4156, %v4140
        %v5325 = vpack.c.b16 %v4157, %v4141
        %v5326 = vpack.c.b16 %v4158, %v4142
        %v5327 = vpack.c.b16 %v4159, %v4143
        %v5328 = vpack.c.b16 %v4160, %v4144
        %v5329 = vpack.c.b16 %v4161, %v4145
        %v5330 = vpack.c.b16 %v4162, %v4146
        %v5331 = vpack.c.b16 %v4163, %v4147
        %v5332 = vpack.c.b16 %v4164, %v4148
        %v5333 = vpack.c.b16 %v4165, %v4149
        %v5334 = vpack.c.b16 %v4166, %v4150
        %v5335 = vpack.c.b16 %v4167, %v4151
        %v5336 = vpack.c.b16 %v4168, %v4152
        %v5337 = vpack.c.b16 %v4169, %v4153
        %v5338 = vpack.c.b16 %v4170, %v4154
        %v5339 = vpack.c.b16 %v4187, %v4171
        %v5340 = vpack.c.b16 %v4188, %v4172
        %v5341 = vpack.c.b16 %v4189, %v4173
        %v5342 = vpack.c.b16 %v4190, %v4174
        %v5343 = vpack.c.b16 %v4191, %v4175
        %v5344 = vpack.c.b16 %v4192, %v4176
        %v5345 = vpack.c.b16 %v4193, %v4177
        %v5346 = vpack.c.b16 %v4194, %v4178
        %v5347 = vpack.c.b16 %v4195, %v4179
        %v5348 = vpack.c.b16 %v4196, %v4180
        %v5349 = vpack.c.b16 %v4197, %v4181
        %v5350 = vpack.c.b16 %v4198, %v4182
        %v5351 = vpack.c.b16 %v4199, %v4183
        %v5352 = vpack.c.b16 %v4200, %v4184
        %v5353 = vpack.c.b16 %v4201, %v4185
        %v5354 = vpack.c.b16 %v4202, %v4186
        %v5355 = vpack.c.b16 %v4219, %v4203
        %v5356 = vpack.c.b16 %v4220, %v4204
        %v5357 = vpack.c.b16 %v4221, %v4205
        %v5358 = vpack.c.b16 %v4222, %v4206
        %v5359 = vpack.c.b16 %v4223, %v4207
        %v5360 = vpack.c.b16 %v4224, %v4208
        %v5361 = vpack.c.b16 %v4225, %v4209
        %v5362 = vpack.c.b16 %v4226, %v4210
        %v5363 = vpack.c.b16 %v4227, %v4211
        %v5364 = vpack.c.b16 %v4228, %v4212
        %v5365 = vpack.c.b16 %v4229, %v4213
        %v5366 = vpack.c.b16 %v4230, %v4214
        %v5367 = vpack.c.b16 %v4231, %v4215
        %v5368 = vpack.c.b16 %v4232, %v4216
        %v5369 = vpack.c.b16 %v4233, %v4217
        %v5370 = vpack.c.b16 %v4234, %v4218
        %v5371 = vpack.c.b16 %v4251, %v4235
        %v5372 = vpack.c.b16 %v4252, %v4236
        %v5373 = vpack.c.b16 %v4253, %v4237
        %v5374 = vpack.c.b16 %v4254, %v4238
        %v5375 = vpack.c.b16 %v4255, %v4239
        %v5376 = vpack.c.b16 %v4256, %v4240
        %v5377 = vpack.c.b16 %v4257, %v4241
        %v5378 = vpack.c.b16 %v4258, %v4242
        %v5379 = vpack.c.b16 %v4259, %v4243
        %v5380 = vpack.c.b16 %v4260, %v4244
        %v5381 = vpack.c.b16 %v4261, %v4245
        %v5382 = vpack.c.b16 %v4262, %v4246
        %v5383 = vpack.c.b16 %v4263, %v4247
        %v5384 = vpack.c.b16 %v4264, %v4248
        %v5385 = vpack.c.b16 %v4265, %v4249
        %v5386 = vpack.c.b16 %v4266, %v4250
        %v5387 = vpack.c.b16 %v4283, %v4267
        %v5388 = vpack.c.b16 %v4284, %v4268
        %v5389 = vpack.c.b16 %v4285, %v4269
        %v5390 = vpack.c.b16 %v4286, %v4270
        %v5391 = vpack.c.b16 %v4287, %v4271
        %v5392 = vpack.c.b16 %v4288, %v4272
        %v5393 = vpack.c.b16 %v4289, %v4273
        %v5394 = vpack.c.b16 %v4290, %v4274
        %v5395 = vpack.c.b16 %v4291, %v4275
        %v5396 = vpack.c.b16 %v4292, %v4276
        %v5397 = vpack.c.b16 %v4293, %v4277
        %v5398 = vpack.c.b16 %v4294, %v4278
        %v5399 = vpack.c.b16 %v4295, %v4279
        %v5400 = vpack.c.b16 %v4296, %v4280
        %v5401 = vpack.c.b16 %v4297, %v4281
        %v5402 = vpack.c.b16 %v4298, %v4282
        %v5403 = vpack.c.b16 %v4315, %v4299
        %v5404 = vpack.c.b16 %v4316, %v4300
        %v5405 = vpack.c.b16 %v4317, %v4301
        %v5406 = vpack.c.b16 %v4318, %v4302
        %v5407 = vpack.c.b16 %v4319, %v4303
        %v5408 = vpack.c.b16 %v4320, %v4304
        %v5409 = vpack.c.b16 %v4321, %v4305
        %v5410 = vpack.c.b16 %v4322, %v4306
        %v5411 = vpack.c.b16 %v4323, %v4307
        %v5412 = vpack.c.b16 %v4324, %v4308
        %v5413 = vpack.c.b16 %v4325, %v4309
        %v5414 = vpack.c.b16 %v4326, %v4310
        %v5415 = vpack.c.b16 %v4327, %v4311
        %v5416 = vpack.c.b16 %v4328, %v4312
        %v5417 = vpack.c.b16 %v4329, %v4313
        %v5418 = vpack.c.b16 %v4330, %v4314
        %v5419 = vpack.c.b16 %v4347, %v4331
        %v5420 = vpack.c.b16 %v4348, %v4332
        %v5421 = vpack.c.b16 %v4349, %v4333
        %v5422 = vpack.c.b16 %v4350, %v4334
        %v5423 = vpack.c.b16 %v4351, %v4335
        %v5424 = vpack.c.b16 %v4352, %v4336
        %v5425 = vpack.c.b16 %v4353, %v4337
        %v5426 = vpack.c.b16 %v4354, %v4338
        %v5427 = vpack.c.b16 %v4355, %v4339
        %v5428 = vpack.c.b16 %v4356, %v4340
        %v5429 = vpack.c.b16 %v4357, %v4341
        %v5430 = vpack.c.b16 %v4358, %v4342
        %v5431 = vpack.c.b16 %v4359, %v4343
        %v5432 = vpack.c.b16 %v4360, %v4344
        %v5433 = vpack.c.b16 %v4361, %v4345
        %v5434 = vpack.c.b16 %v4362, %v4346
        %v5435 = vpack.c.b16 %v4379, %v4363
        %v5436 = vpack.c.b16 %v4380, %v4364
        %v5437 = vpack.c.b16 %v4381, %v4365
        %v5438 = vpack.c.b16 %v4382, %v4366
        %v5439 = vpack.c.b16 %v4383, %v4367
        %v5440 = vpack.c.b16 %v4384, %v4368
        %v5441 = vpack.c.b16 %v4385, %v4369
        %v5442 = vpack.c.b16 %v4386, %v4370
        %v5443 = vpack.c.b16 %v4387, %v4371
        %v5444 = vpack.c.b16 %v4388, %v4372
        %v5445 = vpack.c.b16 %v4389, %v4373
        %v5446 = vpack.c.b16 %v4390, %v4374
        %v5447 = vpack.c.b16 %v4391, %v4375
        %v5448 = vpack.c.b16 %v4392, %v4376
        %v5449 = vpack.c.b16 %v4393, %v4377
        %v5450 = vpack.c.b16 %v4394, %v4378
        %v5451 = vpack.c.b16 %v4411, %v4395
        %v5452 = vpack.c.b16 %v4412, %v4396
        %v5453 = vpack.c.b16 %v4413, %v4397
        %v5454 = vpack.c.b16 %v4414, %v4398
        %v5455 = vpack.c.b16 %v4415, %v4399
        %v5456 = vpack.c.b16 %v4416, %v4400
        %v5457 = vpack.c.b16 %v4417, %v4401
        %v5458 = vpack.c.b16 %v4418, %v4402
        %v5459 = vpack.c.b16 %v4419, %v4403
        %v5460 = vpack.c.b16 %v4420, %v4404
        %v5461 = vpack.c.b16 %v4421, %v4405
        %v5462 = vpack.c.b16 %v4422, %v4406
        %v5463 = vpack.c.b16 %v4423, %v4407
        %v5464 = vpack.c.b16 %v4424, %v4408
        %v5465 = vpack.c.b16 %v4425, %v4409
        %v5466 = vpack.c.b16 %v4426, %v4410
        %v5467 = vpack.c.b16 %v4443, %v4427
        %v5468 = vpack.c.b16 %v4444, %v4428
        %v5469 = vpack.c.b16 %v4445, %v4429
        %v5470 = vpack.c.b16 %v4446, %v4430
        %v5471 = vpack.c.b16 %v4447, %v4431
        %v5472 = vpack.c.b16 %v4448, %v4432
        %v5473 = vpack.c.b16 %v4449, %v4433
        %v5474 = vpack.c.b16 %v4450, %v4434
        %v5475 = vpack.c.b16 %v4451, %v4435
        %v5476 = vpack.c.b16 %v4452, %v4436
        %v5477 = vpack.c.b16 %v4453, %v4437
        %v5478 = vpack.c.b16 %v4454, %v4438
        %v5479 = vpack.c.b16 %v4455, %v4439
        %v5480 = vpack.c.b16 %v4456, %v4440
        %v5481 = vpack.c.b16 %v4457, %v4441
        %v5482 = vpack.c.b16 %v4458, %v4442
        %6507 = vmatprep.subr.bf16.mxu0 %v4460
        %6508 = vmatpush1.bf16.msra.mxu0 %v4459
        %6509 = vmatprep.subr.bf16.mxu0 %v4476
        %6510 = vmatpush1.bf16.msra.mxu0 %v4475
        %6511 = vmatprep.subr.bf16.mxu0 %v4492
        %6512 = vmatpush1.bf16.msra.mxu0 %v4491
        %6513 = vmatprep.subr.bf16.mxu0 %v4508
        %6514 = vmatpush1.bf16.msra.mxu0 %v4507
        %6515 = vmatprep.subr.bf16.mxu0 %v4524
        %6516 = vmatpush1.bf16.msra.mxu0 %v4523
        %6517 = vmatprep.subr.bf16.mxu0 %v4540
        %6518 = vmatpush1.bf16.msra.mxu0 %v4539
        %6519 = vmatprep.subr.bf16.mxu0 %v4556
        %6520 = vmatpush1.bf16.msra.mxu0 %v4555
        %6521 = vmatprep.subr.bf16.mxu0 %v4572
        %6522 = vmatpush1.bf16.msra.mxu0 %v4571
        %6523 = vmatprep.subr.bf16.mxu0 %v4588
        %6524 = vmatpush1.bf16.msra.mxu0 %v4587
        %6525 = vmatprep.subr.bf16.mxu0 %v4604
        %6526 = vmatpush1.bf16.msra.mxu0 %v4603
        %6527 = vmatprep.subr.bf16.mxu0 %v4620
        %6528 = vmatpush1.bf16.msra.mxu0 %v4619
        %6529 = vmatprep.subr.bf16.mxu0 %v4636
        %6530 = vmatpush1.bf16.msra.mxu0 %v4635
        %6531 = vmatprep.subr.bf16.mxu0 %v4652
        %6532 = vmatpush1.bf16.msra.mxu0 %v4651
        %6533 = vmatprep.subr.bf16.mxu0 %v4668
        %6534 = vmatpush1.bf16.msra.mxu0 %v4667
        %6535 = vmatprep.subr.bf16.mxu0 %v4684
        %6536 = vmatpush1.bf16.msra.mxu0 %v4683
        %6537 = vmatprep.subr.bf16.mxu0 %v4700
        %6538 = vmatpush1.bf16.msra.mxu0 %v4699
        %6539 = vmatprep.mubr.bf16.mxu0 %v1372
        %6540 = vmatmul.mubr.bf16.gmra.mrb[0].mxu0 %v1371
        %v6541 = vpop.f32.mrb[0].mxu0
        %v6542 = vadd.f32 0.0, %v6541
        %v6543 = vpop.f32.mrb[0].mxu0
        %v6544 = vadd.f32 0.0, %v6543
        %v6545 = vpop.f32.mrb[0].mxu0
        %v6546 = vpop.f32.mrb[0].mxu0
        %6547 = vdwg.mxu0
        %6548 = vmatprep.subr.bf16.mxu0 %v4716
        %6549 = vmatpush1.bf16.msra.mxu0 %v4715
        %6550 = vmatprep.subr.bf16.mxu0 %v4732
        %6551 = vmatpush1.bf16.msra.mxu0 %v4731
        %6552 = vmatprep.subr.bf16.mxu0 %v4748
        %6553 = vmatpush1.bf16.msra.mxu0 %v4747
        %6554 = vmatprep.subr.bf16.mxu0 %v4764
        %6555 = vmatpush1.bf16.msra.mxu0 %v4763
        %6556 = vmatprep.subr.bf16.mxu0 %v4780
        %6557 = vmatpush1.bf16.msra.mxu0 %v4779
        %6558 = vmatprep.subr.bf16.mxu0 %v4796
        %6559 = vmatpush1.bf16.msra.mxu0 %v4795
        %6560 = vmatprep.subr.bf16.mxu0 %v4812
        %6561 = vmatpush1.bf16.msra.mxu0 %v4811
        %6562 = vmatprep.subr.bf16.mxu0 %v4828
        %6563 = vmatpush1.bf16.msra.mxu0 %v4827
        %6564 = vmatprep.subr.bf16.mxu0 %v4844
        %6565 = vmatpush1.bf16.msra.mxu0 %v4843
        %6566 = vmatprep.subr.bf16.mxu0 %v4860
        %6567 = vmatpush1.bf16.msra.mxu0 %v4859
        %6568 = vmatprep.subr.bf16.mxu0 %v4876
        %6569 = vmatpush1.bf16.msra.mxu0 %v4875
        %6570 = vmatprep.subr.bf16.mxu0 %v4892
        %6571 = vmatpush1.bf16.msra.mxu0 %v4891
        %6572 = vmatprep.subr.bf16.mxu0 %v4908
        %6573 = vmatpush1.bf16.msra.mxu0 %v4907
        %6574 = vmatprep.subr.bf16.mxu0 %v4924
        %6575 = vmatpush1.bf16.msra.mxu0 %v4923
        %6576 = vmatprep.subr.bf16.mxu0 %v4940
        %6577 = vmatpush1.bf16.msra.mxu0 %v4939
        %6578 = vmatprep.subr.bf16.mxu0 %v4956
        %6579 = vmatpush1.bf16.msra.mxu0 %v4955
        %6580 = vmatprep.mubr.bf16.mxu0 %v1374
        %6581 = vmatmul.mubr.bf16.gmra.mrb[0].mxu0 %v1373
        %v6582 = vpop.f32.mrb[0].mxu0
        %v6583 = vadd.f32 %v6542, %v6582
        %v6584 = vpop.f32.mrb[0].mxu0
        %v6585 = vadd.f32 %v6544, %v6584
        %v6586 = vpop.f32.mrb[0].mxu0
        %v6587 = vpop.f32.mrb[0].mxu0
        %6588 = vdwg.mxu0
        %6589 = vmatprep.subr.bf16.mxu0 %v4972
        %6590 = vmatpush1.bf16.msra.mxu0 %v4971
        %6591 = vmatprep.subr.bf16.mxu0 %v4988
        %6592 = vmatpush1.bf16.msra.mxu0 %v4987
        %6593 = vmatprep.subr.bf16.mxu0 %v5004
        %6594 = vmatpush1.bf16.msra.mxu0 %v5003
        %6595 = vmatprep.subr.bf16.mxu0 %v5020
        %6596 = vmatpush1.bf16.msra.mxu0 %v5019
        %6597 = vmatprep.subr.bf16.mxu0 %v5036
        %6598 = vmatpush1.bf16.msra.mxu0 %v5035
        %6599 = vmatprep.subr.bf16.mxu0 %v5052
        %6600 = vmatpush1.bf16.msra.mxu0 %v5051
        %6601 = vmatprep.subr.bf16.mxu0 %v5068
        %6602 = vmatpush1.bf16.msra.mxu0 %v5067
        %6603 = vmatprep.subr.bf16.mxu0 %v5084
        %6604 = vmatpush1.bf16.msra.mxu0 %v5083
        %6605 = vmatprep.subr.bf16.mxu0 %v5100
        %6606 = vmatpush1.bf16.msra.mxu0 %v5099
        %6607 = vmatprep.subr.bf16.mxu0 %v5116
        %6608 = vmatpush1.bf16.msra.mxu0 %v5115
        %6609 = vmatprep.subr.bf16.mxu0 %v5132
        %6610 = vmatpush1.bf16.msra.mxu0 %v5131
        %6611 = vmatprep.subr.bf16.mxu0 %v5148
        %6612 = vmatpush1.bf16.msra.mxu0 %v5147
        %6613 = vmatprep.subr.bf16.mxu0 %v5164
        %6614 = vmatpush1.bf16.msra.mxu0 %v5163
        %6615 = vmatprep.subr.bf16.mxu0 %v5180
        %6616 = vmatpush1.bf16.msra.mxu0 %v5179
        %6617 = vmatprep.subr.bf16.mxu0 %v5196
        %6618 = vmatpush1.bf16.msra.mxu0 %v5195
        %6619 = vmatprep.subr.bf16.mxu0 %v5212
        %6620 = vmatpush1.bf16.msra.mxu0 %v5211
        %6621 = vmatprep.mubr.bf16.mxu0 %v1376
        %6622 = vmatmul.mubr.bf16.gmra.mrb[0].mxu0 %v1375
        %v6623 = vpop.f32.mrb[0].mxu0
        %v6624 = vadd.f32 %v6583, %v6623
        %v6625 = vpop.f32.mrb[0].mxu0
        %v6626 = vadd.f32 %v6585, %v6625
        %v6627 = vpop.f32.mrb[0].mxu0
        %v6628 = vpop.f32.mrb[0].mxu0
        %6629 = vdwg.mxu0
        %6630 = vmatprep.subr.bf16.mxu0 %v5228
        %6631 = vmatpush1.bf16.msra.mxu0 %v5227
        %6632 = vmatprep.subr.bf16.mxu0 %v5244
        %6633 = vmatpush1.bf16.msra.mxu0 %v5243
        %6634 = vmatprep.subr.bf16.mxu0 %v5260
        %6635 = vmatpush1.bf16.msra.mxu0 %v5259
        %6636 = vmatprep.subr.bf16.mxu0 %v5276
        %6637 = vmatpush1.bf16.msra.mxu0 %v5275
        %6638 = vmatprep.subr.bf16.mxu0 %v5292
        %6639 = vmatpush1.bf16.msra.mxu0 %v5291
        %6640 = vmatprep.subr.bf16.mxu0 %v5308
        %6641 = vmatpush1.bf16.msra.mxu0 %v5307
        %6642 = vmatprep.subr.bf16.mxu0 %v5324
        %6643 = vmatpush1.bf16.msra.mxu0 %v5323
        %6644 = vmatprep.subr.bf16.mxu0 %v5340
        %6645 = vmatpush1.bf16.msra.mxu0 %v5339
        %6646 = vmatprep.subr.bf16.mxu0 %v5356
        %6647 = vmatpush1.bf16.msra.mxu0 %v5355
        %6648 = vmatprep.subr.bf16.mxu0 %v5372
        %6649 = vmatpush1.bf16.msra.mxu0 %v5371
        %6650 = vmatprep.subr.bf16.mxu0 %v5388
        %6651 = vmatpush1.bf16.msra.mxu0 %v5387
        %6652 = vmatprep.subr.bf16.mxu0 %v5404
        %6653 = vmatpush1.bf16.msra.mxu0 %v5403
        %6654 = vmatprep.subr.bf16.mxu0 %v5420
        %6655 = vmatpush1.bf16.msra.mxu0 %v5419
        %6656 = vmatprep.subr.bf16.mxu0 %v5436
        %6657 = vmatpush1.bf16.msra.mxu0 %v5435
        %6658 = vmatprep.subr.bf16.mxu0 %v5452
        %6659 = vmatpush1.bf16.msra.mxu0 %v5451
        %6660 = vmatprep.subr.bf16.mxu0 %v5468
        %6661 = vmatpush1.bf16.msra.mxu0 %v5467
        %6662 = vmatprep.mubr.bf16.mxu0 %v1378
        %6663 = vmatmul.mubr.bf16.gmra.mrb[0].mxu0 %v1377
        %v6664 = vpop.f32.mrb[0].mxu0
        %v6665 = vadd.f32 %v6624, %v6664
        %v6666 = vpop.f32.mrb[0].mxu0
        %v6667 = vadd.f32 %v6626, %v6666
        %v6668 = vpop.f32.mrb[0].mxu0
        %v6669 = vpop.f32.mrb[0].mxu0
        %6670 = vdwg.mxu0
        %6671 = vmatprep.subr.bf16.mxu0 %v4462
        %6672 = vmatpush1.bf16.msra.mxu0 %v4461
        %6673 = vmatprep.subr.bf16.mxu0 %v4478
        %6674 = vmatpush1.bf16.msra.mxu0 %v4477
        %6675 = vmatprep.subr.bf16.mxu0 %v4494
        %6676 = vmatpush1.bf16.msra.mxu0 %v4493
        %6677 = vmatprep.subr.bf16.mxu0 %v4510
        %6678 = vmatpush1.bf16.msra.mxu0 %v4509
        %6679 = vmatprep.subr.bf16.mxu0 %v4526
        %6680 = vmatpush1.bf16.msra.mxu0 %v4525
        %6681 = vmatprep.subr.bf16.mxu0 %v4542
        %6682 = vmatpush1.bf16.msra.mxu0 %v4541
        %6683 = vmatprep.subr.bf16.mxu0 %v4558
        %6684 = vmatpush1.bf16.msra.mxu0 %v4557
        %6685 = vmatprep.subr.bf16.mxu0 %v4574
        %6686 = vmatpush1.bf16.msra.mxu0 %v4573
        %6687 = vmatprep.subr.bf16.mxu0 %v4590
        %6688 = vmatpush1.bf16.msra.mxu0 %v4589
        %6689 = vmatprep.subr.bf16.mxu0 %v4606
        %6690 = vmatpush1.bf16.msra.mxu0 %v4605
        %6691 = vmatprep.subr.bf16.mxu0 %v4622
        %6692 = vmatpush1.bf16.msra.mxu0 %v4621
        %6693 = vmatprep.subr.bf16.mxu0 %v4638
        %6694 = vmatpush1.bf16.msra.mxu0 %v4637
        %6695 = vmatprep.subr.bf16.mxu0 %v4654
        %6696 = vmatpush1.bf16.msra.mxu0 %v4653
        %6697 = vmatprep.subr.bf16.mxu0 %v4670
        %6698 = vmatpush1.bf16.msra.mxu0 %v4669
        %6699 = vmatprep.subr.bf16.mxu0 %v4686
        %6700 = vmatpush1.bf16.msra.mxu0 %v4685
        %6701 = vmatprep.subr.bf16.mxu0 %v4702
        %6702 = vmatpush1.bf16.msra.mxu0 %v4701
        %6703 = vmatprep.mubr.bf16.mxu0 %v1372
        %6704 = vmatmul.mubr.bf16.gmra.mrb[0].mxu0 %v1371
        %v6705 = vpop.f32.mrb[0].mxu0
        %v6706 = vadd.f32 0.0, %v6705
        %v6707 = vpop.f32.mrb[0].mxu0
        %v6708 = vadd.f32 0.0, %v6707
        %v6709 = vpop.f32.mrb[0].mxu0
        %v6710 = vpop.f32.mrb[0].mxu0
        %6711 = vdwg.mxu0
        %6712 = vmatprep.subr.bf16.mxu0 %v4718
        %6713 = vmatpush1.bf16.msra.mxu0 %v4717
        %6714 = vmatprep.subr.bf16.mxu0 %v4734
        %6715 = vmatpush1.bf16.msra.mxu0 %v4733
        %6716 = vmatprep.subr.bf16.mxu0 %v4750
        %6717 = vmatpush1.bf16.msra.mxu0 %v4749
        %6718 = vmatprep.subr.bf16.mxu0 %v4766
        %6719 = vmatpush1.bf16.msra.mxu0 %v4765
        %6720 = vmatprep.subr.bf16.mxu0 %v4782
        %6721 = vmatpush1.bf16.msra.mxu0 %v4781
        %6722 = vmatprep.subr.bf16.mxu0 %v4798
        %6723 = vmatpush1.bf16.msra.mxu0 %v4797
        %6724 = vmatprep.subr.bf16.mxu0 %v4814
        %6725 = vmatpush1.bf16.msra.mxu0 %v4813
        %6726 = vmatprep.subr.bf16.mxu0 %v4830
        %6727 = vmatpush1.bf16.msra.mxu0 %v4829
        %6728 = vmatprep.subr.bf16.mxu0 %v4846
        %6729 = vmatpush1.bf16.msra.mxu0 %v4845
        %6730 = vmatprep.subr.bf16.mxu0 %v4862
        %6731 = vmatpush1.bf16.msra.mxu0 %v4861
        %6732 = vmatprep.subr.bf16.mxu0 %v4878
        %6733 = vmatpush1.bf16.msra.mxu0 %v4877
        %6734 = vmatprep.subr.bf16.mxu0 %v4894
        %6735 = vmatpush1.bf16.msra.mxu0 %v4893
        %6736 = vmatprep.subr.bf16.mxu0 %v4910
        %6737 = vmatpush1.bf16.msra.mxu0 %v4909
        %6738 = vmatprep.subr.bf16.mxu0 %v4926
        %6739 = vmatpush1.bf16.msra.mxu0 %v4925
        %6740 = vmatprep.subr.bf16.mxu0 %v4942
        %6741 = vmatpush1.bf16.msra.mxu0 %v4941
        %6742 = vmatprep.subr.bf16.mxu0 %v4958
        %6743 = vmatpush1.bf16.msra.mxu0 %v4957
        %6744 = vmatprep.mubr.bf16.mxu0 %v1374
        %6745 = vmatmul.mubr.bf16.gmra.mrb[0].mxu0 %v1373
        %v6746 = vpop.f32.mrb[0].mxu0
        %v6747 = vadd.f32 %v6706, %v6746
        %v6748 = vpop.f32.mrb[0].mxu0
        %v6749 = vadd.f32 %v6708, %v6748
        %v6750 = vpop.f32.mrb[0].mxu0
        %v6751 = vpop.f32.mrb[0].mxu0
        %6752 = vdwg.mxu0
        %6753 = vmatprep.subr.bf16.mxu0 %v4974
        %6754 = vmatpush1.bf16.msra.mxu0 %v4973
        %6755 = vmatprep.subr.bf16.mxu0 %v4990
        %6756 = vmatpush1.bf16.msra.mxu0 %v4989
        %6757 = vmatprep.subr.bf16.mxu0 %v5006
        %6758 = vmatpush1.bf16.msra.mxu0 %v5005
        %6759 = vmatprep.subr.bf16.mxu0 %v5022
        %6760 = vmatpush1.bf16.msra.mxu0 %v5021
        %6761 = vmatprep.subr.bf16.mxu0 %v5038
        %6762 = vmatpush1.bf16.msra.mxu0 %v5037
        %6763 = vmatprep.subr.bf16.mxu0 %v5054
        %6764 = vmatpush1.bf16.msra.mxu0 %v5053
        %6765 = vmatprep.subr.bf16.mxu0 %v5070
        %6766 = vmatpush1.bf16.msra.mxu0 %v5069
        %6767 = vmatprep.subr.bf16.mxu0 %v5086
        %6768 = vmatpush1.bf16.msra.mxu0 %v5085
        %6769 = vmatprep.subr.bf16.mxu0 %v5102
        %6770 = vmatpush1.bf16.msra.mxu0 %v5101
        %6771 = vmatprep.subr.bf16.mxu0 %v5118
        %6772 = vmatpush1.bf16.msra.mxu0 %v5117
        %6773 = vmatprep.subr.bf16.mxu0 %v5134
        %6774 = vmatpush1.bf16.msra.mxu0 %v5133
        %6775 = vmatprep.subr.bf16.mxu0 %v5150
        %6776 = vmatpush1.bf16.msra.mxu0 %v5149
        %6777 = vmatprep.subr.bf16.mxu0 %v5166
        %6778 = vmatpush1.bf16.msra.mxu0 %v5165
        %6779 = vmatprep.subr.bf16.mxu0 %v5182
        %6780 = vmatpush1.bf16.msra.mxu0 %v5181
        %6781 = vmatprep.subr.bf16.mxu0 %v5198
        %6782 = vmatpush1.bf16.msra.mxu0 %v5197
        %6783 = vmatprep.subr.bf16.mxu0 %v5214
        %6784 = vmatpush1.bf16.msra.mxu0 %v5213
        %6785 = vmatprep.mubr.bf16.mxu0 %v1376
        %6786 = vmatmul.mubr.bf16.gmra.mrb[0].mxu0 %v1375
        %v6787 = vpop.f32.mrb[0].mxu0
        %v6788 = vadd.f32 %v6747, %v6787
        %v6789 = vpop.f32.mrb[0].mxu0
        %v6790 = vadd.f32 %v6749, %v6789
        %v6791 = vpop.f32.mrb[0].mxu0
        %v6792 = vpop.f32.mrb[0].mxu0
        %6793 = vdwg.mxu0
        %6794 = vmatprep.subr.bf16.mxu0 %v5230
        %6795 = vmatpush1.bf16.msra.mxu0 %v5229
        %6796 = vmatprep.subr.bf16.mxu0 %v5246
        %6797 = vmatpush1.bf16.msra.mxu0 %v5245
        %6798 = vmatprep.subr.bf16.mxu0 %v5262
        %6799 = vmatpush1.bf16.msra.mxu0 %v5261
        %6800 = vmatprep.subr.bf16.mxu0 %v5278
        %6801 = vmatpush1.bf16.msra.mxu0 %v5277
        %6802 = vmatprep.subr.bf16.mxu0 %v5294
        %6803 = vmatpush1.bf16.msra.mxu0 %v5293
        %6804 = vmatprep.subr.bf16.mxu0 %v5310
        %6805 = vmatpush1.bf16.msra.mxu0 %v5309
        %6806 = vmatprep.subr.bf16.mxu0 %v5326
        %6807 = vmatpush1.bf16.msra.mxu0 %v5325
        %6808 = vmatprep.subr.bf16.mxu0 %v5342
        %6809 = vmatpush1.bf16.msra.mxu0 %v5341
        %6810 = vmatprep.subr.bf16.mxu0 %v5358
        %6811 = vmatpush1.bf16.msra.mxu0 %v5357
        %6812 = vmatprep.subr.bf16.mxu0 %v5374
        %6813 = vmatpush1.bf16.msra.mxu0 %v5373
        %6814 = vmatprep.subr.bf16.mxu0 %v5390
        %6815 = vmatpush1.bf16.msra.mxu0 %v5389
        %6816 = vmatprep.subr.bf16.mxu0 %v5406
        %6817 = vmatpush1.bf16.msra.mxu0 %v5405
        %6818 = vmatprep.subr.bf16.mxu0 %v5422
        %6819 = vmatpush1.bf16.msra.mxu0 %v5421
        %6820 = vmatprep.subr.bf16.mxu0 %v5438
        %6821 = vmatpush1.bf16.msra.mxu0 %v5437
        %6822 = vmatprep.subr.bf16.mxu0 %v5454
        %6823 = vmatpush1.bf16.msra.mxu0 %v5453
        %6824 = vmatprep.subr.bf16.mxu0 %v5470
        %6825 = vmatpush1.bf16.msra.mxu0 %v5469
        %6826 = vmatprep.mubr.bf16.mxu0 %v1378
        %6827 = vmatmul.mubr.bf16.gmra.mrb[0].mxu0 %v1377
        %v6828 = vpop.f32.mrb[0].mxu0
        %v6829 = vadd.f32 %v6788, %v6828
        %v6830 = vpop.f32.mrb[0].mxu0
        %v6831 = vadd.f32 %v6790, %v6830
        %v6832 = vpop.f32.mrb[0].mxu0
        %v6833 = vpop.f32.mrb[0].mxu0
        %6834 = vdwg.mxu0
        %6835 = vmatprep.subr.bf16.mxu0 %v4464
        %6836 = vmatpush1.bf16.msra.mxu0 %v4463
        %6837 = vmatprep.subr.bf16.mxu0 %v4480
        %6838 = vmatpush1.bf16.msra.mxu0 %v4479
        %6839 = vmatprep.subr.bf16.mxu0 %v4496
        %6840 = vmatpush1.bf16.msra.mxu0 %v4495
        %6841 = vmatprep.subr.bf16.mxu0 %v4512
        %6842 = vmatpush1.bf16.msra.mxu0 %v4511
        %6843 = vmatprep.subr.bf16.mxu0 %v4528
        %6844 = vmatpush1.bf16.msra.mxu0 %v4527
        %6845 = vmatprep.subr.bf16.mxu0 %v4544
        %6846 = vmatpush1.bf16.msra.mxu0 %v4543
        %6847 = vmatprep.subr.bf16.mxu0 %v4560
        %6848 = vmatpush1.bf16.msra.mxu0 %v4559
        %6849 = vmatprep.subr.bf16.mxu0 %v4576
        %6850 = vmatpush1.bf16.msra.mxu0 %v4575
        %6851 = vmatprep.subr.bf16.mxu0 %v4592
        %6852 = vmatpush1.bf16.msra.mxu0 %v4591
        %6853 = vmatprep.subr.bf16.mxu0 %v4608
        %6854 = vmatpush1.bf16.msra.mxu0 %v4607
        %6855 = vmatprep.subr.bf16.mxu0 %v4624
        %6856 = vmatpush1.bf16.msra.mxu0 %v4623
        %6857 = vmatprep.subr.bf16.mxu0 %v4640
        %6858 = vmatpush1.bf16.msra.mxu0 %v4639
        %6859 = vmatprep.subr.bf16.mxu0 %v4656
        %6860 = vmatpush1.bf16.msra.mxu0 %v4655
        %6861 = vmatprep.subr.bf16.mxu0 %v4672
        %6862 = vmatpush1.bf16.msra.mxu0 %v4671
        %6863 = vmatprep.subr.bf16.mxu0 %v4688
        %6864 = vmatpush1.bf16.msra.mxu0 %v4687
        %6865 = vmatprep.subr.bf16.mxu0 %v4704
        %6866 = vmatpush1.bf16.msra.mxu0 %v4703
        %6867 = vmatprep.mubr.bf16.mxu0 %v1372
        %6868 = vmatmul.mubr.bf16.gmra.mrb[0].mxu0 %v1371
        %v6869 = vpop.f32.mrb[0].mxu0
        %v6870 = vadd.f32 0.0, %v6869
        %v6871 = vpop.f32.mrb[0].mxu0
        %v6872 = vadd.f32 0.0, %v6871
        %v6873 = vpop.f32.mrb[0].mxu0
        %v6874 = vpop.f32.mrb[0].mxu0
        %6875 = vdwg.mxu0
        %6876 = vmatprep.subr.bf16.mxu0 %v4720
        %6877 = vmatpush1.bf16.msra.mxu0 %v4719
        %6878 = vmatprep.subr.bf16.mxu0 %v4736
        %6879 = vmatpush1.bf16.msra.mxu0 %v4735
        %6880 = vmatprep.subr.bf16.mxu0 %v4752
        %6881 = vmatpush1.bf16.msra.mxu0 %v4751
        %6882 = vmatprep.subr.bf16.mxu0 %v4768
        %6883 = vmatpush1.bf16.msra.mxu0 %v4767
        %6884 = vmatprep.subr.bf16.mxu0 %v4784
        %6885 = vmatpush1.bf16.msra.mxu0 %v4783
        %6886 = vmatprep.subr.bf16.mxu0 %v4800
        %6887 = vmatpush1.bf16.msra.mxu0 %v4799
        %6888 = vmatprep.subr.bf16.mxu0 %v4816
        %6889 = vmatpush1.bf16.msra.mxu0 %v4815
        %6890 = vmatprep.subr.bf16.mxu0 %v4832
        %6891 = vmatpush1.bf16.msra.mxu0 %v4831
        %6892 = vmatprep.subr.bf16.mxu0 %v4848
        %6893 = vmatpush1.bf16.msra.mxu0 %v4847
        %6894 = vmatprep.subr.bf16.mxu0 %v4864
        %6895 = vmatpush1.bf16.msra.mxu0 %v4863
        %6896 = vmatprep.subr.bf16.mxu0 %v4880
        %6897 = vmatpush1.bf16.msra.mxu0 %v4879
        %6898 = vmatprep.subr.bf16.mxu0 %v4896
        %6899 = vmatpush1.bf16.msra.mxu0 %v4895
        %6900 = vmatprep.subr.bf16.mxu0 %v4912
        %6901 = vmatpush1.bf16.msra.mxu0 %v4911
        %6902 = vmatprep.subr.bf16.mxu0 %v4928
        %6903 = vmatpush1.bf16.msra.mxu0 %v4927
        %6904 = vmatprep.subr.bf16.mxu0 %v4944
        %6905 = vmatpush1.bf16.msra.mxu0 %v4943
        %6906 = vmatprep.subr.bf16.mxu0 %v4960
        %6907 = vmatpush1.bf16.msra.mxu0 %v4959
        %6908 = vmatprep.mubr.bf16.mxu0 %v1374
        %6909 = vmatmul.mubr.bf16.gmra.mrb[0].mxu0 %v1373
        %v6910 = vpop.f32.mrb[0].mxu0
        %v6911 = vadd.f32 %v6870, %v6910
        %v6912 = vpop.f32.mrb[0].mxu0
        %v6913 = vadd.f32 %v6872, %v6912
        %v6914 = vpop.f32.mrb[0].mxu0
        %v6915 = vpop.f32.mrb[0].mxu0
        %6916 = vdwg.mxu0
        %6917 = vmatprep.subr.bf16.mxu0 %v4976
        %6918 = vmatpush1.bf16.msra.mxu0 %v4975
        %6919 = vmatprep.subr.bf16.mxu0 %v4992
        %6920 = vmatpush1.bf16.msra.mxu0 %v4991
        %6921 = vmatprep.subr.bf16.mxu0 %v5008
        %6922 = vmatpush1.bf16.msra.mxu0 %v5007
        %6923 = vmatprep.subr.bf16.mxu0 %v5024
        %6924 = vmatpush1.bf16.msra.mxu0 %v5023
        %6925 = vmatprep.subr.bf16.mxu0 %v5040
        %6926 = vmatpush1.bf16.msra.mxu0 %v5039
        %6927 = vmatprep.subr.bf16.mxu0 %v5056
        %6928 = vmatpush1.bf16.msra.mxu0 %v5055
        %6929 = vmatprep.subr.bf16.mxu0 %v5072
        %6930 = vmatpush1.bf16.msra.mxu0 %v5071
        %6931 = vmatprep.subr.bf16.mxu0 %v5088
        %6932 = vmatpush1.bf16.msra.mxu0 %v5087
        %6933 = vmatprep.subr.bf16.mxu0 %v5104
        %6934 = vmatpush1.bf16.msra.mxu0 %v5103
        %6935 = vmatprep.subr.bf16.mxu0 %v5120
        %6936 = vmatpush1.bf16.msra.mxu0 %v5119
        %6937 = vmatprep.subr.bf16.mxu0 %v5136
        %6938 = vmatpush1.bf16.msra.mxu0 %v5135
        %6939 = vmatprep.subr.bf16.mxu0 %v5152
        %6940 = vmatpush1.bf16.msra.mxu0 %v5151
        %6941 = vmatprep.subr.bf16.mxu0 %v5168
        %6942 = vmatpush1.bf16.msra.mxu0 %v5167
        %6943 = vmatprep.subr.bf16.mxu0 %v5184
        %6944 = vmatpush1.bf16.msra.mxu0 %v5183
        %6945 = vmatprep.subr.bf16.mxu0 %v5200
        %6946 = vmatpush1.bf16.msra.mxu0 %v5199
        %6947 = vmatprep.subr.bf16.mxu0 %v5216
        %6948 = vmatpush1.bf16.msra.mxu0 %v5215
        %6949 = vmatprep.mubr.bf16.mxu0 %v1376
        %6950 = vmatmul.mubr.bf16.gmra.mrb[0].mxu0 %v1375
        %v6951 = vpop.f32.mrb[0].mxu0
        %v6952 = vadd.f32 %v6911, %v6951
        %v6953 = vpop.f32.mrb[0].mxu0
        %v6954 = vadd.f32 %v6913, %v6953
        %v6955 = vpop.f32.mrb[0].mxu0
        %v6956 = vpop.f32.mrb[0].mxu0
        %6957 = vdwg.mxu0
        %6958 = vmatprep.subr.bf16.mxu0 %v5232
        %6959 = vmatpush1.bf16.msra.mxu0 %v5231
        %6960 = vmatprep.subr.bf16.mxu0 %v5248
        %6961 = vmatpush1.bf16.msra.mxu0 %v5247
        %6962 = vmatprep.subr.bf16.mxu0 %v5264
        %6963 = vmatpush1.bf16.msra.mxu0 %v5263
        %6964 = vmatprep.subr.bf16.mxu0 %v5280
        %6965 = vmatpush1.bf16.msra.mxu0 %v5279
        %6966 = vmatprep.subr.bf16.mxu0 %v5296
        %6967 = vmatpush1.bf16.msra.mxu0 %v5295
        %6968 = vmatprep.subr.bf16.mxu0 %v5312
        %6969 = vmatpush1.bf16.msra.mxu0 %v5311
        %6970 = vmatprep.subr.bf16.mxu0 %v5328
        %6971 = vmatpush1.bf16.msra.mxu0 %v5327
        %6972 = vmatprep.subr.bf16.mxu0 %v5344
        %6973 = vmatpush1.bf16.msra.mxu0 %v5343
        %6974 = vmatprep.subr.bf16.mxu0 %v5360
        %6975 = vmatpush1.bf16.msra.mxu0 %v5359
        %6976 = vmatprep.subr.bf16.mxu0 %v5376
        %6977 = vmatpush1.bf16.msra.mxu0 %v5375
        %6978 = vmatprep.subr.bf16.mxu0 %v5392
        %6979 = vmatpush1.bf16.msra.mxu0 %v5391
        %6980 = vmatprep.subr.bf16.mxu0 %v5408
        %6981 = vmatpush1.bf16.msra.mxu0 %v5407
        %6982 = vmatprep.subr.bf16.mxu0 %v5424
        %6983 = vmatpush1.bf16.msra.mxu0 %v5423
        %6984 = vmatprep.subr.bf16.mxu0 %v5440
        %6985 = vmatpush1.bf16.msra.mxu0 %v5439
        %6986 = vmatprep.subr.bf16.mxu0 %v5456
        %6987 = vmatpush1.bf16.msra.mxu0 %v5455
        %6988 = vmatprep.subr.bf16.mxu0 %v5472
        %6989 = vmatpush1.bf16.msra.mxu0 %v5471
        %6990 = vmatprep.mubr.bf16.mxu0 %v1378
        %6991 = vmatmul.mubr.bf16.gmra.mrb[0].mxu0 %v1377
        %v6992 = vpop.f32.mrb[0].mxu0
        %v6993 = vadd.f32 %v6952, %v6992
        %v6994 = vpop.f32.mrb[0].mxu0
        %v6995 = vadd.f32 %v6954, %v6994
        %v6996 = vpop.f32.mrb[0].mxu0
        %v6997 = vpop.f32.mrb[0].mxu0
        %6998 = vdwg.mxu0
        %6999 = vmatprep.subr.bf16.mxu0 %v4466
        %7000 = vmatpush1.bf16.msra.mxu0 %v4465
        %7001 = vmatprep.subr.bf16.mxu0 %v4482
        %7002 = vmatpush1.bf16.msra.mxu0 %v4481
        %7003 = vmatprep.subr.bf16.mxu0 %v4498
        %7004 = vmatpush1.bf16.msra.mxu0 %v4497
        %7005 = vmatprep.subr.bf16.mxu0 %v4514
        %7006 = vmatpush1.bf16.msra.mxu0 %v4513
        %7007 = vmatprep.subr.bf16.mxu0 %v4530
        %7008 = vmatpush1.bf16.msra.mxu0 %v4529
        %7009 = vmatprep.subr.bf16.mxu0 %v4546
        %7010 = vmatpush1.bf16.msra.mxu0 %v4545
        %7011 = vmatprep.subr.bf16.mxu0 %v4562
        %7012 = vmatpush1.bf16.msra.mxu0 %v4561
        %7013 = vmatprep.subr.bf16.mxu0 %v4578
        %7014 = vmatpush1.bf16.msra.mxu0 %v4577
        %7015 = vmatprep.subr.bf16.mxu0 %v4594
        %7016 = vmatpush1.bf16.msra.mxu0 %v4593
        %7017 = vmatprep.subr.bf16.mxu0 %v4610
        %7018 = vmatpush1.bf16.msra.mxu0 %v4609
        %7019 = vmatprep.subr.bf16.mxu0 %v4626
        %7020 = vmatpush1.bf16.msra.mxu0 %v4625
        %7021 = vmatprep.subr.bf16.mxu0 %v4642
        %7022 = vmatpush1.bf16.msra.mxu0 %v4641
        %7023 = vmatprep.subr.bf16.mxu0 %v4658
        %7024 = vmatpush1.bf16.msra.mxu0 %v4657
        %7025 = vmatprep.subr.bf16.mxu0 %v4674
        %7026 = vmatpush1.bf16.msra.mxu0 %v4673
        %7027 = vmatprep.subr.bf16.mxu0 %v4690
        %7028 = vmatpush1.bf16.msra.mxu0 %v4689
        %7029 = vmatprep.subr.bf16.mxu0 %v4706
        %7030 = vmatpush1.bf16.msra.mxu0 %v4705
        %7031 = vmatprep.mubr.bf16.mxu0 %v1372
        %7032 = vmatmul.mubr.bf16.gmra.mrb[0].mxu0 %v1371
        %v7033 = vpop.f32.mrb[0].mxu0
        %v7034 = vadd.f32 0.0, %v7033
        %v7035 = vpop.f32.mrb[0].mxu0
        %v7036 = vadd.f32 0.0, %v7035
        %v7037 = vpop.f32.mrb[0].mxu0
        %v7038 = vpop.f32.mrb[0].mxu0
        %7039 = vdwg.mxu0
        %7040 = vmatprep.subr.bf16.mxu0 %v4722
        %7041 = vmatpush1.bf16.msra.mxu0 %v4721
        %7042 = vmatprep.subr.bf16.mxu0 %v4738
        %7043 = vmatpush1.bf16.msra.mxu0 %v4737
        %7044 = vmatprep.subr.bf16.mxu0 %v4754
        %7045 = vmatpush1.bf16.msra.mxu0 %v4753
        %7046 = vmatprep.subr.bf16.mxu0 %v4770
        %7047 = vmatpush1.bf16.msra.mxu0 %v4769
        %7048 = vmatprep.subr.bf16.mxu0 %v4786
        %7049 = vmatpush1.bf16.msra.mxu0 %v4785
        %7050 = vmatprep.subr.bf16.mxu0 %v4802
        %7051 = vmatpush1.bf16.msra.mxu0 %v4801
        %7052 = vmatprep.subr.bf16.mxu0 %v4818
        %7053 = vmatpush1.bf16.msra.mxu0 %v4817
        %7054 = vmatprep.subr.bf16.mxu0 %v4834
        %7055 = vmatpush1.bf16.msra.mxu0 %v4833
        %7056 = vmatprep.subr.bf16.mxu0 %v4850
        %7057 = vmatpush1.bf16.msra.mxu0 %v4849
        %7058 = vmatprep.subr.bf16.mxu0 %v4866
        %7059 = vmatpush1.bf16.msra.mxu0 %v4865
        %7060 = vmatprep.subr.bf16.mxu0 %v4882
        %7061 = vmatpush1.bf16.msra.mxu0 %v4881
        %7062 = vmatprep.subr.bf16.mxu0 %v4898
        %7063 = vmatpush1.bf16.msra.mxu0 %v4897
        %7064 = vmatprep.subr.bf16.mxu0 %v4914
        %7065 = vmatpush1.bf16.msra.mxu0 %v4913
        %7066 = vmatprep.subr.bf16.mxu0 %v4930
        %7067 = vmatpush1.bf16.msra.mxu0 %v4929
        %7068 = vmatprep.subr.bf16.mxu0 %v4946
        %7069 = vmatpush1.bf16.msra.mxu0 %v4945
        %7070 = vmatprep.subr.bf16.mxu0 %v4962
        %7071 = vmatpush1.bf16.msra.mxu0 %v4961
        %7072 = vmatprep.mubr.bf16.mxu0 %v1374
        %7073 = vmatmul.mubr.bf16.gmra.mrb[0].mxu0 %v1373
        %v7074 = vpop.f32.mrb[0].mxu0
        %v7075 = vadd.f32 %v7034, %v7074
        %v7076 = vpop.f32.mrb[0].mxu0
        %v7077 = vadd.f32 %v7036, %v7076
        %v7078 = vpop.f32.mrb[0].mxu0
        %v7079 = vpop.f32.mrb[0].mxu0
        %7080 = vdwg.mxu0
        %7081 = vmatprep.subr.bf16.mxu0 %v4978
        %7082 = vmatpush1.bf16.msra.mxu0 %v4977
        %7083 = vmatprep.subr.bf16.mxu0 %v4994
        %7084 = vmatpush1.bf16.msra.mxu0 %v4993
        %7085 = vmatprep.subr.bf16.mxu0 %v5010
        %7086 = vmatpush1.bf16.msra.mxu0 %v5009
        %7087 = vmatprep.subr.bf16.mxu0 %v5026
        %7088 = vmatpush1.bf16.msra.mxu0 %v5025
        %7089 = vmatprep.subr.bf16.mxu0 %v5042
        %7090 = vmatpush1.bf16.msra.mxu0 %v5041
        %7091 = vmatprep.subr.bf16.mxu0 %v5058
        %7092 = vmatpush1.bf16.msra.mxu0 %v5057
        %7093 = vmatprep.subr.bf16.mxu0 %v5074
        %7094 = vmatpush1.bf16.msra.mxu0 %v5073
        %7095 = vmatprep.subr.bf16.mxu0 %v5090
        %7096 = vmatpush1.bf16.msra.mxu0 %v5089
        %7097 = vmatprep.subr.bf16.mxu0 %v5106
        %7098 = vmatpush1.bf16.msra.mxu0 %v5105
        %7099 = vmatprep.subr.bf16.mxu0 %v5122
        %7100 = vmatpush1.bf16.msra.mxu0 %v5121
        %7101 = vmatprep.subr.bf16.mxu0 %v5138
        %7102 = vmatpush1.bf16.msra.mxu0 %v5137
        %7103 = vmatprep.subr.bf16.mxu0 %v5154
        %7104 = vmatpush1.bf16.msra.mxu0 %v5153
        %7105 = vmatprep.subr.bf16.mxu0 %v5170
        %7106 = vmatpush1.bf16.msra.mxu0 %v5169
        %7107 = vmatprep.subr.bf16.mxu0 %v5186
        %7108 = vmatpush1.bf16.msra.mxu0 %v5185
        %7109 = vmatprep.subr.bf16.mxu0 %v5202
        %7110 = vmatpush1.bf16.msra.mxu0 %v5201
        %7111 = vmatprep.subr.bf16.mxu0 %v5218
        %7112 = vmatpush1.bf16.msra.mxu0 %v5217
        %7113 = vmatprep.mubr.bf16.mxu0 %v1376
        %7114 = vmatmul.mubr.bf16.gmra.mrb[0].mxu0 %v1375
        %v7115 = vpop.f32.mrb[0].mxu0
        %v7116 = vadd.f32 %v7075, %v7115
        %v7117 = vpop.f32.mrb[0].mxu0
        %v7118 = vadd.f32 %v7077, %v7117
        %v7119 = vpop.f32.mrb[0].mxu0
        %v7120 = vpop.f32.mrb[0].mxu0
        %7121 = vdwg.mxu0
        %7122 = vmatprep.subr.bf16.mxu0 %v5234
        %7123 = vmatpush1.bf16.msra.mxu0 %v5233
        %7124 = vmatprep.subr.bf16.mxu0 %v5250
        %7125 = vmatpush1.bf16.msra.mxu0 %v5249
        %7126 = vmatprep.subr.bf16.mxu0 %v5266
        %7127 = vmatpush1.bf16.msra.mxu0 %v5265
        %7128 = vmatprep.subr.bf16.mxu0 %v5282
        %7129 = vmatpush1.bf16.msra.mxu0 %v5281
        %7130 = vmatprep.subr.bf16.mxu0 %v5298
        %7131 = vmatpush1.bf16.msra.mxu0 %v5297
        %7132 = vmatprep.subr.bf16.mxu0 %v5314
        %7133 = vmatpush1.bf16.msra.mxu0 %v5313
        %7134 = vmatprep.subr.bf16.mxu0 %v5330
        %7135 = vmatpush1.bf16.msra.mxu0 %v5329
        %7136 = vmatprep.subr.bf16.mxu0 %v5346
        %7137 = vmatpush1.bf16.msra.mxu0 %v5345
        %7138 = vmatprep.subr.bf16.mxu0 %v5362
        %7139 = vmatpush1.bf16.msra.mxu0 %v5361
        %7140 = vmatprep.subr.bf16.mxu0 %v5378
        %7141 = vmatpush1.bf16.msra.mxu0 %v5377
        %7142 = vmatprep.subr.bf16.mxu0 %v5394
        %7143 = vmatpush1.bf16.msra.mxu0 %v5393
        %7144 = vmatprep.subr.bf16.mxu0 %v5410
        %7145 = vmatpush1.bf16.msra.mxu0 %v5409
        %7146 = vmatprep.subr.bf16.mxu0 %v5426
        %7147 = vmatpush1.bf16.msra.mxu0 %v5425
        %7148 = vmatprep.subr.bf16.mxu0 %v5442
        %7149 = vmatpush1.bf16.msra.mxu0 %v5441
        %7150 = vmatprep.subr.bf16.mxu0 %v5458
        %7151 = vmatpush1.bf16.msra.mxu0 %v5457
        %7152 = vmatprep.subr.bf16.mxu0 %v5474
        %7153 = vmatpush1.bf16.msra.mxu0 %v5473
        %7154 = vmatprep.mubr.bf16.mxu0 %v1378
        %7155 = vmatmul.mubr.bf16.gmra.mrb[0].mxu0 %v1377
        %v7156 = vpop.f32.mrb[0].mxu0
        %v7157 = vadd.f32 %v7116, %v7156
        %v7158 = vpop.f32.mrb[0].mxu0
        %v7159 = vadd.f32 %v7118, %v7158
        %v7160 = vpop.f32.mrb[0].mxu0
        %v7161 = vpop.f32.mrb[0].mxu0
        %7162 = vdwg.mxu0
        %7163 = vmatprep.subr.bf16.mxu0 %v4468
        %7164 = vmatpush1.bf16.msra.mxu0 %v4467
        %7165 = vmatprep.subr.bf16.mxu0 %v4484
        %7166 = vmatpush1.bf16.msra.mxu0 %v4483
        %7167 = vmatprep.subr.bf16.mxu0 %v4500
        %7168 = vmatpush1.bf16.msra.mxu0 %v4499
        %7169 = vmatprep.subr.bf16.mxu0 %v4516
        %7170 = vmatpush1.bf16.msra.mxu0 %v4515
        %7171 = vmatprep.subr.bf16.mxu0 %v4532
        %7172 = vmatpush1.bf16.msra.mxu0 %v4531
        %7173 = vmatprep.subr.bf16.mxu0 %v4548
        %7174 = vmatpush1.bf16.msra.mxu0 %v4547
        %7175 = vmatprep.subr.bf16.mxu0 %v4564
        %7176 = vmatpush1.bf16.msra.mxu0 %v4563
        %7177 = vmatprep.subr.bf16.mxu0 %v4580
        %7178 = vmatpush1.bf16.msra.mxu0 %v4579
        %7179 = vmatprep.subr.bf16.mxu0 %v4596
        %7180 = vmatpush1.bf16.msra.mxu0 %v4595
        %7181 = vmatprep.subr.bf16.mxu0 %v4612
        %7182 = vmatpush1.bf16.msra.mxu0 %v4611
        %7183 = vmatprep.subr.bf16.mxu0 %v4628
        %7184 = vmatpush1.bf16.msra.mxu0 %v4627
        %7185 = vmatprep.subr.bf16.mxu0 %v4644
        %7186 = vmatpush1.bf16.msra.mxu0 %v4643
        %7187 = vmatprep.subr.bf16.mxu0 %v4660
        %7188 = vmatpush1.bf16.msra.mxu0 %v4659
        %7189 = vmatprep.subr.bf16.mxu0 %v4676
        %7190 = vmatpush1.bf16.msra.mxu0 %v4675
        %7191 = vmatprep.subr.bf16.mxu0 %v4692
        %7192 = vmatpush1.bf16.msra.mxu0 %v4691
        %7193 = vmatprep.subr.bf16.mxu0 %v4708
        %7194 = vmatpush1.bf16.msra.mxu0 %v4707
        %7195 = vmatprep.mubr.bf16.mxu0 %v1372
        %7196 = vmatmul.mubr.bf16.gmra.mrb[0].mxu0 %v1371
        %v7197 = vpop.f32.mrb[0].mxu0
        %v7198 = vadd.f32 0.0, %v7197
        %v7199 = vpop.f32.mrb[0].mxu0
        %v7200 = vadd.f32 0.0, %v7199
        %v7201 = vpop.f32.mrb[0].mxu0
        %v7202 = vpop.f32.mrb[0].mxu0
        %7203 = vdwg.mxu0
        %7204 = vmatprep.subr.bf16.mxu0 %v4724
        %7205 = vmatpush1.bf16.msra.mxu0 %v4723
        %7206 = vmatprep.subr.bf16.mxu0 %v4740
        %7207 = vmatpush1.bf16.msra.mxu0 %v4739
        %7208 = vmatprep.subr.bf16.mxu0 %v4756
        %7209 = vmatpush1.bf16.msra.mxu0 %v4755
        %7210 = vmatprep.subr.bf16.mxu0 %v4772
        %7211 = vmatpush1.bf16.msra.mxu0 %v4771
        %7212 = vmatprep.subr.bf16.mxu0 %v4788
        %7213 = vmatpush1.bf16.msra.mxu0 %v4787
        %7214 = vmatprep.subr.bf16.mxu0 %v4804
        %7215 = vmatpush1.bf16.msra.mxu0 %v4803
        %7216 = vmatprep.subr.bf16.mxu0 %v4820
        %7217 = vmatpush1.bf16.msra.mxu0 %v4819
        %7218 = vmatprep.subr.bf16.mxu0 %v4836
        %7219 = vmatpush1.bf16.msra.mxu0 %v4835
        %7220 = vmatprep.subr.bf16.mxu0 %v4852
        %7221 = vmatpush1.bf16.msra.mxu0 %v4851
        %7222 = vmatprep.subr.bf16.mxu0 %v4868
        %7223 = vmatpush1.bf16.msra.mxu0 %v4867
        %7224 = vmatprep.subr.bf16.mxu0 %v4884
        %7225 = vmatpush1.bf16.msra.mxu0 %v4883
        %7226 = vmatprep.subr.bf16.mxu0 %v4900
        %7227 = vmatpush1.bf16.msra.mxu0 %v4899
        %7228 = vmatprep.subr.bf16.mxu0 %v4916
        %7229 = vmatpush1.bf16.msra.mxu0 %v4915
        %7230 = vmatprep.subr.bf16.mxu0 %v4932
        %7231 = vmatpush1.bf16.msra.mxu0 %v4931
        %7232 = vmatprep.subr.bf16.mxu0 %v4948
        %7233 = vmatpush1.bf16.msra.mxu0 %v4947
        %7234 = vmatprep.subr.bf16.mxu0 %v4964
        %7235 = vmatpush1.bf16.msra.mxu0 %v4963
        %7236 = vmatprep.mubr.bf16.mxu0 %v1374
        %7237 = vmatmul.mubr.bf16.gmra.mrb[0].mxu0 %v1373
        %v7238 = vpop.f32.mrb[0].mxu0
        %v7239 = vadd.f32 %v7198, %v7238
        %v7240 = vpop.f32.mrb[0].mxu0
        %v7241 = vadd.f32 %v7200, %v7240
        %v7242 = vpop.f32.mrb[0].mxu0
        %v7243 = vpop.f32.mrb[0].mxu0
        %7244 = vdwg.mxu0
        %7245 = vmatprep.subr.bf16.mxu0 %v4980
        %7246 = vmatpush1.bf16.msra.mxu0 %v4979
        %7247 = vmatprep.subr.bf16.mxu0 %v4996
        %7248 = vmatpush1.bf16.msra.mxu0 %v4995
        %7249 = vmatprep.subr.bf16.mxu0 %v5012
        %7250 = vmatpush1.bf16.msra.mxu0 %v5011
        %7251 = vmatprep.subr.bf16.mxu0 %v5028
        %7252 = vmatpush1.bf16.msra.mxu0 %v5027
        %7253 = vmatprep.subr.bf16.mxu0 %v5044
        %7254 = vmatpush1.bf16.msra.mxu0 %v5043
        %7255 = vmatprep.subr.bf16.mxu0 %v5060
        %7256 = vmatpush1.bf16.msra.mxu0 %v5059
        %7257 = vmatprep.subr.bf16.mxu0 %v5076
        %7258 = vmatpush1.bf16.msra.mxu0 %v5075
        %7259 = vmatprep.subr.bf16.mxu0 %v5092
        %7260 = vmatpush1.bf16.msra.mxu0 %v5091
        %7261 = vmatprep.subr.bf16.mxu0 %v5108
        %7262 = vmatpush1.bf16.msra.mxu0 %v5107
        %7263 = vmatprep.subr.bf16.mxu0 %v5124
        %7264 = vmatpush1.bf16.msra.mxu0 %v5123
        %7265 = vmatprep.subr.bf16.mxu0 %v5140
        %7266 = vmatpush1.bf16.msra.mxu0 %v5139
        %7267 = vmatprep.subr.bf16.mxu0 %v5156
        %7268 = vmatpush1.bf16.msra.mxu0 %v5155
        %7269 = vmatprep.subr.bf16.mxu0 %v5172
        %7270 = vmatpush1.bf16.msra.mxu0 %v5171
        %7271 = vmatprep.subr.bf16.mxu0 %v5188
        %7272 = vmatpush1.bf16.msra.mxu0 %v5187
        %7273 = vmatprep.subr.bf16.mxu0 %v5204
        %7274 = vmatpush1.bf16.msra.mxu0 %v5203
        %7275 = vmatprep.subr.bf16.mxu0 %v5220
        %7276 = vmatpush1.bf16.msra.mxu0 %v5219
        %7277 = vmatprep.mubr.bf16.mxu0 %v1376
        %7278 = vmatmul.mubr.bf16.gmra.mrb[0].mxu0 %v1375
        %v7279 = vpop.f32.mrb[0].mxu0
        %v7280 = vadd.f32 %v7239, %v7279
        %v7281 = vpop.f32.mrb[0].mxu0
        %v7282 = vadd.f32 %v7241, %v7281
        %v7283 = vpop.f32.mrb[0].mxu0
        %v7284 = vpop.f32.mrb[0].mxu0
        %7285 = vdwg.mxu0
        %7286 = vmatprep.subr.bf16.mxu0 %v5236
        %7287 = vmatpush1.bf16.msra.mxu0 %v5235
        %7288 = vmatprep.subr.bf16.mxu0 %v5252
        %7289 = vmatpush1.bf16.msra.mxu0 %v5251
        %7290 = vmatprep.subr.bf16.mxu0 %v5268
        %7291 = vmatpush1.bf16.msra.mxu0 %v5267
        %7292 = vmatprep.subr.bf16.mxu0 %v5284
        %7293 = vmatpush1.bf16.msra.mxu0 %v5283
        %7294 = vmatprep.subr.bf16.mxu0 %v5300
        %7295 = vmatpush1.bf16.msra.mxu0 %v5299
        %7296 = vmatprep.subr.bf16.mxu0 %v5316
        %7297 = vmatpush1.bf16.msra.mxu0 %v5315
        %7298 = vmatprep.subr.bf16.mxu0 %v5332
        %7299 = vmatpush1.bf16.msra.mxu0 %v5331
        %7300 = vmatprep.subr.bf16.mxu0 %v5348
        %7301 = vmatpush1.bf16.msra.mxu0 %v5347
        %7302 = vmatprep.subr.bf16.mxu0 %v5364
        %7303 = vmatpush1.bf16.msra.mxu0 %v5363
        %7304 = vmatprep.subr.bf16.mxu0 %v5380
        %7305 = vmatpush1.bf16.msra.mxu0 %v5379
        %7306 = vmatprep.subr.bf16.mxu0 %v5396
        %7307 = vmatpush1.bf16.msra.mxu0 %v5395
        %7308 = vmatprep.subr.bf16.mxu0 %v5412
        %7309 = vmatpush1.bf16.msra.mxu0 %v5411
        %7310 = vmatprep.subr.bf16.mxu0 %v5428
        %7311 = vmatpush1.bf16.msra.mxu0 %v5427
        %7312 = vmatprep.subr.bf16.mxu0 %v5444
        %7313 = vmatpush1.bf16.msra.mxu0 %v5443
        %7314 = vmatprep.subr.bf16.mxu0 %v5460
        %7315 = vmatpush1.bf16.msra.mxu0 %v5459
        %7316 = vmatprep.subr.bf16.mxu0 %v5476
        %7317 = vmatpush1.bf16.msra.mxu0 %v5475
        %7318 = vmatprep.mubr.bf16.mxu0 %v1378
        %7319 = vmatmul.mubr.bf16.gmra.mrb[0].mxu0 %v1377
        %v7320 = vpop.f32.mrb[0].mxu0
        %v7321 = vadd.f32 %v7280, %v7320
        %v7322 = vpop.f32.mrb[0].mxu0
        %v7323 = vadd.f32 %v7282, %v7322
        %v7324 = vpop.f32.mrb[0].mxu0
        %v7325 = vpop.f32.mrb[0].mxu0
        %7326 = vdwg.mxu0
        %7327 = vmatprep.subr.bf16.mxu0 %v4470
        %7328 = vmatpush1.bf16.msra.mxu0 %v4469
        %7329 = vmatprep.subr.bf16.mxu0 %v4486
        %7330 = vmatpush1.bf16.msra.mxu0 %v4485
        %7331 = vmatprep.subr.bf16.mxu0 %v4502
        %7332 = vmatpush1.bf16.msra.mxu0 %v4501
        %7333 = vmatprep.subr.bf16.mxu0 %v4518
        %7334 = vmatpush1.bf16.msra.mxu0 %v4517
        %7335 = vmatprep.subr.bf16.mxu0 %v4534
        %7336 = vmatpush1.bf16.msra.mxu0 %v4533
        %7337 = vmatprep.subr.bf16.mxu0 %v4550
        %7338 = vmatpush1.bf16.msra.mxu0 %v4549
        %7339 = vmatprep.subr.bf16.mxu0 %v4566
        %7340 = vmatpush1.bf16.msra.mxu0 %v4565
        %7341 = vmatprep.subr.bf16.mxu0 %v4582
        %7342 = vmatpush1.bf16.msra.mxu0 %v4581
        %7343 = vmatprep.subr.bf16.mxu0 %v4598
        %7344 = vmatpush1.bf16.msra.mxu0 %v4597
        %7345 = vmatprep.subr.bf16.mxu0 %v4614
        %7346 = vmatpush1.bf16.msra.mxu0 %v4613
        %7347 = vmatprep.subr.bf16.mxu0 %v4630
        %7348 = vmatpush1.bf16.msra.mxu0 %v4629
        %7349 = vmatprep.subr.bf16.mxu0 %v4646
        %7350 = vmatpush1.bf16.msra.mxu0 %v4645
        %7351 = vmatprep.subr.bf16.mxu0 %v4662
        %7352 = vmatpush1.bf16.msra.mxu0 %v4661
        %7353 = vmatprep.subr.bf16.mxu0 %v4678
        %7354 = vmatpush1.bf16.msra.mxu0 %v4677
        %7355 = vmatprep.subr.bf16.mxu0 %v4694
        %7356 = vmatpush1.bf16.msra.mxu0 %v4693
        %7357 = vmatprep.subr.bf16.mxu0 %v4710
        %7358 = vmatpush1.bf16.msra.mxu0 %v4709
        %7359 = vmatprep.mubr.bf16.mxu0 %v1372
        %7360 = vmatmul.mubr.bf16.gmra.mrb[0].mxu0 %v1371
        %v7361 = vpop.f32.mrb[0].mxu0
        %v7362 = vadd.f32 0.0, %v7361
        %v7363 = vpop.f32.mrb[0].mxu0
        %v7364 = vadd.f32 0.0, %v7363
        %v7365 = vpop.f32.mrb[0].mxu0
        %v7366 = vpop.f32.mrb[0].mxu0
        %7367 = vdwg.mxu0
        %7368 = vmatprep.subr.bf16.mxu0 %v4726
        %7369 = vmatpush1.bf16.msra.mxu0 %v4725
        %7370 = vmatprep.subr.bf16.mxu0 %v4742
        %7371 = vmatpush1.bf16.msra.mxu0 %v4741
        %7372 = vmatprep.subr.bf16.mxu0 %v4758
        %7373 = vmatpush1.bf16.msra.mxu0 %v4757
        %7374 = vmatprep.subr.bf16.mxu0 %v4774
        %7375 = vmatpush1.bf16.msra.mxu0 %v4773
        %7376 = vmatprep.subr.bf16.mxu0 %v4790
        %7377 = vmatpush1.bf16.msra.mxu0 %v4789
        %7378 = vmatprep.subr.bf16.mxu0 %v4806
        %7379 = vmatpush1.bf16.msra.mxu0 %v4805
        %7380 = vmatprep.subr.bf16.mxu0 %v4822
        %7381 = vmatpush1.bf16.msra.mxu0 %v4821
        %7382 = vmatprep.subr.bf16.mxu0 %v4838
        %7383 = vmatpush1.bf16.msra.mxu0 %v4837
        %7384 = vmatprep.subr.bf16.mxu0 %v4854
        %7385 = vmatpush1.bf16.msra.mxu0 %v4853
        %7386 = vmatprep.subr.bf16.mxu0 %v4870
        %7387 = vmatpush1.bf16.msra.mxu0 %v4869
        %7388 = vmatprep.subr.bf16.mxu0 %v4886
        %7389 = vmatpush1.bf16.msra.mxu0 %v4885
        %7390 = vmatprep.subr.bf16.mxu0 %v4902
        %7391 = vmatpush1.bf16.msra.mxu0 %v4901
        %7392 = vmatprep.subr.bf16.mxu0 %v4918
        %7393 = vmatpush1.bf16.msra.mxu0 %v4917
        %7394 = vmatprep.subr.bf16.mxu0 %v4934
        %7395 = vmatpush1.bf16.msra.mxu0 %v4933
        %7396 = vmatprep.subr.bf16.mxu0 %v4950
        %7397 = vmatpush1.bf16.msra.mxu0 %v4949
        %7398 = vmatprep.subr.bf16.mxu0 %v4966
        %7399 = vmatpush1.bf16.msra.mxu0 %v4965
        %7400 = vmatprep.mubr.bf16.mxu0 %v1374
        %7401 = vmatmul.mubr.bf16.gmra.mrb[0].mxu0 %v1373
        %v7402 = vpop.f32.mrb[0].mxu0
        %v7403 = vadd.f32 %v7362, %v7402
        %v7404 = vpop.f32.mrb[0].mxu0
        %v7405 = vadd.f32 %v7364, %v7404
        %v7406 = vpop.f32.mrb[0].mxu0
        %v7407 = vpop.f32.mrb[0].mxu0
        %7408 = vdwg.mxu0
        %7409 = vmatprep.subr.bf16.mxu0 %v4982
        %7410 = vmatpush1.bf16.msra.mxu0 %v4981
        %7411 = vmatprep.subr.bf16.mxu0 %v4998
        %7412 = vmatpush1.bf16.msra.mxu0 %v4997
        %7413 = vmatprep.subr.bf16.mxu0 %v5014
        %7414 = vmatpush1.bf16.msra.mxu0 %v5013
        %7415 = vmatprep.subr.bf16.mxu0 %v5030
        %7416 = vmatpush1.bf16.msra.mxu0 %v5029
        %7417 = vmatprep.subr.bf16.mxu0 %v5046
        %7418 = vmatpush1.bf16.msra.mxu0 %v5045
        %7419 = vmatprep.subr.bf16.mxu0 %v5062
        %7420 = vmatpush1.bf16.msra.mxu0 %v5061
        %7421 = vmatprep.subr.bf16.mxu0 %v5078
        %7422 = vmatpush1.bf16.msra.mxu0 %v5077
        %7423 = vmatprep.subr.bf16.mxu0 %v5094
        %7424 = vmatpush1.bf16.msra.mxu0 %v5093
        %7425 = vmatprep.subr.bf16.mxu0 %v5110
        %7426 = vmatpush1.bf16.msra.mxu0 %v5109
        %7427 = vmatprep.subr.bf16.mxu0 %v5126
        %7428 = vmatpush1.bf16.msra.mxu0 %v5125
        %7429 = vmatprep.subr.bf16.mxu0 %v5142
        %7430 = vmatpush1.bf16.msra.mxu0 %v5141
        %7431 = vmatprep.subr.bf16.mxu0 %v5158
        %7432 = vmatpush1.bf16.msra.mxu0 %v5157
        %7433 = vmatprep.subr.bf16.mxu0 %v5174
        %7434 = vmatpush1.bf16.msra.mxu0 %v5173
        %7435 = vmatprep.subr.bf16.mxu0 %v5190
        %7436 = vmatpush1.bf16.msra.mxu0 %v5189
        %7437 = vmatprep.subr.bf16.mxu0 %v5206
        %7438 = vmatpush1.bf16.msra.mxu0 %v5205
        %7439 = vmatprep.subr.bf16.mxu0 %v5222
        %7440 = vmatpush1.bf16.msra.mxu0 %v5221
        %7441 = vmatprep.mubr.bf16.mxu0 %v1376
        %7442 = vmatmul.mubr.bf16.gmra.mrb[0].mxu0 %v1375
        %v7443 = vpop.f32.mrb[0].mxu0
        %v7444 = vadd.f32 %v7403, %v7443
        %v7445 = vpop.f32.mrb[0].mxu0
        %v7446 = vadd.f32 %v7405, %v7445
        %v7447 = vpop.f32.mrb[0].mxu0
        %v7448 = vpop.f32.mrb[0].mxu0
        %7449 = vdwg.mxu0
        %7450 = vmatprep.subr.bf16.mxu0 %v5238
        %7451 = vmatpush1.bf16.msra.mxu0 %v5237
        %7452 = vmatprep.subr.bf16.mxu0 %v5254
        %7453 = vmatpush1.bf16.msra.mxu0 %v5253
        %7454 = vmatprep.subr.bf16.mxu0 %v5270
        %7455 = vmatpush1.bf16.msra.mxu0 %v5269
        %7456 = vmatprep.subr.bf16.mxu0 %v5286
        %7457 = vmatpush1.bf16.msra.mxu0 %v5285
        %7458 = vmatprep.subr.bf16.mxu0 %v5302
        %7459 = vmatpush1.bf16.msra.mxu0 %v5301
        %7460 = vmatprep.subr.bf16.mxu0 %v5318
        %7461 = vmatpush1.bf16.msra.mxu0 %v5317
        %7462 = vmatprep.subr.bf16.mxu0 %v5334
        %7463 = vmatpush1.bf16.msra.mxu0 %v5333
        %7464 = vmatprep.subr.bf16.mxu0 %v5350
        %7465 = vmatpush1.bf16.msra.mxu0 %v5349
        %7466 = vmatprep.subr.bf16.mxu0 %v5366
        %7467 = vmatpush1.bf16.msra.mxu0 %v5365
        %7468 = vmatprep.subr.bf16.mxu0 %v5382
        %7469 = vmatpush1.bf16.msra.mxu0 %v5381
        %7470 = vmatprep.subr.bf16.mxu0 %v5398
        %7471 = vmatpush1.bf16.msra.mxu0 %v5397
        %7472 = vmatprep.subr.bf16.mxu0 %v5414
        %7473 = vmatpush1.bf16.msra.mxu0 %v5413
        %7474 = vmatprep.subr.bf16.mxu0 %v5430
        %7475 = vmatpush1.bf16.msra.mxu0 %v5429
        %7476 = vmatprep.subr.bf16.mxu0 %v5446
        %7477 = vmatpush1.bf16.msra.mxu0 %v5445
        %7478 = vmatprep.subr.bf16.mxu0 %v5462
        %7479 = vmatpush1.bf16.msra.mxu0 %v5461
        %7480 = vmatprep.subr.bf16.mxu0 %v5478
        %7481 = vmatpush1.bf16.msra.mxu0 %v5477
        %7482 = vmatprep.mubr.bf16.mxu0 %v1378
        %7483 = vmatmul.mubr.bf16.gmra.mrb[0].mxu0 %v1377
        %v7484 = vpop.f32.mrb[0].mxu0
        %v7485 = vadd.f32 %v7444, %v7484
        %v7486 = vpop.f32.mrb[0].mxu0
        %v7487 = vadd.f32 %v7446, %v7486
        %v7488 = vpop.f32.mrb[0].mxu0
        %v7489 = vpop.f32.mrb[0].mxu0
        %7490 = vdwg.mxu0
        %7491 = vmatprep.subr.bf16.mxu0 %v4472
        %7492 = vmatpush1.bf16.msra.mxu0 %v4471
        %7493 = vmatprep.subr.bf16.mxu0 %v4488
        %7494 = vmatpush1.bf16.msra.mxu0 %v4487
        %7495 = vmatprep.subr.bf16.mxu0 %v4504
        %7496 = vmatpush1.bf16.msra.mxu0 %v4503
        %7497 = vmatprep.subr.bf16.mxu0 %v4520
        %7498 = vmatpush1.bf16.msra.mxu0 %v4519
        %7499 = vmatprep.subr.bf16.mxu0 %v4536
        %7500 = vmatpush1.bf16.msra.mxu0 %v4535
        %7501 = vmatprep.subr.bf16.mxu0 %v4552
        %7502 = vmatpush1.bf16.msra.mxu0 %v4551
        %7503 = vmatprep.subr.bf16.mxu0 %v4568
        %7504 = vmatpush1.bf16.msra.mxu0 %v4567
        %7505 = vmatprep.subr.bf16.mxu0 %v4584
        %7506 = vmatpush1.bf16.msra.mxu0 %v4583
        %7507 = vmatprep.subr.bf16.mxu0 %v4600
        %7508 = vmatpush1.bf16.msra.mxu0 %v4599
        %7509 = vmatprep.subr.bf16.mxu0 %v4616
        %7510 = vmatpush1.bf16.msra.mxu0 %v4615
        %7511 = vmatprep.subr.bf16.mxu0 %v4632
        %7512 = vmatpush1.bf16.msra.mxu0 %v4631
        %7513 = vmatprep.subr.bf16.mxu0 %v4648
        %7514 = vmatpush1.bf16.msra.mxu0 %v4647
        %7515 = vmatprep.subr.bf16.mxu0 %v4664
        %7516 = vmatpush1.bf16.msra.mxu0 %v4663
        %7517 = vmatprep.subr.bf16.mxu0 %v4680
        %7518 = vmatpush1.bf16.msra.mxu0 %v4679
        %7519 = vmatprep.subr.bf16.mxu0 %v4696
        %7520 = vmatpush1.bf16.msra.mxu0 %v4695
        %7521 = vmatprep.subr.bf16.mxu0 %v4712
        %7522 = vmatpush1.bf16.msra.mxu0 %v4711
        %7523 = vmatprep.mubr.bf16.mxu0 %v1372
        %7524 = vmatmul.mubr.bf16.gmra.mrb[0].mxu0 %v1371
        %v7525 = vpop.f32.mrb[0].mxu0
        %v7526 = vadd.f32 0.0, %v7525
        %v7527 = vpop.f32.mrb[0].mxu0
        %v7528 = vadd.f32 0.0, %v7527
        %v7529 = vpop.f32.mrb[0].mxu0
        %v7530 = vpop.f32.mrb[0].mxu0
        %7531 = vdwg.mxu0
        %7532 = vmatprep.subr.bf16.mxu0 %v4728
        %7533 = vmatpush1.bf16.msra.mxu0 %v4727
        %7534 = vmatprep.subr.bf16.mxu0 %v4744
        %7535 = vmatpush1.bf16.msra.mxu0 %v4743
        %7536 = vmatprep.subr.bf16.mxu0 %v4760
        %7537 = vmatpush1.bf16.msra.mxu0 %v4759
        %7538 = vmatprep.subr.bf16.mxu0 %v4776
        %7539 = vmatpush1.bf16.msra.mxu0 %v4775
        %7540 = vmatprep.subr.bf16.mxu0 %v4792
        %7541 = vmatpush1.bf16.msra.mxu0 %v4791
        %7542 = vmatprep.subr.bf16.mxu0 %v4808
        %7543 = vmatpush1.bf16.msra.mxu0 %v4807
        %7544 = vmatprep.subr.bf16.mxu0 %v4824
        %7545 = vmatpush1.bf16.msra.mxu0 %v4823
        %7546 = vmatprep.subr.bf16.mxu0 %v4840
        %7547 = vmatpush1.bf16.msra.mxu0 %v4839
        %7548 = vmatprep.subr.bf16.mxu0 %v4856
        %7549 = vmatpush1.bf16.msra.mxu0 %v4855
        %7550 = vmatprep.subr.bf16.mxu0 %v4872
        %7551 = vmatpush1.bf16.msra.mxu0 %v4871
        %7552 = vmatprep.subr.bf16.mxu0 %v4888
        %7553 = vmatpush1.bf16.msra.mxu0 %v4887
        %7554 = vmatprep.subr.bf16.mxu0 %v4904
        %7555 = vmatpush1.bf16.msra.mxu0 %v4903
        %7556 = vmatprep.subr.bf16.mxu0 %v4920
        %7557 = vmatpush1.bf16.msra.mxu0 %v4919
        %7558 = vmatprep.subr.bf16.mxu0 %v4936
        %7559 = vmatpush1.bf16.msra.mxu0 %v4935
        %7560 = vmatprep.subr.bf16.mxu0 %v4952
        %7561 = vmatpush1.bf16.msra.mxu0 %v4951
        %7562 = vmatprep.subr.bf16.mxu0 %v4968
        %7563 = vmatpush1.bf16.msra.mxu0 %v4967
        %7564 = vmatprep.mubr.bf16.mxu0 %v1374
        %7565 = vmatmul.mubr.bf16.gmra.mrb[0].mxu0 %v1373
        %v7566 = vpop.f32.mrb[0].mxu0
        %v7567 = vadd.f32 %v7526, %v7566
        %v7568 = vpop.f32.mrb[0].mxu0
        %v7569 = vadd.f32 %v7528, %v7568
        %v7570 = vpop.f32.mrb[0].mxu0
        %v7571 = vpop.f32.mrb[0].mxu0
        %7572 = vdwg.mxu0
        %7573 = vmatprep.subr.bf16.mxu0 %v4984
        %7574 = vmatpush1.bf16.msra.mxu0 %v4983
        %7575 = vmatprep.subr.bf16.mxu0 %v5000
        %7576 = vmatpush1.bf16.msra.mxu0 %v4999
        %7577 = vmatprep.subr.bf16.mxu0 %v5016
        %7578 = vmatpush1.bf16.msra.mxu0 %v5015
        %7579 = vmatprep.subr.bf16.mxu0 %v5032
        %7580 = vmatpush1.bf16.msra.mxu0 %v5031
        %7581 = vmatprep.subr.bf16.mxu0 %v5048
        %7582 = vmatpush1.bf16.msra.mxu0 %v5047
        %7583 = vmatprep.subr.bf16.mxu0 %v5064
        %7584 = vmatpush1.bf16.msra.mxu0 %v5063
        %7585 = vmatprep.subr.bf16.mxu0 %v5080
        %7586 = vmatpush1.bf16.msra.mxu0 %v5079
        %7587 = vmatprep.subr.bf16.mxu0 %v5096
        %7588 = vmatpush1.bf16.msra.mxu0 %v5095
        %7589 = vmatprep.subr.bf16.mxu0 %v5112
        %7590 = vmatpush1.bf16.msra.mxu0 %v5111
        %7591 = vmatprep.subr.bf16.mxu0 %v5128
        %7592 = vmatpush1.bf16.msra.mxu0 %v5127
        %7593 = vmatprep.subr.bf16.mxu0 %v5144
        %7594 = vmatpush1.bf16.msra.mxu0 %v5143
        %7595 = vmatprep.subr.bf16.mxu0 %v5160
        %7596 = vmatpush1.bf16.msra.mxu0 %v5159
        %7597 = vmatprep.subr.bf16.mxu0 %v5176
        %7598 = vmatpush1.bf16.msra.mxu0 %v5175
        %7599 = vmatprep.subr.bf16.mxu0 %v5192
        %7600 = vmatpush1.bf16.msra.mxu0 %v5191
        %7601 = vmatprep.subr.bf16.mxu0 %v5208
        %7602 = vmatpush1.bf16.msra.mxu0 %v5207
        %7603 = vmatprep.subr.bf16.mxu0 %v5224
        %7604 = vmatpush1.bf16.msra.mxu0 %v5223
        %7605 = vmatprep.mubr.bf16.mxu0 %v1376
        %7606 = vmatmul.mubr.bf16.gmra.mrb[0].mxu0 %v1375
        %v7607 = vpop.f32.mrb[0].mxu0
        %v7608 = vadd.f32 %v7567, %v7607
        %v7609 = vpop.f32.mrb[0].mxu0
        %v7610 = vadd.f32 %v7569, %v7609
        %v7611 = vpop.f32.mrb[0].mxu0
        %v7612 = vpop.f32.mrb[0].mxu0
        %7613 = vdwg.mxu0
        %7614 = vmatprep.subr.bf16.mxu0 %v5240
        %7615 = vmatpush1.bf16.msra.mxu0 %v5239
        %7616 = vmatprep.subr.bf16.mxu0 %v5256
        %7617 = vmatpush1.bf16.msra.mxu0 %v5255
        %7618 = vmatprep.subr.bf16.mxu0 %v5272
        %7619 = vmatpush1.bf16.msra.mxu0 %v5271
        %7620 = vmatprep.subr.bf16.mxu0 %v5288
        %7621 = vmatpush1.bf16.msra.mxu0 %v5287
        %7622 = vmatprep.subr.bf16.mxu0 %v5304
        %7623 = vmatpush1.bf16.msra.mxu0 %v5303
        %7624 = vmatprep.subr.bf16.mxu0 %v5320
        %7625 = vmatpush1.bf16.msra.mxu0 %v5319
        %7626 = vmatprep.subr.bf16.mxu0 %v5336
        %7627 = vmatpush1.bf16.msra.mxu0 %v5335
        %7628 = vmatprep.subr.bf16.mxu0 %v5352
        %7629 = vmatpush1.bf16.msra.mxu0 %v5351
        %7630 = vmatprep.subr.bf16.mxu0 %v5368
        %7631 = vmatpush1.bf16.msra.mxu0 %v5367
        %7632 = vmatprep.subr.bf16.mxu0 %v5384
        %7633 = vmatpush1.bf16.msra.mxu0 %v5383
        %7634 = vmatprep.subr.bf16.mxu0 %v5400
        %7635 = vmatpush1.bf16.msra.mxu0 %v5399
        %7636 = vmatprep.subr.bf16.mxu0 %v5416
        %7637 = vmatpush1.bf16.msra.mxu0 %v5415
        %7638 = vmatprep.subr.bf16.mxu0 %v5432
        %7639 = vmatpush1.bf16.msra.mxu0 %v5431
        %7640 = vmatprep.subr.bf16.mxu0 %v5448
        %7641 = vmatpush1.bf16.msra.mxu0 %v5447
        %7642 = vmatprep.subr.bf16.mxu0 %v5464
        %7643 = vmatpush1.bf16.msra.mxu0 %v5463
        %7644 = vmatprep.subr.bf16.mxu0 %v5480
        %7645 = vmatpush1.bf16.msra.mxu0 %v5479
        %7646 = vmatprep.mubr.bf16.mxu0 %v1378
        %7647 = vmatmul.mubr.bf16.gmra.mrb[0].mxu0 %v1377
        %v7648 = vpop.f32.mrb[0].mxu0
        %v7649 = vadd.f32 %v7608, %v7648
        %v7650 = vpop.f32.mrb[0].mxu0
        %v7651 = vadd.f32 %v7610, %v7650
        %v7652 = vpop.f32.mrb[0].mxu0
        %v7653 = vpop.f32.mrb[0].mxu0
        %7654 = vdwg.mxu0
        %7655 = vmatprep.subr.bf16.mxu0 %v4474
        %7656 = vmatpush1.bf16.msra.mxu0 %v4473
        %7657 = vmatprep.subr.bf16.mxu0 %v4490
        %7658 = vmatpush1.bf16.msra.mxu0 %v4489
        %7659 = vmatprep.subr.bf16.mxu0 %v4506
        %7660 = vmatpush1.bf16.msra.mxu0 %v4505
        %7661 = vmatprep.subr.bf16.mxu0 %v4522
        %7662 = vmatpush1.bf16.msra.mxu0 %v4521
        %7663 = vmatprep.subr.bf16.mxu0 %v4538
        %7664 = vmatpush1.bf16.msra.mxu0 %v4537
        %7665 = vmatprep.subr.bf16.mxu0 %v4554
        %7666 = vmatpush1.bf16.msra.mxu0 %v4553
        %7667 = vmatprep.subr.bf16.mxu0 %v4570
        %7668 = vmatpush1.bf16.msra.mxu0 %v4569
        %7669 = vmatprep.subr.bf16.mxu0 %v4586
        %7670 = vmatpush1.bf16.msra.mxu0 %v4585
        %7671 = vmatprep.subr.bf16.mxu0 %v4602
        %7672 = vmatpush1.bf16.msra.mxu0 %v4601
        %7673 = vmatprep.subr.bf16.mxu0 %v4618
        %7674 = vmatpush1.bf16.msra.mxu0 %v4617
        %7675 = vmatprep.subr.bf16.mxu0 %v4634
        %7676 = vmatpush1.bf16.msra.mxu0 %v4633
        %7677 = vmatprep.subr.bf16.mxu0 %v4650
        %7678 = vmatpush1.bf16.msra.mxu0 %v4649
        %7679 = vmatprep.subr.bf16.mxu0 %v4666
        %7680 = vmatpush1.bf16.msra.mxu0 %v4665
        %7681 = vmatprep.subr.bf16.mxu0 %v4682
        %7682 = vmatpush1.bf16.msra.mxu0 %v4681
        %7683 = vmatprep.subr.bf16.mxu0 %v4698
        %7684 = vmatpush1.bf16.msra.mxu0 %v4697
        %7685 = vmatprep.subr.bf16.mxu0 %v4714
        %7686 = vmatpush1.bf16.msra.mxu0 %v4713
        %7687 = vmatprep.mubr.bf16.mxu0 %v1372
        %7688 = vmatmul.mubr.bf16.gmra.mrb[0].mxu0 %v1371
        %v7689 = vpop.f32.mrb[0].mxu0
        %v7690 = vadd.f32 0.0, %v7689
        %v7691 = vpop.f32.mrb[0].mxu0
        %v7692 = vadd.f32 0.0, %v7691
        %v7693 = vpop.f32.mrb[0].mxu0
        %v7694 = vpop.f32.mrb[0].mxu0
        %7695 = vdwg.mxu0
        %7696 = vmatprep.subr.bf16.mxu0 %v4730
        %7697 = vmatpush1.bf16.msra.mxu0 %v4729
        %7698 = vmatprep.subr.bf16.mxu0 %v4746
        %7699 = vmatpush1.bf16.msra.mxu0 %v4745
        %7700 = vmatprep.subr.bf16.mxu0 %v4762
        %7701 = vmatpush1.bf16.msra.mxu0 %v4761
        %7702 = vmatprep.subr.bf16.mxu0 %v4778
        %7703 = vmatpush1.bf16.msra.mxu0 %v4777
        %7704 = vmatprep.subr.bf16.mxu0 %v4794
        %7705 = vmatpush1.bf16.msra.mxu0 %v4793
        %7706 = vmatprep.subr.bf16.mxu0 %v4810
        %7707 = vmatpush1.bf16.msra.mxu0 %v4809
        %7708 = vmatprep.subr.bf16.mxu0 %v4826
        %7709 = vmatpush1.bf16.msra.mxu0 %v4825
        %7710 = vmatprep.subr.bf16.mxu0 %v4842
        %7711 = vmatpush1.bf16.msra.mxu0 %v4841
        %7712 = vmatprep.subr.bf16.mxu0 %v4858
        %7713 = vmatpush1.bf16.msra.mxu0 %v4857
        %7714 = vmatprep.subr.bf16.mxu0 %v4874
        %7715 = vmatpush1.bf16.msra.mxu0 %v4873
        %7716 = vmatprep.subr.bf16.mxu0 %v4890
        %7717 = vmatpush1.bf16.msra.mxu0 %v4889
        %7718 = vmatprep.subr.bf16.mxu0 %v4906
        %7719 = vmatpush1.bf16.msra.mxu0 %v4905
        %7720 = vmatprep.subr.bf16.mxu0 %v4922
        %7721 = vmatpush1.bf16.msra.mxu0 %v4921
        %7722 = vmatprep.subr.bf16.mxu0 %v4938
        %7723 = vmatpush1.bf16.msra.mxu0 %v4937
        %7724 = vmatprep.subr.bf16.mxu0 %v4954
        %7725 = vmatpush1.bf16.msra.mxu0 %v4953
        %7726 = vmatprep.subr.bf16.mxu0 %v4970
        %7727 = vmatpush1.bf16.msra.mxu0 %v4969
        %7728 = vmatprep.mubr.bf16.mxu0 %v1374
        %7729 = vmatmul.mubr.bf16.gmra.mrb[0].mxu0 %v1373
        %v7730 = vpop.f32.mrb[0].mxu0
        %v7731 = vadd.f32 %v7690, %v7730
        %v7732 = vpop.f32.mrb[0].mxu0
        %v7733 = vadd.f32 %v7692, %v7732
        %v7734 = vpop.f32.mrb[0].mxu0
        %v7735 = vpop.f32.mrb[0].mxu0
        %7736 = vdwg.mxu0
        %7737 = vmatprep.subr.bf16.mxu0 %v4986
        %7738 = vmatpush1.bf16.msra.mxu0 %v4985
        %7739 = vmatprep.subr.bf16.mxu0 %v5002
        %7740 = vmatpush1.bf16.msra.mxu0 %v5001
        %7741 = vmatprep.subr.bf16.mxu0 %v5018
        %7742 = vmatpush1.bf16.msra.mxu0 %v5017
        %7743 = vmatprep.subr.bf16.mxu0 %v5034
        %7744 = vmatpush1.bf16.msra.mxu0 %v5033
        %7745 = vmatprep.subr.bf16.mxu0 %v5050
        %7746 = vmatpush1.bf16.msra.mxu0 %v5049
        %7747 = vmatprep.subr.bf16.mxu0 %v5066
        %7748 = vmatpush1.bf16.msra.mxu0 %v5065
        %7749 = vmatprep.subr.bf16.mxu0 %v5082
        %7750 = vmatpush1.bf16.msra.mxu0 %v5081
        %7751 = vmatprep.subr.bf16.mxu0 %v5098
        %7752 = vmatpush1.bf16.msra.mxu0 %v5097
        %7753 = vmatprep.subr.bf16.mxu0 %v5114
        %7754 = vmatpush1.bf16.msra.mxu0 %v5113
        %7755 = vmatprep.subr.bf16.mxu0 %v5130
        %7756 = vmatpush1.bf16.msra.mxu0 %v5129
        %7757 = vmatprep.subr.bf16.mxu0 %v5146
        %7758 = vmatpush1.bf16.msra.mxu0 %v5145
        %7759 = vmatprep.subr.bf16.mxu0 %v5162
        %7760 = vmatpush1.bf16.msra.mxu0 %v5161
        %7761 = vmatprep.subr.bf16.mxu0 %v5178
        %7762 = vmatpush1.bf16.msra.mxu0 %v5177
        %7763 = vmatprep.subr.bf16.mxu0 %v5194
        %7764 = vmatpush1.bf16.msra.mxu0 %v5193
        %7765 = vmatprep.subr.bf16.mxu0 %v5210
        %7766 = vmatpush1.bf16.msra.mxu0 %v5209
        %7767 = vmatprep.subr.bf16.mxu0 %v5226
        %7768 = vmatpush1.bf16.msra.mxu0 %v5225
        %7769 = vmatprep.mubr.bf16.mxu0 %v1376
        %7770 = vmatmul.mubr.bf16.gmra.mrb[0].mxu0 %v1375
        %v7771 = vpop.f32.mrb[0].mxu0
        %v7772 = vadd.f32 %v7731, %v7771
        %v7773 = vpop.f32.mrb[0].mxu0
        %v7774 = vadd.f32 %v7733, %v7773
        %v7775 = vpop.f32.mrb[0].mxu0
        %v7776 = vpop.f32.mrb[0].mxu0
        %7777 = vdwg.mxu0
        %7778 = vmatprep.subr.bf16.mxu0 %v5242
        %7779 = vmatpush1.bf16.msra.mxu0 %v5241
        %7780 = vmatprep.subr.bf16.mxu0 %v5258
        %7781 = vmatpush1.bf16.msra.mxu0 %v5257
        %7782 = vmatprep.subr.bf16.mxu0 %v5274
        %7783 = vmatpush1.bf16.msra.mxu0 %v5273
        %7784 = vmatprep.subr.bf16.mxu0 %v5290
        %7785 = vmatpush1.bf16.msra.mxu0 %v5289
        %7786 = vmatprep.subr.bf16.mxu0 %v5306
        %7787 = vmatpush1.bf16.msra.mxu0 %v5305
        %7788 = vmatprep.subr.bf16.mxu0 %v5322
        %7789 = vmatpush1.bf16.msra.mxu0 %v5321
        %7790 = vmatprep.subr.bf16.mxu0 %v5338
        %7791 = vmatpush1.bf16.msra.mxu0 %v5337
        %7792 = vmatprep.subr.bf16.mxu0 %v5354
        %7793 = vmatpush1.bf16.msra.mxu0 %v5353
        %7794 = vmatprep.subr.bf16.mxu0 %v5370
        %7795 = vmatpush1.bf16.msra.mxu0 %v5369
        %7796 = vmatprep.subr.bf16.mxu0 %v5386
        %7797 = vmatpush1.bf16.msra.mxu0 %v5385
        %7798 = vmatprep.subr.bf16.mxu0 %v5402
        %7799 = vmatpush1.bf16.msra.mxu0 %v5401
        %7800 = vmatprep.subr.bf16.mxu0 %v5418
        %7801 = vmatpush1.bf16.msra.mxu0 %v5417
        %7802 = vmatprep.subr.bf16.mxu0 %v5434
        %7803 = vmatpush1.bf16.msra.mxu0 %v5433
        %7804 = vmatprep.subr.bf16.mxu0 %v5450
        %7805 = vmatpush1.bf16.msra.mxu0 %v5449
        %7806 = vmatprep.subr.bf16.mxu0 %v5466
        %7807 = vmatpush1.bf16.msra.mxu0 %v5465
        %7808 = vmatprep.subr.bf16.mxu0 %v5482
        %7809 = vmatpush1.bf16.msra.mxu0 %v5481
        %7810 = vmatprep.mubr.bf16.mxu0 %v1378
        %7811 = vmatmul.mubr.bf16.gmra.mrb[0].mxu0 %v1377
        %v7812 = vpop.f32.mrb[0].mxu0
        %v7813 = vadd.f32 %v7772, %v7812
        %v7814 = vpop.f32.mrb[0].mxu0
        %v7815 = vadd.f32 %v7774, %v7814
        %v7816 = vpop.f32.mrb[0].mxu0
        %v7817 = vpop.f32.mrb[0].mxu0
        %7818 = vdwg.mxu0
        %7819 = vst [vmem:[%s321] sm:$0xff] %v6665
        %7820 = vst [vmem:[%s321 + $0x8] sm:$0xff] %v6667
        %7821 = vst [vmem:[%s321 + $0x10] sm:$0xff] %v6829
        %7822 = vst [vmem:[%s321 + $0x18] sm:$0xff] %v6831
        %7823 = vst [vmem:[%s321 + $0x20] sm:$0xff] %v6993
        %7824 = vst [vmem:[%s321 + $0x28] sm:$0xff] %v6995
        %7825 = vst [vmem:[%s321 + $0x30] sm:$0xff] %v7157
        %7826 = vst [vmem:[%s321 + $0x38] sm:$0xff] %v7159
        %7827 = vst [vmem:[%s321 + $0x40] sm:$0xff] %v7321
        %7828 = vst [vmem:[%s321 + $0x48] sm:$0xff] %v7323
        %7829 = vst [vmem:[%s321 + $0x50] sm:$0xff] %v7485
        %7830 = vst [vmem:[%s321 + $0x58] sm:$0xff] %v7487
        %7831 = vst [vmem:[%s321 + $0x60] sm:$0xff] %v7649
        %7832 = vst [vmem:[%s321 + $0x68] sm:$0xff] %v7651
        %7833 = vst [vmem:[%s321 + $0x70] sm:$0xff] %v7813
        %7834 = vst [vmem:[%s321 + $0x78] sm:$0xff] %v7815
        %s7835 = smul.u32 %s27, 8
        %s7836 = sshra.s32 %s7835, 3
        %s7837 = sand.u32 %s7835, 7
        %s7838 = smul.u32 %s7836, 16
        %s7839 = smul.addr %s7838, 8
        %s7840 = scalar_lea.vmem [#allocation2], %s7839
        %7841 = vst [vmem:[%s7840] sm:$0xff] %v6665
        %7842 = vst [vmem:[%s7840 + $0x8] sm:$0xff] %v6667
        %7843 = vst [vmem:[%s7840 + $0x10] sm:$0xff] %v6829
        %7844 = vst [vmem:[%s7840 + $0x18] sm:$0xff] %v6831
        %7845 = vst [vmem:[%s7840 + $0x20] sm:$0xff] %v6993
        %7846 = vst [vmem:[%s7840 + $0x28] sm:$0xff] %v6995
        %7847 = vst [vmem:[%s7840 + $0x30] sm:$0xff] %v7157
        %7848 = vst [vmem:[%s7840 + $0x38] sm:$0xff] %v7159
        %7849 = vst [vmem:[%s7840 + $0x40] sm:$0xff] %v7321
        %7850 = vst [vmem:[%s7840 + $0x48] sm:$0xff] %v7323
        %7851 = vst [vmem:[%s7840 + $0x50] sm:$0xff] %v7485
        %7852 = vst [vmem:[%s7840 + $0x58] sm:$0xff] %v7487
        %7853 = vst [vmem:[%s7840 + $0x60] sm:$0xff] %v7649
        %7854 = vst [vmem:[%s7840 + $0x68] sm:$0xff] %v7651
        %7855 = vst [vmem:[%s7840 + $0x70] sm:$0xff] %v7813
        %7856 = vst [vmem:[%s7840 + $0x78] sm:$0xff] %v7815
        %v7857 = vld [vmem:[#allocation3] sm:$0xff]
        %v7858 = vld [vmem:[#allocation3 + $0x8] sm:$0xff]
        %v7859 = vrot.slane %v6665, 4
        %v7860 = vadd.f32 %v6665, %v7859
        %v7861 = vrot.slane %v7860, 2
        %v7862 = vadd.f32 %v7860, %v7861
        %v7863 = vrot.slane %v7862, 1
        %v7864 = vadd.f32 %v7862, %v7863
        %v7865 = vrot.slane %v6667, 4
        %v7866 = vadd.f32 %v6667, %v7865
        %v7867 = vrot.slane %v7866, 2
        %v7868 = vadd.f32 %v7866, %v7867
        %v7869 = vrot.slane %v7868, 1
        %v7870 = vadd.f32 %v7868, %v7869
        %v7871 = vrot.slane %v6829, 4
        %v7872 = vadd.f32 %v6829, %v7871
        %v7873 = vrot.slane %v7872, 2
        %v7874 = vadd.f32 %v7872, %v7873
        %v7875 = vrot.slane %v7874, 1
        %v7876 = vadd.f32 %v7874, %v7875
        %v7877 = vrot.slane %v6831, 4
        %v7878 = vadd.f32 %v6831, %v7877
        %v7879 = vrot.slane %v7878, 2
        %v7880 = vadd.f32 %v7878, %v7879
        %v7881 = vrot.slane %v7880, 1
        %v7882 = vadd.f32 %v7880, %v7881
        %v7883 = vrot.slane %v6993, 4
        %v7884 = vadd.f32 %v6993, %v7883
        %v7885 = vrot.slane %v7884, 2
        %v7886 = vadd.f32 %v7884, %v7885
        %v7887 = vrot.slane %v7886, 1
        %v7888 = vadd.f32 %v7886, %v7887
        %v7889 = vrot.slane %v6995, 4
        %v7890 = vadd.f32 %v6995, %v7889
        %v7891 = vrot.slane %v7890, 2
        %v7892 = vadd.f32 %v7890, %v7891
        %v7893 = vrot.slane %v7892, 1
        %v7894 = vadd.f32 %v7892, %v7893
        %v7895 = vrot.slane %v7157, 4
        %v7896 = vadd.f32 %v7157, %v7895
        %v7897 = vrot.slane %v7896, 2
        %v7898 = vadd.f32 %v7896, %v7897
        %v7899 = vrot.slane %v7898, 1
        %v7900 = vadd.f32 %v7898, %v7899
        %v7901 = vrot.slane %v7159, 4
        %v7902 = vadd.f32 %v7159, %v7901
        %v7903 = vrot.slane %v7902, 2
        %v7904 = vadd.f32 %v7902, %v7903
        %v7905 = vrot.slane %v7904, 1
        %v7906 = vadd.f32 %v7904, %v7905
        %v7907 = vrot.slane %v7321, 4
        %v7908 = vadd.f32 %v7321, %v7907
        %v7909 = vrot.slane %v7908, 2
        %v7910 = vadd.f32 %v7908, %v7909
        %v7911 = vrot.slane %v7910, 1
        %v7912 = vadd.f32 %v7910, %v7911
        %v7913 = vrot.slane %v7323, 4
        %v7914 = vadd.f32 %v7323, %v7913
        %v7915 = vrot.slane %v7914, 2
        %v7916 = vadd.f32 %v7914, %v7915
        %v7917 = vrot.slane %v7916, 1
        %v7918 = vadd.f32 %v7916, %v7917
        %v7919 = vrot.slane %v7485, 4
        %v7920 = vadd.f32 %v7485, %v7919
        %v7921 = vrot.slane %v7920, 2
        %v7922 = vadd.f32 %v7920, %v7921
        %v7923 = vrot.slane %v7922, 1
        %v7924 = vadd.f32 %v7922, %v7923
        %v7925 = vrot.slane %v7487, 4
        %v7926 = vadd.f32 %v7487, %v7925
        %v7927 = vrot.slane %v7926, 2
        %v7928 = vadd.f32 %v7926, %v7927
        %v7929 = vrot.slane %v7928, 1
        %v7930 = vadd.f32 %v7928, %v7929
        %v7931 = vrot.slane %v7649, 4
        %v7932 = vadd.f32 %v7649, %v7931
        %v7933 = vrot.slane %v7932, 2
        %v7934 = vadd.f32 %v7932, %v7933
        %v7935 = vrot.slane %v7934, 1
        %v7936 = vadd.f32 %v7934, %v7935
        %v7937 = vrot.slane %v7651, 4
        %v7938 = vadd.f32 %v7651, %v7937
        %v7939 = vrot.slane %v7938, 2
        %v7940 = vadd.f32 %v7938, %v7939
        %v7941 = vrot.slane %v7940, 1
        %v7942 = vadd.f32 %v7940, %v7941
        %v7943 = vrot.slane %v7813, 4
        %v7944 = vadd.f32 %v7813, %v7943
        %v7945 = vrot.slane %v7944, 2
        %v7946 = vadd.f32 %v7944, %v7945
        %v7947 = vrot.slane %v7946, 1
        %v7948 = vadd.f32 %v7946, %v7947
        %v7949 = vrot.slane %v7815, 4
        %v7950 = vadd.f32 %v7815, %v7949
        %v7951 = vrot.slane %v7950, 2
        %v7952 = vadd.f32 %v7950, %v7951
        %v7953 = vrot.slane %v7952, 1
        %v7954 = vadd.f32 %v7952, %v7953
        %v7971 = vcombine.low %v7864, %v7870
        %v7972 = vcombine.low %v7876, %v7882
        %v7973 = vcombine.low %v7888, %v7894
        %v7974 = vcombine.low %v7900, %v7906
        %v7976 = vunpack.c.l.s4 1966171168
        %v7977 = vunpack.c.0.s8 %v7976
        %v7978 = vlaneseq
        %v7979 = vshrl.u32 %v7978, 7
        %v7980 = vsub.s32 %v7977, %v7979
        %v7981 = vrot.slane %v7971, %v7980
        %v7983 = vunpack.c.l.s4 1966171168
        %v7984 = vunpack.c.0.s8 %v7983
        %v7985 = vlaneseq
        %v7986 = vshrl.u32 %v7985, 7
        %v7987 = vsub.s32 %v7984, %v7986
        %v7988 = vrot.slane %v7972, %v7987
        %v7990 = vunpack.c.l.s4 1966171168
        %v7991 = vunpack.c.0.s8 %v7990
        %v7992 = vlaneseq
        %v7993 = vshrl.u32 %v7992, 7
        %v7994 = vsub.s32 %v7991, %v7993
        %v7995 = vrot.slane %v7973, %v7994
        %v7997 = vunpack.c.l.s4 1966171168
        %v7998 = vunpack.c.0.s8 %v7997
        %v7999 = vlaneseq
        %v8000 = vshrl.u32 %v7999, 7
        %v8001 = vsub.s32 %v7998, %v8000
        %v8002 = vrot.slane %v7974, %v8001
        %v8003 = vcombine.low %v7981, %v7988
        %v8004 = vcombine.low %v7995, %v8002
        %v8006 = vunpack.c.l.s4 1966171168
        %v8007 = vunpack.c.0.s8 %v8006
        %v8008 = vlaneseq
        %v8009 = vshrl.u32 %v8008, 7
        %v8010 = vsub.s32 %v8007, %v8009
        %v8011 = vrot.slane %v8003, %v8010
        %v8013 = vunpack.c.l.s4 1966171168
        %v8014 = vunpack.c.0.s8 %v8013
        %v8015 = vlaneseq
        %v8016 = vshrl.u32 %v8015, 7
        %v8017 = vsub.s32 %v8014, %v8016
        %v8018 = vrot.slane %v8004, %v8017
        %v8019 = vcombine.low %v8011, %v8018
        %v8020 = vcombine.low %v7912, %v7918
        %v8021 = vcombine.low %v7924, %v7930
        %v8022 = vcombine.low %v7936, %v7942
        %v8023 = vcombine.low %v7948, %v7954
        %v8025 = vunpack.c.l.s4 1966171168
        %v8026 = vunpack.c.0.s8 %v8025
        %v8027 = vlaneseq
        %v8028 = vshrl.u32 %v8027, 7
        %v8029 = vsub.s32 %v8026, %v8028
        %v8030 = vrot.slane %v8020, %v8029
        %v8032 = vunpack.c.l.s4 1966171168
        %v8033 = vunpack.c.0.s8 %v8032
        %v8034 = vlaneseq
        %v8035 = vshrl.u32 %v8034, 7
        %v8036 = vsub.s32 %v8033, %v8035
        %v8037 = vrot.slane %v8021, %v8036
        %v8039 = vunpack.c.l.s4 1966171168
        %v8040 = vunpack.c.0.s8 %v8039
        %v8041 = vlaneseq
        %v8042 = vshrl.u32 %v8041, 7
        %v8043 = vsub.s32 %v8040, %v8042
        %v8044 = vrot.slane %v8022, %v8043
        %v8046 = vunpack.c.l.s4 1966171168
        %v8047 = vunpack.c.0.s8 %v8046
        %v8048 = vlaneseq
        %v8049 = vshrl.u32 %v8048, 7
        %v8050 = vsub.s32 %v8047, %v8049
        %v8051 = vrot.slane %v8023, %v8050
        %v8052 = vcombine.low %v8030, %v8037
        %v8053 = vcombine.low %v8044, %v8051
        %v8055 = vunpack.c.l.s4 1966171168
        %v8056 = vunpack.c.0.s8 %v8055
        %v8057 = vlaneseq
        %v8058 = vshrl.u32 %v8057, 7
        %v8059 = vsub.s32 %v8056, %v8058
        %v8060 = vrot.slane %v8052, %v8059
        %v8062 = vunpack.c.l.s4 1966171168
        %v8063 = vunpack.c.0.s8 %v8062
        %v8064 = vlaneseq
        %v8065 = vshrl.u32 %v8064, 7
        %v8066 = vsub.s32 %v8063, %v8065
        %v8067 = vrot.slane %v8053, %v8066
        %v8068 = vcombine.low %v8060, %v8067
        %v8071 = vadd.f32 %v7857, %v8019
        %v8072 = vadd.f32 %v7858, %v8068
        %8073 = vst [vmem:[#allocation3] sm:$0xff] %v8071
        %8074 = vst [vmem:[#allocation3 + $0x8] sm:$0xff] %v8072
        %v8075 = vld [vmem:[#allocation4] sm:$0xff]
        %v8076 = vld [vmem:[#allocation4 + $0x8] sm:$0xff]
        %v8077 = vmul.f32 %v6665, %v6665
        %v8078 = vmul.f32 %v6667, %v6667
        %v8079 = vmul.f32 %v6829, %v6829
        %v8080 = vmul.f32 %v6831, %v6831
        %v8081 = vmul.f32 %v6993, %v6993
        %v8082 = vmul.f32 %v6995, %v6995
        %v8083 = vmul.f32 %v7157, %v7157
        %v8084 = vmul.f32 %v7159, %v7159
        %v8085 = vmul.f32 %v7321, %v7321
        %v8086 = vmul.f32 %v7323, %v7323
        %v8087 = vmul.f32 %v7485, %v7485
        %v8088 = vmul.f32 %v7487, %v7487
        %v8089 = vmul.f32 %v7649, %v7649
        %v8090 = vmul.f32 %v7651, %v7651
        %v8091 = vmul.f32 %v7813, %v7813
        %v8092 = vmul.f32 %v7815, %v7815
        %v8093 = vrot.slane %v8077, 4
        %v8094 = vadd.f32 %v8077, %v8093
        %v8095 = vrot.slane %v8094, 2
        %v8096 = vadd.f32 %v8094, %v8095
        %v8097 = vrot.slane %v8096, 1
        %v8098 = vadd.f32 %v8096, %v8097
        %v8099 = vrot.slane %v8078, 4
        %v8100 = vadd.f32 %v8078, %v8099
        %v8101 = vrot.slane %v8100, 2
        %v8102 = vadd.f32 %v8100, %v8101
        %v8103 = vrot.slane %v8102, 1
        %v8104 = vadd.f32 %v8102, %v8103
        %v8105 = vrot.slane %v8079, 4
        %v8106 = vadd.f32 %v8079, %v8105
        %v8107 = vrot.slane %v8106, 2
        %v8108 = vadd.f32 %v8106, %v8107
        %v8109 = vrot.slane %v8108, 1
        %v8110 = vadd.f32 %v8108, %v8109
        %v8111 = vrot.slane %v8080, 4
        %v8112 = vadd.f32 %v8080, %v8111
        %v8113 = vrot.slane %v8112, 2
        %v8114 = vadd.f32 %v8112, %v8113
        %v8115 = vrot.slane %v8114, 1
        %v8116 = vadd.f32 %v8114, %v8115
        %v8117 = vrot.slane %v8081, 4
        %v8118 = vadd.f32 %v8081, %v8117
        %v8119 = vrot.slane %v8118, 2
        %v8120 = vadd.f32 %v8118, %v8119
        %v8121 = vrot.slane %v8120, 1
        %v8122 = vadd.f32 %v8120, %v8121
        %v8123 = vrot.slane %v8082, 4
        %v8124 = vadd.f32 %v8082, %v8123
        %v8125 = vrot.slane %v8124, 2
        %v8126 = vadd.f32 %v8124, %v8125
        %v8127 = vrot.slane %v8126, 1
        %v8128 = vadd.f32 %v8126, %v8127
        %v8129 = vrot.slane %v8083, 4
        %v8130 = vadd.f32 %v8083, %v8129
        %v8131 = vrot.slane %v8130, 2
        %v8132 = vadd.f32 %v8130, %v8131
        %v8133 = vrot.slane %v8132, 1
        %v8134 = vadd.f32 %v8132, %v8133
        %v8135 = vrot.slane %v8084, 4
        %v8136 = vadd.f32 %v8084, %v8135
        %v8137 = vrot.slane %v8136, 2
        %v8138 = vadd.f32 %v8136, %v8137
        %v8139 = vrot.slane %v8138, 1
        %v8140 = vadd.f32 %v8138, %v8139
        %v8141 = vrot.slane %v8085, 4
        %v8142 = vadd.f32 %v8085, %v8141
        %v8143 = vrot.slane %v8142, 2
        %v8144 = vadd.f32 %v8142, %v8143
        %v8145 = vrot.slane %v8144, 1
        %v8146 = vadd.f32 %v8144, %v8145
        %v8147 = vrot.slane %v8086, 4
        %v8148 = vadd.f32 %v8086, %v8147
        %v8149 = vrot.slane %v8148, 2
        %v8150 = vadd.f32 %v8148, %v8149
        %v8151 = vrot.slane %v8150, 1
        %v8152 = vadd.f32 %v8150, %v8151
        %v8153 = vrot.slane %v8087, 4
        %v8154 = vadd.f32 %v8087, %v8153
        %v8155 = vrot.slane %v8154, 2
        %v8156 = vadd.f32 %v8154, %v8155
        %v8157 = vrot.slane %v8156, 1
        %v8158 = vadd.f32 %v8156, %v8157
        %v8159 = vrot.slane %v8088, 4
        %v8160 = vadd.f32 %v8088, %v8159
        %v8161 = vrot.slane %v8160, 2
        %v8162 = vadd.f32 %v8160, %v8161
        %v8163 = vrot.slane %v8162, 1
        %v8164 = vadd.f32 %v8162, %v8163
        %v8165 = vrot.slane %v8089, 4
        %v8166 = vadd.f32 %v8089, %v8165
        %v8167 = vrot.slane %v8166, 2
        %v8168 = vadd.f32 %v8166, %v8167
        %v8169 = vrot.slane %v8168, 1
        %v8170 = vadd.f32 %v8168, %v8169
        %v8171 = vrot.slane %v8090, 4
        %v8172 = vadd.f32 %v8090, %v8171
        %v8173 = vrot.slane %v8172, 2
        %v8174 = vadd.f32 %v8172, %v8173
        %v8175 = vrot.slane %v8174, 1
        %v8176 = vadd.f32 %v8174, %v8175
        %v8177 = vrot.slane %v8091, 4
        %v8178 = vadd.f32 %v8091, %v8177
        %v8179 = vrot.slane %v8178, 2
        %v8180 = vadd.f32 %v8178, %v8179
        %v8181 = vrot.slane %v8180, 1
        %v8182 = vadd.f32 %v8180, %v8181
        %v8183 = vrot.slane %v8092, 4
        %v8184 = vadd.f32 %v8092, %v8183
        %v8185 = vrot.slane %v8184, 2
        %v8186 = vadd.f32 %v8184, %v8185
        %v8187 = vrot.slane %v8186, 1
        %v8188 = vadd.f32 %v8186, %v8187
        %v8205 = vcombine.low %v8098, %v8104
        %v8206 = vcombine.low %v8110, %v8116
        %v8207 = vcombine.low %v8122, %v8128
        %v8208 = vcombine.low %v8134, %v8140
        %v8210 = vunpack.c.l.s4 1966171168
        %v8211 = vunpack.c.0.s8 %v8210
        %v8212 = vlaneseq
        %v8213 = vshrl.u32 %v8212, 7
        %v8214 = vsub.s32 %v8211, %v8213
        %v8215 = vrot.slane %v8205, %v8214
        %v8217 = vunpack.c.l.s4 1966171168
        %v8218 = vunpack.c.0.s8 %v8217
        %v8219 = vlaneseq
        %v8220 = vshrl.u32 %v8219, 7
        %v8221 = vsub.s32 %v8218, %v8220
        %v8222 = vrot.slane %v8206, %v8221
        %v8224 = vunpack.c.l.s4 1966171168
        %v8225 = vunpack.c.0.s8 %v8224
        %v8226 = vlaneseq
        %v8227 = vshrl.u32 %v8226, 7
        %v8228 = vsub.s32 %v8225, %v8227
        %v8229 = vrot.slane %v8207, %v8228
        %v8231 = vunpack.c.l.s4 1966171168
        %v8232 = vunpack.c.0.s8 %v8231
        %v8233 = vlaneseq
        %v8234 = vshrl.u32 %v8233, 7
        %v8235 = vsub.s32 %v8232, %v8234
        %v8236 = vrot.slane %v8208, %v8235
        %v8237 = vcombine.low %v8215, %v8222
        %v8238 = vcombine.low %v8229, %v8236
        %v8240 = vunpack.c.l.s4 1966171168
        %v8241 = vunpack.c.0.s8 %v8240
        %v8242 = vlaneseq
        %v8243 = vshrl.u32 %v8242, 7
        %v8244 = vsub.s32 %v8241, %v8243
        %v8245 = vrot.slane %v8237, %v8244
        %v8247 = vunpack.c.l.s4 1966171168
        %v8248 = vunpack.c.0.s8 %v8247
        %v8249 = vlaneseq
        %v8250 = vshrl.u32 %v8249, 7
        %v8251 = vsub.s32 %v8248, %v8250
        %v8252 = vrot.slane %v8238, %v8251
        %v8253 = vcombine.low %v8245, %v8252
        %v8254 = vcombine.low %v8146, %v8152
        %v8255 = vcombine.low %v8158, %v8164
        %v8256 = vcombine.low %v8170, %v8176
        %v8257 = vcombine.low %v8182, %v8188
        %v8259 = vunpack.c.l.s4 1966171168
        %v8260 = vunpack.c.0.s8 %v8259
        %v8261 = vlaneseq
        %v8262 = vshrl.u32 %v8261, 7
        %v8263 = vsub.s32 %v8260, %v8262
        %v8264 = vrot.slane %v8254, %v8263
        %v8266 = vunpack.c.l.s4 1966171168
        %v8267 = vunpack.c.0.s8 %v8266
        %v8268 = vlaneseq
        %v8269 = vshrl.u32 %v8268, 7
        %v8270 = vsub.s32 %v8267, %v8269
        %v8271 = vrot.slane %v8255, %v8270
        %v8273 = vunpack.c.l.s4 1966171168
        %v8274 = vunpack.c.0.s8 %v8273
        %v8275 = vlaneseq
        %v8276 = vshrl.u32 %v8275, 7
        %v8277 = vsub.s32 %v8274, %v8276
        %v8278 = vrot.slane %v8256, %v8277
        %v8280 = vunpack.c.l.s4 1966171168
        %v8281 = vunpack.c.0.s8 %v8280
        %v8282 = vlaneseq
        %v8283 = vshrl.u32 %v8282, 7
        %v8284 = vsub.s32 %v8281, %v8283
        %v8285 = vrot.slane %v8257, %v8284
        %v8286 = vcombine.low %v8264, %v8271
        %v8287 = vcombine.low %v8278, %v8285
        %v8289 = vunpack.c.l.s4 1966171168
        %v8290 = vunpack.c.0.s8 %v8289
        %v8291 = vlaneseq
        %v8292 = vshrl.u32 %v8291, 7
        %v8293 = vsub.s32 %v8290, %v8292
        %v8294 = vrot.slane %v8286, %v8293
        %v8296 = vunpack.c.l.s4 1966171168
        %v8297 = vunpack.c.0.s8 %v8296
        %v8298 = vlaneseq
        %v8299 = vshrl.u32 %v8298, 7
        %v8300 = vsub.s32 %v8297, %v8299
        %v8301 = vrot.slane %v8287, %v8300
        %v8302 = vcombine.low %v8294, %v8301
        %v8305 = vadd.f32 %v8075, %v8253
        %v8306 = vadd.f32 %v8076, %v8302
        %8307 = vst [vmem:[#allocation4] sm:$0xff] %v8305
        %8308 = vst [vmem:[#allocation4 + $0x8] sm:$0xff] %v8306
        %p8309 = scmp.eq.s32.totalorder %s27, 1
        // Predicated region
        $region65: #{tpu_custom_call.1} parent=39 // pred_check
          %p8310 = pneg %p8309
        $region66: #{tpu_custom_call.1} parent=39 // pred_check_branch
          %8312 = sbr.rel (%p8310) target = $region68
        $region67: #{tpu_custom_call.1} parent=39 // pred_region
          %v8313 = vld [vmem:[#allocation3] sm:$0xff]
          %v8314 = vld [vmem:[#allocation3 + $0x8] sm:$0xff]
          %v8315 = vmul.f32 %v8313, 0.0625
          %v8316 = vmul.f32 %v8314, 0.0625
          %v8317 = vld [vmem:[#allocation4] sm:$0xff]
          %v8318 = vld [vmem:[#allocation4 + $0x8] sm:$0xff]
          %v8319 = vmul.f32 %v8317, 0.0625
          %v8320 = vmul.f32 %v8318, 0.0625
          %v8321 = vmul.f32 %v8315, %v8315
          %v8322 = vmul.f32 %v8316, %v8316
          %v8323 = vsub.f32 %v8319, %v8321
          %v8324 = vsub.f32 %v8320, %v8322
          %v8325 = vld [vmem:[#allocation11] sm:$0xff]
          %v8326 = vld [vmem:[#allocation11 + $0x8] sm:$0xff]
          %v8327 = vadd.f32 %v8323, 1e-05
          %v8328 = vadd.f32 %v8324, 1e-05
          %v8329 = vrsqrt.pop %v8327
          %v8330 = vrsqrt.pop %v8328
          %v8331 = vmul.f32 %v8325, %v8329
          %v8332 = vmul.f32 %v8326, %v8330
          %v8333 = vld [vmem:[#allocation13] sm:$0xff]
          %v8334 = vld [vmem:[#allocation13 + $0x8] sm:$0xff]
          %v8335 = vmul.f32 %v8315, %v8331
          %v8336 = vmul.f32 %v8316, %v8332
          %v8337 = vsub.f32 %v8333, %v8335
          %v8338 = vsub.f32 %v8334, %v8336
          %v8339 = vld [vmem:[#allocation2] sm:$0xff]
          %v8340 = vld [vmem:[#allocation2 + $0x8] sm:$0xff]
          %v8341 = vld [vmem:[#allocation2 + $0x10] sm:$0xff]
          %v8342 = vld [vmem:[#allocation2 + $0x18] sm:$0xff]
          %v8343 = vld [vmem:[#allocation2 + $0x20] sm:$0xff]
          %v8344 = vld [vmem:[#allocation2 + $0x28] sm:$0xff]
          %v8345 = vld [vmem:[#allocation2 + $0x30] sm:$0xff]
          %v8346 = vld [vmem:[#allocation2 + $0x38] sm:$0xff]
          %v8347 = vld [vmem:[#allocation2 + $0x40] sm:$0xff]
          %v8348 = vld [vmem:[#allocation2 + $0x48] sm:$0xff]
          %v8349 = vld [vmem:[#allocation2 + $0x50] sm:$0xff]
          %v8350 = vld [vmem:[#allocation2 + $0x58] sm:$0xff]
          %v8351 = vld [vmem:[#allocation2 + $0x60] sm:$0xff]
          %v8352 = vld [vmem:[#allocation2 + $0x68] sm:$0xff]
          %v8353 = vld [vmem:[#allocation2 + $0x70] sm:$0xff]
          %v8354 = vld [vmem:[#allocation2 + $0x78] sm:$0xff]
          %v8355 = vld [vmem:[#allocation2 + $0x80] sm:$0xff]
          %v8356 = vld [vmem:[#allocation2 + $0x88] sm:$0xff]
          %v8357 = vld [vmem:[#allocation2 + $0x90] sm:$0xff]
          %v8358 = vld [vmem:[#allocation2 + $0x98] sm:$0xff]
          %v8359 = vld [vmem:[#allocation2 + $0xa0] sm:$0xff]
          %v8360 = vld [vmem:[#allocation2 + $0xa8] sm:$0xff]
          %v8361 = vld [vmem:[#allocation2 + $0xb0] sm:$0xff]
          %v8362 = vld [vmem:[#allocation2 + $0xb8] sm:$0xff]
          %v8363 = vld [vmem:[#allocation2 + $0xc0] sm:$0xff]
          %v8364 = vld [vmem:[#allocation2 + $0xc8] sm:$0xff]
          %v8365 = vld [vmem:[#allocation2 + $0xd0] sm:$0xff]
          %v8366 = vld [vmem:[#allocation2 + $0xd8] sm:$0xff]
          %v8367 = vld [vmem:[#allocation2 + $0xe0] sm:$0xff]
          %v8368 = vld [vmem:[#allocation2 + $0xe8] sm:$0xff]
          %v8369 = vld [vmem:[#allocation2 + $0xf0] sm:$0xff]
          %v8370 = vld [vmem:[#allocation2 + $0xf8] sm:$0xff]
          %v8373 = vlaneseq
          %v8374 = vshrl.u32 %v8373, 7
          %v8375 = vsub.s32 0, %v8374
          %v8376 = vrot.slane %v8331, %v8375
          %v8377 = vlaneseq
          %v8378 = vshrl.u32 %v8377, 7
          %v8379 = vsub.s32 1, %v8378
          %v8380 = vrot.slane %v8331, %v8379
          %v8381 = vlaneseq
          %v8382 = vshrl.u32 %v8381, 7
          %v8383 = vsub.s32 2, %v8382
          %v8384 = vrot.slane %v8331, %v8383
          %v8385 = vlaneseq
          %v8386 = vshrl.u32 %v8385, 7
          %v8387 = vsub.s32 3, %v8386
          %v8388 = vrot.slane %v8331, %v8387
          %v8389 = vlaneseq
          %v8390 = vshrl.u32 %v8389, 7
          %v8391 = vsub.s32 4, %v8390
          %v8392 = vrot.slane %v8331, %v8391
          %v8393 = vlaneseq
          %v8394 = vshrl.u32 %v8393, 7
          %v8395 = vsub.s32 5, %v8394
          %v8396 = vrot.slane %v8331, %v8395
          %v8397 = vlaneseq
          %v8398 = vshrl.u32 %v8397, 7
          %v8399 = vsub.s32 6, %v8398
          %v8400 = vrot.slane %v8331, %v8399
          %v8401 = vlaneseq
          %v8402 = vshrl.u32 %v8401, 7
          %v8403 = vsub.s32 7, %v8402
          %v8404 = vrot.slane %v8331, %v8403
          %v8405 = vlaneseq
          %v8406 = vshrl.u32 %v8405, 7
          %v8407 = vsub.s32 0, %v8406
          %v8408 = vrot.slane %v8332, %v8407
          %v8409 = vlaneseq
          %v8410 = vshrl.u32 %v8409, 7
          %v8411 = vsub.s32 1, %v8410
          %v8412 = vrot.slane %v8332, %v8411
          %v8413 = vlaneseq
          %v8414 = vshrl.u32 %v8413, 7
          %v8415 = vsub.s32 2, %v8414
          %v8416 = vrot.slane %v8332, %v8415
          %v8417 = vlaneseq
          %v8418 = vshrl.u32 %v8417, 7
          %v8419 = vsub.s32 3, %v8418
          %v8420 = vrot.slane %v8332, %v8419
          %v8421 = vlaneseq
          %v8422 = vshrl.u32 %v8421, 7
          %v8423 = vsub.s32 4, %v8422
          %v8424 = vrot.slane %v8332, %v8423
          %v8425 = vlaneseq
          %v8426 = vshrl.u32 %v8425, 7
          %v8427 = vsub.s32 5, %v8426
          %v8428 = vrot.slane %v8332, %v8427
          %v8429 = vlaneseq
          %v8430 = vshrl.u32 %v8429, 7
          %v8431 = vsub.s32 6, %v8430
          %v8432 = vrot.slane %v8332, %v8431
          %v8433 = vlaneseq
          %v8434 = vshrl.u32 %v8433, 7
          %v8435 = vsub.s32 7, %v8434
          %v8436 = vrot.slane %v8332, %v8435
          %v8453 = vmul.f32 %v8339, %v8376
          %v8454 = vmul.f32 %v8340, %v8380
          %v8455 = vmul.f32 %v8341, %v8384
          %v8456 = vmul.f32 %v8342, %v8388
          %v8457 = vmul.f32 %v8343, %v8392
          %v8458 = vmul.f32 %v8344, %v8396
          %v8459 = vmul.f32 %v8345, %v8400
          %v8460 = vmul.f32 %v8346, %v8404
          %v8461 = vmul.f32 %v8347, %v8408
          %v8462 = vmul.f32 %v8348, %v8412
          %v8463 = vmul.f32 %v8349, %v8416
          %v8464 = vmul.f32 %v8350, %v8420
          %v8465 = vmul.f32 %v8351, %v8424
          %v8466 = vmul.f32 %v8352, %v8428
          %v8467 = vmul.f32 %v8353, %v8432
          %v8468 = vmul.f32 %v8354, %v8436
          %v8469 = vmul.f32 %v8355, %v8376
          %v8470 = vmul.f32 %v8356, %v8380
          %v8471 = vmul.f32 %v8357, %v8384
          %v8472 = vmul.f32 %v8358, %v8388
          %v8473 = vmul.f32 %v8359, %v8392
          %v8474 = vmul.f32 %v8360, %v8396
          %v8475 = vmul.f32 %v8361, %v8400
          %v8476 = vmul.f32 %v8362, %v8404
          %v8477 = vmul.f32 %v8363, %v8408
          %v8478 = vmul.f32 %v8364, %v8412
          %v8479 = vmul.f32 %v8365, %v8416
          %v8480 = vmul.f32 %v8366, %v8420
          %v8481 = vmul.f32 %v8367, %v8424
          %v8482 = vmul.f32 %v8368, %v8428
          %v8483 = vmul.f32 %v8369, %v8432
          %v8484 = vmul.f32 %v8370, %v8436
          %v8487 = vlaneseq
          %v8488 = vshrl.u32 %v8487, 7
          %v8489 = vsub.s32 0, %v8488
          %v8490 = vrot.slane %v8337, %v8489
          %v8491 = vlaneseq
          %v8492 = vshrl.u32 %v8491, 7
          %v8493 = vsub.s32 1, %v8492
          %v8494 = vrot.slane %v8337, %v8493
          %v8495 = vlaneseq
          %v8496 = vshrl.u32 %v8495, 7
          %v8497 = vsub.s32 2, %v8496
          %v8498 = vrot.slane %v8337, %v8497
          %v8499 = vlaneseq
          %v8500 = vshrl.u32 %v8499, 7
          %v8501 = vsub.s32 3, %v8500
          %v8502 = vrot.slane %v8337, %v8501
          %v8503 = vlaneseq
          %v8504 = vshrl.u32 %v8503, 7
          %v8505 = vsub.s32 4, %v8504
          %v8506 = vrot.slane %v8337, %v8505
          %v8507 = vlaneseq
          %v8508 = vshrl.u32 %v8507, 7
          %v8509 = vsub.s32 5, %v8508
          %v8510 = vrot.slane %v8337, %v8509
          %v8511 = vlaneseq
          %v8512 = vshrl.u32 %v8511, 7
          %v8513 = vsub.s32 6, %v8512
          %v8514 = vrot.slane %v8337, %v8513
          %v8515 = vlaneseq
          %v8516 = vshrl.u32 %v8515, 7
          %v8517 = vsub.s32 7, %v8516
          %v8518 = vrot.slane %v8337, %v8517
          %v8519 = vlaneseq
          %v8520 = vshrl.u32 %v8519, 7
          %v8521 = vsub.s32 0, %v8520
          %v8522 = vrot.slane %v8338, %v8521
          %v8523 = vlaneseq
          %v8524 = vshrl.u32 %v8523, 7
          %v8525 = vsub.s32 1, %v8524
          %v8526 = vrot.slane %v8338, %v8525
          %v8527 = vlaneseq
          %v8528 = vshrl.u32 %v8527, 7
          %v8529 = vsub.s32 2, %v8528
          %v8530 = vrot.slane %v8338, %v8529
          %v8531 = vlaneseq
          %v8532 = vshrl.u32 %v8531, 7
          %v8533 = vsub.s32 3, %v8532
          %v8534 = vrot.slane %v8338, %v8533
          %v8535 = vlaneseq
          %v8536 = vshrl.u32 %v8535, 7
          %v8537 = vsub.s32 4, %v8536
          %v8538 = vrot.slane %v8338, %v8537
          %v8539 = vlaneseq
          %v8540 = vshrl.u32 %v8539, 7
          %v8541 = vsub.s32 5, %v8540
          %v8542 = vrot.slane %v8338, %v8541
          %v8543 = vlaneseq
          %v8544 = vshrl.u32 %v8543, 7
          %v8545 = vsub.s32 6, %v8544
          %v8546 = vrot.slane %v8338, %v8545
          %v8547 = vlaneseq
          %v8548 = vshrl.u32 %v8547, 7
          %v8549 = vsub.s32 7, %v8548
          %v8550 = vrot.slane %v8338, %v8549
          %v8567 = vadd.f32 %v8453, %v8490
          %v8568 = vadd.f32 %v8454, %v8494
          %v8569 = vadd.f32 %v8455, %v8498
          %v8570 = vadd.f32 %v8456, %v8502
          %v8571 = vadd.f32 %v8457, %v8506
          %v8572 = vadd.f32 %v8458, %v8510
          %v8573 = vadd.f32 %v8459, %v8514
          %v8574 = vadd.f32 %v8460, %v8518
          %v8575 = vadd.f32 %v8461, %v8522
          %v8576 = vadd.f32 %v8462, %v8526
          %v8577 = vadd.f32 %v8463, %v8530
          %v8578 = vadd.f32 %v8464, %v8534
          %v8579 = vadd.f32 %v8465, %v8538
          %v8580 = vadd.f32 %v8466, %v8542
          %v8581 = vadd.f32 %v8467, %v8546
          %v8582 = vadd.f32 %v8468, %v8550
          %v8583 = vadd.f32 %v8469, %v8490
          %v8584 = vadd.f32 %v8470, %v8494
          %v8585 = vadd.f32 %v8471, %v8498
          %v8586 = vadd.f32 %v8472, %v8502
          %v8587 = vadd.f32 %v8473, %v8506
          %v8588 = vadd.f32 %v8474, %v8510
          %v8589 = vadd.f32 %v8475, %v8514
          %v8590 = vadd.f32 %v8476, %v8518
          %v8591 = vadd.f32 %v8477, %v8522
          %v8592 = vadd.f32 %v8478, %v8526
          %v8593 = vadd.f32 %v8479, %v8530
          %v8594 = vadd.f32 %v8480, %v8534
          %v8595 = vadd.f32 %v8481, %v8538
          %v8596 = vadd.f32 %v8482, %v8542
          %v8597 = vadd.f32 %v8483, %v8546
          %v8598 = vadd.f32 %v8484, %v8550
          %v8599 = vld [vmem:[#allocation10] sm:$0xff]
          %v8600 = vld [vmem:[#allocation10 + $0x8] sm:$0xff]
          %v8601 = vld [vmem:[#allocation10 + $0x10] sm:$0xff]
          %v8602 = vld [vmem:[#allocation10 + $0x18] sm:$0xff]
          %v8603 = vld [vmem:[#allocation10 + $0x20] sm:$0xff]
          %v8604 = vld [vmem:[#allocation10 + $0x28] sm:$0xff]
          %v8605 = vld [vmem:[#allocation10 + $0x30] sm:$0xff]
          %v8606 = vld [vmem:[#allocation10 + $0x38] sm:$0xff]
          %v8607 = vld [vmem:[#allocation10 + $0x40] sm:$0xff]
          %v8608 = vld [vmem:[#allocation10 + $0x48] sm:$0xff]
          %v8609 = vld [vmem:[#allocation10 + $0x50] sm:$0xff]
          %v8610 = vld [vmem:[#allocation10 + $0x58] sm:$0xff]
          %v8611 = vld [vmem:[#allocation10 + $0x60] sm:$0xff]
          %v8612 = vld [vmem:[#allocation10 + $0x68] sm:$0xff]
          %v8613 = vld [vmem:[#allocation10 + $0x70] sm:$0xff]
          %v8614 = vld [vmem:[#allocation10 + $0x78] sm:$0xff]
          %v8615 = vld [vmem:[#allocation10 + $0x80] sm:$0xff]
          %v8616 = vld [vmem:[#allocation10 + $0x88] sm:$0xff]
          %v8617 = vld [vmem:[#allocation10 + $0x90] sm:$0xff]
          %v8618 = vld [vmem:[#allocation10 + $0x98] sm:$0xff]
          %v8619 = vld [vmem:[#allocation10 + $0xa0] sm:$0xff]
          %v8620 = vld [vmem:[#allocation10 + $0xa8] sm:$0xff]
          %v8621 = vld [vmem:[#allocation10 + $0xb0] sm:$0xff]
          %v8622 = vld [vmem:[#allocation10 + $0xb8] sm:$0xff]
          %v8623 = vld [vmem:[#allocation10 + $0xc0] sm:$0xff]
          %v8624 = vld [vmem:[#allocation10 + $0xc8] sm:$0xff]
          %v8625 = vld [vmem:[#allocation10 + $0xd0] sm:$0xff]
          %v8626 = vld [vmem:[#allocation10 + $0xd8] sm:$0xff]
          %v8627 = vld [vmem:[#allocation10 + $0xe0] sm:$0xff]
          %v8628 = vld [vmem:[#allocation10 + $0xe8] sm:$0xff]
          %v8629 = vld [vmem:[#allocation10 + $0xf0] sm:$0xff]
          %v8630 = vld [vmem:[#allocation10 + $0xf8] sm:$0xff]
          %v8631 = vld [vmem:[#allocation10 + $0x100] sm:$0xff]
          %v8632 = vld [vmem:[#allocation10 + $0x108] sm:$0xff]
          %v8633 = vld [vmem:[#allocation10 + $0x110] sm:$0xff]
          %v8634 = vld [vmem:[#allocation10 + $0x118] sm:$0xff]
          %v8635 = vld [vmem:[#allocation10 + $0x120] sm:$0xff]
          %v8636 = vld [vmem:[#allocation10 + $0x128] sm:$0xff]
          %v8637 = vld [vmem:[#allocation10 + $0x130] sm:$0xff]
          %v8638 = vld [vmem:[#allocation10 + $0x138] sm:$0xff]
          %v8639 = vld [vmem:[#allocation10 + $0x140] sm:$0xff]
          %v8640 = vld [vmem:[#allocation10 + $0x148] sm:$0xff]
          %v8641 = vld [vmem:[#allocation10 + $0x150] sm:$0xff]
          %v8642 = vld [vmem:[#allocation10 + $0x158] sm:$0xff]
          %v8643 = vld [vmem:[#allocation10 + $0x160] sm:$0xff]
          %v8644 = vld [vmem:[#allocation10 + $0x168] sm:$0xff]
          %v8645 = vld [vmem:[#allocation10 + $0x170] sm:$0xff]
          %v8646 = vld [vmem:[#allocation10 + $0x178] sm:$0xff]
          %v8647 = vld [vmem:[#allocation10 + $0x180] sm:$0xff]
          %v8648 = vld [vmem:[#allocation10 + $0x188] sm:$0xff]
          %v8649 = vld [vmem:[#allocation10 + $0x190] sm:$0xff]
          %v8650 = vld [vmem:[#allocation10 + $0x198] sm:$0xff]
          %v8651 = vld [vmem:[#allocation10 + $0x1a0] sm:$0xff]
          %v8652 = vld [vmem:[#allocation10 + $0x1a8] sm:$0xff]
          %v8653 = vld [vmem:[#allocation10 + $0x1b0] sm:$0xff]
          %v8654 = vld [vmem:[#allocation10 + $0x1b8] sm:$0xff]
          %v8655 = vld [vmem:[#allocation10 + $0x1c0] sm:$0xff]
          %v8656 = vld [vmem:[#allocation10 + $0x1c8] sm:$0xff]
          %v8657 = vld [vmem:[#allocation10 + $0x1d0] sm:$0xff]
          %v8658 = vld [vmem:[#allocation10 + $0x1d8] sm:$0xff]
          %v8659 = vld [vmem:[#allocation10 + $0x1e0] sm:$0xff]
          %v8660 = vld [vmem:[#allocation10 + $0x1e8] sm:$0xff]
          %v8661 = vld [vmem:[#allocation10 + $0x1f0] sm:$0xff]
          %v8662 = vld [vmem:[#allocation10 + $0x1f8] sm:$0xff]
          %v8663 = vld [vmem:[#allocation10 + $0x200] sm:$0xff]
          %v8664 = vld [vmem:[#allocation10 + $0x208] sm:$0xff]
          %v8665 = vld [vmem:[#allocation10 + $0x210] sm:$0xff]
          %v8666 = vld [vmem:[#allocation10 + $0x218] sm:$0xff]
          %v8667 = vld [vmem:[#allocation10 + $0x220] sm:$0xff]
          %v8668 = vld [vmem:[#allocation10 + $0x228] sm:$0xff]
          %v8669 = vld [vmem:[#allocation10 + $0x230] sm:$0xff]
          %v8670 = vld [vmem:[#allocation10 + $0x238] sm:$0xff]
          %v8671 = vld [vmem:[#allocation10 + $0x240] sm:$0xff]
          %v8672 = vld [vmem:[#allocation10 + $0x248] sm:$0xff]
          %v8673 = vld [vmem:[#allocation10 + $0x250] sm:$0xff]
          %v8674 = vld [vmem:[#allocation10 + $0x258] sm:$0xff]
          %v8675 = vld [vmem:[#allocation10 + $0x260] sm:$0xff]
          %v8676 = vld [vmem:[#allocation10 + $0x268] sm:$0xff]
          %v8677 = vld [vmem:[#allocation10 + $0x270] sm:$0xff]
          %v8678 = vld [vmem:[#allocation10 + $0x278] sm:$0xff]
          %v8679 = vld [vmem:[#allocation10 + $0x280] sm:$0xff]
          %v8680 = vld [vmem:[#allocation10 + $0x288] sm:$0xff]
          %v8681 = vld [vmem:[#allocation10 + $0x290] sm:$0xff]
          %v8682 = vld [vmem:[#allocation10 + $0x298] sm:$0xff]
          %v8683 = vld [vmem:[#allocation10 + $0x2a0] sm:$0xff]
          %v8684 = vld [vmem:[#allocation10 + $0x2a8] sm:$0xff]
          %v8685 = vld [vmem:[#allocation10 + $0x2b0] sm:$0xff]
          %v8686 = vld [vmem:[#allocation10 + $0x2b8] sm:$0xff]
          %v8687 = vld [vmem:[#allocation10 + $0x2c0] sm:$0xff]
          %v8688 = vld [vmem:[#allocation10 + $0x2c8] sm:$0xff]
          %v8689 = vld [vmem:[#allocation10 + $0x2d0] sm:$0xff]
          %v8690 = vld [vmem:[#allocation10 + $0x2d8] sm:$0xff]
          %v8691 = vld [vmem:[#allocation10 + $0x2e0] sm:$0xff]
          %v8692 = vld [vmem:[#allocation10 + $0x2e8] sm:$0xff]
          %v8693 = vld [vmem:[#allocation10 + $0x2f0] sm:$0xff]
          %v8694 = vld [vmem:[#allocation10 + $0x2f8] sm:$0xff]
          %v8695 = vld [vmem:[#allocation10 + $0x300] sm:$0xff]
          %v8696 = vld [vmem:[#allocation10 + $0x308] sm:$0xff]
          %v8697 = vld [vmem:[#allocation10 + $0x310] sm:$0xff]
          %v8698 = vld [vmem:[#allocation10 + $0x318] sm:$0xff]
          %v8699 = vld [vmem:[#allocation10 + $0x320] sm:$0xff]
          %v8700 = vld [vmem:[#allocation10 + $0x328] sm:$0xff]
          %v8701 = vld [vmem:[#allocation10 + $0x330] sm:$0xff]
          %v8702 = vld [vmem:[#allocation10 + $0x338] sm:$0xff]
          %v8703 = vld [vmem:[#allocation10 + $0x340] sm:$0xff]
          %v8704 = vld [vmem:[#allocation10 + $0x348] sm:$0xff]
          %v8705 = vld [vmem:[#allocation10 + $0x350] sm:$0xff]
          %v8706 = vld [vmem:[#allocation10 + $0x358] sm:$0xff]
          %v8707 = vld [vmem:[#allocation10 + $0x360] sm:$0xff]
          %v8708 = vld [vmem:[#allocation10 + $0x368] sm:$0xff]
          %v8709 = vld [vmem:[#allocation10 + $0x370] sm:$0xff]
          %v8710 = vld [vmem:[#allocation10 + $0x378] sm:$0xff]
          %v8711 = vld [vmem:[#allocation10 + $0x380] sm:$0xff]
          %v8712 = vld [vmem:[#allocation10 + $0x388] sm:$0xff]
          %v8713 = vld [vmem:[#allocation10 + $0x390] sm:$0xff]
          %v8714 = vld [vmem:[#allocation10 + $0x398] sm:$0xff]
          %v8715 = vld [vmem:[#allocation10 + $0x3a0] sm:$0xff]
          %v8716 = vld [vmem:[#allocation10 + $0x3a8] sm:$0xff]
          %v8717 = vld [vmem:[#allocation10 + $0x3b0] sm:$0xff]
          %v8718 = vld [vmem:[#allocation10 + $0x3b8] sm:$0xff]
          %v8719 = vld [vmem:[#allocation10 + $0x3c0] sm:$0xff]
          %v8720 = vld [vmem:[#allocation10 + $0x3c8] sm:$0xff]
          %v8721 = vld [vmem:[#allocation10 + $0x3d0] sm:$0xff]
          %v8722 = vld [vmem:[#allocation10 + $0x3d8] sm:$0xff]
          %v8723 = vld [vmem:[#allocation10 + $0x3e0] sm:$0xff]
          %v8724 = vld [vmem:[#allocation10 + $0x3e8] sm:$0xff]
          %v8725 = vld [vmem:[#allocation10 + $0x3f0] sm:$0xff]
          %v8726 = vld [vmem:[#allocation10 + $0x3f8] sm:$0xff]
          %v8727 = vld [vmem:[#allocation10 + $0x400] sm:$0xff]
          %v8728 = vld [vmem:[#allocation10 + $0x408] sm:$0xff]
          %v8729 = vld [vmem:[#allocation10 + $0x410] sm:$0xff]
          %v8730 = vld [vmem:[#allocation10 + $0x418] sm:$0xff]
          %v8731 = vld [vmem:[#allocation10 + $0x420] sm:$0xff]
          %v8732 = vld [vmem:[#allocation10 + $0x428] sm:$0xff]
          %v8733 = vld [vmem:[#allocation10 + $0x430] sm:$0xff]
          %v8734 = vld [vmem:[#allocation10 + $0x438] sm:$0xff]
          %v8735 = vld [vmem:[#allocation10 + $0x440] sm:$0xff]
          %v8736 = vld [vmem:[#allocation10 + $0x448] sm:$0xff]
          %v8737 = vld [vmem:[#allocation10 + $0x450] sm:$0xff]
          %v8738 = vld [vmem:[#allocation10 + $0x458] sm:$0xff]
          %v8739 = vld [vmem:[#allocation10 + $0x460] sm:$0xff]
          %v8740 = vld [vmem:[#allocation10 + $0x468] sm:$0xff]
          %v8741 = vld [vmem:[#allocation10 + $0x470] sm:$0xff]
          %v8742 = vld [vmem:[#allocation10 + $0x478] sm:$0xff]
          %v8743 = vld [vmem:[#allocation10 + $0x480] sm:$0xff]
          %v8744 = vld [vmem:[#allocation10 + $0x488] sm:$0xff]
          %v8745 = vld [vmem:[#allocation10 + $0x490] sm:$0xff]
          %v8746 = vld [vmem:[#allocation10 + $0x498] sm:$0xff]
          %v8747 = vld [vmem:[#allocation10 + $0x4a0] sm:$0xff]
          %v8748 = vld [vmem:[#allocation10 + $0x4a8] sm:$0xff]
          %v8749 = vld [vmem:[#allocation10 + $0x4b0] sm:$0xff]
          %v8750 = vld [vmem:[#allocation10 + $0x4b8] sm:$0xff]
          %v8751 = vld [vmem:[#allocation10 + $0x4c0] sm:$0xff]
          %v8752 = vld [vmem:[#allocation10 + $0x4c8] sm:$0xff]
          %v8753 = vld [vmem:[#allocation10 + $0x4d0] sm:$0xff]
          %v8754 = vld [vmem:[#allocation10 + $0x4d8] sm:$0xff]
          %v8755 = vld [vmem:[#allocation10 + $0x4e0] sm:$0xff]
          %v8756 = vld [vmem:[#allocation10 + $0x4e8] sm:$0xff]
          %v8757 = vld [vmem:[#allocation10 + $0x4f0] sm:$0xff]
          %v8758 = vld [vmem:[#allocation10 + $0x4f8] sm:$0xff]
          %v8759 = vld [vmem:[#allocation10 + $0x500] sm:$0xff]
          %v8760 = vld [vmem:[#allocation10 + $0x508] sm:$0xff]
          %v8761 = vld [vmem:[#allocation10 + $0x510] sm:$0xff]
          %v8762 = vld [vmem:[#allocation10 + $0x518] sm:$0xff]
          %v8763 = vld [vmem:[#allocation10 + $0x520] sm:$0xff]
          %v8764 = vld [vmem:[#allocation10 + $0x528] sm:$0xff]
          %v8765 = vld [vmem:[#allocation10 + $0x530] sm:$0xff]
          %v8766 = vld [vmem:[#allocation10 + $0x538] sm:$0xff]
          %v8767 = vld [vmem:[#allocation10 + $0x540] sm:$0xff]
          %v8768 = vld [vmem:[#allocation10 + $0x548] sm:$0xff]
          %v8769 = vld [vmem:[#allocation10 + $0x550] sm:$0xff]
          %v8770 = vld [vmem:[#allocation10 + $0x558] sm:$0xff]
          %v8771 = vld [vmem:[#allocation10 + $0x560] sm:$0xff]
          %v8772 = vld [vmem:[#allocation10 + $0x568] sm:$0xff]
          %v8773 = vld [vmem:[#allocation10 + $0x570] sm:$0xff]
          %v8774 = vld [vmem:[#allocation10 + $0x578] sm:$0xff]
          %v8775 = vld [vmem:[#allocation10 + $0x580] sm:$0xff]
          %v8776 = vld [vmem:[#allocation10 + $0x588] sm:$0xff]
          %v8777 = vld [vmem:[#allocation10 + $0x590] sm:$0xff]
          %v8778 = vld [vmem:[#allocation10 + $0x598] sm:$0xff]
          %v8779 = vld [vmem:[#allocation10 + $0x5a0] sm:$0xff]
          %v8780 = vld [vmem:[#allocation10 + $0x5a8] sm:$0xff]
          %v8781 = vld [vmem:[#allocation10 + $0x5b0] sm:$0xff]
          %v8782 = vld [vmem:[#allocation10 + $0x5b8] sm:$0xff]
          %v8783 = vld [vmem:[#allocation10 + $0x5c0] sm:$0xff]
          %v8784 = vld [vmem:[#allocation10 + $0x5c8] sm:$0xff]
          %v8785 = vld [vmem:[#allocation10 + $0x5d0] sm:$0xff]
          %v8786 = vld [vmem:[#allocation10 + $0x5d8] sm:$0xff]
          %v8787 = vld [vmem:[#allocation10 + $0x5e0] sm:$0xff]
          %v8788 = vld [vmem:[#allocation10 + $0x5e8] sm:$0xff]
          %v8789 = vld [vmem:[#allocation10 + $0x5f0] sm:$0xff]
          %v8790 = vld [vmem:[#allocation10 + $0x5f8] sm:$0xff]
          %v8791 = vld [vmem:[#allocation10 + $0x600] sm:$0xff]
          %v8792 = vld [vmem:[#allocation10 + $0x608] sm:$0xff]
          %v8793 = vld [vmem:[#allocation10 + $0x610] sm:$0xff]
          %v8794 = vld [vmem:[#allocation10 + $0x618] sm:$0xff]
          %v8795 = vld [vmem:[#allocation10 + $0x620] sm:$0xff]
          %v8796 = vld [vmem:[#allocation10 + $0x628] sm:$0xff]
          %v8797 = vld [vmem:[#allocation10 + $0x630] sm:$0xff]
          %v8798 = vld [vmem:[#allocation10 + $0x638] sm:$0xff]
          %v8799 = vld [vmem:[#allocation10 + $0x640] sm:$0xff]
          %v8800 = vld [vmem:[#allocation10 + $0x648] sm:$0xff]
          %v8801 = vld [vmem:[#allocation10 + $0x650] sm:$0xff]
          %v8802 = vld [vmem:[#allocation10 + $0x658] sm:$0xff]
          %v8803 = vld [vmem:[#allocation10 + $0x660] sm:$0xff]
          %v8804 = vld [vmem:[#allocation10 + $0x668] sm:$0xff]
          %v8805 = vld [vmem:[#allocation10 + $0x670] sm:$0xff]
          %v8806 = vld [vmem:[#allocation10 + $0x678] sm:$0xff]
          %v8807 = vld [vmem:[#allocation10 + $0x680] sm:$0xff]
          %v8808 = vld [vmem:[#allocation10 + $0x688] sm:$0xff]
          %v8809 = vld [vmem:[#allocation10 + $0x690] sm:$0xff]
          %v8810 = vld [vmem:[#allocation10 + $0x698] sm:$0xff]
          %v8811 = vld [vmem:[#allocation10 + $0x6a0] sm:$0xff]
          %v8812 = vld [vmem:[#allocation10 + $0x6a8] sm:$0xff]
          %v8813 = vld [vmem:[#allocation10 + $0x6b0] sm:$0xff]
          %v8814 = vld [vmem:[#allocation10 + $0x6b8] sm:$0xff]
          %v8815 = vld [vmem:[#allocation10 + $0x6c0] sm:$0xff]
          %v8816 = vld [vmem:[#allocation10 + $0x6c8] sm:$0xff]
          %v8817 = vld [vmem:[#allocation10 + $0x6d0] sm:$0xff]
          %v8818 = vld [vmem:[#allocation10 + $0x6d8] sm:$0xff]
          %v8819 = vld [vmem:[#allocation10 + $0x6e0] sm:$0xff]
          %v8820 = vld [vmem:[#allocation10 + $0x6e8] sm:$0xff]
          %v8821 = vld [vmem:[#allocation10 + $0x6f0] sm:$0xff]
          %v8822 = vld [vmem:[#allocation10 + $0x6f8] sm:$0xff]
          %v8823 = vld [vmem:[#allocation10 + $0x700] sm:$0xff]
          %v8824 = vld [vmem:[#allocation10 + $0x708] sm:$0xff]
          %v8825 = vld [vmem:[#allocation10 + $0x710] sm:$0xff]
          %v8826 = vld [vmem:[#allocation10 + $0x718] sm:$0xff]
          %v8827 = vld [vmem:[#allocation10 + $0x720] sm:$0xff]
          %v8828 = vld [vmem:[#allocation10 + $0x728] sm:$0xff]
          %v8829 = vld [vmem:[#allocation10 + $0x730] sm:$0xff]
          %v8830 = vld [vmem:[#allocation10 + $0x738] sm:$0xff]
          %v8831 = vld [vmem:[#allocation10 + $0x740] sm:$0xff]
          %v8832 = vld [vmem:[#allocation10 + $0x748] sm:$0xff]
          %v8833 = vld [vmem:[#allocation10 + $0x750] sm:$0xff]
          %v8834 = vld [vmem:[#allocation10 + $0x758] sm:$0xff]
          %v8835 = vld [vmem:[#allocation10 + $0x760] sm:$0xff]
          %v8836 = vld [vmem:[#allocation10 + $0x768] sm:$0xff]
          %v8837 = vld [vmem:[#allocation10 + $0x770] sm:$0xff]
          %v8838 = vld [vmem:[#allocation10 + $0x778] sm:$0xff]
          %v8839 = vld [vmem:[#allocation10 + $0x780] sm:$0xff]
          %v8840 = vld [vmem:[#allocation10 + $0x788] sm:$0xff]
          %v8841 = vld [vmem:[#allocation10 + $0x790] sm:$0xff]
          %v8842 = vld [vmem:[#allocation10 + $0x798] sm:$0xff]
          %v8843 = vld [vmem:[#allocation10 + $0x7a0] sm:$0xff]
          %v8844 = vld [vmem:[#allocation10 + $0x7a8] sm:$0xff]
          %v8845 = vld [vmem:[#allocation10 + $0x7b0] sm:$0xff]
          %v8846 = vld [vmem:[#allocation10 + $0x7b8] sm:$0xff]
          %v8847 = vld [vmem:[#allocation10 + $0x7c0] sm:$0xff]
          %v8848 = vld [vmem:[#allocation10 + $0x7c8] sm:$0xff]
          %v8849 = vld [vmem:[#allocation10 + $0x7d0] sm:$0xff]
          %v8850 = vld [vmem:[#allocation10 + $0x7d8] sm:$0xff]
          %v8851 = vld [vmem:[#allocation10 + $0x7e0] sm:$0xff]
          %v8852 = vld [vmem:[#allocation10 + $0x7e8] sm:$0xff]
          %v8853 = vld [vmem:[#allocation10 + $0x7f0] sm:$0xff]
          %v8854 = vld [vmem:[#allocation10 + $0x7f8] sm:$0xff]
          %8855 = vmatprep.subr.mxu0 %v8600
          %8856 = vmatpush1.xpose.msra.mxu0 %v8599
          %8857 = vmatprep.subr.mxu0 %v8616
          %8858 = vmatpush1.xpose.msra.mxu0 %v8615
          %8859 = vmatprep.subr.mxu0 %v8632
          %8860 = vmatpush1.xpose.msra.mxu0 %v8631
          %8861 = vmatprep.subr.mxu0 %v8648
          %8862 = vmatpush1.xpose.msra.mxu0 %v8647
          %8863 = vmatprep.subr.mxu0 %v8664
          %8864 = vmatpush1.xpose.msra.mxu0 %v8663
          %8865 = vmatprep.subr.mxu0 %v8680
          %8866 = vmatpush1.xpose.msra.mxu0 %v8679
          %8867 = vmatprep.subr.mxu0 %v8696
          %8868 = vmatpush1.xpose.msra.mxu0 %v8695
          %8869 = vmatprep.subr.mxu0 %v8712
          %8870 = vmatpush1.xpose.msra.mxu0 %v8711
          %8871 = vmatprep.subr.mxu0 %v8728
          %8872 = vmatpush1.xpose.msra.mxu0 %v8727
          %8873 = vmatprep.subr.mxu0 %v8744
          %8874 = vmatpush1.xpose.msra.mxu0 %v8743
          %8875 = vmatprep.subr.mxu0 %v8760
          %8876 = vmatpush1.xpose.msra.mxu0 %v8759
          %8877 = vmatprep.subr.mxu0 %v8776
          %8878 = vmatpush1.xpose.msra.mxu0 %v8775
          %8879 = vmatprep.subr.mxu0 %v8792
          %8880 = vmatpush1.xpose.msra.mxu0 %v8791
          %8881 = vmatprep.subr.mxu0 %v8808
          %8882 = vmatpush1.xpose.msra.mxu0 %v8807
          %8883 = vmatprep.subr.mxu0 %v8824
          %8884 = vmatpush1.xpose.msra.mxu0 %v8823
          %8885 = vmatprep.subr.mxu0 %v8840
          %8886 = vmatpush1.xpose.msra.mxu0 %v8839
          %8887 = vmatprep.subr.mxu0 0.0
          %8888 = vmatpush1.xpose.msra.mxu0 0.0
          %8889 = vmatprep.subr.mxu0 0.0
          %8890 = vmatpush1.xpose.msra.mxu0 0.0
          %8891 = vmatprep.subr.mxu0 0.0
          %8892 = vmatpush1.xpose.msra.mxu0 0.0
          %8893 = vmatprep.subr.mxu0 0.0
          %8894 = vmatpush1.xpose.msra.mxu0 0.0
          %8895 = vmatprep.subr.mxu0 0.0
          %8896 = vmatpush1.xpose.msra.mxu0 0.0
          %8897 = vmatprep.subr.mxu0 0.0
          %8898 = vmatpush1.xpose.msra.mxu0 0.0
          %8899 = vmatprep.subr.mxu0 0.0
          %8900 = vmatpush1.xpose.msra.mxu0 0.0
          %8901 = vmatprep.subr.mxu0 0.0
          %8902 = vmatpush1.xpose.msra.mxu0 0.0
          %8903 = vmatprep.subr.mxu0 0.0
          %8904 = vmatpush1.xpose.msra.mxu0 0.0
          %8905 = vmatprep.subr.mxu0 0.0
          %8906 = vmatpush1.xpose.msra.mxu0 0.0
          %8907 = vmatprep.subr.mxu0 0.0
          %8908 = vmatpush1.xpose.msra.mxu0 0.0
          %8909 = vmatprep.subr.mxu0 0.0
          %8910 = vmatpush1.xpose.msra.mxu0 0.0
          %8911 = vmatprep.subr.mxu0 0.0
          %8912 = vmatpush1.xpose.msra.mxu0 0.0
          %8913 = vmatprep.subr.mxu0 0.0
          %8914 = vmatpush1.xpose.msra.mxu0 0.0
          %8915 = vmatprep.subr.mxu0 0.0
          %8916 = vmatpush1.xpose.msra.mxu0 0.0
          %8917 = vmatprep.subr.mxu0 0.0
          %8918 = vmatpush1.xpose.msra.mxu0 0.0
          %8919 = vmatprep.mubr.f32.mxu0 %v8568
          %8920 = vmatmul.mubr.f32.gmra.mrb[0].mxu0 %v8567
          %v8921 = vpop.f32.mrb[0].mxu0
          %v8922 = vadd.f32 0.0, %v8921
          %v8923 = vpop.f32.mrb[0].mxu0
          %8924 = vmatprep.mubr.f32.mxu0 %v8584
          %8925 = vmatmul.mubr.f32.gmra.mrb[0].mxu0 %v8583
          %v8926 = vpop.f32.mrb[0].mxu0
          %v8927 = vadd.f32 0.0, %v8926
          %v8928 = vpop.f32.mrb[0].mxu0
          %8929 = vdwg.mxu0
          %8930 = vmatprep.subr.mxu0 %v8602
          %8931 = vmatpush1.xpose.msra.mxu0 %v8601
          %8932 = vmatprep.subr.mxu0 %v8618
          %8933 = vmatpush1.xpose.msra.mxu0 %v8617
          %8934 = vmatprep.subr.mxu0 %v8634
          %8935 = vmatpush1.xpose.msra.mxu0 %v8633
          %8936 = vmatprep.subr.mxu0 %v8650
          %8937 = vmatpush1.xpose.msra.mxu0 %v8649
          %8938 = vmatprep.subr.mxu0 %v8666
          %8939 = vmatpush1.xpose.msra.mxu0 %v8665
          %8940 = vmatprep.subr.mxu0 %v8682
          %8941 = vmatpush1.xpose.msra.mxu0 %v8681
          %8942 = vmatprep.subr.mxu0 %v8698
          %8943 = vmatpush1.xpose.msra.mxu0 %v8697
          %8944 = vmatprep.subr.mxu0 %v8714
          %8945 = vmatpush1.xpose.msra.mxu0 %v8713
          %8946 = vmatprep.subr.mxu0 %v8730
          %8947 = vmatpush1.xpose.msra.mxu0 %v8729
          %8948 = vmatprep.subr.mxu0 %v8746
          %8949 = vmatpush1.xpose.msra.mxu0 %v8745
          %8950 = vmatprep.subr.mxu0 %v8762
          %8951 = vmatpush1.xpose.msra.mxu0 %v8761
          %8952 = vmatprep.subr.mxu0 %v8778
          %8953 = vmatpush1.xpose.msra.mxu0 %v8777
          %8954 = vmatprep.subr.mxu0 %v8794
          %8955 = vmatpush1.xpose.msra.mxu0 %v8793
          %8956 = vmatprep.subr.mxu0 %v8810
          %8957 = vmatpush1.xpose.msra.mxu0 %v8809
          %8958 = vmatprep.subr.mxu0 %v8826
          %8959 = vmatpush1.xpose.msra.mxu0 %v8825
          %8960 = vmatprep.subr.mxu0 %v8842
          %8961 = vmatpush1.xpose.msra.mxu0 %v8841
          %8962 = vmatprep.subr.mxu0 0.0
          %8963 = vmatpush1.xpose.msra.mxu0 0.0
          %8964 = vmatprep.subr.mxu0 0.0
          %8965 = vmatpush1.xpose.msra.mxu0 0.0
          %8966 = vmatprep.subr.mxu0 0.0
          %8967 = vmatpush1.xpose.msra.mxu0 0.0
          %8968 = vmatprep.subr.mxu0 0.0
          %8969 = vmatpush1.xpose.msra.mxu0 0.0
          %8970 = vmatprep.subr.mxu0 0.0
          %8971 = vmatpush1.xpose.msra.mxu0 0.0
          %8972 = vmatprep.subr.mxu0 0.0
          %8973 = vmatpush1.xpose.msra.mxu0 0.0
          %8974 = vmatprep.subr.mxu0 0.0
          %8975 = vmatpush1.xpose.msra.mxu0 0.0
          %8976 = vmatprep.subr.mxu0 0.0
          %8977 = vmatpush1.xpose.msra.mxu0 0.0
          %8978 = vmatprep.subr.mxu0 0.0
          %8979 = vmatpush1.xpose.msra.mxu0 0.0
          %8980 = vmatprep.subr.mxu0 0.0
          %8981 = vmatpush1.xpose.msra.mxu0 0.0
          %8982 = vmatprep.subr.mxu0 0.0
          %8983 = vmatpush1.xpose.msra.mxu0 0.0
          %8984 = vmatprep.subr.mxu0 0.0
          %8985 = vmatpush1.xpose.msra.mxu0 0.0
          %8986 = vmatprep.subr.mxu0 0.0
          %8987 = vmatpush1.xpose.msra.mxu0 0.0
          %8988 = vmatprep.subr.mxu0 0.0
          %8989 = vmatpush1.xpose.msra.mxu0 0.0
          %8990 = vmatprep.subr.mxu0 0.0
          %8991 = vmatpush1.xpose.msra.mxu0 0.0
          %8992 = vmatprep.subr.mxu0 0.0
          %8993 = vmatpush1.xpose.msra.mxu0 0.0
          %8994 = vmatprep.mubr.f32.mxu0 %v8570
          %8995 = vmatmul.mubr.f32.gmra.mrb[0].mxu0 %v8569
          %v8996 = vpop.f32.mrb[0].mxu0
          %v8997 = vadd.f32 %v8922, %v8996
          %v8998 = vpop.f32.mrb[0].mxu0
          %8999 = vmatprep.mubr.f32.mxu0 %v8586
          %9000 = vmatmul.mubr.f32.gmra.mrb[0].mxu0 %v8585
          %v9001 = vpop.f32.mrb[0].mxu0
          %v9002 = vadd.f32 %v8927, %v9001
          %v9003 = vpop.f32.mrb[0].mxu0
          %9004 = vdwg.mxu0
          %9005 = vmatprep.subr.mxu0 %v8604
          %9006 = vmatpush1.xpose.msra.mxu0 %v8603
          %9007 = vmatprep.subr.mxu0 %v8620
          %9008 = vmatpush1.xpose.msra.mxu0 %v8619
          %9009 = vmatprep.subr.mxu0 %v8636
          %9010 = vmatpush1.xpose.msra.mxu0 %v8635
          %9011 = vmatprep.subr.mxu0 %v8652
          %9012 = vmatpush1.xpose.msra.mxu0 %v8651
          %9013 = vmatprep.subr.mxu0 %v8668
          %9014 = vmatpush1.xpose.msra.mxu0 %v8667
          %9015 = vmatprep.subr.mxu0 %v8684
          %9016 = vmatpush1.xpose.msra.mxu0 %v8683
          %9017 = vmatprep.subr.mxu0 %v8700
          %9018 = vmatpush1.xpose.msra.mxu0 %v8699
          %9019 = vmatprep.subr.mxu0 %v8716
          %9020 = vmatpush1.xpose.msra.mxu0 %v8715
          %9021 = vmatprep.subr.mxu0 %v8732
          %9022 = vmatpush1.xpose.msra.mxu0 %v8731
          %9023 = vmatprep.subr.mxu0 %v8748
          %9024 = vmatpush1.xpose.msra.mxu0 %v8747
          %9025 = vmatprep.subr.mxu0 %v8764
          %9026 = vmatpush1.xpose.msra.mxu0 %v8763
          %9027 = vmatprep.subr.mxu0 %v8780
          %9028 = vmatpush1.xpose.msra.mxu0 %v8779
          %9029 = vmatprep.subr.mxu0 %v8796
          %9030 = vmatpush1.xpose.msra.mxu0 %v8795
          %9031 = vmatprep.subr.mxu0 %v8812
          %9032 = vmatpush1.xpose.msra.mxu0 %v8811
          %9033 = vmatprep.subr.mxu0 %v8828
          %9034 = vmatpush1.xpose.msra.mxu0 %v8827
          %9035 = vmatprep.subr.mxu0 %v8844
          %9036 = vmatpush1.xpose.msra.mxu0 %v8843
          %9037 = vmatprep.subr.mxu0 0.0
          %9038 = vmatpush1.xpose.msra.mxu0 0.0
          %9039 = vmatprep.subr.mxu0 0.0
          %9040 = vmatpush1.xpose.msra.mxu0 0.0
          %9041 = vmatprep.subr.mxu0 0.0
          %9042 = vmatpush1.xpose.msra.mxu0 0.0
          %9043 = vmatprep.subr.mxu0 0.0
          %9044 = vmatpush1.xpose.msra.mxu0 0.0
          %9045 = vmatprep.subr.mxu0 0.0
          %9046 = vmatpush1.xpose.msra.mxu0 0.0
          %9047 = vmatprep.subr.mxu0 0.0
          %9048 = vmatpush1.xpose.msra.mxu0 0.0
          %9049 = vmatprep.subr.mxu0 0.0
          %9050 = vmatpush1.xpose.msra.mxu0 0.0
          %9051 = vmatprep.subr.mxu0 0.0
          %9052 = vmatpush1.xpose.msra.mxu0 0.0
          %9053 = vmatprep.subr.mxu0 0.0
          %9054 = vmatpush1.xpose.msra.mxu0 0.0
          %9055 = vmatprep.subr.mxu0 0.0
          %9056 = vmatpush1.xpose.msra.mxu0 0.0
          %9057 = vmatprep.subr.mxu0 0.0
          %9058 = vmatpush1.xpose.msra.mxu0 0.0
          %9059 = vmatprep.subr.mxu0 0.0
          %9060 = vmatpush1.xpose.msra.mxu0 0.0
          %9061 = vmatprep.subr.mxu0 0.0
          %9062 = vmatpush1.xpose.msra.mxu0 0.0
          %9063 = vmatprep.subr.mxu0 0.0
          %9064 = vmatpush1.xpose.msra.mxu0 0.0
          %9065 = vmatprep.subr.mxu0 0.0
          %9066 = vmatpush1.xpose.msra.mxu0 0.0
          %9067 = vmatprep.subr.mxu0 0.0
          %9068 = vmatpush1.xpose.msra.mxu0 0.0
          %9069 = vmatprep.mubr.f32.mxu0 %v8572
          %9070 = vmatmul.mubr.f32.gmra.mrb[0].mxu0 %v8571
          %v9071 = vpop.f32.mrb[0].mxu0
          %v9072 = vadd.f32 %v8997, %v9071
          %v9073 = vpop.f32.mrb[0].mxu0
          %9074 = vmatprep.mubr.f32.mxu0 %v8588
          %9075 = vmatmul.mubr.f32.gmra.mrb[0].mxu0 %v8587
          %v9076 = vpop.f32.mrb[0].mxu0
          %v9077 = vadd.f32 %v9002, %v9076
          %v9078 = vpop.f32.mrb[0].mxu0
          %9079 = vdwg.mxu0
          %9080 = vmatprep.subr.mxu0 %v8606
          %9081 = vmatpush1.xpose.msra.mxu0 %v8605
          %9082 = vmatprep.subr.mxu0 %v8622
          %9083 = vmatpush1.xpose.msra.mxu0 %v8621
          %9084 = vmatprep.subr.mxu0 %v8638
          %9085 = vmatpush1.xpose.msra.mxu0 %v8637
          %9086 = vmatprep.subr.mxu0 %v8654
          %9087 = vmatpush1.xpose.msra.mxu0 %v8653
          %9088 = vmatprep.subr.mxu0 %v8670
          %9089 = vmatpush1.xpose.msra.mxu0 %v8669
          %9090 = vmatprep.subr.mxu0 %v8686
          %9091 = vmatpush1.xpose.msra.mxu0 %v8685
          %9092 = vmatprep.subr.mxu0 %v8702
          %9093 = vmatpush1.xpose.msra.mxu0 %v8701
          %9094 = vmatprep.subr.mxu0 %v8718
          %9095 = vmatpush1.xpose.msra.mxu0 %v8717
          %9096 = vmatprep.subr.mxu0 %v8734
          %9097 = vmatpush1.xpose.msra.mxu0 %v8733
          %9098 = vmatprep.subr.mxu0 %v8750
          %9099 = vmatpush1.xpose.msra.mxu0 %v8749
          %9100 = vmatprep.subr.mxu0 %v8766
          %9101 = vmatpush1.xpose.msra.mxu0 %v8765
          %9102 = vmatprep.subr.mxu0 %v8782
          %9103 = vmatpush1.xpose.msra.mxu0 %v8781
          %9104 = vmatprep.subr.mxu0 %v8798
          %9105 = vmatpush1.xpose.msra.mxu0 %v8797
          %9106 = vmatprep.subr.mxu0 %v8814
          %9107 = vmatpush1.xpose.msra.mxu0 %v8813
          %9108 = vmatprep.subr.mxu0 %v8830
          %9109 = vmatpush1.xpose.msra.mxu0 %v8829
          %9110 = vmatprep.subr.mxu0 %v8846
          %9111 = vmatpush1.xpose.msra.mxu0 %v8845
          %9112 = vmatprep.subr.mxu0 0.0
          %9113 = vmatpush1.xpose.msra.mxu0 0.0
          %9114 = vmatprep.subr.mxu0 0.0
          %9115 = vmatpush1.xpose.msra.mxu0 0.0
          %9116 = vmatprep.subr.mxu0 0.0
          %9117 = vmatpush1.xpose.msra.mxu0 0.0
          %9118 = vmatprep.subr.mxu0 0.0
          %9119 = vmatpush1.xpose.msra.mxu0 0.0
          %9120 = vmatprep.subr.mxu0 0.0
          %9121 = vmatpush1.xpose.msra.mxu0 0.0
          %9122 = vmatprep.subr.mxu0 0.0
          %9123 = vmatpush1.xpose.msra.mxu0 0.0
          %9124 = vmatprep.subr.mxu0 0.0
          %9125 = vmatpush1.xpose.msra.mxu0 0.0
          %9126 = vmatprep.subr.mxu0 0.0
          %9127 = vmatpush1.xpose.msra.mxu0 0.0
          %9128 = vmatprep.subr.mxu0 0.0
          %9129 = vmatpush1.xpose.msra.mxu0 0.0
          %9130 = vmatprep.subr.mxu0 0.0
          %9131 = vmatpush1.xpose.msra.mxu0 0.0
          %9132 = vmatprep.subr.mxu0 0.0
          %9133 = vmatpush1.xpose.msra.mxu0 0.0
          %9134 = vmatprep.subr.mxu0 0.0
          %9135 = vmatpush1.xpose.msra.mxu0 0.0
          %9136 = vmatprep.subr.mxu0 0.0
          %9137 = vmatpush1.xpose.msra.mxu0 0.0
          %9138 = vmatprep.subr.mxu0 0.0
          %9139 = vmatpush1.xpose.msra.mxu0 0.0
          %9140 = vmatprep.subr.mxu0 0.0
          %9141 = vmatpush1.xpose.msra.mxu0 0.0
          %9142 = vmatprep.subr.mxu0 0.0
          %9143 = vmatpush1.xpose.msra.mxu0 0.0
          %9144 = vmatprep.mubr.f32.mxu0 %v8574
          %9145 = vmatmul.mubr.f32.gmra.mrb[0].mxu0 %v8573
          %v9146 = vpop.f32.mrb[0].mxu0
          %v9147 = vadd.f32 %v9072, %v9146
          %v9148 = vpop.f32.mrb[0].mxu0
          %9149 = vmatprep.mubr.f32.mxu0 %v8590
          %9150 = vmatmul.mubr.f32.gmra.mrb[0].mxu0 %v8589
          %v9151 = vpop.f32.mrb[0].mxu0
          %v9152 = vadd.f32 %v9077, %v9151
          %v9153 = vpop.f32.mrb[0].mxu0
          %9154 = vdwg.mxu0
          %9155 = vmatprep.subr.mxu0 %v8608
          %9156 = vmatpush1.xpose.msra.mxu0 %v8607
          %9157 = vmatprep.subr.mxu0 %v8624
          %9158 = vmatpush1.xpose.msra.mxu0 %v8623
          %9159 = vmatprep.subr.mxu0 %v8640
          %9160 = vmatpush1.xpose.msra.mxu0 %v8639
          %9161 = vmatprep.subr.mxu0 %v8656
          %9162 = vmatpush1.xpose.msra.mxu0 %v8655
          %9163 = vmatprep.subr.mxu0 %v8672
          %9164 = vmatpush1.xpose.msra.mxu0 %v8671
          %9165 = vmatprep.subr.mxu0 %v8688
          %9166 = vmatpush1.xpose.msra.mxu0 %v8687
          %9167 = vmatprep.subr.mxu0 %v8704
          %9168 = vmatpush1.xpose.msra.mxu0 %v8703
          %9169 = vmatprep.subr.mxu0 %v8720
          %9170 = vmatpush1.xpose.msra.mxu0 %v8719
          %9171 = vmatprep.subr.mxu0 %v8736
          %9172 = vmatpush1.xpose.msra.mxu0 %v8735
          %9173 = vmatprep.subr.mxu0 %v8752
          %9174 = vmatpush1.xpose.msra.mxu0 %v8751
          %9175 = vmatprep.subr.mxu0 %v8768
          %9176 = vmatpush1.xpose.msra.mxu0 %v8767
          %9177 = vmatprep.subr.mxu0 %v8784
          %9178 = vmatpush1.xpose.msra.mxu0 %v8783
          %9179 = vmatprep.subr.mxu0 %v8800
          %9180 = vmatpush1.xpose.msra.mxu0 %v8799
          %9181 = vmatprep.subr.mxu0 %v8816
          %9182 = vmatpush1.xpose.msra.mxu0 %v8815
          %9183 = vmatprep.subr.mxu0 %v8832
          %9184 = vmatpush1.xpose.msra.mxu0 %v8831
          %9185 = vmatprep.subr.mxu0 %v8848
          %9186 = vmatpush1.xpose.msra.mxu0 %v8847
          %9187 = vmatprep.subr.mxu0 0.0
          %9188 = vmatpush1.xpose.msra.mxu0 0.0
          %9189 = vmatprep.subr.mxu0 0.0
          %9190 = vmatpush1.xpose.msra.mxu0 0.0
          %9191 = vmatprep.subr.mxu0 0.0
          %9192 = vmatpush1.xpose.msra.mxu0 0.0
          %9193 = vmatprep.subr.mxu0 0.0
          %9194 = vmatpush1.xpose.msra.mxu0 0.0
          %9195 = vmatprep.subr.mxu0 0.0
          %9196 = vmatpush1.xpose.msra.mxu0 0.0
          %9197 = vmatprep.subr.mxu0 0.0
          %9198 = vmatpush1.xpose.msra.mxu0 0.0
          %9199 = vmatprep.subr.mxu0 0.0
          %9200 = vmatpush1.xpose.msra.mxu0 0.0
          %9201 = vmatprep.subr.mxu0 0.0
          %9202 = vmatpush1.xpose.msra.mxu0 0.0
          %9203 = vmatprep.subr.mxu0 0.0
          %9204 = vmatpush1.xpose.msra.mxu0 0.0
          %9205 = vmatprep.subr.mxu0 0.0
          %9206 = vmatpush1.xpose.msra.mxu0 0.0
          %9207 = vmatprep.subr.mxu0 0.0
          %9208 = vmatpush1.xpose.msra.mxu0 0.0
          %9209 = vmatprep.subr.mxu0 0.0
          %9210 = vmatpush1.xpose.msra.mxu0 0.0
          %9211 = vmatprep.subr.mxu0 0.0
          %9212 = vmatpush1.xpose.msra.mxu0 0.0
          %9213 = vmatprep.subr.mxu0 0.0
          %9214 = vmatpush1.xpose.msra.mxu0 0.0
          %9215 = vmatprep.subr.mxu0 0.0
          %9216 = vmatpush1.xpose.msra.mxu0 0.0
          %9217 = vmatprep.subr.mxu0 0.0
          %9218 = vmatpush1.xpose.msra.mxu0 0.0
          %9219 = vmatprep.mubr.f32.mxu0 %v8576
          %9220 = vmatmul.mubr.f32.gmra.mrb[0].mxu0 %v8575
          %v9221 = vpop.f32.mrb[0].mxu0
          %v9222 = vadd.f32 %v9147, %v9221
          %v9223 = vpop.f32.mrb[0].mxu0
          %9224 = vmatprep.mubr.f32.mxu0 %v8592
          %9225 = vmatmul.mubr.f32.gmra.mrb[0].mxu0 %v8591
          %v9226 = vpop.f32.mrb[0].mxu0
          %v9227 = vadd.f32 %v9152, %v9226
          %v9228 = vpop.f32.mrb[0].mxu0
          %9229 = vdwg.mxu0
          %9230 = vmatprep.subr.mxu0 %v8610
          %9231 = vmatpush1.xpose.msra.mxu0 %v8609
          %9232 = vmatprep.subr.mxu0 %v8626
          %9233 = vmatpush1.xpose.msra.mxu0 %v8625
          %9234 = vmatprep.subr.mxu0 %v8642
          %9235 = vmatpush1.xpose.msra.mxu0 %v8641
          %9236 = vmatprep.subr.mxu0 %v8658
          %9237 = vmatpush1.xpose.msra.mxu0 %v8657
          %9238 = vmatprep.subr.mxu0 %v8674
          %9239 = vmatpush1.xpose.msra.mxu0 %v8673
          %9240 = vmatprep.subr.mxu0 %v8690
          %9241 = vmatpush1.xpose.msra.mxu0 %v8689
          %9242 = vmatprep.subr.mxu0 %v8706
          %9243 = vmatpush1.xpose.msra.mxu0 %v8705
          %9244 = vmatprep.subr.mxu0 %v8722
          %9245 = vmatpush1.xpose.msra.mxu0 %v8721
          %9246 = vmatprep.subr.mxu0 %v8738
          %9247 = vmatpush1.xpose.msra.mxu0 %v8737
          %9248 = vmatprep.subr.mxu0 %v8754
          %9249 = vmatpush1.xpose.msra.mxu0 %v8753
          %9250 = vmatprep.subr.mxu0 %v8770
          %9251 = vmatpush1.xpose.msra.mxu0 %v8769
          %9252 = vmatprep.subr.mxu0 %v8786
          %9253 = vmatpush1.xpose.msra.mxu0 %v8785
          %9254 = vmatprep.subr.mxu0 %v8802
          %9255 = vmatpush1.xpose.msra.mxu0 %v8801
          %9256 = vmatprep.subr.mxu0 %v8818
          %9257 = vmatpush1.xpose.msra.mxu0 %v8817
          %9258 = vmatprep.subr.mxu0 %v8834
          %9259 = vmatpush1.xpose.msra.mxu0 %v8833
          %9260 = vmatprep.subr.mxu0 %v8850
          %9261 = vmatpush1.xpose.msra.mxu0 %v8849
          %9262 = vmatprep.subr.mxu0 0.0
          %9263 = vmatpush1.xpose.msra.mxu0 0.0
          %9264 = vmatprep.subr.mxu0 0.0
          %9265 = vmatpush1.xpose.msra.mxu0 0.0
          %9266 = vmatprep.subr.mxu0 0.0
          %9267 = vmatpush1.xpose.msra.mxu0 0.0
          %9268 = vmatprep.subr.mxu0 0.0
          %9269 = vmatpush1.xpose.msra.mxu0 0.0
          %9270 = vmatprep.subr.mxu0 0.0
          %9271 = vmatpush1.xpose.msra.mxu0 0.0
          %9272 = vmatprep.subr.mxu0 0.0
          %9273 = vmatpush1.xpose.msra.mxu0 0.0
          %9274 = vmatprep.subr.mxu0 0.0
          %9275 = vmatpush1.xpose.msra.mxu0 0.0
          %9276 = vmatprep.subr.mxu0 0.0
          %9277 = vmatpush1.xpose.msra.mxu0 0.0
          %9278 = vmatprep.subr.mxu0 0.0
          %9279 = vmatpush1.xpose.msra.mxu0 0.0
          %9280 = vmatprep.subr.mxu0 0.0
          %9281 = vmatpush1.xpose.msra.mxu0 0.0
          %9282 = vmatprep.subr.mxu0 0.0
          %9283 = vmatpush1.xpose.msra.mxu0 0.0
          %9284 = vmatprep.subr.mxu0 0.0
          %9285 = vmatpush1.xpose.msra.mxu0 0.0
          %9286 = vmatprep.subr.mxu0 0.0
          %9287 = vmatpush1.xpose.msra.mxu0 0.0
          %9288 = vmatprep.subr.mxu0 0.0
          %9289 = vmatpush1.xpose.msra.mxu0 0.0
          %9290 = vmatprep.subr.mxu0 0.0
          %9291 = vmatpush1.xpose.msra.mxu0 0.0
          %9292 = vmatprep.subr.mxu0 0.0
          %9293 = vmatpush1.xpose.msra.mxu0 0.0
          %9294 = vmatprep.mubr.f32.mxu0 %v8578
          %9295 = vmatmul.mubr.f32.gmra.mrb[0].mxu0 %v8577
          %v9296 = vpop.f32.mrb[0].mxu0
          %v9297 = vadd.f32 %v9222, %v9296
          %v9298 = vpop.f32.mrb[0].mxu0
          %9299 = vmatprep.mubr.f32.mxu0 %v8594
          %9300 = vmatmul.mubr.f32.gmra.mrb[0].mxu0 %v8593
          %v9301 = vpop.f32.mrb[0].mxu0
          %v9302 = vadd.f32 %v9227, %v9301
          %v9303 = vpop.f32.mrb[0].mxu0
          %9304 = vdwg.mxu0
          %9305 = vmatprep.subr.mxu0 %v8612
          %9306 = vmatpush1.xpose.msra.mxu0 %v8611
          %9307 = vmatprep.subr.mxu0 %v8628
          %9308 = vmatpush1.xpose.msra.mxu0 %v8627
          %9309 = vmatprep.subr.mxu0 %v8644
          %9310 = vmatpush1.xpose.msra.mxu0 %v8643
          %9311 = vmatprep.subr.mxu0 %v8660
          %9312 = vmatpush1.xpose.msra.mxu0 %v8659
          %9313 = vmatprep.subr.mxu0 %v8676
          %9314 = vmatpush1.xpose.msra.mxu0 %v8675
          %9315 = vmatprep.subr.mxu0 %v8692
          %9316 = vmatpush1.xpose.msra.mxu0 %v8691
          %9317 = vmatprep.subr.mxu0 %v8708
          %9318 = vmatpush1.xpose.msra.mxu0 %v8707
          %9319 = vmatprep.subr.mxu0 %v8724
          %9320 = vmatpush1.xpose.msra.mxu0 %v8723
          %9321 = vmatprep.subr.mxu0 %v8740
          %9322 = vmatpush1.xpose.msra.mxu0 %v8739
          %9323 = vmatprep.subr.mxu0 %v8756
          %9324 = vmatpush1.xpose.msra.mxu0 %v8755
          %9325 = vmatprep.subr.mxu0 %v8772
          %9326 = vmatpush1.xpose.msra.mxu0 %v8771
          %9327 = vmatprep.subr.mxu0 %v8788
          %9328 = vmatpush1.xpose.msra.mxu0 %v8787
          %9329 = vmatprep.subr.mxu0 %v8804
          %9330 = vmatpush1.xpose.msra.mxu0 %v8803
          %9331 = vmatprep.subr.mxu0 %v8820
          %9332 = vmatpush1.xpose.msra.mxu0 %v8819
          %9333 = vmatprep.subr.mxu0 %v8836
          %9334 = vmatpush1.xpose.msra.mxu0 %v8835
          %9335 = vmatprep.subr.mxu0 %v8852
          %9336 = vmatpush1.xpose.msra.mxu0 %v8851
          %9337 = vmatprep.subr.mxu0 0.0
          %9338 = vmatpush1.xpose.msra.mxu0 0.0
          %9339 = vmatprep.subr.mxu0 0.0
          %9340 = vmatpush1.xpose.msra.mxu0 0.0
          %9341 = vmatprep.subr.mxu0 0.0
          %9342 = vmatpush1.xpose.msra.mxu0 0.0
          %9343 = vmatprep.subr.mxu0 0.0
          %9344 = vmatpush1.xpose.msra.mxu0 0.0
          %9345 = vmatprep.subr.mxu0 0.0
          %9346 = vmatpush1.xpose.msra.mxu0 0.0
          %9347 = vmatprep.subr.mxu0 0.0
          %9348 = vmatpush1.xpose.msra.mxu0 0.0
          %9349 = vmatprep.subr.mxu0 0.0
          %9350 = vmatpush1.xpose.msra.mxu0 0.0
          %9351 = vmatprep.subr.mxu0 0.0
          %9352 = vmatpush1.xpose.msra.mxu0 0.0
          %9353 = vmatprep.subr.mxu0 0.0
          %9354 = vmatpush1.xpose.msra.mxu0 0.0
          %9355 = vmatprep.subr.mxu0 0.0
          %9356 = vmatpush1.xpose.msra.mxu0 0.0
          %9357 = vmatprep.subr.mxu0 0.0
          %9358 = vmatpush1.xpose.msra.mxu0 0.0
          %9359 = vmatprep.subr.mxu0 0.0
          %9360 = vmatpush1.xpose.msra.mxu0 0.0
          %9361 = vmatprep.subr.mxu0 0.0
          %9362 = vmatpush1.xpose.msra.mxu0 0.0
          %9363 = vmatprep.subr.mxu0 0.0
          %9364 = vmatpush1.xpose.msra.mxu0 0.0
          %9365 = vmatprep.subr.mxu0 0.0
          %9366 = vmatpush1.xpose.msra.mxu0 0.0
          %9367 = vmatprep.subr.mxu0 0.0
          %9368 = vmatpush1.xpose.msra.mxu0 0.0
          %9369 = vmatprep.mubr.f32.mxu0 %v8580
          %9370 = vmatmul.mubr.f32.gmra.mrb[0].mxu0 %v8579
          %v9371 = vpop.f32.mrb[0].mxu0
          %v9372 = vadd.f32 %v9297, %v9371
          %v9373 = vpop.f32.mrb[0].mxu0
          %9374 = vmatprep.mubr.f32.mxu0 %v8596
          %9375 = vmatmul.mubr.f32.gmra.mrb[0].mxu0 %v8595
          %v9376 = vpop.f32.mrb[0].mxu0
          %v9377 = vadd.f32 %v9302, %v9376
          %v9378 = vpop.f32.mrb[0].mxu0
          %9379 = vdwg.mxu0
          %9380 = vmatprep.subr.mxu0 %v8614
          %9381 = vmatpush1.xpose.msra.mxu0 %v8613
          %9382 = vmatprep.subr.mxu0 %v8630
          %9383 = vmatpush1.xpose.msra.mxu0 %v8629
          %9384 = vmatprep.subr.mxu0 %v8646
          %9385 = vmatpush1.xpose.msra.mxu0 %v8645
          %9386 = vmatprep.subr.mxu0 %v8662
          %9387 = vmatpush1.xpose.msra.mxu0 %v8661
          %9388 = vmatprep.subr.mxu0 %v8678
          %9389 = vmatpush1.xpose.msra.mxu0 %v8677
          %9390 = vmatprep.subr.mxu0 %v8694
          %9391 = vmatpush1.xpose.msra.mxu0 %v8693
          %9392 = vmatprep.subr.mxu0 %v8710
          %9393 = vmatpush1.xpose.msra.mxu0 %v8709
          %9394 = vmatprep.subr.mxu0 %v8726
          %9395 = vmatpush1.xpose.msra.mxu0 %v8725
          %9396 = vmatprep.subr.mxu0 %v8742
          %9397 = vmatpush1.xpose.msra.mxu0 %v8741
          %9398 = vmatprep.subr.mxu0 %v8758
          %9399 = vmatpush1.xpose.msra.mxu0 %v8757
          %9400 = vmatprep.subr.mxu0 %v8774
          %9401 = vmatpush1.xpose.msra.mxu0 %v8773
          %9402 = vmatprep.subr.mxu0 %v8790
          %9403 = vmatpush1.xpose.msra.mxu0 %v8789
          %9404 = vmatprep.subr.mxu0 %v8806
          %9405 = vmatpush1.xpose.msra.mxu0 %v8805
          %9406 = vmatprep.subr.mxu0 %v8822
          %9407 = vmatpush1.xpose.msra.mxu0 %v8821
          %9408 = vmatprep.subr.mxu0 %v8838
          %9409 = vmatpush1.xpose.msra.mxu0 %v8837
          %9410 = vmatprep.subr.mxu0 %v8854
          %9411 = vmatpush1.xpose.msra.mxu0 %v8853
          %9412 = vmatprep.subr.mxu0 0.0
          %9413 = vmatpush1.xpose.msra.mxu0 0.0
          %9414 = vmatprep.subr.mxu0 0.0
          %9415 = vmatpush1.xpose.msra.mxu0 0.0
          %9416 = vmatprep.subr.mxu0 0.0
          %9417 = vmatpush1.xpose.msra.mxu0 0.0
          %9418 = vmatprep.subr.mxu0 0.0
          %9419 = vmatpush1.xpose.msra.mxu0 0.0
          %9420 = vmatprep.subr.mxu0 0.0
          %9421 = vmatpush1.xpose.msra.mxu0 0.0
          %9422 = vmatprep.subr.mxu0 0.0
          %9423 = vmatpush1.xpose.msra.mxu0 0.0
          %9424 = vmatprep.subr.mxu0 0.0
          %9425 = vmatpush1.xpose.msra.mxu0 0.0
          %9426 = vmatprep.subr.mxu0 0.0
          %9427 = vmatpush1.xpose.msra.mxu0 0.0
          %9428 = vmatprep.subr.mxu0 0.0
          %9429 = vmatpush1.xpose.msra.mxu0 0.0
          %9430 = vmatprep.subr.mxu0 0.0
          %9431 = vmatpush1.xpose.msra.mxu0 0.0
          %9432 = vmatprep.subr.mxu0 0.0
          %9433 = vmatpush1.xpose.msra.mxu0 0.0
          %9434 = vmatprep.subr.mxu0 0.0
          %9435 = vmatpush1.xpose.msra.mxu0 0.0
          %9436 = vmatprep.subr.mxu0 0.0
          %9437 = vmatpush1.xpose.msra.mxu0 0.0
          %9438 = vmatprep.subr.mxu0 0.0
          %9439 = vmatpush1.xpose.msra.mxu0 0.0
          %9440 = vmatprep.subr.mxu0 0.0
          %9441 = vmatpush1.xpose.msra.mxu0 0.0
          %9442 = vmatprep.subr.mxu0 0.0
          %9443 = vmatpush1.xpose.msra.mxu0 0.0
          %9444 = vmatprep.mubr.f32.mxu0 %v8582
          %9445 = vmatmul.mubr.f32.gmra.mrb[0].mxu0 %v8581
          %v9446 = vpop.f32.mrb[0].mxu0
          %v9447 = vadd.f32 %v9372, %v9446
          %v9448 = vpop.f32.mrb[0].mxu0
          %9449 = vmatprep.mubr.f32.mxu0 %v8598
          %9450 = vmatmul.mubr.f32.gmra.mrb[0].mxu0 %v8597
          %v9451 = vpop.f32.mrb[0].mxu0
          %v9452 = vadd.f32 %v9377, %v9451
          %v9453 = vpop.f32.mrb[0].mxu0
          %9454 = vdwg.mxu0
          %9455 = vst [vmem:[#allocation14] sm:$0xff] %v9447
          %9456 = vst [vmem:[#allocation14 + $0x8] sm:$0xff] %v9452
        $region68: #{tpu_custom_call.1} parent=39 // pred_fallthru
          _
        %s9457 = sand.u32 %s166, 1
        %s9458 = scalar_lea.sflag [#allocation16], %s9457
        %s9459 = sand.u32 %s166, 1
        %s9460 = smul.addr %s9459, 128
        %s9461 = scalar_lea.vmem [#allocation15], %s9460
        // Predicated region
        $region69: #{tpu_custom_call.1} parent=39 // pred_check
          %p9462 = pneg %p150
        $region70: #{tpu_custom_call.1} parent=39 // pred_check_branch
          %9464 = sbr.rel (%p9462) target = $region72
        $region71: #{tpu_custom_call.1} parent=39 // pred_region
          %s9466 = ssub.s32 256, 256
          %9467 = vsyncadd [#allocation7], %s9466
          %s9468 = sshll.u32 [#allocation14], 4
          %s9469 = int_to_ptr.vmem [resolvable:$true] %s9468
          %9474 = dma.vmem_to_hbm [thread:$0]  %s9469, 256, %s5, [#allocation7], 128, 128, 8
        $region72: #{tpu_custom_call.1} parent=39 // pred_fallthru
          _
        // Predicated region
        $region73: #{tpu_custom_call.1} parent=39 // pred_check
          %p9475 = pneg %p176
        $region74: #{tpu_custom_call.1} parent=39 // pred_check_branch
          %9477 = sbr.rel (%p9475) target = $region76
        $region75: #{tpu_custom_call.1} parent=39 // pred_region
          %s9479 = ssub.s32 2048, 2048
          %9480 = vsyncadd %s9458, %s9479
          %s9481 = smul.addr %s27, 16
          %s9482 = smul.addr %s9481, 128
          %s9483 = scalar_lea.hbm %s6, %s9482
          %s9485 = sshll.u32 %s9461, 4
          %s9486 = int_to_ptr.vmem [resolvable:$true] %s9485
          %9488 = dma.vmem_to_hbm [thread:$0]  %s9486, 2048, %s9483, %s9458
        $region76: #{tpu_custom_call.1} parent=39 // pred_fallthru
          _
        // Predicated region
        $region77: #{tpu_custom_call.1} parent=39 // pred_check
          %p9489 = pneg %p150
        $region78: #{tpu_custom_call.1} parent=39 // pred_check_branch
          %9491 = sbr.rel (%p9489) target = $region80
        $region79: #{tpu_custom_call.1} parent=39 // pred_region
          %9492 = dma.done [#allocation7], 256
        $region80: #{tpu_custom_call.1} parent=39 // pred_fallthru
          _
      $region40: #{tpu_custom_call.1} parent=5 // pred_fallthru
        _
      %p9493 = scmp.le.s32.totalorder 2, %s22
      // Predicated region
      $region81: #{tpu_custom_call.1} parent=5 // pred_check
        %p9494 = pneg %p9493
      $region82: #{tpu_custom_call.1} parent=5 // pred_check_branch
        %9496 = sbr.rel (%p9494) target = $region84
      $region83: #{tpu_custom_call.1} parent=5 // pred_region
        %s9497 = ssub.s32 %s22, 2
        // Predicated region
        $region85: #{tpu_custom_call.1} parent=83 // pred_check
          %p9498 = pneg %p182
        $region86: #{tpu_custom_call.1} parent=83 // pred_check_branch
          %9500 = sbr.rel (%p9498) target = $region88
        $region87: #{tpu_custom_call.1} parent=83 // pred_region
          %s9501 = sand.u32 %s167, 1
          %s9502 = scalar_lea.sflag [#allocation16], %s9501
          %s9503 = sand.u32 %s167, 1
          %s9504 = smul.addr %s9503, 128
          %s9505 = scalar_lea.vmem [#allocation15], %s9504
          %9506 = dma.done %s9502, 2048
        $region88: #{tpu_custom_call.1} parent=83 // pred_fallthru
          _
      $region84: #{tpu_custom_call.1} parent=5 // pred_fallthru
        _
    $region6: #{tpu_custom_call.1} parent=1 // loop_footer
      %s26 = sadd.s32 1, %s22
    $region7: #{tpu_custom_call.1} parent=1 // loop_footer_branch
      %21 = sbr.rel target = $region3
    $region8: #{tpu_custom_call.1} parent=1 // loop_exit
      _
    %9507 = vsyncpa [#allocation6], 1
    %s9508 = scalar_lea.sflag [#allocation6], 1
    %9509 = vsyncpa %s9508, 1
    %9510 = vsyncpa [#allocation9], 1
    %9511 = vsyncpa [#allocation12], 1
    %9512 = vsyncpa [#allocation7], 1
    %s9513 = scalar_lea.sflag [#allocation7], 1
    %9514 = vsyncpa %s9513, 1
    %9515 = vsyncpa [#allocation16], 1
    %s9516 = scalar_lea.sflag [#allocation16], 1
    %9517 = vsyncpa %s9516, 1

</llo_original>
